<compile_context>
chip_gen: v5e
topology: v5e:2x2
jax: 0.10.0
libtpu: 0.0.40
codegen_flags: <defaults>
</compile_context>

<pallas_src>
import jax
import jax.numpy as jnp
from jax.experimental import pallas as pl
from jax.experimental.pallas import tpu as pltpu

# ---- synthetic "config" values (small shapes) --------------------------------
CHANNELS = 4
IMG_HEIGHT = 16
IMG_WIDTH = 16
NUM_CLASSES = 10
DROPOUT_RATE = 0.5  # inference -> identity


def _pick_block_n(n, max_nb=32):
    """Images per grid step.  Dual-TC chips (v7x): prefer an even number of grid
    steps so the 'parallel' batch axis feeds both TensorCores; single-TC chips
    (v5e/v6e): minimize grid steps (maximize NB)."""
    try:
        kind = jax.devices()[0].device_kind.lower()
    except Exception:
        kind = ""
    dual_tc = "v7" in kind
    divisors = [nb for nb in range(min(n, max_nb), 0, -1) if n % nb == 0]
    if dual_tc:
        for nb in divisors:
            if (n // nb) % 2 == 0:
                return nb
    return divisors[0]


def _flat_sizes(nb, h, w):
    """pitch, per-image padded flat size S, batched shifted-view length L."""
    pitch = w + 2
    s = (h + 2) * pitch
    l = (nb - 1) * s + (h - 1) * pitch + w
    return pitch, s, l


# ---- in-kernel building blocks -------------------------------------------------
def _conv_relu_pool(src_ref, nb, h, w, wt_ref, b_ref, cs_ref):
    """conv3x3(same) + ReLU + maxpool2x2/2 on a batched zero-padded flat buffer.

    src_ref: (nb*(h+2)*(w+2), cin)   padded inputs, image-major / row-major flat
    wt_ref : (9, cin, cout) bf16     taps flattened as t = ky*3 + kx
    b_ref  : (1, cout) f32
    cs_ref : (L, cout) f32           conv+ReLU scratch (batched flat view)
    Returns ph (value); pooled(n, io, jo) = ph[n*S//2 + io*(w+2) + jo].
    """
    pitch, s, l = _flat_sizes(nb, h, w)

    # 9 whole-batch matmuls on shifted flat views (one dot per tap for all nb
    # images at once); bf16 operands, f32 accumulation.
    acc = None
    for t in range(9):
        ky, kx = divmod(t, 3)
        lhs = src_ref[pl.ds(ky * pitch + kx, l), :].astype(jnp.bfloat16)
        d = jnp.dot(lhs, wt_ref[t], preferred_element_type=jnp.float32)
        acc = d if acc is None else acc + d
    cs_ref[...] = jnp.maximum(acc + b_ref[...], 0.0)            # bias + ReLU (bulk)

    # W-direction pool: one pair of sublane-strided loads; H-direction pool:
    # one shifted bulk max.  Junk rows are computed but never read.
    lh = l // 2
    p2 = pitch // 2
    pw = jnp.maximum(cs_ref[pl.ds(0, lh, stride=2), :],
                     cs_ref[pl.ds(1, lh, stride=2), :])
    k = lh - p2
    return jnp.maximum(pw[0:k], pw[p2:p2 + k])


def _store_pooled_padded(ph, nb, h, w, cout, dst_ref):
    """Write pooled maps into the NEXT layer's zero-padded flat buffer: one dense
    (S_next, cout) store per image that carries the halo zeros along with the
    interior rows, so dst never needs a separate zeroing pass."""
    pitch, s, _ = _flat_sizes(nb, h, w)
    hs = s // 2
    ho, wo = h // 2, w // 2
    pn = wo + 2                       # next layer's padded row pitch
    sn = (ho + 2) * pn                # next layer's per-image padded flat size
    zend = jnp.zeros((pn + 1, cout), jnp.float32)   # hoisted: built once
    zgap = jnp.zeros((2, cout), jnp.float32)
    for n in range(nb):
        base = n * hs
        pieces = [zend]
        for io in range(ho):
            r0 = base + io * pitch
            pieces.append(ph[r0:r0 + wo])
            pieces.append(zgap if io + 1 < ho else zend)
        dst_ref[pl.ds(n * sn, sn), :] = jnp.concatenate(pieces, axis=0)


def _gather_features(ph, nb, h, w):
    """Final pooled maps -> (nb, ho*wo*128) lane-major feature slab, returned as a
    value and fed straight into the single K=512 fc1 matmul (no scratch store)."""
    pitch, s, _ = _flat_sizes(nb, h, w)
    hs = s // 2
    ho, wo = h // 2, w // 2
    rows = []
    for n in range(nb):
        base = n * hs
        pos = [ph[base + io * pitch + jo: base + io * pitch + jo + 1, :]
               for io in range(ho) for jo in range(wo)]
        rows.append(jnp.concatenate(pos, axis=-1))
    return jnp.concatenate(rows, axis=0)


# ---- parameters (deterministic, synthetic) -----------------------------------
def init_params(key):
    """PyTorch-like layouts (fw1 rows follow nn.Flatten on NCHW, i.e. (c, h, w))."""
    ks = jax.random.split(key, 5)

    def conv_w(k, cin, cout):
        return jax.random.normal(k, (3, 3, cin, cout), jnp.float32) / jnp.sqrt(9.0 * cin)

    def fc_w(k, fin, fout):
        return jax.random.normal(k, (fin, fout), jnp.float32) / jnp.sqrt(float(fin))

    feat = 128 * (IMG_HEIGHT // 8) * (IMG_WIDTH // 8)
    return {
        "cw1": conv_w(ks[0], CHANNELS, 32), "cb1": jnp.zeros((32,), jnp.float32),
        "cw2": conv_w(ks[1], 32, 64),       "cb2": jnp.zeros((64,), jnp.float32),
        "cw3": conv_w(ks[2], 64, 128),      "cb3": jnp.zeros((128,), jnp.float32),
        "fw1": fc_w(ks[3], feat, 512),      "fb1": jnp.zeros((512,), jnp.float32),
        "fw2": fc_w(ks[4], 512, NUM_CLASSES), "fb2": jnp.zeros((NUM_CLASSES,), jnp.float32),
    }


def prepare_params(p):
    """One-time re-layout into the fused-kernel format (at init, not per call):
    conv taps flattened, conv/fc1 weights in bf16, and the NCHW-flatten
    permutation folded into fc1 so the head is a single K=512 matmul."""
    ho3, wo3, c3 = IMG_HEIGHT // 8, IMG_WIDTH // 8, 128
    bf = jnp.bfloat16
    fw1 = p["fw1"].reshape(c3, ho3, wo3, -1).transpose(1, 2, 0, 3)
    fw1 = fw1.reshape(ho3 * wo3 * c3, -1)
    return {
        "cw1": p["cw1"].reshape(9, CHANNELS, 32).astype(bf), "cb1": p["cb1"].reshape(1, -1),
        "cw2": p["cw2"].reshape(9, 32, 64).astype(bf),       "cb2": p["cb2"].reshape(1, -1),
        "cw3": p["cw3"].reshape(9, 64, 128).astype(bf),      "cb3": p["cb3"].reshape(1, -1),
        "fw1": fw1.astype(bf),                               "fb1": p["fb1"].reshape(1, -1),
        "fw2": p["fw2"],                                     "fb2": p["fb2"].reshape(1, -1),
    }


# ---- forward pass -------------------------------------------------------------
@jax.jit
def cnn_forward(x_nchw, p):
    N, Cin, H, W = x_nchw.shape
    C1, C2, C3 = p["cw1"].shape[-1], p["cw2"].shape[-1], p["cw3"].shape[-1]
    nclass = p["fw2"].shape[-1]
    NB = _pick_block_n(N)
    G = N // NB

    # NCHW -> NHWC once; fold conv1's zero padding into the HBM layout and cast
    # to bf16 (half the input DMA, MXU-native lhs); flatten to the batched
    # "flat row" view the kernel slices per tap.
    x = jnp.transpose(x_nchw, (0, 2, 3, 1))
    xp = jnp.pad(x, ((0, 0), (1, 1), (1, 1), (0, 0))).astype(jnp.bfloat16)
    s1 = (H + 2) * (W + 2)
    xp = xp.reshape(G, NB * s1, Cin)

    _, _, l1 = _flat_sizes(NB, H, W)
    _, s2, l2 = _flat_sizes(NB, H // 2, W // 2)
    _, s3, l3 = _flat_sizes(NB, H // 4, W // 4)

    def kernel(x_ref, w1, b1, w2, b2, w3, b3, fw1, fb1, fw2, fb2,
               out_ref, cs1, cs2, cs3, pad2, pad3):
        # conv -> ReLU -> pool x3; all activations stay VMEM-resident
        ph1 = _conv_relu_pool(x_ref, NB, H, W, w1, b1, cs1)
        _store_pooled_padded(ph1, NB, H, W, C1, pad2)
        ph2 = _conv_relu_pool(pad2, NB, H // 2, W // 2, w2, b2, cs2)
        _store_pooled_padded(ph2, NB, H // 2, W // 2, C2, pad3)
        ph3 = _conv_relu_pool(pad3, NB, H // 4, W // 4, w3, b3, cs3)
        feat = _gather_features(ph3, NB, H // 4, W // 4)          # (NB, 512)

        # head: fc1 (single K=512 bf16 matmul; flatten fold done at init) + ReLU
        hidden = jnp.dot(feat.astype(jnp.bfloat16), fw1[...],
                         preferred_element_type=jnp.float32) + fb1[...]
        hidden = jnp.maximum(hidden, 0.0)
        # TODO(synk): nn.Dropout(DROPOUT_RATE) is identity at inference; no mask.
        logits = jnp.dot(hidden, fw2[...], preferred_element_type=jnp.float32) + fb2[...]
        logits = logits - jnp.max(logits, axis=-1, keepdims=True)
        e = jnp.exp(logits)
        out_ref[...] = e / jnp.sum(e, axis=-1, keepdims=True)     # exact softmax

    out = pl.pallas_call(
        kernel,
        out_shape=jax.ShapeDtypeStruct((G, NB, nclass), jnp.float32),
        grid=(G,),
        in_specs=[
            pl.BlockSpec((None, NB * s1, Cin), lambda n: (n, 0, 0)),
            pl.BlockSpec(p["cw1"].shape, lambda n: (0, 0, 0)),
            pl.BlockSpec(p["cb1"].shape, lambda n: (0, 0)),
            pl.BlockSpec(p["cw2"].shape, lambda n: (0, 0, 0)),
            pl.BlockSpec(p["cb2"].shape, lambda n: (0, 0)),
            pl.BlockSpec(p["cw3"].shape, lambda n: (0, 0, 0)),
            pl.BlockSpec(p["cb3"].shape, lambda n: (0, 0)),
            pl.BlockSpec(p["fw1"].shape, lambda n: (0, 0)),
            pl.BlockSpec(p["fb1"].shape, lambda n: (0, 0)),
            pl.BlockSpec(p["fw2"].shape, lambda n: (0, 0)),
            pl.BlockSpec(p["fb2"].shape, lambda n: (0, 0)),
        ],
        out_specs=pl.BlockSpec((None, NB, nclass), lambda n: (n, 0, 0)),
        scratch_shapes=[
            pltpu.VMEM((l1, C1), jnp.float32),        # conv1+ReLU, batched flat view
            pltpu.VMEM((l2, C2), jnp.float32),        # conv2+ReLU
            pltpu.VMEM((l3, C3), jnp.float32),        # conv3+ReLU
            pltpu.VMEM((NB * s2, C1), jnp.float32),   # padded pooled layer-1 output
            pltpu.VMEM((NB * s3, C2), jnp.float32),   # padded pooled layer-2 output
        ],
        compiler_params=pltpu.CompilerParams(dimension_semantics=("parallel",)),
    )(xp, p["cw1"], p["cb1"], p["cw2"], p["cb2"], p["cw3"], p["cb3"],
      p["fw1"], p["fb1"], p["fw2"], p["fb2"])
    return out.reshape(N, nclass)


if __name__ == "__main__":
    key = jax.random.PRNGKey(0)
    pkey, xkey = jax.random.split(key)
    params = prepare_params(init_params(pkey))
    x = jax.random.normal(xkey, (2, CHANNELS, IMG_HEIGHT, IMG_WIDTH), jnp.float32)

    probs = jax.block_until_ready(cnn_forward(x, params))
    assert probs.shape == (2, NUM_CLASSES)
    assert bool(jnp.all(jnp.abs(jnp.sum(probs, axis=1) - 1.0) < 1e-3))
    assert bool(jnp.all(probs >= 0.0))
    print("KERNEL_OK")
</pallas_src>

<mosaic_0001>
module attributes {stable_mosaic.version = 11 : i64} {
  func.func @kernel(%arg0: i32, %arg1: memref<1x648x4xbf16, #tpu.memory_space<vmem>>, %arg2: memref<9x4x32xbf16, #tpu.memory_space<vmem>>, %arg3: memref<1x32xf32, #tpu.memory_space<vmem>>, %arg4: memref<9x32x64xbf16, #tpu.memory_space<vmem>>, %arg5: memref<1x64xf32, #tpu.memory_space<vmem>>, %arg6: memref<9x64x128xbf16, #tpu.memory_space<vmem>>, %arg7: memref<1x128xf32, #tpu.memory_space<vmem>>, %arg8: memref<512x512xbf16, #tpu.memory_space<vmem>>, %arg9: memref<1x512xf32, #tpu.memory_space<vmem>>, %arg10: memref<512x10xf32, #tpu.memory_space<vmem>>, %arg11: memref<1x10xf32, #tpu.memory_space<vmem>>, %arg12: memref<1x2x10xf32, #tpu.memory_space<vmem>>, %arg13: memref<610x32xf32, #tpu.memory_space<vmem>>, %arg14: memref<178x64xf32, #tpu.memory_space<vmem>>, %arg15: memref<58x128xf32, #tpu.memory_space<vmem>>, %arg16: memref<200x32xf32, #tpu.memory_space<vmem>>, %arg17: memref<72x64xf32, #tpu.memory_space<vmem>>) attributes {dimension_semantics = [#tpu.dimension_semantics<parallel>], iteration_bounds = array<i64: 1>, scalar_prefetch = 0 : i64, scratch_operands = 5 : i64, tpu.core_type = #tpu.core_type<tc>, window_params = [{transform_indices = @transform_0, window_bounds = array<i64: 1, 648, 4>}, {pipeline_mode = #tpu.pipeline_mode<synchronous>, transform_indices = @transform_1, window_bounds = array<i64: 9, 4, 32>}, {pipeline_mode = #tpu.pipeline_mode<synchronous>, transform_indices = @transform_2, window_bounds = array<i64: 1, 32>}, {pipeline_mode = #tpu.pipeline_mode<synchronous>, transform_indices = @transform_3, window_bounds = array<i64: 9, 32, 64>}, {pipeline_mode = #tpu.pipeline_mode<synchronous>, transform_indices = @transform_4, window_bounds = array<i64: 1, 64>}, {pipeline_mode = #tpu.pipeline_mode<synchronous>, transform_indices = @transform_5, window_bounds = array<i64: 9, 64, 128>}, {pipeline_mode = #tpu.pipeline_mode<synchronous>, transform_indices = @transform_6, window_bounds = array<i64: 1, 128>}, {pipeline_mode = #tpu.pipeline_mode<synchronous>, transform_indices = @transform_7, window_bounds = array<i64: 512, 512>}, {pipeline_mode = #tpu.pipeline_mode<synchronous>, transform_indices = @transform_8, window_bounds = array<i64: 1, 512>}, {pipeline_mode = #tpu.pipeline_mode<synchronous>, transform_indices = @transform_9, window_bounds = array<i64: 512, 10>}, {pipeline_mode = #tpu.pipeline_mode<synchronous>, transform_indices = @transform_10, window_bounds = array<i64: 1, 10>}, {transform_indices = @transform_11, window_bounds = array<i64: 1, 2, 10>}]} {
    %c0 = arith.constant 0 : index
    %c0_0 = arith.constant 0 : index
    %c0_1 = arith.constant 0 : index
    %0 = vector.load %arg1[%c0, %c0_0, %c0_1] : memref<1x648x4xbf16, #tpu.memory_space<vmem>>, vector<1x610x4xbf16>
    %1 = vector.shape_cast %0 : vector<1x610x4xbf16> to vector<610x4xbf16>
    %c0_2 = arith.constant 0 : index
    %c0_3 = arith.constant 0 : index
    %c0_4 = arith.constant 0 : index
    %2 = vector.load %arg2[%c0_2, %c0_3, %c0_4] : memref<9x4x32xbf16, #tpu.memory_space<vmem>>, vector<1x4x32xbf16>
    %3 = vector.shape_cast %2 : vector<1x4x32xbf16> to vector<4x32xbf16>
    %cst = arith.constant dense<0.000000e+00> : vector<610x32xf32>
    %4 = tpu.matmul %1, %3, %cst {dimension_numbers = #tpu.dot_dimension_numbers<[1], [0], [0], [1], [0, 0, 1, 1], [], []>} : vector<610x4xbf16>, vector<4x32xbf16>, vector<610x32xf32> -> vector<610x32xf32>
    %c0_5 = arith.constant 0 : index
    %c1 = arith.constant 1 : index
    %c0_6 = arith.constant 0 : index
    %5 = vector.load %arg1[%c0_5, %c1, %c0_6] : memref<1x648x4xbf16, #tpu.memory_space<vmem>>, vector<1x610x4xbf16>
    %6 = vector.shape_cast %5 : vector<1x610x4xbf16> to vector<610x4xbf16>
    %c1_7 = arith.constant 1 : index
    %c0_8 = arith.constant 0 : index
    %c0_9 = arith.constant 0 : index
    %7 = vector.load %arg2[%c1_7, %c0_8, %c0_9] : memref<9x4x32xbf16, #tpu.memory_space<vmem>>, vector<1x4x32xbf16>
    %8 = vector.shape_cast %7 : vector<1x4x32xbf16> to vector<4x32xbf16>
    %cst_10 = arith.constant dense<0.000000e+00> : vector<610x32xf32>
    %9 = tpu.matmul %6, %8, %cst_10 {dimension_numbers = #tpu.dot_dimension_numbers<[1], [0], [0], [1], [0, 0, 1, 1], [], []>} : vector<610x4xbf16>, vector<4x32xbf16>, vector<610x32xf32> -> vector<610x32xf32>
    %10 = arith.addf %4, %9 : vector<610x32xf32>
    %c0_11 = arith.constant 0 : index
    %c2 = arith.constant 2 : index
    %c0_12 = arith.constant 0 : index
    %11 = vector.load %arg1[%c0_11, %c2, %c0_12] : memref<1x648x4xbf16, #tpu.memory_space<vmem>>, vector<1x610x4xbf16>
    %12 = vector.shape_cast %11 : vector<1x610x4xbf16> to vector<610x4xbf16>
    %c2_13 = arith.constant 2 : index
    %c0_14 = arith.constant 0 : index
    %c0_15 = arith.constant 0 : index
    %13 = vector.load %arg2[%c2_13, %c0_14, %c0_15] : memref<9x4x32xbf16, #tpu.memory_space<vmem>>, vector<1x4x32xbf16>
    %14 = vector.shape_cast %13 : vector<1x4x32xbf16> to vector<4x32xbf16>
    %cst_16 = arith.constant dense<0.000000e+00> : vector<610x32xf32>
    %15 = tpu.matmul %12, %14, %cst_16 {dimension_numbers = #tpu.dot_dimension_numbers<[1], [0], [0], [1], [0, 0, 1, 1], [], []>} : vector<610x4xbf16>, vector<4x32xbf16>, vector<610x32xf32> -> vector<610x32xf32>
    %16 = arith.addf %10, %15 : vector<610x32xf32>
    %c0_17 = arith.constant 0 : index
    %c18 = arith.constant 18 : index
    %c0_18 = arith.constant 0 : index
    %17 = vector.load %arg1[%c0_17, %c18, %c0_18] : memref<1x648x4xbf16, #tpu.memory_space<vmem>>, vector<1x610x4xbf16>
    %18 = vector.shape_cast %17 : vector<1x610x4xbf16> to vector<610x4xbf16>
    %c3 = arith.constant 3 : index
    %c0_19 = arith.constant 0 : index
    %c0_20 = arith.constant 0 : index
    %19 = vector.load %arg2[%c3, %c0_19, %c0_20] : memref<9x4x32xbf16, #tpu.memory_space<vmem>>, vector<1x4x32xbf16>
    %20 = vector.shape_cast %19 : vector<1x4x32xbf16> to vector<4x32xbf16>
    %cst_21 = arith.constant dense<0.000000e+00> : vector<610x32xf32>
    %21 = tpu.matmul %18, %20, %cst_21 {dimension_numbers = #tpu.dot_dimension_numbers<[1], [0], [0], [1], [0, 0, 1, 1], [], []>} : vector<610x4xbf16>, vector<4x32xbf16>, vector<610x32xf32> -> vector<610x32xf32>
    %22 = arith.addf %16, %21 : vector<610x32xf32>
    %c0_22 = arith.constant 0 : index
    %c19 = arith.constant 19 : index
    %c0_23 = arith.constant 0 : index
    %23 = vector.load %arg1[%c0_22, %c19, %c0_23] : memref<1x648x4xbf16, #tpu.memory_space<vmem>>, vector<1x610x4xbf16>
    %24 = vector.shape_cast %23 : vector<1x610x4xbf16> to vector<610x4xbf16>
    %c4 = arith.constant 4 : index
    %c0_24 = arith.constant 0 : index
    %c0_25 = arith.constant 0 : index
    %25 = vector.load %arg2[%c4, %c0_24, %c0_25] : memref<9x4x32xbf16, #tpu.memory_space<vmem>>, vector<1x4x32xbf16>
    %26 = vector.shape_cast %25 : vector<1x4x32xbf16> to vector<4x32xbf16>
    %cst_26 = arith.constant dense<0.000000e+00> : vector<610x32xf32>
    %27 = tpu.matmul %24, %26, %cst_26 {dimension_numbers = #tpu.dot_dimension_numbers<[1], [0], [0], [1], [0, 0, 1, 1], [], []>} : vector<610x4xbf16>, vector<4x32xbf16>, vector<610x32xf32> -> vector<610x32xf32>
    %28 = arith.addf %22, %27 : vector<610x32xf32>
    %c0_27 = arith.constant 0 : index
    %c20 = arith.constant 20 : index
    %c0_28 = arith.constant 0 : index
    %29 = vector.load %arg1[%c0_27, %c20, %c0_28] : memref<1x648x4xbf16, #tpu.memory_space<vmem>>, vector<1x610x4xbf16>
    %30 = vector.shape_cast %29 : vector<1x610x4xbf16> to vector<610x4xbf16>
    %c5 = arith.constant 5 : index
    %c0_29 = arith.constant 0 : index
    %c0_30 = arith.constant 0 : index
    %31 = vector.load %arg2[%c5, %c0_29, %c0_30] : memref<9x4x32xbf16, #tpu.memory_space<vmem>>, vector<1x4x32xbf16>
    %32 = vector.shape_cast %31 : vector<1x4x32xbf16> to vector<4x32xbf16>
    %cst_31 = arith.constant dense<0.000000e+00> : vector<610x32xf32>
    %33 = tpu.matmul %30, %32, %cst_31 {dimension_numbers = #tpu.dot_dimension_numbers<[1], [0], [0], [1], [0, 0, 1, 1], [], []>} : vector<610x4xbf16>, vector<4x32xbf16>, vector<610x32xf32> -> vector<610x32xf32>
    %34 = arith.addf %28, %33 : vector<610x32xf32>
    %c0_32 = arith.constant 0 : index
    %c36 = arith.constant 36 : index
    %c0_33 = arith.constant 0 : index
    %35 = vector.load %arg1[%c0_32, %c36, %c0_33] : memref<1x648x4xbf16, #tpu.memory_space<vmem>>, vector<1x610x4xbf16>
    %36 = vector.shape_cast %35 : vector<1x610x4xbf16> to vector<610x4xbf16>
    %c6 = arith.constant 6 : index
    %c0_34 = arith.constant 0 : index
    %c0_35 = arith.constant 0 : index
    %37 = vector.load %arg2[%c6, %c0_34, %c0_35] : memref<9x4x32xbf16, #tpu.memory_space<vmem>>, vector<1x4x32xbf16>
    %38 = vector.shape_cast %37 : vector<1x4x32xbf16> to vector<4x32xbf16>
    %cst_36 = arith.constant dense<0.000000e+00> : vector<610x32xf32>
    %39 = tpu.matmul %36, %38, %cst_36 {dimension_numbers = #tpu.dot_dimension_numbers<[1], [0], [0], [1], [0, 0, 1, 1], [], []>} : vector<610x4xbf16>, vector<4x32xbf16>, vector<610x32xf32> -> vector<610x32xf32>
    %40 = arith.addf %34, %39 : vector<610x32xf32>
    %c0_37 = arith.constant 0 : index
    %c37 = arith.constant 37 : index
    %c0_38 = arith.constant 0 : index
    %41 = vector.load %arg1[%c0_37, %c37, %c0_38] : memref<1x648x4xbf16, #tpu.memory_space<vmem>>, vector<1x610x4xbf16>
    %42 = vector.shape_cast %41 : vector<1x610x4xbf16> to vector<610x4xbf16>
    %c7 = arith.constant 7 : index
    %c0_39 = arith.constant 0 : index
    %c0_40 = arith.constant 0 : index
    %43 = vector.load %arg2[%c7, %c0_39, %c0_40] : memref<9x4x32xbf16, #tpu.memory_space<vmem>>, vector<1x4x32xbf16>
    %44 = vector.shape_cast %43 : vector<1x4x32xbf16> to vector<4x32xbf16>
    %cst_41 = arith.constant dense<0.000000e+00> : vector<610x32xf32>
    %45 = tpu.matmul %42, %44, %cst_41 {dimension_numbers = #tpu.dot_dimension_numbers<[1], [0], [0], [1], [0, 0, 1, 1], [], []>} : vector<610x4xbf16>, vector<4x32xbf16>, vector<610x32xf32> -> vector<610x32xf32>
    %46 = arith.addf %40, %45 : vector<610x32xf32>
    %c0_42 = arith.constant 0 : index
    %c38 = arith.constant 38 : index
    %c0_43 = arith.constant 0 : index
    %47 = vector.load %arg1[%c0_42, %c38, %c0_43] : memref<1x648x4xbf16, #tpu.memory_space<vmem>>, vector<1x610x4xbf16>
    %48 = vector.shape_cast %47 : vector<1x610x4xbf16> to vector<610x4xbf16>
    %c8 = arith.constant 8 : index
    %c0_44 = arith.constant 0 : index
    %c0_45 = arith.constant 0 : index
    %49 = vector.load %arg2[%c8, %c0_44, %c0_45] : memref<9x4x32xbf16, #tpu.memory_space<vmem>>, vector<1x4x32xbf16>
    %50 = vector.shape_cast %49 : vector<1x4x32xbf16> to vector<4x32xbf16>
    %cst_46 = arith.constant dense<0.000000e+00> : vector<610x32xf32>
    %51 = tpu.matmul %48, %50, %cst_46 {dimension_numbers = #tpu.dot_dimension_numbers<[1], [0], [0], [1], [0, 0, 1, 1], [], []>} : vector<610x4xbf16>, vector<4x32xbf16>, vector<610x32xf32> -> vector<610x32xf32>
    %52 = arith.addf %46, %51 : vector<610x32xf32>
    %c0_47 = arith.constant 0 : index
    %c0_48 = arith.constant 0 : index
    %53 = vector.load %arg3[%c0_47, %c0_48] : memref<1x32xf32, #tpu.memory_space<vmem>>, vector<1x32xf32>
    %54 = vector.broadcast %53 : vector<1x32xf32> to vector<610x32xf32>
    %55 = arith.addf %52, %54 : vector<610x32xf32>
    %cst_49 = arith.constant 0.000000e+00 : f32
    %56 = vector.broadcast %cst_49 : f32 to vector<610x32xf32>
    %57 = arith.maximumf %55, %56 : vector<610x32xf32>
    %c0_50 = arith.constant 0 : index
    %c0_51 = arith.constant 0 : index
    %58 = vector.load %arg13[%c0_50, %c0_51] : memref<610x32xf32, #tpu.memory_space<vmem>>, vector<610x32xf32>
    tpu.vector_store %arg13[%c0_50, %c0_51], %57 {strides = array<i32>} : memref<610x32xf32, #tpu.memory_space<vmem>>, vector<610x32xf32>,
    %c0_52 = arith.constant 0 : index
    %c0_53 = arith.constant 0 : index
    %59 = tpu.strided_load %arg13[%c0_52, %c0_53] {strides = array<i32: 2, 1>} : memref<610x32xf32, #tpu.memory_space<vmem>>, vector<305x32xf32>
    %c1_54 = arith.constant 1 : index
    %c0_55 = arith.constant 0 : index
    %60 = tpu.strided_load %arg13[%c1_54, %c0_55] {strides = array<i32: 2, 1>} : memref<610x32xf32, #tpu.memory_space<vmem>>, vector<305x32xf32>
    %61 = arith.maximumf %59, %60 : vector<305x32xf32>
    %62 = vector.extract_strided_slice %61 {offsets = [0, 0], sizes = [296, 32], strides = [1, 1]} : vector<305x32xf32> to vector<296x32xf32>
    %63 = vector.extract_strided_slice %61 {offsets = [9, 0], sizes = [296, 32], strides = [1, 1]} : vector<305x32xf32> to vector<296x32xf32>
    %64 = arith.maximumf %62, %63 : vector<296x32xf32>
    %cst_56 = arith.constant 0.000000e+00 : f32
    %65 = vector.broadcast %cst_56 : f32 to vector<11x32xf32>
    %cst_57 = arith.constant 0.000000e+00 : f32
    %66 = vector.broadcast %cst_57 : f32 to vector<2x32xf32>
    %67 = vector.extract_strided_slice %64 {offsets = [0, 0], sizes = [8, 32], strides = [1, 1]} : vector<296x32xf32> to vector<8x32xf32>
    %68 = vector.extract_strided_slice %64 {offsets = [18, 0], sizes = [8, 32], strides = [1, 1]} : vector<296x32xf32> to vector<8x32xf32>
    %69 = vector.extract_strided_slice %64 {offsets = [36, 0], sizes = [8, 32], strides = [1, 1]} : vector<296x32xf32> to vector<8x32xf32>
    %70 = vector.extract_strided_slice %64 {offsets = [54, 0], sizes = [8, 32], strides = [1, 1]} : vector<296x32xf32> to vector<8x32xf32>
    %71 = vector.extract_strided_slice %64 {offsets = [72, 0], sizes = [8, 32], strides = [1, 1]} : vector<296x32xf32> to vector<8x32xf32>
    %72 = vector.extract_strided_slice %64 {offsets = [90, 0], sizes = [8, 32], strides = [1, 1]} : vector<296x32xf32> to vector<8x32xf32>
    %73 = vector.extract_strided_slice %64 {offsets = [108, 0], sizes = [8, 32], strides = [1, 1]} : vector<296x32xf32> to vector<8x32xf32>
    %74 = vector.extract_strided_slice %64 {offsets = [126, 0], sizes = [8, 32], strides = [1, 1]} : vector<296x32xf32> to vector<8x32xf32>
    %75 = tpu.concatenate %65, %67, %66, %68, %66, %69, %66, %70, %66, %71, %66, %72, %66, %73, %66, %74 in 0 : vector<11x32xf32>, vector<8x32xf32>, vector<2x32xf32>, vector<8x32xf32>, vector<2x32xf32>, vector<8x32xf32>, vector<2x32xf32>, vector<8x32xf32>, vector<2x32xf32>, vector<8x32xf32>, vector<2x32xf32>, vector<8x32xf32>, vector<2x32xf32>, vector<8x32xf32>, vector<2x32xf32>, vector<8x32xf32> -> vector<89x32xf32>
    %76 = tpu.concatenate %75, %65 in 0 : vector<89x32xf32>, vector<11x32xf32> -> vector<100x32xf32>
    %c0_58 = arith.constant 0 : index
    %c0_59 = arith.constant 0 : index
    %77 = vector.load %arg16[%c0_58, %c0_59] : memref<200x32xf32, #tpu.memory_space<vmem>>, vector<100x32xf32>
    tpu.vector_store %arg16[%c0_58, %c0_59], %76 {strides = array<i32>} : memref<200x32xf32, #tpu.memory_space<vmem>>, vector<100x32xf32>,
    %78 = vector.extract_strided_slice %64 {offsets = [162, 0], sizes = [8, 32], strides = [1, 1]} : vector<296x32xf32> to vector<8x32xf32>
    %79 = vector.extract_strided_slice %64 {offsets = [180, 0], sizes = [8, 32], strides = [1, 1]} : vector<296x32xf32> to vector<8x32xf32>
    %80 = vector.extract_strided_slice %64 {offsets = [198, 0], sizes = [8, 32], strides = [1, 1]} : vector<296x32xf32> to vector<8x32xf32>
    %81 = vector.extract_strided_slice %64 {offsets = [216, 0], sizes = [8, 32], strides = [1, 1]} : vector<296x32xf32> to vector<8x32xf32>
    %82 = vector.extract_strided_slice %64 {offsets = [234, 0], sizes = [8, 32], strides = [1, 1]} : vector<296x32xf32> to vector<8x32xf32>
    %83 = vector.extract_strided_slice %64 {offsets = [252, 0], sizes = [8, 32], strides = [1, 1]} : vector<296x32xf32> to vector<8x32xf32>
    %84 = vector.extract_strided_slice %64 {offsets = [270, 0], sizes = [8, 32], strides = [1, 1]} : vector<296x32xf32> to vector<8x32xf32>
    %85 = vector.extract_strided_slice %64 {offsets = [288, 0], sizes = [8, 32], strides = [1, 1]} : vector<296x32xf32> to vector<8x32xf32>
    %86 = tpu.concatenate %65, %78, %66, %79, %66, %80, %66, %81, %66, %82, %66, %83, %66, %84, %66, %85 in 0 : vector<11x32xf32>, vector<8x32xf32>, vector<2x32xf32>, vector<8x32xf32>, vector<2x32xf32>, vector<8x32xf32>, vector<2x32xf32>, vector<8x32xf32>, vector<2x32xf32>, vector<8x32xf32>, vector<2x32xf32>, vector<8x32xf32>, vector<2x32xf32>, vector<8x32xf32>, vector<2x32xf32>, vector<8x32xf32> -> vector<89x32xf32>
    %87 = tpu.concatenate %86, %65 in 0 : vector<89x32xf32>, vector<11x32xf32> -> vector<100x32xf32>
    %c100 = arith.constant 100 : index
    %c0_60 = arith.constant 0 : index
    %88 = vector.load %arg16[%c100, %c0_60] : memref<200x32xf32, #tpu.memory_space<vmem>>, vector<100x32xf32>
    tpu.vector_store %arg16[%c100, %c0_60], %87 {strides = array<i32>} : memref<200x32xf32, #tpu.memory_space<vmem>>, vector<100x32xf32>,
    %c0_61 = arith.constant 0 : index
    %c0_62 = arith.constant 0 : index
    %89 = vector.load %arg16[%c0_61, %c0_62] : memref<200x32xf32, #tpu.memory_space<vmem>>, vector<178x32xf32>
    %90 = arith.truncf %89 : vector<178x32xf32> to vector<178x32xbf16>
    %c0_63 = arith.constant 0 : index
    %c0_64 = arith.constant 0 : index
    %c0_65 = arith.constant 0 : index
    %91 = vector.load %arg4[%c0_63, %c0_64, %c0_65] : memref<9x32x64xbf16, #tpu.memory_space<vmem>>, vector<1x32x64xbf16>
    %92 = vector.shape_cast %91 : vector<1x32x64xbf16> to vector<32x64xbf16>
    %cst_66 = arith.constant dense<0.000000e+00> : vector<178x64xf32>
    %93 = tpu.matmul %90, %92, %cst_66 {dimension_numbers = #tpu.dot_dimension_numbers<[1], [0], [0], [1], [0, 0, 1, 1], [], []>} : vector<178x32xbf16>, vector<32x64xbf16>, vector<178x64xf32> -> vector<178x64xf32>
    %c1_67 = arith.constant 1 : index
    %c0_68 = arith.constant 0 : index
    %94 = vector.load %arg16[%c1_67, %c0_68] : memref<200x32xf32, #tpu.memory_space<vmem>>, vector<178x32xf32>
    %95 = arith.truncf %94 : vector<178x32xf32> to vector<178x32xbf16>
    %c1_69 = arith.constant 1 : index
    %c0_70 = arith.constant 0 : index
    %c0_71 = arith.constant 0 : index
    %96 = vector.load %arg4[%c1_69, %c0_70, %c0_71] : memref<9x32x64xbf16, #tpu.memory_space<vmem>>, vector<1x32x64xbf16>
    %97 = vector.shape_cast %96 : vector<1x32x64xbf16> to vector<32x64xbf16>
    %cst_72 = arith.constant dense<0.000000e+00> : vector<178x64xf32>
    %98 = tpu.matmul %95, %97, %cst_72 {dimension_numbers = #tpu.dot_dimension_numbers<[1], [0], [0], [1], [0, 0, 1, 1], [], []>} : vector<178x32xbf16>, vector<32x64xbf16>, vector<178x64xf32> -> vector<178x64xf32>
    %99 = arith.addf %93, %98 : vector<178x64xf32>
    %c2_73 = arith.constant 2 : index
    %c0_74 = arith.constant 0 : index
    %100 = vector.load %arg16[%c2_73, %c0_74] : memref<200x32xf32, #tpu.memory_space<vmem>>, vector<178x32xf32>
    %101 = arith.truncf %100 : vector<178x32xf32> to vector<178x32xbf16>
    %c2_75 = arith.constant 2 : index
    %c0_76 = arith.constant 0 : index
    %c0_77 = arith.constant 0 : index
    %102 = vector.load %arg4[%c2_75, %c0_76, %c0_77] : memref<9x32x64xbf16, #tpu.memory_space<vmem>>, vector<1x32x64xbf16>
    %103 = vector.shape_cast %102 : vector<1x32x64xbf16> to vector<32x64xbf16>
    %cst_78 = arith.constant dense<0.000000e+00> : vector<178x64xf32>
    %104 = tpu.matmul %101, %103, %cst_78 {dimension_numbers = #tpu.dot_dimension_numbers<[1], [0], [0], [1], [0, 0, 1, 1], [], []>} : vector<178x32xbf16>, vector<32x64xbf16>, vector<178x64xf32> -> vector<178x64xf32>
    %105 = arith.addf %99, %104 : vector<178x64xf32>
    %c10 = arith.constant 10 : index
    %c0_79 = arith.constant 0 : index
    %106 = vector.load %arg16[%c10, %c0_79] : memref<200x32xf32, #tpu.memory_space<vmem>>, vector<178x32xf32>
    %107 = arith.truncf %106 : vector<178x32xf32> to vector<178x32xbf16>
    %c3_80 = arith.constant 3 : index
    %c0_81 = arith.constant 0 : index
    %c0_82 = arith.constant 0 : index
    %108 = vector.load %arg4[%c3_80, %c0_81, %c0_82] : memref<9x32x64xbf16, #tpu.memory_space<vmem>>, vector<1x32x64xbf16>
    %109 = vector.shape_cast %108 : vector<1x32x64xbf16> to vector<32x64xbf16>
    %cst_83 = arith.constant dense<0.000000e+00> : vector<178x64xf32>
    %110 = tpu.matmul %107, %109, %cst_83 {dimension_numbers = #tpu.dot_dimension_numbers<[1], [0], [0], [1], [0, 0, 1, 1], [], []>} : vector<178x32xbf16>, vector<32x64xbf16>, vector<178x64xf32> -> vector<178x64xf32>
    %111 = arith.addf %105, %110 : vector<178x64xf32>
    %c11 = arith.constant 11 : index
    %c0_84 = arith.constant 0 : index
    %112 = vector.load %arg16[%c11, %c0_84] : memref<200x32xf32, #tpu.memory_space<vmem>>, vector<178x32xf32>
    %113 = arith.truncf %112 : vector<178x32xf32> to vector<178x32xbf16>
    %c4_85 = arith.constant 4 : index
    %c0_86 = arith.constant 0 : index
    %c0_87 = arith.constant 0 : index
    %114 = vector.load %arg4[%c4_85, %c0_86, %c0_87] : memref<9x32x64xbf16, #tpu.memory_space<vmem>>, vector<1x32x64xbf16>
    %115 = vector.shape_cast %114 : vector<1x32x64xbf16> to vector<32x64xbf16>
    %cst_88 = arith.constant dense<0.000000e+00> : vector<178x64xf32>
    %116 = tpu.matmul %113, %115, %cst_88 {dimension_numbers = #tpu.dot_dimension_numbers<[1], [0], [0], [1], [0, 0, 1, 1], [], []>} : vector<178x32xbf16>, vector<32x64xbf16>, vector<178x64xf32> -> vector<178x64xf32>
    %117 = arith.addf %111, %116 : vector<178x64xf32>
    %c12 = arith.constant 12 : index
    %c0_89 = arith.constant 0 : index
    %118 = vector.load %arg16[%c12, %c0_89] : memref<200x32xf32, #tpu.memory_space<vmem>>, vector<178x32xf32>
    %119 = arith.truncf %118 : vector<178x32xf32> to vector<178x32xbf16>
    %c5_90 = arith.constant 5 : index
    %c0_91 = arith.constant 0 : index
    %c0_92 = arith.constant 0 : index
    %120 = vector.load %arg4[%c5_90, %c0_91, %c0_92] : memref<9x32x64xbf16, #tpu.memory_space<vmem>>, vector<1x32x64xbf16>
    %121 = vector.shape_cast %120 : vector<1x32x64xbf16> to vector<32x64xbf16>
    %cst_93 = arith.constant dense<0.000000e+00> : vector<178x64xf32>
    %122 = tpu.matmul %119, %121, %cst_93 {dimension_numbers = #tpu.dot_dimension_numbers<[1], [0], [0], [1], [0, 0, 1, 1], [], []>} : vector<178x32xbf16>, vector<32x64xbf16>, vector<178x64xf32> -> vector<178x64xf32>
    %123 = arith.addf %117, %122 : vector<178x64xf32>
    %c20_94 = arith.constant 20 : index
    %c0_95 = arith.constant 0 : index
    %124 = vector.load %arg16[%c20_94, %c0_95] : memref<200x32xf32, #tpu.memory_space<vmem>>, vector<178x32xf32>
    %125 = arith.truncf %124 : vector<178x32xf32> to vector<178x32xbf16>
    %c6_96 = arith.constant 6 : index
    %c0_97 = arith.constant 0 : index
    %c0_98 = arith.constant 0 : index
    %126 = vector.load %arg4[%c6_96, %c0_97, %c0_98] : memref<9x32x64xbf16, #tpu.memory_space<vmem>>, vector<1x32x64xbf16>
    %127 = vector.shape_cast %126 : vector<1x32x64xbf16> to vector<32x64xbf16>
    %cst_99 = arith.constant dense<0.000000e+00> : vector<178x64xf32>
    %128 = tpu.matmul %125, %127, %cst_99 {dimension_numbers = #tpu.dot_dimension_numbers<[1], [0], [0], [1], [0, 0, 1, 1], [], []>} : vector<178x32xbf16>, vector<32x64xbf16>, vector<178x64xf32> -> vector<178x64xf32>
    %129 = arith.addf %123, %128 : vector<178x64xf32>
    %c21 = arith.constant 21 : index
    %c0_100 = arith.constant 0 : index
    %130 = vector.load %arg16[%c21, %c0_100] : memref<200x32xf32, #tpu.memory_space<vmem>>, vector<178x32xf32>
    %131 = arith.truncf %130 : vector<178x32xf32> to vector<178x32xbf16>
    %c7_101 = arith.constant 7 : index
    %c0_102 = arith.constant 0 : index
    %c0_103 = arith.constant 0 : index
    %132 = vector.load %arg4[%c7_101, %c0_102, %c0_103] : memref<9x32x64xbf16, #tpu.memory_space<vmem>>, vector<1x32x64xbf16>
    %133 = vector.shape_cast %132 : vector<1x32x64xbf16> to vector<32x64xbf16>
    %cst_104 = arith.constant dense<0.000000e+00> : vector<178x64xf32>
    %134 = tpu.matmul %131, %133, %cst_104 {dimension_numbers = #tpu.dot_dimension_numbers<[1], [0], [0], [1], [0, 0, 1, 1], [], []>} : vector<178x32xbf16>, vector<32x64xbf16>, vector<178x64xf32> -> vector<178x64xf32>
    %135 = arith.addf %129, %134 : vector<178x64xf32>
    %c22 = arith.constant 22 : index
    %c0_105 = arith.constant 0 : index
    %136 = vector.load %arg16[%c22, %c0_105] : memref<200x32xf32, #tpu.memory_space<vmem>>, vector<178x32xf32>
    %137 = arith.truncf %136 : vector<178x32xf32> to vector<178x32xbf16>
    %c8_106 = arith.constant 8 : index
    %c0_107 = arith.constant 0 : index
    %c0_108 = arith.constant 0 : index
    %138 = vector.load %arg4[%c8_106, %c0_107, %c0_108] : memref<9x32x64xbf16, #tpu.memory_space<vmem>>, vector<1x32x64xbf16>
    %139 = vector.shape_cast %138 : vector<1x32x64xbf16> to vector<32x64xbf16>
    %cst_109 = arith.constant dense<0.000000e+00> : vector<178x64xf32>
    %140 = tpu.matmul %137, %139, %cst_109 {dimension_numbers = #tpu.dot_dimension_numbers<[1], [0], [0], [1], [0, 0, 1, 1], [], []>} : vector<178x32xbf16>, vector<32x64xbf16>, vector<178x64xf32> -> vector<178x64xf32>
    %141 = arith.addf %135, %140 : vector<178x64xf32>
    %c0_110 = arith.constant 0 : index
    %c0_111 = arith.constant 0 : index
    %142 = vector.load %arg5[%c0_110, %c0_111] : memref<1x64xf32, #tpu.memory_space<vmem>>, vector<1x64xf32>
    %143 = vector.broadcast %142 : vector<1x64xf32> to vector<178x64xf32>
    %144 = arith.addf %141, %143 : vector<178x64xf32>
    %cst_112 = arith.constant 0.000000e+00 : f32
    %145 = vector.broadcast %cst_112 : f32 to vector<178x64xf32>
    %146 = arith.maximumf %144, %145 : vector<178x64xf32>
    %c0_113 = arith.constant 0 : index
    %c0_114 = arith.constant 0 : index
    %147 = vector.load %arg14[%c0_113, %c0_114] : memref<178x64xf32, #tpu.memory_space<vmem>>, vector<178x64xf32>
    tpu.vector_store %arg14[%c0_113, %c0_114], %146 {strides = array<i32>} : memref<178x64xf32, #tpu.memory_space<vmem>>, vector<178x64xf32>,
    %c0_115 = arith.constant 0 : index
    %c0_116 = arith.constant 0 : index
    %148 = tpu.strided_load %arg14[%c0_115, %c0_116] {strides = array<i32: 2, 1>} : memref<178x64xf32, #tpu.memory_space<vmem>>, vector<89x64xf32>
    %c1_117 = arith.constant 1 : index
    %c0_118 = arith.constant 0 : index
    %149 = tpu.strided_load %arg14[%c1_117, %c0_118] {strides = array<i32: 2, 1>} : memref<178x64xf32, #tpu.memory_space<vmem>>, vector<89x64xf32>
    %150 = arith.maximumf %148, %149 : vector<89x64xf32>
    %151 = vector.extract_strided_slice %150 {offsets = [0, 0], sizes = [84, 64], strides = [1, 1]} : vector<89x64xf32> to vector<84x64xf32>
    %152 = vector.extract_strided_slice %150 {offsets = [5, 0], sizes = [84, 64], strides = [1, 1]} : vector<89x64xf32> to vector<84x64xf32>
    %153 = arith.maximumf %151, %152 : vector<84x64xf32>
    %cst_119 = arith.constant 0.000000e+00 : f32
    %154 = vector.broadcast %cst_119 : f32 to vector<7x64xf32>
    %cst_120 = arith.constant 0.000000e+00 : f32
    %155 = vector.broadcast %cst_120 : f32 to vector<2x64xf32>
    %156 = vector.extract_strided_slice %153 {offsets = [0, 0], sizes = [4, 64], strides = [1, 1]} : vector<84x64xf32> to vector<4x64xf32>
    %157 = vector.extract_strided_slice %153 {offsets = [10, 0], sizes = [4, 64], strides = [1, 1]} : vector<84x64xf32> to vector<4x64xf32>
    %158 = vector.extract_strided_slice %153 {offsets = [20, 0], sizes = [4, 64], strides = [1, 1]} : vector<84x64xf32> to vector<4x64xf32>
    %159 = vector.extract_strided_slice %153 {offsets = [30, 0], sizes = [4, 64], strides = [1, 1]} : vector<84x64xf32> to vector<4x64xf32>
    %160 = tpu.concatenate %154, %156, %155, %157, %155, %158, %155, %159, %154 in 0 : vector<7x64xf32>, vector<4x64xf32>, vector<2x64xf32>, vector<4x64xf32>, vector<2x64xf32>, vector<4x64xf32>, vector<2x64xf32>, vector<4x64xf32>, vector<7x64xf32> -> vector<36x64xf32>
    %c0_121 = arith.constant 0 : index
    %c0_122 = arith.constant 0 : index
    %161 = vector.load %arg17[%c0_121, %c0_122] : memref<72x64xf32, #tpu.memory_space<vmem>>, vector<36x64xf32>
    tpu.vector_store %arg17[%c0_121, %c0_122], %160 {strides = array<i32>} : memref<72x64xf32, #tpu.memory_space<vmem>>, vector<36x64xf32>,
    %162 = vector.extract_strided_slice %153 {offsets = [50, 0], sizes = [4, 64], strides = [1, 1]} : vector<84x64xf32> to vector<4x64xf32>
    %163 = vector.extract_strided_slice %153 {offsets = [60, 0], sizes = [4, 64], strides = [1, 1]} : vector<84x64xf32> to vector<4x64xf32>
    %164 = vector.extract_strided_slice %153 {offsets = [70, 0], sizes = [4, 64], strides = [1, 1]} : vector<84x64xf32> to vector<4x64xf32>
    %165 = vector.extract_strided_slice %153 {offsets = [80, 0], sizes = [4, 64], strides = [1, 1]} : vector<84x64xf32> to vector<4x64xf32>
    %166 = tpu.concatenate %154, %162, %155, %163, %155, %164, %155, %165, %154 in 0 : vector<7x64xf32>, vector<4x64xf32>, vector<2x64xf32>, vector<4x64xf32>, vector<2x64xf32>, vector<4x64xf32>, vector<2x64xf32>, vector<4x64xf32>, vector<7x64xf32> -> vector<36x64xf32>
    %c36_123 = arith.constant 36 : index
    %c0_124 = arith.constant 0 : index
    %167 = vector.load %arg17[%c36_123, %c0_124] : memref<72x64xf32, #tpu.memory_space<vmem>>, vector<36x64xf32>
    tpu.vector_store %arg17[%c36_123, %c0_124], %166 {strides = array<i32>} : memref<72x64xf32, #tpu.memory_space<vmem>>, vector<36x64xf32>,
    %c0_125 = arith.constant 0 : index
    %c0_126 = arith.constant 0 : index
    %168 = vector.load %arg17[%c0_125, %c0_126] : memref<72x64xf32, #tpu.memory_space<vmem>>, vector<58x64xf32>
    %169 = arith.truncf %168 : vector<58x64xf32> to vector<58x64xbf16>
    %c0_127 = arith.constant 0 : index
    %c0_128 = arith.constant 0 : index
    %c0_129 = arith.constant 0 : index
    %170 = vector.load %arg6[%c0_127, %c0_128, %c0_129] : memref<9x64x128xbf16, #tpu.memory_space<vmem>>, vector<1x64x128xbf16>
    %171 = vector.shape_cast %170 : vector<1x64x128xbf16> to vector<64x128xbf16>
    %cst_130 = arith.constant dense<0.000000e+00> : vector<58x128xf32>
    %172 = tpu.matmul %169, %171, %cst_130 {dimension_numbers = #tpu.dot_dimension_numbers<[1], [0], [0], [1], [0, 0, 1, 1], [], []>} : vector<58x64xbf16>, vector<64x128xbf16>, vector<58x128xf32> -> vector<58x128xf32>
    %c1_131 = arith.constant 1 : index
    %c0_132 = arith.constant 0 : index
    %173 = vector.load %arg17[%c1_131, %c0_132] : memref<72x64xf32, #tpu.memory_space<vmem>>, vector<58x64xf32>
    %174 = arith.truncf %173 : vector<58x64xf32> to vector<58x64xbf16>
    %c1_133 = arith.constant 1 : index
    %c0_134 = arith.constant 0 : index
    %c0_135 = arith.constant 0 : index
    %175 = vector.load %arg6[%c1_133, %c0_134, %c0_135] : memref<9x64x128xbf16, #tpu.memory_space<vmem>>, vector<1x64x128xbf16>
    %176 = vector.shape_cast %175 : vector<1x64x128xbf16> to vector<64x128xbf16>
    %cst_136 = arith.constant dense<0.000000e+00> : vector<58x128xf32>
    %177 = tpu.matmul %174, %176, %cst_136 {dimension_numbers = #tpu.dot_dimension_numbers<[1], [0], [0], [1], [0, 0, 1, 1], [], []>} : vector<58x64xbf16>, vector<64x128xbf16>, vector<58x128xf32> -> vector<58x128xf32>
    %178 = arith.addf %172, %177 : vector<58x128xf32>
    %c2_137 = arith.constant 2 : index
    %c0_138 = arith.constant 0 : index
    %179 = vector.load %arg17[%c2_137, %c0_138] : memref<72x64xf32, #tpu.memory_space<vmem>>, vector<58x64xf32>
    %180 = arith.truncf %179 : vector<58x64xf32> to vector<58x64xbf16>
    %c2_139 = arith.constant 2 : index
    %c0_140 = arith.constant 0 : index
    %c0_141 = arith.constant 0 : index
    %181 = vector.load %arg6[%c2_139, %c0_140, %c0_141] : memref<9x64x128xbf16, #tpu.memory_space<vmem>>, vector<1x64x128xbf16>
    %182 = vector.shape_cast %181 : vector<1x64x128xbf16> to vector<64x128xbf16>
    %cst_142 = arith.constant dense<0.000000e+00> : vector<58x128xf32>
    %183 = tpu.matmul %180, %182, %cst_142 {dimension_numbers = #tpu.dot_dimension_numbers<[1], [0], [0], [1], [0, 0, 1, 1], [], []>} : vector<58x64xbf16>, vector<64x128xbf16>, vector<58x128xf32> -> vector<58x128xf32>
    %184 = arith.addf %178, %183 : vector<58x128xf32>
    %c6_143 = arith.constant 6 : index
    %c0_144 = arith.constant 0 : index
    %185 = vector.load %arg17[%c6_143, %c0_144] : memref<72x64xf32, #tpu.memory_space<vmem>>, vector<58x64xf32>
    %186 = arith.truncf %185 : vector<58x64xf32> to vector<58x64xbf16>
    %c3_145 = arith.constant 3 : index
    %c0_146 = arith.constant 0 : index
    %c0_147 = arith.constant 0 : index
    %187 = vector.load %arg6[%c3_145, %c0_146, %c0_147] : memref<9x64x128xbf16, #tpu.memory_space<vmem>>, vector<1x64x128xbf16>
    %188 = vector.shape_cast %187 : vector<1x64x128xbf16> to vector<64x128xbf16>
    %cst_148 = arith.constant dense<0.000000e+00> : vector<58x128xf32>
    %189 = tpu.matmul %186, %188, %cst_148 {dimension_numbers = #tpu.dot_dimension_numbers<[1], [0], [0], [1], [0, 0, 1, 1], [], []>} : vector<58x64xbf16>, vector<64x128xbf16>, vector<58x128xf32> -> vector<58x128xf32>
    %190 = arith.addf %184, %189 : vector<58x128xf32>
    %c7_149 = arith.constant 7 : index
    %c0_150 = arith.constant 0 : index
    %191 = vector.load %arg17[%c7_149, %c0_150] : memref<72x64xf32, #tpu.memory_space<vmem>>, vector<58x64xf32>
    %192 = arith.truncf %191 : vector<58x64xf32> to vector<58x64xbf16>
    %c4_151 = arith.constant 4 : index
    %c0_152 = arith.constant 0 : index
    %c0_153 = arith.constant 0 : index
    %193 = vector.load %arg6[%c4_151, %c0_152, %c0_153] : memref<9x64x128xbf16, #tpu.memory_space<vmem>>, vector<1x64x128xbf16>
    %194 = vector.shape_cast %193 : vector<1x64x128xbf16> to vector<64x128xbf16>
    %cst_154 = arith.constant dense<0.000000e+00> : vector<58x128xf32>
    %195 = tpu.matmul %192, %194, %cst_154 {dimension_numbers = #tpu.dot_dimension_numbers<[1], [0], [0], [1], [0, 0, 1, 1], [], []>} : vector<58x64xbf16>, vector<64x128xbf16>, vector<58x128xf32> -> vector<58x128xf32>
    %196 = arith.addf %190, %195 : vector<58x128xf32>
    %c8_155 = arith.constant 8 : index
    %c0_156 = arith.constant 0 : index
    %197 = vector.load %arg17[%c8_155, %c0_156] : memref<72x64xf32, #tpu.memory_space<vmem>>, vector<58x64xf32>
    %198 = arith.truncf %197 : vector<58x64xf32> to vector<58x64xbf16>
    %c5_157 = arith.constant 5 : index
    %c0_158 = arith.constant 0 : index
    %c0_159 = arith.constant 0 : index
    %199 = vector.load %arg6[%c5_157, %c0_158, %c0_159] : memref<9x64x128xbf16, #tpu.memory_space<vmem>>, vector<1x64x128xbf16>
    %200 = vector.shape_cast %199 : vector<1x64x128xbf16> to vector<64x128xbf16>
    %cst_160 = arith.constant dense<0.000000e+00> : vector<58x128xf32>
    %201 = tpu.matmul %198, %200, %cst_160 {dimension_numbers = #tpu.dot_dimension_numbers<[1], [0], [0], [1], [0, 0, 1, 1], [], []>} : vector<58x64xbf16>, vector<64x128xbf16>, vector<58x128xf32> -> vector<58x128xf32>
    %202 = arith.addf %196, %201 : vector<58x128xf32>
    %c12_161 = arith.constant 12 : index
    %c0_162 = arith.constant 0 : index
    %203 = vector.load %arg17[%c12_161, %c0_162] : memref<72x64xf32, #tpu.memory_space<vmem>>, vector<58x64xf32>
    %204 = arith.truncf %203 : vector<58x64xf32> to vector<58x64xbf16>
    %c6_163 = arith.constant 6 : index
    %c0_164 = arith.constant 0 : index
    %c0_165 = arith.constant 0 : index
    %205 = vector.load %arg6[%c6_163, %c0_164, %c0_165] : memref<9x64x128xbf16, #tpu.memory_space<vmem>>, vector<1x64x128xbf16>
    %206 = vector.shape_cast %205 : vector<1x64x128xbf16> to vector<64x128xbf16>
    %cst_166 = arith.constant dense<0.000000e+00> : vector<58x128xf32>
    %207 = tpu.matmul %204, %206, %cst_166 {dimension_numbers = #tpu.dot_dimension_numbers<[1], [0], [0], [1], [0, 0, 1, 1], [], []>} : vector<58x64xbf16>, vector<64x128xbf16>, vector<58x128xf32> -> vector<58x128xf32>
    %208 = arith.addf %202, %207 : vector<58x128xf32>
    %c13 = arith.constant 13 : index
    %c0_167 = arith.constant 0 : index
    %209 = vector.load %arg17[%c13, %c0_167] : memref<72x64xf32, #tpu.memory_space<vmem>>, vector<58x64xf32>
    %210 = arith.truncf %209 : vector<58x64xf32> to vector<58x64xbf16>
    %c7_168 = arith.constant 7 : index
    %c0_169 = arith.constant 0 : index
    %c0_170 = arith.constant 0 : index
    %211 = vector.load %arg6[%c7_168, %c0_169, %c0_170] : memref<9x64x128xbf16, #tpu.memory_space<vmem>>, vector<1x64x128xbf16>
    %212 = vector.shape_cast %211 : vector<1x64x128xbf16> to vector<64x128xbf16>
    %cst_171 = arith.constant dense<0.000000e+00> : vector<58x128xf32>
    %213 = tpu.matmul %210, %212, %cst_171 {dimension_numbers = #tpu.dot_dimension_numbers<[1], [0], [0], [1], [0, 0, 1, 1], [], []>} : vector<58x64xbf16>, vector<64x128xbf16>, vector<58x128xf32> -> vector<58x128xf32>
    %214 = arith.addf %208, %213 : vector<58x128xf32>
    %c14 = arith.constant 14 : index
    %c0_172 = arith.constant 0 : index
    %215 = vector.load %arg17[%c14, %c0_172] : memref<72x64xf32, #tpu.memory_space<vmem>>, vector<58x64xf32>
    %216 = arith.truncf %215 : vector<58x64xf32> to vector<58x64xbf16>
    %c8_173 = arith.constant 8 : index
    %c0_174 = arith.constant 0 : index
    %c0_175 = arith.constant 0 : index
    %217 = vector.load %arg6[%c8_173, %c0_174, %c0_175] : memref<9x64x128xbf16, #tpu.memory_space<vmem>>, vector<1x64x128xbf16>
    %218 = vector.shape_cast %217 : vector<1x64x128xbf16> to vector<64x128xbf16>
    %cst_176 = arith.constant dense<0.000000e+00> : vector<58x128xf32>
    %219 = tpu.matmul %216, %218, %cst_176 {dimension_numbers = #tpu.dot_dimension_numbers<[1], [0], [0], [1], [0, 0, 1, 1], [], []>} : vector<58x64xbf16>, vector<64x128xbf16>, vector<58x128xf32> -> vector<58x128xf32>
    %220 = arith.addf %214, %219 : vector<58x128xf32>
    %c0_177 = arith.constant 0 : index
    %c0_178 = arith.constant 0 : index
    %221 = vector.load %arg7[%c0_177, %c0_178] : memref<1x128xf32, #tpu.memory_space<vmem>>, vector<1x128xf32>
    %222 = vector.broadcast %221 : vector<1x128xf32> to vector<58x128xf32>
    %223 = arith.addf %220, %222 : vector<58x128xf32>
    %cst_179 = arith.constant 0.000000e+00 : f32
    %224 = vector.broadcast %cst_179 : f32 to vector<58x128xf32>
    %225 = arith.maximumf %223, %224 : vector<58x128xf32>
    %c0_180 = arith.constant 0 : index
    %c0_181 = arith.constant 0 : index
    %226 = vector.load %arg15[%c0_180, %c0_181] : memref<58x128xf32, #tpu.memory_space<vmem>>, vector<58x128xf32>
    tpu.vector_store %arg15[%c0_180, %c0_181], %225 {strides = array<i32>} : memref<58x128xf32, #tpu.memory_space<vmem>>, vector<58x128xf32>,
    %c0_182 = arith.constant 0 : index
    %c0_183 = arith.constant 0 : index
    %227 = tpu.strided_load %arg15[%c0_182, %c0_183] {strides = array<i32: 2, 1>} : memref<58x128xf32, #tpu.memory_space<vmem>>, vector<29x128xf32>
    %c1_184 = arith.constant 1 : index
    %c0_185 = arith.constant 0 : index
    %228 = tpu.strided_load %arg15[%c1_184, %c0_185] {strides = array<i32: 2, 1>} : memref<58x128xf32, #tpu.memory_space<vmem>>, vector<29x128xf32>
    %229 = arith.maximumf %227, %228 : vector<29x128xf32>
    %230 = vector.extract_strided_slice %229 {offsets = [0, 0], sizes = [26, 128], strides = [1, 1]} : vector<29x128xf32> to vector<26x128xf32>
    %231 = vector.extract_strided_slice %229 {offsets = [3, 0], sizes = [26, 128], strides = [1, 1]} : vector<29x128xf32> to vector<26x128xf32>
    %232 = arith.maximumf %230, %231 : vector<26x128xf32>
    %233 = vector.extract_strided_slice %232 {offsets = [0, 0], sizes = [1, 128], strides = [1, 1]} : vector<26x128xf32> to vector<1x128xf32>
    %234 = vector.extract_strided_slice %232 {offsets = [1, 0], sizes = [1, 128], strides = [1, 1]} : vector<26x128xf32> to vector<1x128xf32>
    %235 = vector.extract_strided_slice %232 {offsets = [6, 0], sizes = [1, 128], strides = [1, 1]} : vector<26x128xf32> to vector<1x128xf32>
    %236 = vector.extract_strided_slice %232 {offsets = [7, 0], sizes = [1, 128], strides = [1, 1]} : vector<26x128xf32> to vector<1x128xf32>
    %237 = tpu.concatenate %233, %234, %235, %236 in 1 : vector<1x128xf32>, vector<1x128xf32>, vector<1x128xf32>, vector<1x128xf32> -> vector<1x512xf32>
    %238 = vector.extract_strided_slice %232 {offsets = [18, 0], sizes = [1, 128], strides = [1, 1]} : vector<26x128xf32> to vector<1x128xf32>
    %239 = vector.extract_strided_slice %232 {offsets = [19, 0], sizes = [1, 128], strides = [1, 1]} : vector<26x128xf32> to vector<1x128xf32>
    %240 = vector.extract_strided_slice %232 {offsets = [24, 0], sizes = [1, 128], strides = [1, 1]} : vector<26x128xf32> to vector<1x128xf32>
    %241 = vector.extract_strided_slice %232 {offsets = [25, 0], sizes = [1, 128], strides = [1, 1]} : vector<26x128xf32> to vector<1x128xf32>
    %242 = tpu.concatenate %238, %239, %240, %241 in 1 : vector<1x128xf32>, vector<1x128xf32>, vector<1x128xf32>, vector<1x128xf32> -> vector<1x512xf32>
    %243 = tpu.concatenate %237, %242 in 0 : vector<1x512xf32>, vector<1x512xf32> -> vector<2x512xf32>
    %244 = arith.truncf %243 : vector<2x512xf32> to vector<2x512xbf16>
    %c0_186 = arith.constant 0 : index
    %c0_187 = arith.constant 0 : index
    %245 = vector.load %arg8[%c0_186, %c0_187] : memref<512x512xbf16, #tpu.memory_space<vmem>>, vector<512x512xbf16>
    %cst_188 = arith.constant dense<0.000000e+00> : vector<2x512xf32>
    %246 = tpu.matmul %244, %245, %cst_188 {dimension_numbers = #tpu.dot_dimension_numbers<[1], [0], [0], [1], [0, 0, 1, 1], [], []>} : vector<2x512xbf16>, vector<512x512xbf16>, vector<2x512xf32> -> vector<2x512xf32>
    %c0_189 = arith.constant 0 : index
    %c0_190 = arith.constant 0 : index
    %247 = vector.load %arg9[%c0_189, %c0_190] : memref<1x512xf32, #tpu.memory_space<vmem>>, vector<1x512xf32>
    %248 = vector.broadcast %247 : vector<1x512xf32> to vector<2x512xf32>
    %249 = arith.addf %246, %248 : vector<2x512xf32>
    %cst_191 = arith.constant 0.000000e+00 : f32
    %250 = vector.broadcast %cst_191 : f32 to vector<2x512xf32>
    %251 = arith.maximumf %249, %250 : vector<2x512xf32>
    %c0_192 = arith.constant 0 : index
    %c0_193 = arith.constant 0 : index
    %252 = vector.load %arg10[%c0_192, %c0_193] : memref<512x10xf32, #tpu.memory_space<vmem>>, vector<512x10xf32>
    %cst_194 = arith.constant dense<0.000000e+00> : vector<2x10xf32>
    %253 = tpu.matmul %251, %252, %cst_194 {dimension_numbers = #tpu.dot_dimension_numbers<[1], [0], [0], [1], [0, 0, 1, 1], [], []>} : vector<2x512xf32>, vector<512x10xf32>, vector<2x10xf32> -> vector<2x10xf32>
    %c0_195 = arith.constant 0 : index
    %c0_196 = arith.constant 0 : index
    %254 = vector.load %arg11[%c0_195, %c0_196] : memref<1x10xf32, #tpu.memory_space<vmem>>, vector<1x10xf32>
    %255 = vector.broadcast %254 : vector<1x10xf32> to vector<2x10xf32>
    %256 = arith.addf %253, %255 : vector<2x10xf32>
    %cst_197 = arith.constant dense<0xFF800000> : vector<2xf32>
    %257 = vector.multi_reduction <maximumf>, %256, %cst_197 [1] : vector<2x10xf32> to vector<2xf32>
    %258 = vector.shape_cast %257 : vector<2xf32> to vector<2x1xf32>
    %259 = vector.broadcast %258 : vector<2x1xf32> to vector<2x10xf32>
    %260 = arith.subf %256, %259 : vector<2x10xf32>
    %261 = math.exp %260 : vector<2x10xf32>
    %cst_198 = arith.constant dense<0.000000e+00> : vector<2xf32>
    %262 = vector.multi_reduction <add>, %261, %cst_198 [1] : vector<2x10xf32> to vector<2xf32>
    %263 = vector.shape_cast %262 : vector<2xf32> to vector<2x1xf32>
    %264 = vector.broadcast %263 : vector<2x1xf32> to vector<2x10xf32>
    %265 = arith.divf %261, %264 : vector<2x10xf32>
    %c0_199 = arith.constant 0 : index
    %c0_200 = arith.constant 0 : index
    %c0_201 = arith.constant 0 : index
    %266 = vector.load %arg12[%c0_199, %c0_200, %c0_201] : memref<1x2x10xf32, #tpu.memory_space<vmem>>, vector<1x2x10xf32>
    %267 = vector.shape_cast %266 : vector<1x2x10xf32> to vector<2x10xf32>
    %268 = vector.shape_cast %265 : vector<2x10xf32> to vector<1x2x10xf32>
    tpu.vector_store %arg12[%c0_199, %c0_200, %c0_201], %268 {strides = array<i32>} : memref<1x2x10xf32, #tpu.memory_space<vmem>>, vector<1x2x10xf32>,
    return
  }
  func.func @transform_0(%arg0: i32) -> (i32, i32, i32) {
    %c0_i32 = arith.constant 0 : i32
    %c0_i32_0 = arith.constant 0 : i32
    %c0_i32_1 = arith.constant 0 : i32
    return %arg0, %c0_i32, %c0_i32_0 : i32, i32, i32
  }
  func.func @transform_1(%arg0: i32) -> (i32, i32, i32) {
    %c0_i32 = arith.constant 0 : i32
    %c0_i32_0 = arith.constant 0 : i32
    %c0_i32_1 = arith.constant 0 : i32
    %c0_i32_2 = arith.constant 0 : i32
    return %c0_i32, %c0_i32_0, %c0_i32_1 : i32, i32, i32
  }
  func.func @transform_2(%arg0: i32) -> (i32, i32) {
    %c0_i32 = arith.constant 0 : i32
    %c0_i32_0 = arith.constant 0 : i32
    %c0_i32_1 = arith.constant 0 : i32
    return %c0_i32, %c0_i32_0 : i32, i32
  }
  func.func @transform_3(%arg0: i32) -> (i32, i32, i32) {
    %c0_i32 = arith.constant 0 : i32
    %c0_i32_0 = arith.constant 0 : i32
    %c0_i32_1 = arith.constant 0 : i32
    %c0_i32_2 = arith.constant 0 : i32
    return %c0_i32, %c0_i32_0, %c0_i32_1 : i32, i32, i32
  }
  func.func @transform_4(%arg0: i32) -> (i32, i32) {
    %c0_i32 = arith.constant 0 : i32
    %c0_i32_0 = arith.constant 0 : i32
    %c0_i32_1 = arith.constant 0 : i32
    return %c0_i32, %c0_i32_0 : i32, i32
  }
  func.func @transform_5(%arg0: i32) -> (i32, i32, i32) {
    %c0_i32 = arith.constant 0 : i32
    %c0_i32_0 = arith.constant 0 : i32
    %c0_i32_1 = arith.constant 0 : i32
    %c0_i32_2 = arith.constant 0 : i32
    return %c0_i32, %c0_i32_0, %c0_i32_1 : i32, i32, i32
  }
  func.func @transform_6(%arg0: i32) -> (i32, i32) {
    %c0_i32 = arith.constant 0 : i32
    %c0_i32_0 = arith.constant 0 : i32
    %c0_i32_1 = arith.constant 0 : i32
    return %c0_i32, %c0_i32_0 : i32, i32
  }
  func.func @transform_7(%arg0: i32) -> (i32, i32) {
    %c0_i32 = arith.constant 0 : i32
    %c0_i32_0 = arith.constant 0 : i32
    %c0_i32_1 = arith.constant 0 : i32
    return %c0_i32, %c0_i32_0 : i32, i32
  }
  func.func @transform_8(%arg0: i32) -> (i32, i32) {
    %c0_i32 = arith.constant 0 : i32
    %c0_i32_0 = arith.constant 0 : i32
    %c0_i32_1 = arith.constant 0 : i32
    return %c0_i32, %c0_i32_0 : i32, i32
  }
  func.func @transform_9(%arg0: i32) -> (i32, i32) {
    %c0_i32 = arith.constant 0 : i32
    %c0_i32_0 = arith.constant 0 : i32
    %c0_i32_1 = arith.constant 0 : i32
    return %c0_i32, %c0_i32_0 : i32, i32
  }
  func.func @transform_10(%arg0: i32) -> (i32, i32) {
    %c0_i32 = arith.constant 0 : i32
    %c0_i32_0 = arith.constant 0 : i32
    %c0_i32_1 = arith.constant 0 : i32
    return %c0_i32, %c0_i32_0 : i32, i32
  }
  func.func @transform_11(%arg0: i32) -> (i32, i32, i32) {
    %c0_i32 = arith.constant 0 : i32
    %c0_i32_0 = arith.constant 0 : i32
    %c0_i32_1 = arith.constant 0 : i32
    return %arg0, %c0_i32, %c0_i32_0 : i32, i32, i32
  }
}

</mosaic_0001>

<llo_original>
// kernel: cnn_forward.1
$region0: #{cnn_forward.1}
  #allocation0 [shape = 'u32[]', space=smem, size = 0x4, offset = 0x4, fixed_abs, tag = 'smem constant byte address 0x4 - core index']
  #allocation1 [shape = 'u32[72,128]{1,0:T(1,128)}', space=vmem, size = 0x9000, scoped, tag = 'internal scratch']
  #allocation2 [shape = 'f32[610,32]{1,0:T(8,128)}', space=vmem, size = 0x4d000, scoped, tag = 'scratch operand']
  #allocation3 [shape = 'f32[178,64]{1,0:T(8,128)}', space=vmem, size = 0x17000, scoped, tag = 'scratch operand']
  #allocation4 [shape = 'f32[58,128]{1,0:T(8,128)}', space=vmem, size = 0x8000, scoped, tag = 'scratch operand']
  #allocation5 [shape = 'f32[200,32]{1,0:T(8,128)}', space=vmem, size = 0x19000, scoped, tag = 'scratch operand']
  #allocation6 [shape = 'f32[72,64]{1,0:T(8,128)}', space=vmem, size = 0x9000, scoped, tag = 'scratch operand']
  %s0 = inlined_call_operand.vmem [shape: bf16[1,648,4], index: 0, kind: input, shape index: {}]
  %s1 = inlined_call_operand.vmem [shape: bf16[9,4,32], index: 1, kind: input, shape index: {}]
  %s2 = inlined_call_operand.vmem [shape: f32[1,32], index: 2, kind: input, shape index: {}]
  %s3 = inlined_call_operand.vmem [shape: bf16[9,32,64], index: 3, kind: input, shape index: {}]
  %s4 = inlined_call_operand.vmem [shape: f32[1,64], index: 4, kind: input, shape index: {}]
  %s5 = inlined_call_operand.vmem [shape: bf16[9,64,128], index: 5, kind: input, shape index: {}]
  %s6 = inlined_call_operand.vmem [shape: f32[1,128], index: 6, kind: input, shape index: {}]
  %s7 = inlined_call_operand.hbm [shape: bf16[512,512], index: 7, kind: input, shape index: {}]
  %s8 = inlined_call_operand.vmem [shape: f32[1,512], index: 8, kind: input, shape index: {}]
  %s9 = inlined_call_operand.vmem [shape: f32[512,10], index: 9, kind: input, shape index: {}]
  %s10 = inlined_call_operand.vmem [shape: f32[1,10], index: 10, kind: input, shape index: {}]
  %s11 = inlined_call_operand.hbm [shape: f32[1,2,10], index: 11, kind: output, shape index: {}]
  %s12 = sld [smem:[#allocation0]]
  $region58: #{cnn_forward.1} parent=0
    _
  %s14 = ssub.s32 1, %s12
  %s15 = scalar_select 0, %s14, %s12
  $region1: #{cnn_forward.1} parent=0
    #allocation7 [shape = 'u8[524288]{0}', space=vmem, size = 0x80000, scoped, tag = 'input window, operand 7, single buffered']
    #allocation8 [shape = 's32[1]{0}', space=sflag, size = 0x4, scoped, tag = 'scoped memory for cnn_forward.1']
    #allocation9 [shape = 's32[1]{0}', space=sflag, size = 0x4, scoped, tag = 'scoped memory for cnn_forward.1']
    #allocation10 [shape = 'u8[1024]{0}', space=vmem, size = 0x400, scoped, tag = 'output window, operand 0, single buffered']
    %16 = vsyncpa [#allocation8], 0
    %17 = vsyncpa [#allocation9], 0
    // Predicated region
    $region2: #{cnn_forward.1} parent=1 // pred_check
      _
    $region3: #{cnn_forward.1} parent=1 // pred_check_branch
      %19 = sbr.rel (0) target = $region5
    $region4: #{cnn_forward.1} parent=1 // pred_region
      _
    $region5: #{cnn_forward.1} parent=1 // pred_fallthru
      _
    // Predicated region
    $region6: #{cnn_forward.1} parent=1 // pred_check
      _
    $region7: #{cnn_forward.1} parent=1 // pred_check_branch
      %21 = sbr.rel (0) target = $region9
    $region8: #{cnn_forward.1} parent=1 // pred_region
      _
    $region9: #{cnn_forward.1} parent=1 // pred_fallthru
      _
    // Predicated region
    $region10: #{cnn_forward.1} parent=1 // pred_check
      _
    $region11: #{cnn_forward.1} parent=1 // pred_check_branch
      %23 = sbr.rel (0) target = $region13
    $region12: #{cnn_forward.1} parent=1 // pred_region
      _
    $region13: #{cnn_forward.1} parent=1 // pred_fallthru
      _
    // Predicated region
    $region14: #{cnn_forward.1} parent=1 // pred_check
      _
    $region15: #{cnn_forward.1} parent=1 // pred_check_branch
      %25 = sbr.rel (0) target = $region17
    $region16: #{cnn_forward.1} parent=1 // pred_region
      _
    $region17: #{cnn_forward.1} parent=1 // pred_fallthru
      _
    // Predicated region
    $region18: #{cnn_forward.1} parent=1 // pred_check
      _
    $region19: #{cnn_forward.1} parent=1 // pred_check_branch
      %27 = sbr.rel (0) target = $region21
    $region20: #{cnn_forward.1} parent=1 // pred_region
      _
    $region21: #{cnn_forward.1} parent=1 // pred_fallthru
      _
    // Predicated region
    $region22: #{cnn_forward.1} parent=1 // pred_check
      _
    $region23: #{cnn_forward.1} parent=1 // pred_check_branch
      %29 = sbr.rel (0) target = $region25
    $region24: #{cnn_forward.1} parent=1 // pred_region
      _
    $region25: #{cnn_forward.1} parent=1 // pred_fallthru
      _
    // Predicated region
    $region26: #{cnn_forward.1} parent=1 // pred_check
      _
    $region27: #{cnn_forward.1} parent=1 // pred_check_branch
      %31 = sbr.rel (0) target = $region29
    $region28: #{cnn_forward.1} parent=1 // pred_region
      _
    $region29: #{cnn_forward.1} parent=1 // pred_fallthru
      _
    // Predicated region
    $region30: #{cnn_forward.1} parent=1 // pred_check
      _
    $region31: #{cnn_forward.1} parent=1 // pred_check_branch
      %33 = sbr.rel (0) target = $region33
    $region32: #{cnn_forward.1} parent=1 // pred_region
      %35 = vsyncadd [#allocation8], 0
      %s36 = sshll.u32 %s7, 4
      %s37 = int_to_ptr.hbm [resolvable:$true] %s36
      %s38 = sshll.u32 [#allocation7], 4
      %s39 = int_to_ptr.vmem [resolvable:$true] %s38
      %44 = dma.hbm_to_vmem [thread:$0]  %s37, 16384, %s39, [#allocation8], 256, 256, 16
    $region33: #{cnn_forward.1} parent=1 // pred_fallthru
      _
    // Predicated region
    $region34: #{cnn_forward.1} parent=1 // pred_check
      _
    $region35: #{cnn_forward.1} parent=1 // pred_check_branch
      %46 = sbr.rel (0) target = $region37
    $region36: #{cnn_forward.1} parent=1 // pred_region
      _
    $region37: #{cnn_forward.1} parent=1 // pred_fallthru
      _
    // Predicated region
    $region38: #{cnn_forward.1} parent=1 // pred_check
      _
    $region39: #{cnn_forward.1} parent=1 // pred_check_branch
      %48 = sbr.rel (0) target = $region41
    $region40: #{cnn_forward.1} parent=1 // pred_region
      _
    $region41: #{cnn_forward.1} parent=1 // pred_fallthru
      _
    // Predicated region
    $region42: #{cnn_forward.1} parent=1 // pred_check
      _
    $region43: #{cnn_forward.1} parent=1 // pred_check_branch
      %50 = sbr.rel (0) target = $region45
    $region44: #{cnn_forward.1} parent=1 // pred_region
      _
    $region45: #{cnn_forward.1} parent=1 // pred_fallthru
      _
    // Predicated region
    $region46: #{cnn_forward.1} parent=1 // pred_check
      _
    $region47: #{cnn_forward.1} parent=1 // pred_check_branch
      %52 = sbr.rel (0) target = $region49
    $region48: #{cnn_forward.1} parent=1 // pred_region
      %54 = dma.done [#allocation8], 16384
    $region49: #{cnn_forward.1} parent=1 // pred_fallthru
      _
    %v56 = vld [vmem:[%s0] sm:$0xf]
    %v57 = vld [vmem:[%s0 + $0x4] sm:$0xf]
    %v58 = vld [vmem:[%s0 + $0x8] sm:$0xf]
    %v59 = vld [vmem:[%s0 + $0xc] sm:$0xf]
    %v60 = vld [vmem:[%s0 + $0x10] sm:$0xf]
    %v61 = vld [vmem:[%s0 + $0x14] sm:$0xf]
    %v62 = vld [vmem:[%s0 + $0x18] sm:$0xf]
    %v63 = vld [vmem:[%s0 + $0x1c] sm:$0xf]
    %v64 = vld [vmem:[%s0 + $0x20] sm:$0xf]
    %v65 = vld [vmem:[%s0 + $0x24] sm:$0xf]
    %v66 = vld [vmem:[%s0 + $0x28] sm:$0xf]
    %v67 = vld [vmem:[%s0 + $0x2c] sm:$0xf]
    %v68 = vld [vmem:[%s0 + $0x30] sm:$0xf]
    %v69 = vld [vmem:[%s0 + $0x34] sm:$0xf]
    %v70 = vld [vmem:[%s0 + $0x38] sm:$0xf]
    %v71 = vld [vmem:[%s0 + $0x3c] sm:$0xf]
    %v72 = vld [vmem:[%s0 + $0x40] sm:$0xf]
    %v73 = vld [vmem:[%s0 + $0x44] sm:$0xf]
    %v74 = vld [vmem:[%s0 + $0x48] sm:$0xf]
    %v75 = vld [vmem:[%s0 + $0x4c] sm:$0xf]
    %v76 = vld [vmem:[%s0 + $0x50] sm:$0xf]
    %v77 = vld [vmem:[%s0 + $0x54] sm:$0xf]
    %v78 = vld [vmem:[%s0 + $0x58] sm:$0xf]
    %v79 = vld [vmem:[%s0 + $0x5c] sm:$0xf]
    %v80 = vld [vmem:[%s0 + $0x60] sm:$0xf]
    %v81 = vld [vmem:[%s0 + $0x64] sm:$0xf]
    %v82 = vld [vmem:[%s0 + $0x68] sm:$0xf]
    %v83 = vld [vmem:[%s0 + $0x6c] sm:$0xf]
    %v84 = vld [vmem:[%s0 + $0x70] sm:$0xf]
    %v85 = vld [vmem:[%s0 + $0x74] sm:$0xf]
    %v86 = vld [vmem:[%s0 + $0x78] sm:$0xf]
    %v87 = vld [vmem:[%s0 + $0x7c] sm:$0xf]
    %v88 = vld [vmem:[%s0 + $0x80] sm:$0xf]
    %v89 = vld [vmem:[%s0 + $0x84] sm:$0xf]
    %v90 = vld [vmem:[%s0 + $0x88] sm:$0xf]
    %v91 = vld [vmem:[%s0 + $0x8c] sm:$0xf]
    %v92 = vld [vmem:[%s0 + $0x90] sm:$0xf]
    %v93 = vld [vmem:[%s0 + $0x94] sm:$0xf]
    %v94 = vld [vmem:[%s0 + $0x98] sm:$0xf]
    %v95 = vld [vmem:[%s0 + $0x9c] sm:$0xf]
    %v96 = vld [vmem:[%s0 + $0xa0] sm:$0xf]
    %v97 = vld [vmem:[%s0 + $0xa4] sm:$0xf]
    %v98 = vld [vmem:[%s0 + $0xa8] sm:$0xf]
    %v99 = vld [vmem:[%s0 + $0xac] sm:$0xf]
    %v100 = vld [vmem:[%s0 + $0xb0] sm:$0xf]
    %v101 = vld [vmem:[%s0 + $0xb4] sm:$0xf]
    %v102 = vld [vmem:[%s0 + $0xb8] sm:$0xf]
    %v103 = vld [vmem:[%s0 + $0xbc] sm:$0xf]
    %v104 = vld [vmem:[%s0 + $0xc0] sm:$0xf]
    %v105 = vld [vmem:[%s0 + $0xc4] sm:$0xf]
    %v106 = vld [vmem:[%s0 + $0xc8] sm:$0xf]
    %v107 = vld [vmem:[%s0 + $0xcc] sm:$0xf]
    %v108 = vld [vmem:[%s0 + $0xd0] sm:$0xf]
    %v109 = vld [vmem:[%s0 + $0xd4] sm:$0xf]
    %v110 = vld [vmem:[%s0 + $0xd8] sm:$0xf]
    %v111 = vld [vmem:[%s0 + $0xdc] sm:$0xf]
    %v112 = vld [vmem:[%s0 + $0xe0] sm:$0xf]
    %v113 = vld [vmem:[%s0 + $0xe4] sm:$0xf]
    %v114 = vld [vmem:[%s0 + $0xe8] sm:$0xf]
    %v115 = vld [vmem:[%s0 + $0xec] sm:$0xf]
    %v116 = vld [vmem:[%s0 + $0xf0] sm:$0xf]
    %v117 = vld [vmem:[%s0 + $0xf4] sm:$0xf]
    %v118 = vld [vmem:[%s0 + $0xf8] sm:$0xf]
    %v119 = vld [vmem:[%s0 + $0xfc] sm:$0xf]
    %v120 = vld [vmem:[%s0 + $0x100] sm:$0xf]
    %v121 = vld [vmem:[%s0 + $0x104] sm:$0xf]
    %v122 = vld [vmem:[%s0 + $0x108] sm:$0xf]
    %v123 = vld [vmem:[%s0 + $0x10c] sm:$0xf]
    %v124 = vld [vmem:[%s0 + $0x110] sm:$0xf]
    %v125 = vld [vmem:[%s0 + $0x114] sm:$0xf]
    %v126 = vld [vmem:[%s0 + $0x118] sm:$0xf]
    %v127 = vld [vmem:[%s0 + $0x11c] sm:$0xf]
    %v128 = vld [vmem:[%s0 + $0x120] sm:$0xf]
    %v129 = vld [vmem:[%s0 + $0x124] sm:$0xf]
    %v130 = vld [vmem:[%s0 + $0x128] sm:$0xf]
    %v131 = vld [vmem:[%s0 + $0x12c] sm:$0xf]
    %v132 = vld [vmem:[%s0 + $0x130] sm:$0x1]
    %v133 = vld [vmem:[%s1] sm:$0x3]
    %v134 = vld [vmem:[%s0 + $0x130] sm:$0x3]
    %s135 = scalar_lea.vmem %s1, 2
    %v136 = vld [vmem:[%s135] sm:$0x3]
    %v214 = vunpack.c.l.b16 %v56
    %v215 = vunpack.c.l.b16 %v57
    %v216 = vunpack.c.l.b16 %v58
    %v217 = vunpack.c.l.b16 %v59
    %v218 = vunpack.c.l.b16 %v60
    %v219 = vunpack.c.l.b16 %v61
    %v220 = vunpack.c.l.b16 %v62
    %v221 = vunpack.c.l.b16 %v63
    %v222 = vunpack.c.l.b16 %v64
    %v223 = vunpack.c.l.b16 %v65
    %v224 = vunpack.c.l.b16 %v66
    %v225 = vunpack.c.l.b16 %v67
    %v226 = vunpack.c.l.b16 %v68
    %v227 = vunpack.c.l.b16 %v69
    %v228 = vunpack.c.l.b16 %v70
    %v229 = vunpack.c.l.b16 %v71
    %v230 = vunpack.c.l.b16 %v72
    %v231 = vunpack.c.l.b16 %v73
    %v232 = vunpack.c.l.b16 %v74
    %v233 = vunpack.c.l.b16 %v75
    %v234 = vunpack.c.l.b16 %v76
    %v235 = vunpack.c.l.b16 %v77
    %v236 = vunpack.c.l.b16 %v78
    %v237 = vunpack.c.l.b16 %v79
    %v238 = vunpack.c.l.b16 %v80
    %v239 = vunpack.c.l.b16 %v81
    %v240 = vunpack.c.l.b16 %v82
    %v241 = vunpack.c.l.b16 %v83
    %v242 = vunpack.c.l.b16 %v84
    %v243 = vunpack.c.l.b16 %v85
    %v244 = vunpack.c.l.b16 %v86
    %v245 = vunpack.c.l.b16 %v87
    %v246 = vunpack.c.l.b16 %v88
    %v247 = vunpack.c.l.b16 %v89
    %v248 = vunpack.c.l.b16 %v90
    %v249 = vunpack.c.l.b16 %v91
    %v250 = vunpack.c.l.b16 %v92
    %v251 = vunpack.c.l.b16 %v93
    %v252 = vunpack.c.l.b16 %v94
    %v253 = vunpack.c.l.b16 %v95
    %v254 = vunpack.c.l.b16 %v96
    %v255 = vunpack.c.l.b16 %v97
    %v256 = vunpack.c.l.b16 %v98
    %v257 = vunpack.c.l.b16 %v99
    %v258 = vunpack.c.l.b16 %v100
    %v259 = vunpack.c.l.b16 %v101
    %v260 = vunpack.c.l.b16 %v102
    %v261 = vunpack.c.l.b16 %v103
    %v262 = vunpack.c.l.b16 %v104
    %v263 = vunpack.c.l.b16 %v105
    %v264 = vunpack.c.l.b16 %v106
    %v265 = vunpack.c.l.b16 %v107
    %v266 = vunpack.c.l.b16 %v108
    %v267 = vunpack.c.l.b16 %v109
    %v268 = vunpack.c.l.b16 %v110
    %v269 = vunpack.c.l.b16 %v111
    %v270 = vunpack.c.l.b16 %v112
    %v271 = vunpack.c.l.b16 %v113
    %v272 = vunpack.c.l.b16 %v114
    %v273 = vunpack.c.l.b16 %v115
    %v274 = vunpack.c.l.b16 %v116
    %v275 = vunpack.c.l.b16 %v117
    %v276 = vunpack.c.l.b16 %v118
    %v277 = vunpack.c.l.b16 %v119
    %v278 = vunpack.c.l.b16 %v120
    %v279 = vunpack.c.l.b16 %v121
    %v280 = vunpack.c.l.b16 %v122
    %v281 = vunpack.c.l.b16 %v123
    %v282 = vunpack.c.l.b16 %v124
    %v283 = vunpack.c.l.b16 %v125
    %v284 = vunpack.c.l.b16 %v126
    %v285 = vunpack.c.l.b16 %v127
    %v286 = vunpack.c.l.b16 %v128
    %v287 = vunpack.c.l.b16 %v129
    %v288 = vunpack.c.l.b16 %v130
    %v289 = vunpack.c.l.b16 %v131
    %v290 = vunpack.c.l.b16 %v134
    %v291 = vpack.c.b16 %v215, %v214
    %v292 = vpack.c.b16 %v217, %v216
    %v293 = vpack.c.b16 %v219, %v218
    %v294 = vpack.c.b16 %v221, %v220
    %v295 = vpack.c.b16 %v223, %v222
    %v296 = vpack.c.b16 %v225, %v224
    %v297 = vpack.c.b16 %v227, %v226
    %v298 = vpack.c.b16 %v229, %v228
    %v299 = vpack.c.b16 %v231, %v230
    %v300 = vpack.c.b16 %v233, %v232
    %v301 = vpack.c.b16 %v235, %v234
    %v302 = vpack.c.b16 %v237, %v236
    %v303 = vpack.c.b16 %v239, %v238
    %v304 = vpack.c.b16 %v241, %v240
    %v305 = vpack.c.b16 %v243, %v242
    %v306 = vpack.c.b16 %v245, %v244
    %v307 = vpack.c.b16 %v247, %v246
    %v308 = vpack.c.b16 %v249, %v248
    %v309 = vpack.c.b16 %v251, %v250
    %v310 = vpack.c.b16 %v253, %v252
    %v311 = vpack.c.b16 %v255, %v254
    %v312 = vpack.c.b16 %v257, %v256
    %v313 = vpack.c.b16 %v259, %v258
    %v314 = vpack.c.b16 %v261, %v260
    %v315 = vpack.c.b16 %v263, %v262
    %v316 = vpack.c.b16 %v265, %v264
    %v317 = vpack.c.b16 %v267, %v266
    %v318 = vpack.c.b16 %v269, %v268
    %v319 = vpack.c.b16 %v271, %v270
    %v320 = vpack.c.b16 %v273, %v272
    %v321 = vpack.c.b16 %v275, %v274
    %v322 = vpack.c.b16 %v277, %v276
    %v323 = vpack.c.b16 %v279, %v278
    %v324 = vpack.c.b16 %v281, %v280
    %v325 = vpack.c.b16 %v283, %v282
    %v326 = vpack.c.b16 %v285, %v284
    %v327 = vpack.c.b16 %v287, %v286
    %v328 = vpack.c.b16 %v289, %v288
    %v329 = vpack.c.b16 %v290, %v290
    %vm330 = vsmask.f32 7424
    %v332 = vshrl.u32 %v291, 16
    %v334 = vshll.u32 %v291, 16
    %v336 = vrot.slane %v334, 1
    %v337 = vor.u32 %v332, %v336
    %v339 = vshll.u32 %v292, 16
    %v341 = vrot.slane %v339, 1
    %v342 = vsel %vm330, %v337, %v341
    %v343 = vshrl.u32 %v292, 16
    %v345 = vor.u32 %v343, %v341
    %v347 = vshll.u32 %v293, 16
    %v349 = vrot.slane %v347, 1
    %v350 = vsel %vm330, %v345, %v349
    %v351 = vshrl.u32 %v293, 16
    %v353 = vor.u32 %v351, %v349
    %v355 = vshll.u32 %v294, 16
    %v357 = vrot.slane %v355, 1
    %v358 = vsel %vm330, %v353, %v357
    %v359 = vshrl.u32 %v294, 16
    %v361 = vor.u32 %v359, %v357
    %v363 = vshll.u32 %v295, 16
    %v365 = vrot.slane %v363, 1
    %v366 = vsel %vm330, %v361, %v365
    %v367 = vshrl.u32 %v295, 16
    %v369 = vor.u32 %v367, %v365
    %v371 = vshll.u32 %v296, 16
    %v373 = vrot.slane %v371, 1
    %v374 = vsel %vm330, %v369, %v373
    %v375 = vshrl.u32 %v296, 16
    %v377 = vor.u32 %v375, %v373
    %v379 = vshll.u32 %v297, 16
    %v381 = vrot.slane %v379, 1
    %v382 = vsel %vm330, %v377, %v381
    %v383 = vshrl.u32 %v297, 16
    %v385 = vor.u32 %v383, %v381
    %v387 = vshll.u32 %v298, 16
    %v389 = vrot.slane %v387, 1
    %v390 = vsel %vm330, %v385, %v389
    %v391 = vshrl.u32 %v298, 16
    %v393 = vor.u32 %v391, %v389
    %v395 = vshll.u32 %v299, 16
    %v397 = vrot.slane %v395, 1
    %v398 = vsel %vm330, %v393, %v397
    %v399 = vshrl.u32 %v299, 16
    %v401 = vor.u32 %v399, %v397
    %v403 = vshll.u32 %v300, 16
    %v405 = vrot.slane %v403, 1
    %v406 = vsel %vm330, %v401, %v405
    %v407 = vshrl.u32 %v300, 16
    %v409 = vor.u32 %v407, %v405
    %v411 = vshll.u32 %v301, 16
    %v413 = vrot.slane %v411, 1
    %v414 = vsel %vm330, %v409, %v413
    %v415 = vshrl.u32 %v301, 16
    %v417 = vor.u32 %v415, %v413
    %v419 = vshll.u32 %v302, 16
    %v421 = vrot.slane %v419, 1
    %v422 = vsel %vm330, %v417, %v421
    %v423 = vshrl.u32 %v302, 16
    %v425 = vor.u32 %v423, %v421
    %v427 = vshll.u32 %v303, 16
    %v429 = vrot.slane %v427, 1
    %v430 = vsel %vm330, %v425, %v429
    %v431 = vshrl.u32 %v303, 16
    %v433 = vor.u32 %v431, %v429
    %v435 = vshll.u32 %v304, 16
    %v437 = vrot.slane %v435, 1
    %v438 = vsel %vm330, %v433, %v437
    %v439 = vshrl.u32 %v304, 16
    %v441 = vor.u32 %v439, %v437
    %v443 = vshll.u32 %v305, 16
    %v445 = vrot.slane %v443, 1
    %v446 = vsel %vm330, %v441, %v445
    %v447 = vshrl.u32 %v305, 16
    %v449 = vor.u32 %v447, %v445
    %v451 = vshll.u32 %v306, 16
    %v453 = vrot.slane %v451, 1
    %v454 = vsel %vm330, %v449, %v453
    %v455 = vshrl.u32 %v306, 16
    %v457 = vor.u32 %v455, %v453
    %v459 = vshll.u32 %v307, 16
    %v461 = vrot.slane %v459, 1
    %v462 = vsel %vm330, %v457, %v461
    %v463 = vshrl.u32 %v307, 16
    %v465 = vor.u32 %v463, %v461
    %v467 = vshll.u32 %v308, 16
    %v469 = vrot.slane %v467, 1
    %v470 = vsel %vm330, %v465, %v469
    %v471 = vshrl.u32 %v308, 16
    %v473 = vor.u32 %v471, %v469
    %v475 = vshll.u32 %v309, 16
    %v477 = vrot.slane %v475, 1
    %v478 = vsel %vm330, %v473, %v477
    %v479 = vshrl.u32 %v309, 16
    %v481 = vor.u32 %v479, %v477
    %v483 = vshll.u32 %v310, 16
    %v485 = vrot.slane %v483, 1
    %v486 = vsel %vm330, %v481, %v485
    %v487 = vshrl.u32 %v310, 16
    %v489 = vor.u32 %v487, %v485
    %v491 = vshll.u32 %v311, 16
    %v493 = vrot.slane %v491, 1
    %v494 = vsel %vm330, %v489, %v493
    %v495 = vshrl.u32 %v311, 16
    %v497 = vor.u32 %v495, %v493
    %v499 = vshll.u32 %v312, 16
    %v501 = vrot.slane %v499, 1
    %v502 = vsel %vm330, %v497, %v501
    %v503 = vshrl.u32 %v312, 16
    %v505 = vor.u32 %v503, %v501
    %v507 = vshll.u32 %v313, 16
    %v509 = vrot.slane %v507, 1
    %v510 = vsel %vm330, %v505, %v509
    %v511 = vshrl.u32 %v313, 16
    %v513 = vor.u32 %v511, %v509
    %v515 = vshll.u32 %v314, 16
    %v517 = vrot.slane %v515, 1
    %v518 = vsel %vm330, %v513, %v517
    %v519 = vshrl.u32 %v314, 16
    %v521 = vor.u32 %v519, %v517
    %v523 = vshll.u32 %v315, 16
    %v525 = vrot.slane %v523, 1
    %v526 = vsel %vm330, %v521, %v525
    %v527 = vshrl.u32 %v315, 16
    %v529 = vor.u32 %v527, %v525
    %v531 = vshll.u32 %v316, 16
    %v533 = vrot.slane %v531, 1
    %v534 = vsel %vm330, %v529, %v533
    %v535 = vshrl.u32 %v316, 16
    %v537 = vor.u32 %v535, %v533
    %v539 = vshll.u32 %v317, 16
    %v541 = vrot.slane %v539, 1
    %v542 = vsel %vm330, %v537, %v541
    %v543 = vshrl.u32 %v317, 16
    %v545 = vor.u32 %v543, %v541
    %v547 = vshll.u32 %v318, 16
    %v549 = vrot.slane %v547, 1
    %v550 = vsel %vm330, %v545, %v549
    %v551 = vshrl.u32 %v318, 16
    %v553 = vor.u32 %v551, %v549
    %v555 = vshll.u32 %v319, 16
    %v557 = vrot.slane %v555, 1
    %v558 = vsel %vm330, %v553, %v557
    %v559 = vshrl.u32 %v319, 16
    %v561 = vor.u32 %v559, %v557
    %v563 = vshll.u32 %v320, 16
    %v565 = vrot.slane %v563, 1
    %v566 = vsel %vm330, %v561, %v565
    %v567 = vshrl.u32 %v320, 16
    %v569 = vor.u32 %v567, %v565
    %v571 = vshll.u32 %v321, 16
    %v573 = vrot.slane %v571, 1
    %v574 = vsel %vm330, %v569, %v573
    %v575 = vshrl.u32 %v321, 16
    %v577 = vor.u32 %v575, %v573
    %v579 = vshll.u32 %v322, 16
    %v581 = vrot.slane %v579, 1
    %v582 = vsel %vm330, %v577, %v581
    %v583 = vshrl.u32 %v322, 16
    %v585 = vor.u32 %v583, %v581
    %v587 = vshll.u32 %v323, 16
    %v589 = vrot.slane %v587, 1
    %v590 = vsel %vm330, %v585, %v589
    %v591 = vshrl.u32 %v323, 16
    %v593 = vor.u32 %v591, %v589
    %v595 = vshll.u32 %v324, 16
    %v597 = vrot.slane %v595, 1
    %v598 = vsel %vm330, %v593, %v597
    %v599 = vshrl.u32 %v324, 16
    %v601 = vor.u32 %v599, %v597
    %v603 = vshll.u32 %v325, 16
    %v605 = vrot.slane %v603, 1
    %v606 = vsel %vm330, %v601, %v605
    %v607 = vshrl.u32 %v325, 16
    %v609 = vor.u32 %v607, %v605
    %v611 = vshll.u32 %v326, 16
    %v613 = vrot.slane %v611, 1
    %v614 = vsel %vm330, %v609, %v613
    %v615 = vshrl.u32 %v326, 16
    %v617 = vor.u32 %v615, %v613
    %v619 = vshll.u32 %v327, 16
    %v621 = vrot.slane %v619, 1
    %v622 = vsel %vm330, %v617, %v621
    %v623 = vshrl.u32 %v327, 16
    %v625 = vor.u32 %v623, %v621
    %v627 = vshll.u32 %v328, 16
    %v629 = vrot.slane %v627, 1
    %v630 = vsel %vm330, %v625, %v629
    %v631 = vshrl.u32 %v328, 16
    %v633 = vor.u32 %v631, %v629
    %v635 = vshll.u32 %v329, 16
    %v637 = vrot.slane %v635, 1
    %v638 = vsel %vm330, %v633, %v637
    %v639 = vshrl.u32 %v329, 16
    %v641 = vor.u32 %v639, %v637
    %vm642 = vcmask 31744
    %v644 = vsel %vm642, %v342, 0
    %v647 = vsel %vm642, %v350, 0
    %v650 = vsel %vm642, %v358, 0
    %v653 = vsel %vm642, %v366, 0
    %v656 = vsel %vm642, %v374, 0
    %v659 = vsel %vm642, %v382, 0
    %v662 = vsel %vm642, %v390, 0
    %v665 = vsel %vm642, %v398, 0
    %v668 = vsel %vm642, %v406, 0
    %v671 = vsel %vm642, %v414, 0
    %v674 = vsel %vm642, %v422, 0
    %v677 = vsel %vm642, %v430, 0
    %v680 = vsel %vm642, %v438, 0
    %v683 = vsel %vm642, %v446, 0
    %v686 = vsel %vm642, %v454, 0
    %v689 = vsel %vm642, %v462, 0
    %v692 = vsel %vm642, %v470, 0
    %v695 = vsel %vm642, %v478, 0
    %v698 = vsel %vm642, %v486, 0
    %v701 = vsel %vm642, %v494, 0
    %v704 = vsel %vm642, %v502, 0
    %v707 = vsel %vm642, %v510, 0
    %v710 = vsel %vm642, %v518, 0
    %v713 = vsel %vm642, %v526, 0
    %v716 = vsel %vm642, %v534, 0
    %v719 = vsel %vm642, %v542, 0
    %v722 = vsel %vm642, %v550, 0
    %v725 = vsel %vm642, %v558, 0
    %v728 = vsel %vm642, %v566, 0
    %v731 = vsel %vm642, %v574, 0
    %v734 = vsel %vm642, %v582, 0
    %v737 = vsel %vm642, %v590, 0
    %v740 = vsel %vm642, %v598, 0
    %v743 = vsel %vm642, %v606, 0
    %v746 = vsel %vm642, %v614, 0
    %v749 = vsel %vm642, %v622, 0
    %v752 = vsel %vm642, %v630, 0
    %v755 = vsel %vm642, %v638, 0
    %v758 = vsel %vm642, %v641, 0
    %vm760 = vcmask 1041408
    %v762 = vsel %vm760, %v136, 0
    %764 = vmatpush.bf16.msra.mxu0 0
    %765 = vmatpush.bf16.msra.mxu0 0
    %766 = vmatpush.bf16.msra.mxu0 0
    %767 = vmatpush.bf16.msra.mxu0 0
    %768 = vmatpush.bf16.msra.mxu0 0
    %769 = vmatpush.bf16.msra.mxu0 0
    %770 = vmatpush.bf16.msra.mxu0 0
    %771 = vmatpush.bf16.msra.mxu0 %v762
    %772 = vmatmul.bf16.gmra.mxu0 %v644
    %v773 = vpop.f32.mrf.mxu0
    %v774 = vadd.f32 0.0, %v773
    %v775 = vpop.f32.mrf.mxu0
    %v776 = vadd.f32 0.0, %v775
    %777 = vmatmul.bf16.gmra.mxu0 %v647
    %v778 = vpop.f32.mrf.mxu0
    %v779 = vadd.f32 0.0, %v778
    %v780 = vpop.f32.mrf.mxu0
    %v781 = vadd.f32 0.0, %v780
    %782 = vmatmul.bf16.gmra.mxu0 %v650
    %v783 = vpop.f32.mrf.mxu0
    %v784 = vadd.f32 0.0, %v783
    %v785 = vpop.f32.mrf.mxu0
    %v786 = vadd.f32 0.0, %v785
    %787 = vmatmul.bf16.gmra.mxu0 %v653
    %v788 = vpop.f32.mrf.mxu0
    %v789 = vadd.f32 0.0, %v788
    %v790 = vpop.f32.mrf.mxu0
    %v791 = vadd.f32 0.0, %v790
    %792 = vmatmul.bf16.gmra.mxu0 %v656
    %v793 = vpop.f32.mrf.mxu0
    %v794 = vadd.f32 0.0, %v793
    %v795 = vpop.f32.mrf.mxu0
    %v796 = vadd.f32 0.0, %v795
    %797 = vmatmul.bf16.gmra.mxu0 %v659
    %v798 = vpop.f32.mrf.mxu0
    %v799 = vadd.f32 0.0, %v798
    %v800 = vpop.f32.mrf.mxu0
    %v801 = vadd.f32 0.0, %v800
    %802 = vmatmul.bf16.gmra.mxu0 %v662
    %v803 = vpop.f32.mrf.mxu0
    %v804 = vadd.f32 0.0, %v803
    %v805 = vpop.f32.mrf.mxu0
    %v806 = vadd.f32 0.0, %v805
    %807 = vmatmul.bf16.gmra.mxu0 %v665
    %v808 = vpop.f32.mrf.mxu0
    %v809 = vadd.f32 0.0, %v808
    %v810 = vpop.f32.mrf.mxu0
    %v811 = vadd.f32 0.0, %v810
    %812 = vmatmul.bf16.gmra.mxu0 %v668
    %v813 = vpop.f32.mrf.mxu0
    %v814 = vadd.f32 0.0, %v813
    %v815 = vpop.f32.mrf.mxu0
    %v816 = vadd.f32 0.0, %v815
    %817 = vmatmul.bf16.gmra.mxu0 %v671
    %v818 = vpop.f32.mrf.mxu0
    %v819 = vadd.f32 0.0, %v818
    %v820 = vpop.f32.mrf.mxu0
    %v821 = vadd.f32 0.0, %v820
    %822 = vmatmul.bf16.gmra.mxu0 %v674
    %v823 = vpop.f32.mrf.mxu0
    %v824 = vadd.f32 0.0, %v823
    %v825 = vpop.f32.mrf.mxu0
    %v826 = vadd.f32 0.0, %v825
    %827 = vmatmul.bf16.gmra.mxu0 %v677
    %v828 = vpop.f32.mrf.mxu0
    %v829 = vadd.f32 0.0, %v828
    %v830 = vpop.f32.mrf.mxu0
    %v831 = vadd.f32 0.0, %v830
    %832 = vmatmul.bf16.gmra.mxu0 %v680
    %v833 = vpop.f32.mrf.mxu0
    %v834 = vadd.f32 0.0, %v833
    %v835 = vpop.f32.mrf.mxu0
    %v836 = vadd.f32 0.0, %v835
    %837 = vmatmul.bf16.gmra.mxu0 %v683
    %v838 = vpop.f32.mrf.mxu0
    %v839 = vadd.f32 0.0, %v838
    %v840 = vpop.f32.mrf.mxu0
    %v841 = vadd.f32 0.0, %v840
    %842 = vmatmul.bf16.gmra.mxu0 %v686
    %v843 = vpop.f32.mrf.mxu0
    %v844 = vadd.f32 0.0, %v843
    %v845 = vpop.f32.mrf.mxu0
    %v846 = vadd.f32 0.0, %v845
    %847 = vmatmul.bf16.gmra.mxu0 %v689
    %v848 = vpop.f32.mrf.mxu0
    %v849 = vadd.f32 0.0, %v848
    %v850 = vpop.f32.mrf.mxu0
    %v851 = vadd.f32 0.0, %v850
    %852 = vmatmul.bf16.gmra.mxu0 %v692
    %v853 = vpop.f32.mrf.mxu0
    %v854 = vadd.f32 0.0, %v853
    %v855 = vpop.f32.mrf.mxu0
    %v856 = vadd.f32 0.0, %v855
    %857 = vmatmul.bf16.gmra.mxu0 %v695
    %v858 = vpop.f32.mrf.mxu0
    %v859 = vadd.f32 0.0, %v858
    %v860 = vpop.f32.mrf.mxu0
    %v861 = vadd.f32 0.0, %v860
    %862 = vmatmul.bf16.gmra.mxu0 %v698
    %v863 = vpop.f32.mrf.mxu0
    %v864 = vadd.f32 0.0, %v863
    %v865 = vpop.f32.mrf.mxu0
    %v866 = vadd.f32 0.0, %v865
    %867 = vmatmul.bf16.gmra.mxu0 %v701
    %v868 = vpop.f32.mrf.mxu0
    %v869 = vadd.f32 0.0, %v868
    %v870 = vpop.f32.mrf.mxu0
    %v871 = vadd.f32 0.0, %v870
    %872 = vmatmul.bf16.gmra.mxu0 %v704
    %v873 = vpop.f32.mrf.mxu0
    %v874 = vadd.f32 0.0, %v873
    %v875 = vpop.f32.mrf.mxu0
    %v876 = vadd.f32 0.0, %v875
    %877 = vmatmul.bf16.gmra.mxu0 %v707
    %v878 = vpop.f32.mrf.mxu0
    %v879 = vadd.f32 0.0, %v878
    %v880 = vpop.f32.mrf.mxu0
    %v881 = vadd.f32 0.0, %v880
    %882 = vmatmul.bf16.gmra.mxu0 %v710
    %v883 = vpop.f32.mrf.mxu0
    %v884 = vadd.f32 0.0, %v883
    %v885 = vpop.f32.mrf.mxu0
    %v886 = vadd.f32 0.0, %v885
    %887 = vmatmul.bf16.gmra.mxu0 %v713
    %v888 = vpop.f32.mrf.mxu0
    %v889 = vadd.f32 0.0, %v888
    %v890 = vpop.f32.mrf.mxu0
    %v891 = vadd.f32 0.0, %v890
    %892 = vmatmul.bf16.gmra.mxu0 %v716
    %v893 = vpop.f32.mrf.mxu0
    %v894 = vadd.f32 0.0, %v893
    %v895 = vpop.f32.mrf.mxu0
    %v896 = vadd.f32 0.0, %v895
    %897 = vmatmul.bf16.gmra.mxu0 %v719
    %v898 = vpop.f32.mrf.mxu0
    %v899 = vadd.f32 0.0, %v898
    %v900 = vpop.f32.mrf.mxu0
    %v901 = vadd.f32 0.0, %v900
    %902 = vmatmul.bf16.gmra.mxu0 %v722
    %v903 = vpop.f32.mrf.mxu0
    %v904 = vadd.f32 0.0, %v903
    %v905 = vpop.f32.mrf.mxu0
    %v906 = vadd.f32 0.0, %v905
    %907 = vmatmul.bf16.gmra.mxu0 %v725
    %v908 = vpop.f32.mrf.mxu0
    %v909 = vadd.f32 0.0, %v908
    %v910 = vpop.f32.mrf.mxu0
    %v911 = vadd.f32 0.0, %v910
    %912 = vmatmul.bf16.gmra.mxu0 %v728
    %v913 = vpop.f32.mrf.mxu0
    %v914 = vadd.f32 0.0, %v913
    %v915 = vpop.f32.mrf.mxu0
    %v916 = vadd.f32 0.0, %v915
    %917 = vmatmul.bf16.gmra.mxu0 %v731
    %v918 = vpop.f32.mrf.mxu0
    %v919 = vadd.f32 0.0, %v918
    %v920 = vpop.f32.mrf.mxu0
    %v921 = vadd.f32 0.0, %v920
    %922 = vmatmul.bf16.gmra.mxu0 %v734
    %v923 = vpop.f32.mrf.mxu0
    %v924 = vadd.f32 0.0, %v923
    %v925 = vpop.f32.mrf.mxu0
    %v926 = vadd.f32 0.0, %v925
    %927 = vmatmul.bf16.gmra.mxu0 %v737
    %v928 = vpop.f32.mrf.mxu0
    %v929 = vadd.f32 0.0, %v928
    %v930 = vpop.f32.mrf.mxu0
    %v931 = vadd.f32 0.0, %v930
    %932 = vmatmul.bf16.gmra.mxu0 %v740
    %v933 = vpop.f32.mrf.mxu0
    %v934 = vadd.f32 0.0, %v933
    %v935 = vpop.f32.mrf.mxu0
    %v936 = vadd.f32 0.0, %v935
    %937 = vmatmul.bf16.gmra.mxu0 %v743
    %v938 = vpop.f32.mrf.mxu0
    %v939 = vadd.f32 0.0, %v938
    %v940 = vpop.f32.mrf.mxu0
    %v941 = vadd.f32 0.0, %v940
    %942 = vmatmul.bf16.gmra.mxu0 %v746
    %v943 = vpop.f32.mrf.mxu0
    %v944 = vadd.f32 0.0, %v943
    %v945 = vpop.f32.mrf.mxu0
    %v946 = vadd.f32 0.0, %v945
    %947 = vmatmul.bf16.gmra.mxu0 %v749
    %v948 = vpop.f32.mrf.mxu0
    %v949 = vadd.f32 0.0, %v948
    %v950 = vpop.f32.mrf.mxu0
    %v951 = vadd.f32 0.0, %v950
    %952 = vmatmul.bf16.gmra.mxu0 %v752
    %v953 = vpop.f32.mrf.mxu0
    %v954 = vadd.f32 0.0, %v953
    %v955 = vpop.f32.mrf.mxu0
    %v956 = vadd.f32 0.0, %v955
    %957 = vmatmul.bf16.gmra.mxu0 %v755
    %v958 = vpop.f32.mrf.mxu0
    %v959 = vadd.f32 0.0, %v958
    %v960 = vpop.f32.mrf.mxu0
    %v961 = vadd.f32 0.0, %v960
    %962 = vmatmul.bf16.gmra.mxu0 %v758
    %v963 = vpop.f32.mrf.mxu0
    %v964 = vadd.f32 0.0, %v963
    %v965 = vpop.f32.mrf.mxu0
    %966 = vdwg.mxu0
    %v968 = vunpack.c.l.b16 %v132
    %v969 = vpack.c.b16 %v968, %v968
    %v970 = vsel %vm642, %v291, 0
    %v972 = vsel %vm642, %v292, 0
    %v974 = vsel %vm642, %v293, 0
    %v976 = vsel %vm642, %v294, 0
    %v978 = vsel %vm642, %v295, 0
    %v980 = vsel %vm642, %v296, 0
    %v982 = vsel %vm642, %v297, 0
    %v984 = vsel %vm642, %v298, 0
    %v986 = vsel %vm642, %v299, 0
    %v988 = vsel %vm642, %v300, 0
    %v990 = vsel %vm642, %v301, 0
    %v992 = vsel %vm642, %v302, 0
    %v994 = vsel %vm642, %v303, 0
    %v996 = vsel %vm642, %v304, 0
    %v998 = vsel %vm642, %v305, 0
    %v1000 = vsel %vm642, %v306, 0
    %v1002 = vsel %vm642, %v307, 0
    %v1004 = vsel %vm642, %v308, 0
    %v1006 = vsel %vm642, %v309, 0
    %v1008 = vsel %vm642, %v310, 0
    %v1010 = vsel %vm642, %v311, 0
    %v1012 = vsel %vm642, %v312, 0
    %v1014 = vsel %vm642, %v313, 0
    %v1016 = vsel %vm642, %v314, 0
    %v1018 = vsel %vm642, %v315, 0
    %v1020 = vsel %vm642, %v316, 0
    %v1022 = vsel %vm642, %v317, 0
    %v1024 = vsel %vm642, %v318, 0
    %v1026 = vsel %vm642, %v319, 0
    %v1028 = vsel %vm642, %v320, 0
    %v1030 = vsel %vm642, %v321, 0
    %v1032 = vsel %vm642, %v322, 0
    %v1034 = vsel %vm642, %v323, 0
    %v1036 = vsel %vm642, %v324, 0
    %v1038 = vsel %vm642, %v325, 0
    %v1040 = vsel %vm642, %v326, 0
    %v1042 = vsel %vm642, %v327, 0
    %v1044 = vsel %vm642, %v328, 0
    %v1047 = vsel %vm642, %v969, 0
    %v1050 = vsel %vm760, %v133, 0
    %1052 = vmatpush.bf16.msra.mxu0 0
    %1053 = vmatpush.bf16.msra.mxu0 0
    %1054 = vmatpush.bf16.msra.mxu0 0
    %1055 = vmatpush.bf16.msra.mxu0 0
    %1056 = vmatpush.bf16.msra.mxu0 0
    %1057 = vmatpush.bf16.msra.mxu0 0
    %1058 = vmatpush.bf16.msra.mxu0 0
    %1059 = vmatpush.bf16.msra.mxu0 %v1050
    %1060 = vmatmul.bf16.gmra.mxu0 %v970
    %v1061 = vpop.f32.mrf.mxu0
    %v1062 = vadd.f32 %v774, %v1061
    %v1063 = vpop.f32.mrf.mxu0
    %v1064 = vadd.f32 %v776, %v1063
    %1065 = vmatmul.bf16.gmra.mxu0 %v972
    %v1066 = vpop.f32.mrf.mxu0
    %v1067 = vadd.f32 %v779, %v1066
    %v1068 = vpop.f32.mrf.mxu0
    %v1069 = vadd.f32 %v781, %v1068
    %1070 = vmatmul.bf16.gmra.mxu0 %v974
    %v1071 = vpop.f32.mrf.mxu0
    %v1072 = vadd.f32 %v784, %v1071
    %v1073 = vpop.f32.mrf.mxu0
    %v1074 = vadd.f32 %v786, %v1073
    %1075 = vmatmul.bf16.gmra.mxu0 %v976
    %v1076 = vpop.f32.mrf.mxu0
    %v1077 = vadd.f32 %v789, %v1076
    %v1078 = vpop.f32.mrf.mxu0
    %v1079 = vadd.f32 %v791, %v1078
    %1080 = vmatmul.bf16.gmra.mxu0 %v978
    %v1081 = vpop.f32.mrf.mxu0
    %v1082 = vadd.f32 %v794, %v1081
    %v1083 = vpop.f32.mrf.mxu0
    %v1084 = vadd.f32 %v796, %v1083
    %1085 = vmatmul.bf16.gmra.mxu0 %v980
    %v1086 = vpop.f32.mrf.mxu0
    %v1087 = vadd.f32 %v799, %v1086
    %v1088 = vpop.f32.mrf.mxu0
    %v1089 = vadd.f32 %v801, %v1088
    %1090 = vmatmul.bf16.gmra.mxu0 %v982
    %v1091 = vpop.f32.mrf.mxu0
    %v1092 = vadd.f32 %v804, %v1091
    %v1093 = vpop.f32.mrf.mxu0
    %v1094 = vadd.f32 %v806, %v1093
    %1095 = vmatmul.bf16.gmra.mxu0 %v984
    %v1096 = vpop.f32.mrf.mxu0
    %v1097 = vadd.f32 %v809, %v1096
    %v1098 = vpop.f32.mrf.mxu0
    %v1099 = vadd.f32 %v811, %v1098
    %1100 = vmatmul.bf16.gmra.mxu0 %v986
    %v1101 = vpop.f32.mrf.mxu0
    %v1102 = vadd.f32 %v814, %v1101
    %v1103 = vpop.f32.mrf.mxu0
    %v1104 = vadd.f32 %v816, %v1103
    %1105 = vmatmul.bf16.gmra.mxu0 %v988
    %v1106 = vpop.f32.mrf.mxu0
    %v1107 = vadd.f32 %v819, %v1106
    %v1108 = vpop.f32.mrf.mxu0
    %v1109 = vadd.f32 %v821, %v1108
    %1110 = vmatmul.bf16.gmra.mxu0 %v990
    %v1111 = vpop.f32.mrf.mxu0
    %v1112 = vadd.f32 %v824, %v1111
    %v1113 = vpop.f32.mrf.mxu0
    %v1114 = vadd.f32 %v826, %v1113
    %1115 = vmatmul.bf16.gmra.mxu0 %v992
    %v1116 = vpop.f32.mrf.mxu0
    %v1117 = vadd.f32 %v829, %v1116
    %v1118 = vpop.f32.mrf.mxu0
    %v1119 = vadd.f32 %v831, %v1118
    %1120 = vmatmul.bf16.gmra.mxu0 %v994
    %v1121 = vpop.f32.mrf.mxu0
    %v1122 = vadd.f32 %v834, %v1121
    %v1123 = vpop.f32.mrf.mxu0
    %v1124 = vadd.f32 %v836, %v1123
    %1125 = vmatmul.bf16.gmra.mxu0 %v996
    %v1126 = vpop.f32.mrf.mxu0
    %v1127 = vadd.f32 %v839, %v1126
    %v1128 = vpop.f32.mrf.mxu0
    %v1129 = vadd.f32 %v841, %v1128
    %1130 = vmatmul.bf16.gmra.mxu0 %v998
    %v1131 = vpop.f32.mrf.mxu0
    %v1132 = vadd.f32 %v844, %v1131
    %v1133 = vpop.f32.mrf.mxu0
    %v1134 = vadd.f32 %v846, %v1133
    %1135 = vmatmul.bf16.gmra.mxu0 %v1000
    %v1136 = vpop.f32.mrf.mxu0
    %v1137 = vadd.f32 %v849, %v1136
    %v1138 = vpop.f32.mrf.mxu0
    %v1139 = vadd.f32 %v851, %v1138
    %1140 = vmatmul.bf16.gmra.mxu0 %v1002
    %v1141 = vpop.f32.mrf.mxu0
    %v1142 = vadd.f32 %v854, %v1141
    %v1143 = vpop.f32.mrf.mxu0
    %v1144 = vadd.f32 %v856, %v1143
    %1145 = vmatmul.bf16.gmra.mxu0 %v1004
    %v1146 = vpop.f32.mrf.mxu0
    %v1147 = vadd.f32 %v859, %v1146
    %v1148 = vpop.f32.mrf.mxu0
    %v1149 = vadd.f32 %v861, %v1148
    %1150 = vmatmul.bf16.gmra.mxu0 %v1006
    %v1151 = vpop.f32.mrf.mxu0
    %v1152 = vadd.f32 %v864, %v1151
    %v1153 = vpop.f32.mrf.mxu0
    %v1154 = vadd.f32 %v866, %v1153
    %1155 = vmatmul.bf16.gmra.mxu0 %v1008
    %v1156 = vpop.f32.mrf.mxu0
    %v1157 = vadd.f32 %v869, %v1156
    %v1158 = vpop.f32.mrf.mxu0
    %v1159 = vadd.f32 %v871, %v1158
    %1160 = vmatmul.bf16.gmra.mxu0 %v1010
    %v1161 = vpop.f32.mrf.mxu0
    %v1162 = vadd.f32 %v874, %v1161
    %v1163 = vpop.f32.mrf.mxu0
    %v1164 = vadd.f32 %v876, %v1163
    %1165 = vmatmul.bf16.gmra.mxu0 %v1012
    %v1166 = vpop.f32.mrf.mxu0
    %v1167 = vadd.f32 %v879, %v1166
    %v1168 = vpop.f32.mrf.mxu0
    %v1169 = vadd.f32 %v881, %v1168
    %1170 = vmatmul.bf16.gmra.mxu0 %v1014
    %v1171 = vpop.f32.mrf.mxu0
    %v1172 = vadd.f32 %v884, %v1171
    %v1173 = vpop.f32.mrf.mxu0
    %v1174 = vadd.f32 %v886, %v1173
    %1175 = vmatmul.bf16.gmra.mxu0 %v1016
    %v1176 = vpop.f32.mrf.mxu0
    %v1177 = vadd.f32 %v889, %v1176
    %v1178 = vpop.f32.mrf.mxu0
    %v1179 = vadd.f32 %v891, %v1178
    %1180 = vmatmul.bf16.gmra.mxu0 %v1018
    %v1181 = vpop.f32.mrf.mxu0
    %v1182 = vadd.f32 %v894, %v1181
    %v1183 = vpop.f32.mrf.mxu0
    %v1184 = vadd.f32 %v896, %v1183
    %1185 = vmatmul.bf16.gmra.mxu0 %v1020
    %v1186 = vpop.f32.mrf.mxu0
    %v1187 = vadd.f32 %v899, %v1186
    %v1188 = vpop.f32.mrf.mxu0
    %v1189 = vadd.f32 %v901, %v1188
    %1190 = vmatmul.bf16.gmra.mxu0 %v1022
    %v1191 = vpop.f32.mrf.mxu0
    %v1192 = vadd.f32 %v904, %v1191
    %v1193 = vpop.f32.mrf.mxu0
    %v1194 = vadd.f32 %v906, %v1193
    %1195 = vmatmul.bf16.gmra.mxu0 %v1024
    %v1196 = vpop.f32.mrf.mxu0
    %v1197 = vadd.f32 %v909, %v1196
    %v1198 = vpop.f32.mrf.mxu0
    %v1199 = vadd.f32 %v911, %v1198
    %1200 = vmatmul.bf16.gmra.mxu0 %v1026
    %v1201 = vpop.f32.mrf.mxu0
    %v1202 = vadd.f32 %v914, %v1201
    %v1203 = vpop.f32.mrf.mxu0
    %v1204 = vadd.f32 %v916, %v1203
    %1205 = vmatmul.bf16.gmra.mxu0 %v1028
    %v1206 = vpop.f32.mrf.mxu0
    %v1207 = vadd.f32 %v919, %v1206
    %v1208 = vpop.f32.mrf.mxu0
    %v1209 = vadd.f32 %v921, %v1208
    %1210 = vmatmul.bf16.gmra.mxu0 %v1030
    %v1211 = vpop.f32.mrf.mxu0
    %v1212 = vadd.f32 %v924, %v1211
    %v1213 = vpop.f32.mrf.mxu0
    %v1214 = vadd.f32 %v926, %v1213
    %1215 = vmatmul.bf16.gmra.mxu0 %v1032
    %v1216 = vpop.f32.mrf.mxu0
    %v1217 = vadd.f32 %v929, %v1216
    %v1218 = vpop.f32.mrf.mxu0
    %v1219 = vadd.f32 %v931, %v1218
    %1220 = vmatmul.bf16.gmra.mxu0 %v1034
    %v1221 = vpop.f32.mrf.mxu0
    %v1222 = vadd.f32 %v934, %v1221
    %v1223 = vpop.f32.mrf.mxu0
    %v1224 = vadd.f32 %v936, %v1223
    %1225 = vmatmul.bf16.gmra.mxu0 %v1036
    %v1226 = vpop.f32.mrf.mxu0
    %v1227 = vadd.f32 %v939, %v1226
    %v1228 = vpop.f32.mrf.mxu0
    %v1229 = vadd.f32 %v941, %v1228
    %1230 = vmatmul.bf16.gmra.mxu0 %v1038
    %v1231 = vpop.f32.mrf.mxu0
    %v1232 = vadd.f32 %v944, %v1231
    %v1233 = vpop.f32.mrf.mxu0
    %v1234 = vadd.f32 %v946, %v1233
    %1235 = vmatmul.bf16.gmra.mxu0 %v1040
    %v1236 = vpop.f32.mrf.mxu0
    %v1237 = vadd.f32 %v949, %v1236
    %v1238 = vpop.f32.mrf.mxu0
    %v1239 = vadd.f32 %v951, %v1238
    %1240 = vmatmul.bf16.gmra.mxu0 %v1042
    %v1241 = vpop.f32.mrf.mxu0
    %v1242 = vadd.f32 %v954, %v1241
    %v1243 = vpop.f32.mrf.mxu0
    %v1244 = vadd.f32 %v956, %v1243
    %1245 = vmatmul.bf16.gmra.mxu0 %v1044
    %v1246 = vpop.f32.mrf.mxu0
    %v1247 = vadd.f32 %v959, %v1246
    %v1248 = vpop.f32.mrf.mxu0
    %v1249 = vadd.f32 %v961, %v1248
    %1250 = vmatmul.bf16.gmra.mxu0 %v1047
    %v1251 = vpop.f32.mrf.mxu0
    %v1252 = vadd.f32 %v964, %v1251
    %v1253 = vpop.f32.mrf.mxu0
    %1254 = vdwg.mxu0
    %v1255 = vld [vmem:[%s0] sm:$0xe]
    %s1256 = scalar_lea.vmem %s1, 4
    %v1257 = vld [vmem:[%s1256] sm:$0x3]
    %v1259 = vunpack.c.l.b16 %v1255
    %v1260 = vpack.c.b16 %v215, %v1259
    %vm1261 = vcmask 1046528
    %v1262 = vrot.slane %v1260, 1
    %v1263 = vrot.slane %v292, 1
    %v1264 = vsel %vm1261, %v1262, %v1263
    %v1265 = vrot.slane %v293, 1
    %v1266 = vsel %vm1261, %v1263, %v1265
    %v1267 = vrot.slane %v294, 1
    %v1268 = vsel %vm1261, %v1265, %v1267
    %v1269 = vrot.slane %v295, 1
    %v1270 = vsel %vm1261, %v1267, %v1269
    %v1271 = vrot.slane %v296, 1
    %v1272 = vsel %vm1261, %v1269, %v1271
    %v1273 = vrot.slane %v297, 1
    %v1274 = vsel %vm1261, %v1271, %v1273
    %v1275 = vrot.slane %v298, 1
    %v1276 = vsel %vm1261, %v1273, %v1275
    %v1277 = vrot.slane %v299, 1
    %v1278 = vsel %vm1261, %v1275, %v1277
    %v1279 = vrot.slane %v300, 1
    %v1280 = vsel %vm1261, %v1277, %v1279
    %v1281 = vrot.slane %v301, 1
    %v1282 = vsel %vm1261, %v1279, %v1281
    %v1283 = vrot.slane %v302, 1
    %v1284 = vsel %vm1261, %v1281, %v1283
    %v1285 = vrot.slane %v303, 1
    %v1286 = vsel %vm1261, %v1283, %v1285
    %v1287 = vrot.slane %v304, 1
    %v1288 = vsel %vm1261, %v1285, %v1287
    %v1289 = vrot.slane %v305, 1
    %v1290 = vsel %vm1261, %v1287, %v1289
    %v1291 = vrot.slane %v306, 1
    %v1292 = vsel %vm1261, %v1289, %v1291
    %v1293 = vrot.slane %v307, 1
    %v1294 = vsel %vm1261, %v1291, %v1293
    %v1295 = vrot.slane %v308, 1
    %v1296 = vsel %vm1261, %v1293, %v1295
    %v1297 = vrot.slane %v309, 1
    %v1298 = vsel %vm1261, %v1295, %v1297
    %v1299 = vrot.slane %v310, 1
    %v1300 = vsel %vm1261, %v1297, %v1299
    %v1301 = vrot.slane %v311, 1
    %v1302 = vsel %vm1261, %v1299, %v1301
    %v1303 = vrot.slane %v312, 1
    %v1304 = vsel %vm1261, %v1301, %v1303
    %v1305 = vrot.slane %v313, 1
    %v1306 = vsel %vm1261, %v1303, %v1305
    %v1307 = vrot.slane %v314, 1
    %v1308 = vsel %vm1261, %v1305, %v1307
    %v1309 = vrot.slane %v315, 1
    %v1310 = vsel %vm1261, %v1307, %v1309
    %v1311 = vrot.slane %v316, 1
    %v1312 = vsel %vm1261, %v1309, %v1311
    %v1313 = vrot.slane %v317, 1
    %v1314 = vsel %vm1261, %v1311, %v1313
    %v1315 = vrot.slane %v318, 1
    %v1316 = vsel %vm1261, %v1313, %v1315
    %v1317 = vrot.slane %v319, 1
    %v1318 = vsel %vm1261, %v1315, %v1317
    %v1319 = vrot.slane %v320, 1
    %v1320 = vsel %vm1261, %v1317, %v1319
    %v1321 = vrot.slane %v321, 1
    %v1322 = vsel %vm1261, %v1319, %v1321
    %v1323 = vrot.slane %v322, 1
    %v1324 = vsel %vm1261, %v1321, %v1323
    %v1325 = vrot.slane %v323, 1
    %v1326 = vsel %vm1261, %v1323, %v1325
    %v1327 = vrot.slane %v324, 1
    %v1328 = vsel %vm1261, %v1325, %v1327
    %v1329 = vrot.slane %v325, 1
    %v1330 = vsel %vm1261, %v1327, %v1329
    %v1331 = vrot.slane %v326, 1
    %v1332 = vsel %vm1261, %v1329, %v1331
    %v1333 = vrot.slane %v327, 1
    %v1334 = vsel %vm1261, %v1331, %v1333
    %v1335 = vrot.slane %v328, 1
    %v1336 = vsel %vm1261, %v1333, %v1335
    %v1337 = vrot.slane %v329, 1
    %v1338 = vsel %vm1261, %v1335, %v1337
    %v1340 = vsel %vm642, %v1264, 0
    %v1343 = vsel %vm642, %v1266, 0
    %v1346 = vsel %vm642, %v1268, 0
    %v1349 = vsel %vm642, %v1270, 0
    %v1352 = vsel %vm642, %v1272, 0
    %v1355 = vsel %vm642, %v1274, 0
    %v1358 = vsel %vm642, %v1276, 0
    %v1361 = vsel %vm642, %v1278, 0
    %v1364 = vsel %vm642, %v1280, 0
    %v1367 = vsel %vm642, %v1282, 0
    %v1370 = vsel %vm642, %v1284, 0
    %v1373 = vsel %vm642, %v1286, 0
    %v1376 = vsel %vm642, %v1288, 0
    %v1379 = vsel %vm642, %v1290, 0
    %v1382 = vsel %vm642, %v1292, 0
    %v1385 = vsel %vm642, %v1294, 0
    %v1388 = vsel %vm642, %v1296, 0
    %v1391 = vsel %vm642, %v1298, 0
    %v1394 = vsel %vm642, %v1300, 0
    %v1397 = vsel %vm642, %v1302, 0
    %v1400 = vsel %vm642, %v1304, 0
    %v1403 = vsel %vm642, %v1306, 0
    %v1406 = vsel %vm642, %v1308, 0
    %v1409 = vsel %vm642, %v1310, 0
    %v1412 = vsel %vm642, %v1312, 0
    %v1415 = vsel %vm642, %v1314, 0
    %v1418 = vsel %vm642, %v1316, 0
    %v1421 = vsel %vm642, %v1318, 0
    %v1424 = vsel %vm642, %v1320, 0
    %v1427 = vsel %vm642, %v1322, 0
    %v1430 = vsel %vm642, %v1324, 0
    %v1433 = vsel %vm642, %v1326, 0
    %v1436 = vsel %vm642, %v1328, 0
    %v1439 = vsel %vm642, %v1330, 0
    %v1442 = vsel %vm642, %v1332, 0
    %v1445 = vsel %vm642, %v1334, 0
    %v1448 = vsel %vm642, %v1336, 0
    %v1451 = vsel %vm642, %v1338, 0
    %v1454 = vsel %vm642, %v1337, 0
    %v1457 = vsel %vm760, %v1257, 0
    %1459 = vmatpush.bf16.msra.mxu0 0
    %1460 = vmatpush.bf16.msra.mxu0 0
    %1461 = vmatpush.bf16.msra.mxu0 0
    %1462 = vmatpush.bf16.msra.mxu0 0
    %1463 = vmatpush.bf16.msra.mxu0 0
    %1464 = vmatpush.bf16.msra.mxu0 0
    %1465 = vmatpush.bf16.msra.mxu0 0
    %1466 = vmatpush.bf16.msra.mxu0 %v1457
    %1467 = vmatmul.bf16.gmra.mxu0 %v1340
    %v1468 = vpop.f32.mrf.mxu0
    %v1469 = vadd.f32 0.0, %v1468
    %v1470 = vpop.f32.mrf.mxu0
    %v1471 = vadd.f32 0.0, %v1470
    %1472 = vmatmul.bf16.gmra.mxu0 %v1343
    %v1473 = vpop.f32.mrf.mxu0
    %v1474 = vadd.f32 0.0, %v1473
    %v1475 = vpop.f32.mrf.mxu0
    %v1476 = vadd.f32 0.0, %v1475
    %1477 = vmatmul.bf16.gmra.mxu0 %v1346
    %v1478 = vpop.f32.mrf.mxu0
    %v1479 = vadd.f32 0.0, %v1478
    %v1480 = vpop.f32.mrf.mxu0
    %v1481 = vadd.f32 0.0, %v1480
    %1482 = vmatmul.bf16.gmra.mxu0 %v1349
    %v1483 = vpop.f32.mrf.mxu0
    %v1484 = vadd.f32 0.0, %v1483
    %v1485 = vpop.f32.mrf.mxu0
    %v1486 = vadd.f32 0.0, %v1485
    %1487 = vmatmul.bf16.gmra.mxu0 %v1352
    %v1488 = vpop.f32.mrf.mxu0
    %v1489 = vadd.f32 0.0, %v1488
    %v1490 = vpop.f32.mrf.mxu0
    %v1491 = vadd.f32 0.0, %v1490
    %1492 = vmatmul.bf16.gmra.mxu0 %v1355
    %v1493 = vpop.f32.mrf.mxu0
    %v1494 = vadd.f32 0.0, %v1493
    %v1495 = vpop.f32.mrf.mxu0
    %v1496 = vadd.f32 0.0, %v1495
    %1497 = vmatmul.bf16.gmra.mxu0 %v1358
    %v1498 = vpop.f32.mrf.mxu0
    %v1499 = vadd.f32 0.0, %v1498
    %v1500 = vpop.f32.mrf.mxu0
    %v1501 = vadd.f32 0.0, %v1500
    %1502 = vmatmul.bf16.gmra.mxu0 %v1361
    %v1503 = vpop.f32.mrf.mxu0
    %v1504 = vadd.f32 0.0, %v1503
    %v1505 = vpop.f32.mrf.mxu0
    %v1506 = vadd.f32 0.0, %v1505
    %1507 = vmatmul.bf16.gmra.mxu0 %v1364
    %v1508 = vpop.f32.mrf.mxu0
    %v1509 = vadd.f32 0.0, %v1508
    %v1510 = vpop.f32.mrf.mxu0
    %v1511 = vadd.f32 0.0, %v1510
    %1512 = vmatmul.bf16.gmra.mxu0 %v1367
    %v1513 = vpop.f32.mrf.mxu0
    %v1514 = vadd.f32 0.0, %v1513
    %v1515 = vpop.f32.mrf.mxu0
    %v1516 = vadd.f32 0.0, %v1515
    %1517 = vmatmul.bf16.gmra.mxu0 %v1370
    %v1518 = vpop.f32.mrf.mxu0
    %v1519 = vadd.f32 0.0, %v1518
    %v1520 = vpop.f32.mrf.mxu0
    %v1521 = vadd.f32 0.0, %v1520
    %1522 = vmatmul.bf16.gmra.mxu0 %v1373
    %v1523 = vpop.f32.mrf.mxu0
    %v1524 = vadd.f32 0.0, %v1523
    %v1525 = vpop.f32.mrf.mxu0
    %v1526 = vadd.f32 0.0, %v1525
    %1527 = vmatmul.bf16.gmra.mxu0 %v1376
    %v1528 = vpop.f32.mrf.mxu0
    %v1529 = vadd.f32 0.0, %v1528
    %v1530 = vpop.f32.mrf.mxu0
    %v1531 = vadd.f32 0.0, %v1530
    %1532 = vmatmul.bf16.gmra.mxu0 %v1379
    %v1533 = vpop.f32.mrf.mxu0
    %v1534 = vadd.f32 0.0, %v1533
    %v1535 = vpop.f32.mrf.mxu0
    %v1536 = vadd.f32 0.0, %v1535
    %1537 = vmatmul.bf16.gmra.mxu0 %v1382
    %v1538 = vpop.f32.mrf.mxu0
    %v1539 = vadd.f32 0.0, %v1538
    %v1540 = vpop.f32.mrf.mxu0
    %v1541 = vadd.f32 0.0, %v1540
    %1542 = vmatmul.bf16.gmra.mxu0 %v1385
    %v1543 = vpop.f32.mrf.mxu0
    %v1544 = vadd.f32 0.0, %v1543
    %v1545 = vpop.f32.mrf.mxu0
    %v1546 = vadd.f32 0.0, %v1545
    %1547 = vmatmul.bf16.gmra.mxu0 %v1388
    %v1548 = vpop.f32.mrf.mxu0
    %v1549 = vadd.f32 0.0, %v1548
    %v1550 = vpop.f32.mrf.mxu0
    %v1551 = vadd.f32 0.0, %v1550
    %1552 = vmatmul.bf16.gmra.mxu0 %v1391
    %v1553 = vpop.f32.mrf.mxu0
    %v1554 = vadd.f32 0.0, %v1553
    %v1555 = vpop.f32.mrf.mxu0
    %v1556 = vadd.f32 0.0, %v1555
    %1557 = vmatmul.bf16.gmra.mxu0 %v1394
    %v1558 = vpop.f32.mrf.mxu0
    %v1559 = vadd.f32 0.0, %v1558
    %v1560 = vpop.f32.mrf.mxu0
    %v1561 = vadd.f32 0.0, %v1560
    %1562 = vmatmul.bf16.gmra.mxu0 %v1397
    %v1563 = vpop.f32.mrf.mxu0
    %v1564 = vadd.f32 0.0, %v1563
    %v1565 = vpop.f32.mrf.mxu0
    %v1566 = vadd.f32 0.0, %v1565
    %1567 = vmatmul.bf16.gmra.mxu0 %v1400
    %v1568 = vpop.f32.mrf.mxu0
    %v1569 = vadd.f32 0.0, %v1568
    %v1570 = vpop.f32.mrf.mxu0
    %v1571 = vadd.f32 0.0, %v1570
    %1572 = vmatmul.bf16.gmra.mxu0 %v1403
    %v1573 = vpop.f32.mrf.mxu0
    %v1574 = vadd.f32 0.0, %v1573
    %v1575 = vpop.f32.mrf.mxu0
    %v1576 = vadd.f32 0.0, %v1575
    %1577 = vmatmul.bf16.gmra.mxu0 %v1406
    %v1578 = vpop.f32.mrf.mxu0
    %v1579 = vadd.f32 0.0, %v1578
    %v1580 = vpop.f32.mrf.mxu0
    %v1581 = vadd.f32 0.0, %v1580
    %1582 = vmatmul.bf16.gmra.mxu0 %v1409
    %v1583 = vpop.f32.mrf.mxu0
    %v1584 = vadd.f32 0.0, %v1583
    %v1585 = vpop.f32.mrf.mxu0
    %v1586 = vadd.f32 0.0, %v1585
    %1587 = vmatmul.bf16.gmra.mxu0 %v1412
    %v1588 = vpop.f32.mrf.mxu0
    %v1589 = vadd.f32 0.0, %v1588
    %v1590 = vpop.f32.mrf.mxu0
    %v1591 = vadd.f32 0.0, %v1590
    %1592 = vmatmul.bf16.gmra.mxu0 %v1415
    %v1593 = vpop.f32.mrf.mxu0
    %v1594 = vadd.f32 0.0, %v1593
    %v1595 = vpop.f32.mrf.mxu0
    %v1596 = vadd.f32 0.0, %v1595
    %1597 = vmatmul.bf16.gmra.mxu0 %v1418
    %v1598 = vpop.f32.mrf.mxu0
    %v1599 = vadd.f32 0.0, %v1598
    %v1600 = vpop.f32.mrf.mxu0
    %v1601 = vadd.f32 0.0, %v1600
    %1602 = vmatmul.bf16.gmra.mxu0 %v1421
    %v1603 = vpop.f32.mrf.mxu0
    %v1604 = vadd.f32 0.0, %v1603
    %v1605 = vpop.f32.mrf.mxu0
    %v1606 = vadd.f32 0.0, %v1605
    %1607 = vmatmul.bf16.gmra.mxu0 %v1424
    %v1608 = vpop.f32.mrf.mxu0
    %v1609 = vadd.f32 0.0, %v1608
    %v1610 = vpop.f32.mrf.mxu0
    %v1611 = vadd.f32 0.0, %v1610
    %1612 = vmatmul.bf16.gmra.mxu0 %v1427
    %v1613 = vpop.f32.mrf.mxu0
    %v1614 = vadd.f32 0.0, %v1613
    %v1615 = vpop.f32.mrf.mxu0
    %v1616 = vadd.f32 0.0, %v1615
    %1617 = vmatmul.bf16.gmra.mxu0 %v1430
    %v1618 = vpop.f32.mrf.mxu0
    %v1619 = vadd.f32 0.0, %v1618
    %v1620 = vpop.f32.mrf.mxu0
    %v1621 = vadd.f32 0.0, %v1620
    %1622 = vmatmul.bf16.gmra.mxu0 %v1433
    %v1623 = vpop.f32.mrf.mxu0
    %v1624 = vadd.f32 0.0, %v1623
    %v1625 = vpop.f32.mrf.mxu0
    %v1626 = vadd.f32 0.0, %v1625
    %1627 = vmatmul.bf16.gmra.mxu0 %v1436
    %v1628 = vpop.f32.mrf.mxu0
    %v1629 = vadd.f32 0.0, %v1628
    %v1630 = vpop.f32.mrf.mxu0
    %v1631 = vadd.f32 0.0, %v1630
    %1632 = vmatmul.bf16.gmra.mxu0 %v1439
    %v1633 = vpop.f32.mrf.mxu0
    %v1634 = vadd.f32 0.0, %v1633
    %v1635 = vpop.f32.mrf.mxu0
    %v1636 = vadd.f32 0.0, %v1635
    %1637 = vmatmul.bf16.gmra.mxu0 %v1442
    %v1638 = vpop.f32.mrf.mxu0
    %v1639 = vadd.f32 0.0, %v1638
    %v1640 = vpop.f32.mrf.mxu0
    %v1641 = vadd.f32 0.0, %v1640
    %1642 = vmatmul.bf16.gmra.mxu0 %v1445
    %v1643 = vpop.f32.mrf.mxu0
    %v1644 = vadd.f32 0.0, %v1643
    %v1645 = vpop.f32.mrf.mxu0
    %v1646 = vadd.f32 0.0, %v1645
    %1647 = vmatmul.bf16.gmra.mxu0 %v1448
    %v1648 = vpop.f32.mrf.mxu0
    %v1649 = vadd.f32 0.0, %v1648
    %v1650 = vpop.f32.mrf.mxu0
    %v1651 = vadd.f32 0.0, %v1650
    %1652 = vmatmul.bf16.gmra.mxu0 %v1451
    %v1653 = vpop.f32.mrf.mxu0
    %v1654 = vadd.f32 0.0, %v1653
    %v1655 = vpop.f32.mrf.mxu0
    %v1656 = vadd.f32 0.0, %v1655
    %1657 = vmatmul.bf16.gmra.mxu0 %v1454
    %v1658 = vpop.f32.mrf.mxu0
    %v1659 = vadd.f32 0.0, %v1658
    %v1660 = vpop.f32.mrf.mxu0
    %1661 = vdwg.mxu0
    %v1662 = vadd.f32 %v1062, %v1469
    %v1663 = vadd.f32 %v1064, %v1471
    %v1664 = vadd.f32 %v1067, %v1474
    %v1665 = vadd.f32 %v1069, %v1476
    %v1666 = vadd.f32 %v1072, %v1479
    %v1667 = vadd.f32 %v1074, %v1481
    %v1668 = vadd.f32 %v1077, %v1484
    %v1669 = vadd.f32 %v1079, %v1486
    %v1670 = vadd.f32 %v1082, %v1489
    %v1671 = vadd.f32 %v1084, %v1491
    %v1672 = vadd.f32 %v1087, %v1494
    %v1673 = vadd.f32 %v1089, %v1496
    %v1674 = vadd.f32 %v1092, %v1499
    %v1675 = vadd.f32 %v1094, %v1501
    %v1676 = vadd.f32 %v1097, %v1504
    %v1677 = vadd.f32 %v1099, %v1506
    %v1678 = vadd.f32 %v1102, %v1509
    %v1679 = vadd.f32 %v1104, %v1511
    %v1680 = vadd.f32 %v1107, %v1514
    %v1681 = vadd.f32 %v1109, %v1516
    %v1682 = vadd.f32 %v1112, %v1519
    %v1683 = vadd.f32 %v1114, %v1521
    %v1684 = vadd.f32 %v1117, %v1524
    %v1685 = vadd.f32 %v1119, %v1526
    %v1686 = vadd.f32 %v1122, %v1529
    %v1687 = vadd.f32 %v1124, %v1531
    %v1688 = vadd.f32 %v1127, %v1534
    %v1689 = vadd.f32 %v1129, %v1536
    %v1690 = vadd.f32 %v1132, %v1539
    %v1691 = vadd.f32 %v1134, %v1541
    %v1692 = vadd.f32 %v1137, %v1544
    %v1693 = vadd.f32 %v1139, %v1546
    %v1694 = vadd.f32 %v1142, %v1549
    %v1695 = vadd.f32 %v1144, %v1551
    %v1696 = vadd.f32 %v1147, %v1554
    %v1697 = vadd.f32 %v1149, %v1556
    %v1698 = vadd.f32 %v1152, %v1559
    %v1699 = vadd.f32 %v1154, %v1561
    %v1700 = vadd.f32 %v1157, %v1564
    %v1701 = vadd.f32 %v1159, %v1566
    %v1702 = vadd.f32 %v1162, %v1569
    %v1703 = vadd.f32 %v1164, %v1571
    %v1704 = vadd.f32 %v1167, %v1574
    %v1705 = vadd.f32 %v1169, %v1576
    %v1706 = vadd.f32 %v1172, %v1579
    %v1707 = vadd.f32 %v1174, %v1581
    %v1708 = vadd.f32 %v1177, %v1584
    %v1709 = vadd.f32 %v1179, %v1586
    %v1710 = vadd.f32 %v1182, %v1589
    %v1711 = vadd.f32 %v1184, %v1591
    %v1712 = vadd.f32 %v1187, %v1594
    %v1713 = vadd.f32 %v1189, %v1596
    %v1714 = vadd.f32 %v1192, %v1599
    %v1715 = vadd.f32 %v1194, %v1601
    %v1716 = vadd.f32 %v1197, %v1604
    %v1717 = vadd.f32 %v1199, %v1606
    %v1718 = vadd.f32 %v1202, %v1609
    %v1719 = vadd.f32 %v1204, %v1611
    %v1720 = vadd.f32 %v1207, %v1614
    %v1721 = vadd.f32 %v1209, %v1616
    %v1722 = vadd.f32 %v1212, %v1619
    %v1723 = vadd.f32 %v1214, %v1621
    %v1724 = vadd.f32 %v1217, %v1624
    %v1725 = vadd.f32 %v1219, %v1626
    %v1726 = vadd.f32 %v1222, %v1629
    %v1727 = vadd.f32 %v1224, %v1631
    %v1728 = vadd.f32 %v1227, %v1634
    %v1729 = vadd.f32 %v1229, %v1636
    %v1730 = vadd.f32 %v1232, %v1639
    %v1731 = vadd.f32 %v1234, %v1641
    %v1732 = vadd.f32 %v1237, %v1644
    %v1733 = vadd.f32 %v1239, %v1646
    %v1734 = vadd.f32 %v1242, %v1649
    %v1735 = vadd.f32 %v1244, %v1651
    %v1736 = vadd.f32 %v1247, %v1654
    %v1737 = vadd.f32 %v1249, %v1656
    %v1738 = vadd.f32 %v1252, %v1659
    %v1739 = vld [vmem:[%s0 + $0x8] sm:$0xe]
    %v1740 = vld [vmem:[%s0 + $0xc] sm:$0xf]
    %v1741 = vld [vmem:[%s0 + $0x10] sm:$0xf]
    %v1742 = vld [vmem:[%s0 + $0x14] sm:$0xf]
    %v1743 = vld [vmem:[%s0 + $0x18] sm:$0xf]
    %v1744 = vld [vmem:[%s0 + $0x1c] sm:$0xf]
    %v1745 = vld [vmem:[%s0 + $0x20] sm:$0xf]
    %v1746 = vld [vmem:[%s0 + $0x24] sm:$0xf]
    %v1747 = vld [vmem:[%s0 + $0x28] sm:$0xf]
    %v1748 = vld [vmem:[%s0 + $0x2c] sm:$0xf]
    %v1749 = vld [vmem:[%s0 + $0x30] sm:$0xf]
    %v1750 = vld [vmem:[%s0 + $0x34] sm:$0xf]
    %v1751 = vld [vmem:[%s0 + $0x38] sm:$0xf]
    %v1752 = vld [vmem:[%s0 + $0x3c] sm:$0xf]
    %v1753 = vld [vmem:[%s0 + $0x40] sm:$0xf]
    %v1754 = vld [vmem:[%s0 + $0x44] sm:$0xf]
    %v1755 = vld [vmem:[%s0 + $0x48] sm:$0xf]
    %v1756 = vld [vmem:[%s0 + $0x4c] sm:$0xf]
    %v1757 = vld [vmem:[%s0 + $0x50] sm:$0xf]
    %v1758 = vld [vmem:[%s0 + $0x54] sm:$0xf]
    %v1759 = vld [vmem:[%s0 + $0x58] sm:$0xf]
    %v1760 = vld [vmem:[%s0 + $0x5c] sm:$0xf]
    %v1761 = vld [vmem:[%s0 + $0x60] sm:$0xf]
    %v1762 = vld [vmem:[%s0 + $0x64] sm:$0xf]
    %v1763 = vld [vmem:[%s0 + $0x68] sm:$0xf]
    %v1764 = vld [vmem:[%s0 + $0x6c] sm:$0xf]
    %v1765 = vld [vmem:[%s0 + $0x70] sm:$0xf]
    %v1766 = vld [vmem:[%s0 + $0x74] sm:$0xf]
    %v1767 = vld [vmem:[%s0 + $0x78] sm:$0xf]
    %v1768 = vld [vmem:[%s0 + $0x7c] sm:$0xf]
    %v1769 = vld [vmem:[%s0 + $0x80] sm:$0xf]
    %v1770 = vld [vmem:[%s0 + $0x84] sm:$0xf]
    %v1771 = vld [vmem:[%s0 + $0x88] sm:$0xf]
    %v1772 = vld [vmem:[%s0 + $0x8c] sm:$0xf]
    %v1773 = vld [vmem:[%s0 + $0x90] sm:$0xf]
    %v1774 = vld [vmem:[%s0 + $0x94] sm:$0xf]
    %v1775 = vld [vmem:[%s0 + $0x98] sm:$0xf]
    %v1776 = vld [vmem:[%s0 + $0x9c] sm:$0xf]
    %v1777 = vld [vmem:[%s0 + $0xa0] sm:$0xf]
    %v1778 = vld [vmem:[%s0 + $0xa4] sm:$0xf]
    %v1779 = vld [vmem:[%s0 + $0xa8] sm:$0xf]
    %v1780 = vld [vmem:[%s0 + $0xac] sm:$0xf]
    %v1781 = vld [vmem:[%s0 + $0xb0] sm:$0xf]
    %v1782 = vld [vmem:[%s0 + $0xb4] sm:$0xf]
    %v1783 = vld [vmem:[%s0 + $0xb8] sm:$0xf]
    %v1784 = vld [vmem:[%s0 + $0xbc] sm:$0xf]
    %v1785 = vld [vmem:[%s0 + $0xc0] sm:$0xf]
    %v1786 = vld [vmem:[%s0 + $0xc4] sm:$0xf]
    %v1787 = vld [vmem:[%s0 + $0xc8] sm:$0xf]
    %v1788 = vld [vmem:[%s0 + $0xcc] sm:$0xf]
    %v1789 = vld [vmem:[%s0 + $0xd0] sm:$0xf]
    %v1790 = vld [vmem:[%s0 + $0xd4] sm:$0xf]
    %v1791 = vld [vmem:[%s0 + $0xd8] sm:$0xf]
    %v1792 = vld [vmem:[%s0 + $0xdc] sm:$0xf]
    %v1793 = vld [vmem:[%s0 + $0xe0] sm:$0xf]
    %v1794 = vld [vmem:[%s0 + $0xe4] sm:$0xf]
    %v1795 = vld [vmem:[%s0 + $0xe8] sm:$0xf]
    %v1796 = vld [vmem:[%s0 + $0xec] sm:$0xf]
    %v1797 = vld [vmem:[%s0 + $0xf0] sm:$0xf]
    %v1798 = vld [vmem:[%s0 + $0xf4] sm:$0xf]
    %v1799 = vld [vmem:[%s0 + $0xf8] sm:$0xf]
    %v1800 = vld [vmem:[%s0 + $0xfc] sm:$0xf]
    %v1801 = vld [vmem:[%s0 + $0x100] sm:$0xf]
    %v1802 = vld [vmem:[%s0 + $0x104] sm:$0xf]
    %v1803 = vld [vmem:[%s0 + $0x108] sm:$0xf]
    %v1804 = vld [vmem:[%s0 + $0x10c] sm:$0xf]
    %v1805 = vld [vmem:[%s0 + $0x110] sm:$0xf]
    %v1806 = vld [vmem:[%s0 + $0x114] sm:$0xf]
    %v1807 = vld [vmem:[%s0 + $0x118] sm:$0xf]
    %v1808 = vld [vmem:[%s0 + $0x11c] sm:$0xf]
    %v1809 = vld [vmem:[%s0 + $0x120] sm:$0xf]
    %v1810 = vld [vmem:[%s0 + $0x124] sm:$0xf]
    %v1811 = vld [vmem:[%s0 + $0x128] sm:$0xf]
    %v1812 = vld [vmem:[%s0 + $0x12c] sm:$0xf]
    %v1813 = vld [vmem:[%s0 + $0x130] sm:$0xf]
    %v1814 = vld [vmem:[%s0 + $0x134] sm:$0xf]
    %v1815 = vld [vmem:[%s0 + $0x138] sm:$0x3]
    %s1816 = scalar_lea.vmem %s1, 6
    %v1817 = vld [vmem:[%s1816] sm:$0x3]
    %v1895 = vunpack.c.l.b16 %v1739
    %v1896 = vunpack.c.l.b16 %v1740
    %v1897 = vunpack.c.l.b16 %v1741
    %v1898 = vunpack.c.l.b16 %v1742
    %v1899 = vunpack.c.l.b16 %v1743
    %v1900 = vunpack.c.l.b16 %v1744
    %v1901 = vunpack.c.l.b16 %v1745
    %v1902 = vunpack.c.l.b16 %v1746
    %v1903 = vunpack.c.l.b16 %v1747
    %v1904 = vunpack.c.l.b16 %v1748
    %v1905 = vunpack.c.l.b16 %v1749
    %v1906 = vunpack.c.l.b16 %v1750
    %v1907 = vunpack.c.l.b16 %v1751
    %v1908 = vunpack.c.l.b16 %v1752
    %v1909 = vunpack.c.l.b16 %v1753
    %v1910 = vunpack.c.l.b16 %v1754
    %v1911 = vunpack.c.l.b16 %v1755
    %v1912 = vunpack.c.l.b16 %v1756
    %v1913 = vunpack.c.l.b16 %v1757
    %v1914 = vunpack.c.l.b16 %v1758
    %v1915 = vunpack.c.l.b16 %v1759
    %v1916 = vunpack.c.l.b16 %v1760
    %v1917 = vunpack.c.l.b16 %v1761
    %v1918 = vunpack.c.l.b16 %v1762
    %v1919 = vunpack.c.l.b16 %v1763
    %v1920 = vunpack.c.l.b16 %v1764
    %v1921 = vunpack.c.l.b16 %v1765
    %v1922 = vunpack.c.l.b16 %v1766
    %v1923 = vunpack.c.l.b16 %v1767
    %v1924 = vunpack.c.l.b16 %v1768
    %v1925 = vunpack.c.l.b16 %v1769
    %v1926 = vunpack.c.l.b16 %v1770
    %v1927 = vunpack.c.l.b16 %v1771
    %v1928 = vunpack.c.l.b16 %v1772
    %v1929 = vunpack.c.l.b16 %v1773
    %v1930 = vunpack.c.l.b16 %v1774
    %v1931 = vunpack.c.l.b16 %v1775
    %v1932 = vunpack.c.l.b16 %v1776
    %v1933 = vunpack.c.l.b16 %v1777
    %v1934 = vunpack.c.l.b16 %v1778
    %v1935 = vunpack.c.l.b16 %v1779
    %v1936 = vunpack.c.l.b16 %v1780
    %v1937 = vunpack.c.l.b16 %v1781
    %v1938 = vunpack.c.l.b16 %v1782
    %v1939 = vunpack.c.l.b16 %v1783
    %v1940 = vunpack.c.l.b16 %v1784
    %v1941 = vunpack.c.l.b16 %v1785
    %v1942 = vunpack.c.l.b16 %v1786
    %v1943 = vunpack.c.l.b16 %v1787
    %v1944 = vunpack.c.l.b16 %v1788
    %v1945 = vunpack.c.l.b16 %v1789
    %v1946 = vunpack.c.l.b16 %v1790
    %v1947 = vunpack.c.l.b16 %v1791
    %v1948 = vunpack.c.l.b16 %v1792
    %v1949 = vunpack.c.l.b16 %v1793
    %v1950 = vunpack.c.l.b16 %v1794
    %v1951 = vunpack.c.l.b16 %v1795
    %v1952 = vunpack.c.l.b16 %v1796
    %v1953 = vunpack.c.l.b16 %v1797
    %v1954 = vunpack.c.l.b16 %v1798
    %v1955 = vunpack.c.l.b16 %v1799
    %v1956 = vunpack.c.l.b16 %v1800
    %v1957 = vunpack.c.l.b16 %v1801
    %v1958 = vunpack.c.l.b16 %v1802
    %v1959 = vunpack.c.l.b16 %v1803
    %v1960 = vunpack.c.l.b16 %v1804
    %v1961 = vunpack.c.l.b16 %v1805
    %v1962 = vunpack.c.l.b16 %v1806
    %v1963 = vunpack.c.l.b16 %v1807
    %v1964 = vunpack.c.l.b16 %v1808
    %v1965 = vunpack.c.l.b16 %v1809
    %v1966 = vunpack.c.l.b16 %v1810
    %v1967 = vunpack.c.l.b16 %v1811
    %v1968 = vunpack.c.l.b16 %v1812
    %v1969 = vunpack.c.l.b16 %v1813
    %v1970 = vunpack.c.l.b16 %v1814
    %v1971 = vunpack.c.l.b16 %v1815
    %v1972 = vpack.c.b16 %v1896, %v1895
    %v1973 = vpack.c.b16 %v1898, %v1897
    %v1974 = vpack.c.b16 %v1900, %v1899
    %v1975 = vpack.c.b16 %v1902, %v1901
    %v1976 = vpack.c.b16 %v1904, %v1903
    %v1977 = vpack.c.b16 %v1906, %v1905
    %v1978 = vpack.c.b16 %v1908, %v1907
    %v1979 = vpack.c.b16 %v1910, %v1909
    %v1980 = vpack.c.b16 %v1912, %v1911
    %v1981 = vpack.c.b16 %v1914, %v1913
    %v1982 = vpack.c.b16 %v1916, %v1915
    %v1983 = vpack.c.b16 %v1918, %v1917
    %v1984 = vpack.c.b16 %v1920, %v1919
    %v1985 = vpack.c.b16 %v1922, %v1921
    %v1986 = vpack.c.b16 %v1924, %v1923
    %v1987 = vpack.c.b16 %v1926, %v1925
    %v1988 = vpack.c.b16 %v1928, %v1927
    %v1989 = vpack.c.b16 %v1930, %v1929
    %v1990 = vpack.c.b16 %v1932, %v1931
    %v1991 = vpack.c.b16 %v1934, %v1933
    %v1992 = vpack.c.b16 %v1936, %v1935
    %v1993 = vpack.c.b16 %v1938, %v1937
    %v1994 = vpack.c.b16 %v1940, %v1939
    %v1995 = vpack.c.b16 %v1942, %v1941
    %v1996 = vpack.c.b16 %v1944, %v1943
    %v1997 = vpack.c.b16 %v1946, %v1945
    %v1998 = vpack.c.b16 %v1948, %v1947
    %v1999 = vpack.c.b16 %v1950, %v1949
    %v2000 = vpack.c.b16 %v1952, %v1951
    %v2001 = vpack.c.b16 %v1954, %v1953
    %v2002 = vpack.c.b16 %v1956, %v1955
    %v2003 = vpack.c.b16 %v1958, %v1957
    %v2004 = vpack.c.b16 %v1960, %v1959
    %v2005 = vpack.c.b16 %v1962, %v1961
    %v2006 = vpack.c.b16 %v1964, %v1963
    %v2007 = vpack.c.b16 %v1966, %v1965
    %v2008 = vpack.c.b16 %v1968, %v1967
    %v2009 = vpack.c.b16 %v1970, %v1969
    %v2010 = vpack.c.b16 %v1971, %v1971
    %v2011 = vrot.slane %v1972, 1
    %v2012 = vrot.slane %v1973, 1
    %v2013 = vsel %vm1261, %v2011, %v2012
    %v2014 = vrot.slane %v1974, 1
    %v2015 = vsel %vm1261, %v2012, %v2014
    %v2016 = vrot.slane %v1975, 1
    %v2017 = vsel %vm1261, %v2014, %v2016
    %v2018 = vrot.slane %v1976, 1
    %v2019 = vsel %vm1261, %v2016, %v2018
    %v2020 = vrot.slane %v1977, 1
    %v2021 = vsel %vm1261, %v2018, %v2020
    %v2022 = vrot.slane %v1978, 1
    %v2023 = vsel %vm1261, %v2020, %v2022
    %v2024 = vrot.slane %v1979, 1
    %v2025 = vsel %vm1261, %v2022, %v2024
    %v2026 = vrot.slane %v1980, 1
    %v2027 = vsel %vm1261, %v2024, %v2026
    %v2028 = vrot.slane %v1981, 1
    %v2029 = vsel %vm1261, %v2026, %v2028
    %v2030 = vrot.slane %v1982, 1
    %v2031 = vsel %vm1261, %v2028, %v2030
    %v2032 = vrot.slane %v1983, 1
    %v2033 = vsel %vm1261, %v2030, %v2032
    %v2034 = vrot.slane %v1984, 1
    %v2035 = vsel %vm1261, %v2032, %v2034
    %v2036 = vrot.slane %v1985, 1
    %v2037 = vsel %vm1261, %v2034, %v2036
    %v2038 = vrot.slane %v1986, 1
    %v2039 = vsel %vm1261, %v2036, %v2038
    %v2040 = vrot.slane %v1987, 1
    %v2041 = vsel %vm1261, %v2038, %v2040
    %v2042 = vrot.slane %v1988, 1
    %v2043 = vsel %vm1261, %v2040, %v2042
    %v2044 = vrot.slane %v1989, 1
    %v2045 = vsel %vm1261, %v2042, %v2044
    %v2046 = vrot.slane %v1990, 1
    %v2047 = vsel %vm1261, %v2044, %v2046
    %v2048 = vrot.slane %v1991, 1
    %v2049 = vsel %vm1261, %v2046, %v2048
    %v2050 = vrot.slane %v1992, 1
    %v2051 = vsel %vm1261, %v2048, %v2050
    %v2052 = vrot.slane %v1993, 1
    %v2053 = vsel %vm1261, %v2050, %v2052
    %v2054 = vrot.slane %v1994, 1
    %v2055 = vsel %vm1261, %v2052, %v2054
    %v2056 = vrot.slane %v1995, 1
    %v2057 = vsel %vm1261, %v2054, %v2056
    %v2058 = vrot.slane %v1996, 1
    %v2059 = vsel %vm1261, %v2056, %v2058
    %v2060 = vrot.slane %v1997, 1
    %v2061 = vsel %vm1261, %v2058, %v2060
    %v2062 = vrot.slane %v1998, 1
    %v2063 = vsel %vm1261, %v2060, %v2062
    %v2064 = vrot.slane %v1999, 1
    %v2065 = vsel %vm1261, %v2062, %v2064
    %v2066 = vrot.slane %v2000, 1
    %v2067 = vsel %vm1261, %v2064, %v2066
    %v2068 = vrot.slane %v2001, 1
    %v2069 = vsel %vm1261, %v2066, %v2068
    %v2070 = vrot.slane %v2002, 1
    %v2071 = vsel %vm1261, %v2068, %v2070
    %v2072 = vrot.slane %v2003, 1
    %v2073 = vsel %vm1261, %v2070, %v2072
    %v2074 = vrot.slane %v2004, 1
    %v2075 = vsel %vm1261, %v2072, %v2074
    %v2076 = vrot.slane %v2005, 1
    %v2077 = vsel %vm1261, %v2074, %v2076
    %v2078 = vrot.slane %v2006, 1
    %v2079 = vsel %vm1261, %v2076, %v2078
    %v2080 = vrot.slane %v2007, 1
    %v2081 = vsel %vm1261, %v2078, %v2080
    %v2082 = vrot.slane %v2008, 1
    %v2083 = vsel %vm1261, %v2080, %v2082
    %v2084 = vrot.slane %v2009, 1
    %v2085 = vsel %vm1261, %v2082, %v2084
    %v2086 = vrot.slane %v2010, 1
    %v2087 = vsel %vm1261, %v2084, %v2086
    %v2089 = vsel %vm642, %v2013, 0
    %v2092 = vsel %vm642, %v2015, 0
    %v2095 = vsel %vm642, %v2017, 0
    %v2098 = vsel %vm642, %v2019, 0
    %v2101 = vsel %vm642, %v2021, 0
    %v2104 = vsel %vm642, %v2023, 0
    %v2107 = vsel %vm642, %v2025, 0
    %v2110 = vsel %vm642, %v2027, 0
    %v2113 = vsel %vm642, %v2029, 0
    %v2116 = vsel %vm642, %v2031, 0
    %v2119 = vsel %vm642, %v2033, 0
    %v2122 = vsel %vm642, %v2035, 0
    %v2125 = vsel %vm642, %v2037, 0
    %v2128 = vsel %vm642, %v2039, 0
    %v2131 = vsel %vm642, %v2041, 0
    %v2134 = vsel %vm642, %v2043, 0
    %v2137 = vsel %vm642, %v2045, 0
    %v2140 = vsel %vm642, %v2047, 0
    %v2143 = vsel %vm642, %v2049, 0
    %v2146 = vsel %vm642, %v2051, 0
    %v2149 = vsel %vm642, %v2053, 0
    %v2152 = vsel %vm642, %v2055, 0
    %v2155 = vsel %vm642, %v2057, 0
    %v2158 = vsel %vm642, %v2059, 0
    %v2161 = vsel %vm642, %v2061, 0
    %v2164 = vsel %vm642, %v2063, 0
    %v2167 = vsel %vm642, %v2065, 0
    %v2170 = vsel %vm642, %v2067, 0
    %v2173 = vsel %vm642, %v2069, 0
    %v2176 = vsel %vm642, %v2071, 0
    %v2179 = vsel %vm642, %v2073, 0
    %v2182 = vsel %vm642, %v2075, 0
    %v2185 = vsel %vm642, %v2077, 0
    %v2188 = vsel %vm642, %v2079, 0
    %v2191 = vsel %vm642, %v2081, 0
    %v2194 = vsel %vm642, %v2083, 0
    %v2197 = vsel %vm642, %v2085, 0
    %v2200 = vsel %vm642, %v2087, 0
    %v2203 = vsel %vm642, %v2086, 0
    %v2206 = vsel %vm760, %v1817, 0
    %2208 = vmatpush.bf16.msra.mxu0 0
    %2209 = vmatpush.bf16.msra.mxu0 0
    %2210 = vmatpush.bf16.msra.mxu0 0
    %2211 = vmatpush.bf16.msra.mxu0 0
    %2212 = vmatpush.bf16.msra.mxu0 0
    %2213 = vmatpush.bf16.msra.mxu0 0
    %2214 = vmatpush.bf16.msra.mxu0 0
    %2215 = vmatpush.bf16.msra.mxu0 %v2206
    %2216 = vmatmul.bf16.gmra.mxu0 %v2089
    %v2217 = vpop.f32.mrf.mxu0
    %v2218 = vadd.f32 0.0, %v2217
    %v2219 = vpop.f32.mrf.mxu0
    %v2220 = vadd.f32 0.0, %v2219
    %2221 = vmatmul.bf16.gmra.mxu0 %v2092
    %v2222 = vpop.f32.mrf.mxu0
    %v2223 = vadd.f32 0.0, %v2222
    %v2224 = vpop.f32.mrf.mxu0
    %v2225 = vadd.f32 0.0, %v2224
    %2226 = vmatmul.bf16.gmra.mxu0 %v2095
    %v2227 = vpop.f32.mrf.mxu0
    %v2228 = vadd.f32 0.0, %v2227
    %v2229 = vpop.f32.mrf.mxu0
    %v2230 = vadd.f32 0.0, %v2229
    %2231 = vmatmul.bf16.gmra.mxu0 %v2098
    %v2232 = vpop.f32.mrf.mxu0
    %v2233 = vadd.f32 0.0, %v2232
    %v2234 = vpop.f32.mrf.mxu0
    %v2235 = vadd.f32 0.0, %v2234
    %2236 = vmatmul.bf16.gmra.mxu0 %v2101
    %v2237 = vpop.f32.mrf.mxu0
    %v2238 = vadd.f32 0.0, %v2237
    %v2239 = vpop.f32.mrf.mxu0
    %v2240 = vadd.f32 0.0, %v2239
    %2241 = vmatmul.bf16.gmra.mxu0 %v2104
    %v2242 = vpop.f32.mrf.mxu0
    %v2243 = vadd.f32 0.0, %v2242
    %v2244 = vpop.f32.mrf.mxu0
    %v2245 = vadd.f32 0.0, %v2244
    %2246 = vmatmul.bf16.gmra.mxu0 %v2107
    %v2247 = vpop.f32.mrf.mxu0
    %v2248 = vadd.f32 0.0, %v2247
    %v2249 = vpop.f32.mrf.mxu0
    %v2250 = vadd.f32 0.0, %v2249
    %2251 = vmatmul.bf16.gmra.mxu0 %v2110
    %v2252 = vpop.f32.mrf.mxu0
    %v2253 = vadd.f32 0.0, %v2252
    %v2254 = vpop.f32.mrf.mxu0
    %v2255 = vadd.f32 0.0, %v2254
    %2256 = vmatmul.bf16.gmra.mxu0 %v2113
    %v2257 = vpop.f32.mrf.mxu0
    %v2258 = vadd.f32 0.0, %v2257
    %v2259 = vpop.f32.mrf.mxu0
    %v2260 = vadd.f32 0.0, %v2259
    %2261 = vmatmul.bf16.gmra.mxu0 %v2116
    %v2262 = vpop.f32.mrf.mxu0
    %v2263 = vadd.f32 0.0, %v2262
    %v2264 = vpop.f32.mrf.mxu0
    %v2265 = vadd.f32 0.0, %v2264
    %2266 = vmatmul.bf16.gmra.mxu0 %v2119
    %v2267 = vpop.f32.mrf.mxu0
    %v2268 = vadd.f32 0.0, %v2267
    %v2269 = vpop.f32.mrf.mxu0
    %v2270 = vadd.f32 0.0, %v2269
    %2271 = vmatmul.bf16.gmra.mxu0 %v2122
    %v2272 = vpop.f32.mrf.mxu0
    %v2273 = vadd.f32 0.0, %v2272
    %v2274 = vpop.f32.mrf.mxu0
    %v2275 = vadd.f32 0.0, %v2274
    %2276 = vmatmul.bf16.gmra.mxu0 %v2125
    %v2277 = vpop.f32.mrf.mxu0
    %v2278 = vadd.f32 0.0, %v2277
    %v2279 = vpop.f32.mrf.mxu0
    %v2280 = vadd.f32 0.0, %v2279
    %2281 = vmatmul.bf16.gmra.mxu0 %v2128
    %v2282 = vpop.f32.mrf.mxu0
    %v2283 = vadd.f32 0.0, %v2282
    %v2284 = vpop.f32.mrf.mxu0
    %v2285 = vadd.f32 0.0, %v2284
    %2286 = vmatmul.bf16.gmra.mxu0 %v2131
    %v2287 = vpop.f32.mrf.mxu0
    %v2288 = vadd.f32 0.0, %v2287
    %v2289 = vpop.f32.mrf.mxu0
    %v2290 = vadd.f32 0.0, %v2289
    %2291 = vmatmul.bf16.gmra.mxu0 %v2134
    %v2292 = vpop.f32.mrf.mxu0
    %v2293 = vadd.f32 0.0, %v2292
    %v2294 = vpop.f32.mrf.mxu0
    %v2295 = vadd.f32 0.0, %v2294
    %2296 = vmatmul.bf16.gmra.mxu0 %v2137
    %v2297 = vpop.f32.mrf.mxu0
    %v2298 = vadd.f32 0.0, %v2297
    %v2299 = vpop.f32.mrf.mxu0
    %v2300 = vadd.f32 0.0, %v2299
    %2301 = vmatmul.bf16.gmra.mxu0 %v2140
    %v2302 = vpop.f32.mrf.mxu0
    %v2303 = vadd.f32 0.0, %v2302
    %v2304 = vpop.f32.mrf.mxu0
    %v2305 = vadd.f32 0.0, %v2304
    %2306 = vmatmul.bf16.gmra.mxu0 %v2143
    %v2307 = vpop.f32.mrf.mxu0
    %v2308 = vadd.f32 0.0, %v2307
    %v2309 = vpop.f32.mrf.mxu0
    %v2310 = vadd.f32 0.0, %v2309
    %2311 = vmatmul.bf16.gmra.mxu0 %v2146
    %v2312 = vpop.f32.mrf.mxu0
    %v2313 = vadd.f32 0.0, %v2312
    %v2314 = vpop.f32.mrf.mxu0
    %v2315 = vadd.f32 0.0, %v2314
    %2316 = vmatmul.bf16.gmra.mxu0 %v2149
    %v2317 = vpop.f32.mrf.mxu0
    %v2318 = vadd.f32 0.0, %v2317
    %v2319 = vpop.f32.mrf.mxu0
    %v2320 = vadd.f32 0.0, %v2319
    %2321 = vmatmul.bf16.gmra.mxu0 %v2152
    %v2322 = vpop.f32.mrf.mxu0
    %v2323 = vadd.f32 0.0, %v2322
    %v2324 = vpop.f32.mrf.mxu0
    %v2325 = vadd.f32 0.0, %v2324
    %2326 = vmatmul.bf16.gmra.mxu0 %v2155
    %v2327 = vpop.f32.mrf.mxu0
    %v2328 = vadd.f32 0.0, %v2327
    %v2329 = vpop.f32.mrf.mxu0
    %v2330 = vadd.f32 0.0, %v2329
    %2331 = vmatmul.bf16.gmra.mxu0 %v2158
    %v2332 = vpop.f32.mrf.mxu0
    %v2333 = vadd.f32 0.0, %v2332
    %v2334 = vpop.f32.mrf.mxu0
    %v2335 = vadd.f32 0.0, %v2334
    %2336 = vmatmul.bf16.gmra.mxu0 %v2161
    %v2337 = vpop.f32.mrf.mxu0
    %v2338 = vadd.f32 0.0, %v2337
    %v2339 = vpop.f32.mrf.mxu0
    %v2340 = vadd.f32 0.0, %v2339
    %2341 = vmatmul.bf16.gmra.mxu0 %v2164
    %v2342 = vpop.f32.mrf.mxu0
    %v2343 = vadd.f32 0.0, %v2342
    %v2344 = vpop.f32.mrf.mxu0
    %v2345 = vadd.f32 0.0, %v2344
    %2346 = vmatmul.bf16.gmra.mxu0 %v2167
    %v2347 = vpop.f32.mrf.mxu0
    %v2348 = vadd.f32 0.0, %v2347
    %v2349 = vpop.f32.mrf.mxu0
    %v2350 = vadd.f32 0.0, %v2349
    %2351 = vmatmul.bf16.gmra.mxu0 %v2170
    %v2352 = vpop.f32.mrf.mxu0
    %v2353 = vadd.f32 0.0, %v2352
    %v2354 = vpop.f32.mrf.mxu0
    %v2355 = vadd.f32 0.0, %v2354
    %2356 = vmatmul.bf16.gmra.mxu0 %v2173
    %v2357 = vpop.f32.mrf.mxu0
    %v2358 = vadd.f32 0.0, %v2357
    %v2359 = vpop.f32.mrf.mxu0
    %v2360 = vadd.f32 0.0, %v2359
    %2361 = vmatmul.bf16.gmra.mxu0 %v2176
    %v2362 = vpop.f32.mrf.mxu0
    %v2363 = vadd.f32 0.0, %v2362
    %v2364 = vpop.f32.mrf.mxu0
    %v2365 = vadd.f32 0.0, %v2364
    %2366 = vmatmul.bf16.gmra.mxu0 %v2179
    %v2367 = vpop.f32.mrf.mxu0
    %v2368 = vadd.f32 0.0, %v2367
    %v2369 = vpop.f32.mrf.mxu0
    %v2370 = vadd.f32 0.0, %v2369
    %2371 = vmatmul.bf16.gmra.mxu0 %v2182
    %v2372 = vpop.f32.mrf.mxu0
    %v2373 = vadd.f32 0.0, %v2372
    %v2374 = vpop.f32.mrf.mxu0
    %v2375 = vadd.f32 0.0, %v2374
    %2376 = vmatmul.bf16.gmra.mxu0 %v2185
    %v2377 = vpop.f32.mrf.mxu0
    %v2378 = vadd.f32 0.0, %v2377
    %v2379 = vpop.f32.mrf.mxu0
    %v2380 = vadd.f32 0.0, %v2379
    %2381 = vmatmul.bf16.gmra.mxu0 %v2188
    %v2382 = vpop.f32.mrf.mxu0
    %v2383 = vadd.f32 0.0, %v2382
    %v2384 = vpop.f32.mrf.mxu0
    %v2385 = vadd.f32 0.0, %v2384
    %2386 = vmatmul.bf16.gmra.mxu0 %v2191
    %v2387 = vpop.f32.mrf.mxu0
    %v2388 = vadd.f32 0.0, %v2387
    %v2389 = vpop.f32.mrf.mxu0
    %v2390 = vadd.f32 0.0, %v2389
    %2391 = vmatmul.bf16.gmra.mxu0 %v2194
    %v2392 = vpop.f32.mrf.mxu0
    %v2393 = vadd.f32 0.0, %v2392
    %v2394 = vpop.f32.mrf.mxu0
    %v2395 = vadd.f32 0.0, %v2394
    %2396 = vmatmul.bf16.gmra.mxu0 %v2197
    %v2397 = vpop.f32.mrf.mxu0
    %v2398 = vadd.f32 0.0, %v2397
    %v2399 = vpop.f32.mrf.mxu0
    %v2400 = vadd.f32 0.0, %v2399
    %2401 = vmatmul.bf16.gmra.mxu0 %v2200
    %v2402 = vpop.f32.mrf.mxu0
    %v2403 = vadd.f32 0.0, %v2402
    %v2404 = vpop.f32.mrf.mxu0
    %v2405 = vadd.f32 0.0, %v2404
    %2406 = vmatmul.bf16.gmra.mxu0 %v2203
    %v2407 = vpop.f32.mrf.mxu0
    %v2408 = vadd.f32 0.0, %v2407
    %v2409 = vpop.f32.mrf.mxu0
    %2410 = vdwg.mxu0
    %v2411 = vadd.f32 %v1662, %v2218
    %v2412 = vadd.f32 %v1663, %v2220
    %v2413 = vadd.f32 %v1664, %v2223
    %v2414 = vadd.f32 %v1665, %v2225
    %v2415 = vadd.f32 %v1666, %v2228
    %v2416 = vadd.f32 %v1667, %v2230
    %v2417 = vadd.f32 %v1668, %v2233
    %v2418 = vadd.f32 %v1669, %v2235
    %v2419 = vadd.f32 %v1670, %v2238
    %v2420 = vadd.f32 %v1671, %v2240
    %v2421 = vadd.f32 %v1672, %v2243
    %v2422 = vadd.f32 %v1673, %v2245
    %v2423 = vadd.f32 %v1674, %v2248
    %v2424 = vadd.f32 %v1675, %v2250
    %v2425 = vadd.f32 %v1676, %v2253
    %v2426 = vadd.f32 %v1677, %v2255
    %v2427 = vadd.f32 %v1678, %v2258
    %v2428 = vadd.f32 %v1679, %v2260
    %v2429 = vadd.f32 %v1680, %v2263
    %v2430 = vadd.f32 %v1681, %v2265
    %v2431 = vadd.f32 %v1682, %v2268
    %v2432 = vadd.f32 %v1683, %v2270
    %v2433 = vadd.f32 %v1684, %v2273
    %v2434 = vadd.f32 %v1685, %v2275
    %v2435 = vadd.f32 %v1686, %v2278
    %v2436 = vadd.f32 %v1687, %v2280
    %v2437 = vadd.f32 %v1688, %v2283
    %v2438 = vadd.f32 %v1689, %v2285
    %v2439 = vadd.f32 %v1690, %v2288
    %v2440 = vadd.f32 %v1691, %v2290
    %v2441 = vadd.f32 %v1692, %v2293
    %v2442 = vadd.f32 %v1693, %v2295
    %v2443 = vadd.f32 %v1694, %v2298
    %v2444 = vadd.f32 %v1695, %v2300
    %v2445 = vadd.f32 %v1696, %v2303
    %v2446 = vadd.f32 %v1697, %v2305
    %v2447 = vadd.f32 %v1698, %v2308
    %v2448 = vadd.f32 %v1699, %v2310
    %v2449 = vadd.f32 %v1700, %v2313
    %v2450 = vadd.f32 %v1701, %v2315
    %v2451 = vadd.f32 %v1702, %v2318
    %v2452 = vadd.f32 %v1703, %v2320
    %v2453 = vadd.f32 %v1704, %v2323
    %v2454 = vadd.f32 %v1705, %v2325
    %v2455 = vadd.f32 %v1706, %v2328
    %v2456 = vadd.f32 %v1707, %v2330
    %v2457 = vadd.f32 %v1708, %v2333
    %v2458 = vadd.f32 %v1709, %v2335
    %v2459 = vadd.f32 %v1710, %v2338
    %v2460 = vadd.f32 %v1711, %v2340
    %v2461 = vadd.f32 %v1712, %v2343
    %v2462 = vadd.f32 %v1713, %v2345
    %v2463 = vadd.f32 %v1714, %v2348
    %v2464 = vadd.f32 %v1715, %v2350
    %v2465 = vadd.f32 %v1716, %v2353
    %v2466 = vadd.f32 %v1717, %v2355
    %v2467 = vadd.f32 %v1718, %v2358
    %v2468 = vadd.f32 %v1719, %v2360
    %v2469 = vadd.f32 %v1720, %v2363
    %v2470 = vadd.f32 %v1721, %v2365
    %v2471 = vadd.f32 %v1722, %v2368
    %v2472 = vadd.f32 %v1723, %v2370
    %v2473 = vadd.f32 %v1724, %v2373
    %v2474 = vadd.f32 %v1725, %v2375
    %v2475 = vadd.f32 %v1726, %v2378
    %v2476 = vadd.f32 %v1727, %v2380
    %v2477 = vadd.f32 %v1728, %v2383
    %v2478 = vadd.f32 %v1729, %v2385
    %v2479 = vadd.f32 %v1730, %v2388
    %v2480 = vadd.f32 %v1731, %v2390
    %v2481 = vadd.f32 %v1732, %v2393
    %v2482 = vadd.f32 %v1733, %v2395
    %v2483 = vadd.f32 %v1734, %v2398
    %v2484 = vadd.f32 %v1735, %v2400
    %v2485 = vadd.f32 %v1736, %v2403
    %v2486 = vadd.f32 %v1737, %v2405
    %v2487 = vadd.f32 %v1738, %v2408
    %v2488 = vld [vmem:[%s0 + $0x138] sm:$0x7]
    %s2489 = scalar_lea.vmem %s1, 8
    %v2490 = vld [vmem:[%s2489] sm:$0x3]
    %v2492 = vunpack.c.l.b16 %v2488
    %v2493 = vpack.c.b16 %v2492, %v2492
    %vm2494 = vsmask.f32 6400
    %v2496 = vshrl.u32 %v1972, 16
    %v2498 = vrot.slane %v2496, 1
    %v2499 = vshll.u32 %v1972, 16
    %v2501 = vrot.slane %v2499, 2
    %v2502 = vor.u32 %v2498, %v2501
    %v2504 = vshrl.u32 %v1973, 16
    %v2506 = vrot.slane %v2504, 1
    %v2507 = vshll.u32 %v1973, 16
    %v2509 = vrot.slane %v2507, 2
    %v2510 = vor.u32 %v2506, %v2509
    %v2511 = vsel %vm2494, %v2502, %v2510
    %v2513 = vshrl.u32 %v1974, 16
    %v2515 = vrot.slane %v2513, 1
    %v2516 = vshll.u32 %v1974, 16
    %v2518 = vrot.slane %v2516, 2
    %v2519 = vor.u32 %v2515, %v2518
    %v2520 = vsel %vm2494, %v2510, %v2519
    %v2522 = vshrl.u32 %v1975, 16
    %v2524 = vrot.slane %v2522, 1
    %v2525 = vshll.u32 %v1975, 16
    %v2527 = vrot.slane %v2525, 2
    %v2528 = vor.u32 %v2524, %v2527
    %v2529 = vsel %vm2494, %v2519, %v2528
    %v2531 = vshrl.u32 %v1976, 16
    %v2533 = vrot.slane %v2531, 1
    %v2534 = vshll.u32 %v1976, 16
    %v2536 = vrot.slane %v2534, 2
    %v2537 = vor.u32 %v2533, %v2536
    %v2538 = vsel %vm2494, %v2528, %v2537
    %v2540 = vshrl.u32 %v1977, 16
    %v2542 = vrot.slane %v2540, 1
    %v2543 = vshll.u32 %v1977, 16
    %v2545 = vrot.slane %v2543, 2
    %v2546 = vor.u32 %v2542, %v2545
    %v2547 = vsel %vm2494, %v2537, %v2546
    %v2549 = vshrl.u32 %v1978, 16
    %v2551 = vrot.slane %v2549, 1
    %v2552 = vshll.u32 %v1978, 16
    %v2554 = vrot.slane %v2552, 2
    %v2555 = vor.u32 %v2551, %v2554
    %v2556 = vsel %vm2494, %v2546, %v2555
    %v2558 = vshrl.u32 %v1979, 16
    %v2560 = vrot.slane %v2558, 1
    %v2561 = vshll.u32 %v1979, 16
    %v2563 = vrot.slane %v2561, 2
    %v2564 = vor.u32 %v2560, %v2563
    %v2565 = vsel %vm2494, %v2555, %v2564
    %v2567 = vshrl.u32 %v1980, 16
    %v2569 = vrot.slane %v2567, 1
    %v2570 = vshll.u32 %v1980, 16
    %v2572 = vrot.slane %v2570, 2
    %v2573 = vor.u32 %v2569, %v2572
    %v2574 = vsel %vm2494, %v2564, %v2573
    %v2576 = vshrl.u32 %v1981, 16
    %v2578 = vrot.slane %v2576, 1
    %v2579 = vshll.u32 %v1981, 16
    %v2581 = vrot.slane %v2579, 2
    %v2582 = vor.u32 %v2578, %v2581
    %v2583 = vsel %vm2494, %v2573, %v2582
    %v2585 = vshrl.u32 %v1982, 16
    %v2587 = vrot.slane %v2585, 1
    %v2588 = vshll.u32 %v1982, 16
    %v2590 = vrot.slane %v2588, 2
    %v2591 = vor.u32 %v2587, %v2590
    %v2592 = vsel %vm2494, %v2582, %v2591
    %v2594 = vshrl.u32 %v1983, 16
    %v2596 = vrot.slane %v2594, 1
    %v2597 = vshll.u32 %v1983, 16
    %v2599 = vrot.slane %v2597, 2
    %v2600 = vor.u32 %v2596, %v2599
    %v2601 = vsel %vm2494, %v2591, %v2600
    %v2603 = vshrl.u32 %v1984, 16
    %v2605 = vrot.slane %v2603, 1
    %v2606 = vshll.u32 %v1984, 16
    %v2608 = vrot.slane %v2606, 2
    %v2609 = vor.u32 %v2605, %v2608
    %v2610 = vsel %vm2494, %v2600, %v2609
    %v2612 = vshrl.u32 %v1985, 16
    %v2614 = vrot.slane %v2612, 1
    %v2615 = vshll.u32 %v1985, 16
    %v2617 = vrot.slane %v2615, 2
    %v2618 = vor.u32 %v2614, %v2617
    %v2619 = vsel %vm2494, %v2609, %v2618
    %v2621 = vshrl.u32 %v1986, 16
    %v2623 = vrot.slane %v2621, 1
    %v2624 = vshll.u32 %v1986, 16
    %v2626 = vrot.slane %v2624, 2
    %v2627 = vor.u32 %v2623, %v2626
    %v2628 = vsel %vm2494, %v2618, %v2627
    %v2630 = vshrl.u32 %v1987, 16
    %v2632 = vrot.slane %v2630, 1
    %v2633 = vshll.u32 %v1987, 16
    %v2635 = vrot.slane %v2633, 2
    %v2636 = vor.u32 %v2632, %v2635
    %v2637 = vsel %vm2494, %v2627, %v2636
    %v2639 = vshrl.u32 %v1988, 16
    %v2641 = vrot.slane %v2639, 1
    %v2642 = vshll.u32 %v1988, 16
    %v2644 = vrot.slane %v2642, 2
    %v2645 = vor.u32 %v2641, %v2644
    %v2646 = vsel %vm2494, %v2636, %v2645
    %v2648 = vshrl.u32 %v1989, 16
    %v2650 = vrot.slane %v2648, 1
    %v2651 = vshll.u32 %v1989, 16
    %v2653 = vrot.slane %v2651, 2
    %v2654 = vor.u32 %v2650, %v2653
    %v2655 = vsel %vm2494, %v2645, %v2654
    %v2657 = vshrl.u32 %v1990, 16
    %v2659 = vrot.slane %v2657, 1
    %v2660 = vshll.u32 %v1990, 16
    %v2662 = vrot.slane %v2660, 2
    %v2663 = vor.u32 %v2659, %v2662
    %v2664 = vsel %vm2494, %v2654, %v2663
    %v2666 = vshrl.u32 %v1991, 16
    %v2668 = vrot.slane %v2666, 1
    %v2669 = vshll.u32 %v1991, 16
    %v2671 = vrot.slane %v2669, 2
    %v2672 = vor.u32 %v2668, %v2671
    %v2673 = vsel %vm2494, %v2663, %v2672
    %v2675 = vshrl.u32 %v1992, 16
    %v2677 = vrot.slane %v2675, 1
    %v2678 = vshll.u32 %v1992, 16
    %v2680 = vrot.slane %v2678, 2
    %v2681 = vor.u32 %v2677, %v2680
    %v2682 = vsel %vm2494, %v2672, %v2681
    %v2684 = vshrl.u32 %v1993, 16
    %v2686 = vrot.slane %v2684, 1
    %v2687 = vshll.u32 %v1993, 16
    %v2689 = vrot.slane %v2687, 2
    %v2690 = vor.u32 %v2686, %v2689
    %v2691 = vsel %vm2494, %v2681, %v2690
    %v2693 = vshrl.u32 %v1994, 16
    %v2695 = vrot.slane %v2693, 1
    %v2696 = vshll.u32 %v1994, 16
    %v2698 = vrot.slane %v2696, 2
    %v2699 = vor.u32 %v2695, %v2698
    %v2700 = vsel %vm2494, %v2690, %v2699
    %v2702 = vshrl.u32 %v1995, 16
    %v2704 = vrot.slane %v2702, 1
    %v2705 = vshll.u32 %v1995, 16
    %v2707 = vrot.slane %v2705, 2
    %v2708 = vor.u32 %v2704, %v2707
    %v2709 = vsel %vm2494, %v2699, %v2708
    %v2711 = vshrl.u32 %v1996, 16
    %v2713 = vrot.slane %v2711, 1
    %v2714 = vshll.u32 %v1996, 16
    %v2716 = vrot.slane %v2714, 2
    %v2717 = vor.u32 %v2713, %v2716
    %v2718 = vsel %vm2494, %v2708, %v2717
    %v2720 = vshrl.u32 %v1997, 16
    %v2722 = vrot.slane %v2720, 1
    %v2723 = vshll.u32 %v1997, 16
    %v2725 = vrot.slane %v2723, 2
    %v2726 = vor.u32 %v2722, %v2725
    %v2727 = vsel %vm2494, %v2717, %v2726
    %v2729 = vshrl.u32 %v1998, 16
    %v2731 = vrot.slane %v2729, 1
    %v2732 = vshll.u32 %v1998, 16
    %v2734 = vrot.slane %v2732, 2
    %v2735 = vor.u32 %v2731, %v2734
    %v2736 = vsel %vm2494, %v2726, %v2735
    %v2738 = vshrl.u32 %v1999, 16
    %v2740 = vrot.slane %v2738, 1
    %v2741 = vshll.u32 %v1999, 16
    %v2743 = vrot.slane %v2741, 2
    %v2744 = vor.u32 %v2740, %v2743
    %v2745 = vsel %vm2494, %v2735, %v2744
    %v2747 = vshrl.u32 %v2000, 16
    %v2749 = vrot.slane %v2747, 1
    %v2750 = vshll.u32 %v2000, 16
    %v2752 = vrot.slane %v2750, 2
    %v2753 = vor.u32 %v2749, %v2752
    %v2754 = vsel %vm2494, %v2744, %v2753
    %v2756 = vshrl.u32 %v2001, 16
    %v2758 = vrot.slane %v2756, 1
    %v2759 = vshll.u32 %v2001, 16
    %v2761 = vrot.slane %v2759, 2
    %v2762 = vor.u32 %v2758, %v2761
    %v2763 = vsel %vm2494, %v2753, %v2762
    %v2765 = vshrl.u32 %v2002, 16
    %v2767 = vrot.slane %v2765, 1
    %v2768 = vshll.u32 %v2002, 16
    %v2770 = vrot.slane %v2768, 2
    %v2771 = vor.u32 %v2767, %v2770
    %v2772 = vsel %vm2494, %v2762, %v2771
    %v2774 = vshrl.u32 %v2003, 16
    %v2776 = vrot.slane %v2774, 1
    %v2777 = vshll.u32 %v2003, 16
    %v2779 = vrot.slane %v2777, 2
    %v2780 = vor.u32 %v2776, %v2779
    %v2781 = vsel %vm2494, %v2771, %v2780
    %v2783 = vshrl.u32 %v2004, 16
    %v2785 = vrot.slane %v2783, 1
    %v2786 = vshll.u32 %v2004, 16
    %v2788 = vrot.slane %v2786, 2
    %v2789 = vor.u32 %v2785, %v2788
    %v2790 = vsel %vm2494, %v2780, %v2789
    %v2792 = vshrl.u32 %v2005, 16
    %v2794 = vrot.slane %v2792, 1
    %v2795 = vshll.u32 %v2005, 16
    %v2797 = vrot.slane %v2795, 2
    %v2798 = vor.u32 %v2794, %v2797
    %v2799 = vsel %vm2494, %v2789, %v2798
    %v2801 = vshrl.u32 %v2006, 16
    %v2803 = vrot.slane %v2801, 1
    %v2804 = vshll.u32 %v2006, 16
    %v2806 = vrot.slane %v2804, 2
    %v2807 = vor.u32 %v2803, %v2806
    %v2808 = vsel %vm2494, %v2798, %v2807
    %v2810 = vshrl.u32 %v2007, 16
    %v2812 = vrot.slane %v2810, 1
    %v2813 = vshll.u32 %v2007, 16
    %v2815 = vrot.slane %v2813, 2
    %v2816 = vor.u32 %v2812, %v2815
    %v2817 = vsel %vm2494, %v2807, %v2816
    %v2819 = vshrl.u32 %v2008, 16
    %v2821 = vrot.slane %v2819, 1
    %v2822 = vshll.u32 %v2008, 16
    %v2824 = vrot.slane %v2822, 2
    %v2825 = vor.u32 %v2821, %v2824
    %v2826 = vsel %vm2494, %v2816, %v2825
    %v2828 = vshrl.u32 %v2009, 16
    %v2830 = vrot.slane %v2828, 1
    %v2831 = vshll.u32 %v2009, 16
    %v2833 = vrot.slane %v2831, 2
    %v2834 = vor.u32 %v2830, %v2833
    %v2835 = vsel %vm2494, %v2825, %v2834
    %v2837 = vshrl.u32 %v2493, 16
    %v2839 = vrot.slane %v2837, 1
    %v2840 = vshll.u32 %v2493, 16
    %v2842 = vrot.slane %v2840, 2
    %v2843 = vor.u32 %v2839, %v2842
    %v2844 = vsel %vm2494, %v2834, %v2843
    %v2846 = vsel %vm642, %v2511, 0
    %v2849 = vsel %vm642, %v2520, 0
    %v2852 = vsel %vm642, %v2529, 0
    %v2855 = vsel %vm642, %v2538, 0
    %v2858 = vsel %vm642, %v2547, 0
    %v2861 = vsel %vm642, %v2556, 0
    %v2864 = vsel %vm642, %v2565, 0
    %v2867 = vsel %vm642, %v2574, 0
    %v2870 = vsel %vm642, %v2583, 0
    %v2873 = vsel %vm642, %v2592, 0
    %v2876 = vsel %vm642, %v2601, 0
    %v2879 = vsel %vm642, %v2610, 0
    %v2882 = vsel %vm642, %v2619, 0
    %v2885 = vsel %vm642, %v2628, 0
    %v2888 = vsel %vm642, %v2637, 0
    %v2891 = vsel %vm642, %v2646, 0
    %v2894 = vsel %vm642, %v2655, 0
    %v2897 = vsel %vm642, %v2664, 0
    %v2900 = vsel %vm642, %v2673, 0
    %v2903 = vsel %vm642, %v2682, 0
    %v2906 = vsel %vm642, %v2691, 0
    %v2909 = vsel %vm642, %v2700, 0
    %v2912 = vsel %vm642, %v2709, 0
    %v2915 = vsel %vm642, %v2718, 0
    %v2918 = vsel %vm642, %v2727, 0
    %v2921 = vsel %vm642, %v2736, 0
    %v2924 = vsel %vm642, %v2745, 0
    %v2927 = vsel %vm642, %v2754, 0
    %v2930 = vsel %vm642, %v2763, 0
    %v2933 = vsel %vm642, %v2772, 0
    %v2936 = vsel %vm642, %v2781, 0
    %v2939 = vsel %vm642, %v2790, 0
    %v2942 = vsel %vm642, %v2799, 0
    %v2945 = vsel %vm642, %v2808, 0
    %v2948 = vsel %vm642, %v2817, 0
    %v2951 = vsel %vm642, %v2826, 0
    %v2954 = vsel %vm642, %v2835, 0
    %v2957 = vsel %vm642, %v2844, 0
    %v2960 = vsel %vm642, %v2843, 0
    %v2963 = vsel %vm760, %v2490, 0
    %2965 = vmatpush.bf16.msra.mxu0 0
    %2966 = vmatpush.bf16.msra.mxu0 0
    %2967 = vmatpush.bf16.msra.mxu0 0
    %2968 = vmatpush.bf16.msra.mxu0 0
    %2969 = vmatpush.bf16.msra.mxu0 0
    %2970 = vmatpush.bf16.msra.mxu0 0
    %2971 = vmatpush.bf16.msra.mxu0 0
    %2972 = vmatpush.bf16.msra.mxu0 %v2963
    %2973 = vmatmul.bf16.gmra.mxu0 %v2846
    %v2974 = vpop.f32.mrf.mxu0
    %v2975 = vadd.f32 0.0, %v2974
    %v2976 = vpop.f32.mrf.mxu0
    %v2977 = vadd.f32 0.0, %v2976
    %2978 = vmatmul.bf16.gmra.mxu0 %v2849
    %v2979 = vpop.f32.mrf.mxu0
    %v2980 = vadd.f32 0.0, %v2979
    %v2981 = vpop.f32.mrf.mxu0
    %v2982 = vadd.f32 0.0, %v2981
    %2983 = vmatmul.bf16.gmra.mxu0 %v2852
    %v2984 = vpop.f32.mrf.mxu0
    %v2985 = vadd.f32 0.0, %v2984
    %v2986 = vpop.f32.mrf.mxu0
    %v2987 = vadd.f32 0.0, %v2986
    %2988 = vmatmul.bf16.gmra.mxu0 %v2855
    %v2989 = vpop.f32.mrf.mxu0
    %v2990 = vadd.f32 0.0, %v2989
    %v2991 = vpop.f32.mrf.mxu0
    %v2992 = vadd.f32 0.0, %v2991
    %2993 = vmatmul.bf16.gmra.mxu0 %v2858
    %v2994 = vpop.f32.mrf.mxu0
    %v2995 = vadd.f32 0.0, %v2994
    %v2996 = vpop.f32.mrf.mxu0
    %v2997 = vadd.f32 0.0, %v2996
    %2998 = vmatmul.bf16.gmra.mxu0 %v2861
    %v2999 = vpop.f32.mrf.mxu0
    %v3000 = vadd.f32 0.0, %v2999
    %v3001 = vpop.f32.mrf.mxu0
    %v3002 = vadd.f32 0.0, %v3001
    %3003 = vmatmul.bf16.gmra.mxu0 %v2864
    %v3004 = vpop.f32.mrf.mxu0
    %v3005 = vadd.f32 0.0, %v3004
    %v3006 = vpop.f32.mrf.mxu0
    %v3007 = vadd.f32 0.0, %v3006
    %3008 = vmatmul.bf16.gmra.mxu0 %v2867
    %v3009 = vpop.f32.mrf.mxu0
    %v3010 = vadd.f32 0.0, %v3009
    %v3011 = vpop.f32.mrf.mxu0
    %v3012 = vadd.f32 0.0, %v3011
    %3013 = vmatmul.bf16.gmra.mxu0 %v2870
    %v3014 = vpop.f32.mrf.mxu0
    %v3015 = vadd.f32 0.0, %v3014
    %v3016 = vpop.f32.mrf.mxu0
    %v3017 = vadd.f32 0.0, %v3016
    %3018 = vmatmul.bf16.gmra.mxu0 %v2873
    %v3019 = vpop.f32.mrf.mxu0
    %v3020 = vadd.f32 0.0, %v3019
    %v3021 = vpop.f32.mrf.mxu0
    %v3022 = vadd.f32 0.0, %v3021
    %3023 = vmatmul.bf16.gmra.mxu0 %v2876
    %v3024 = vpop.f32.mrf.mxu0
    %v3025 = vadd.f32 0.0, %v3024
    %v3026 = vpop.f32.mrf.mxu0
    %v3027 = vadd.f32 0.0, %v3026
    %3028 = vmatmul.bf16.gmra.mxu0 %v2879
    %v3029 = vpop.f32.mrf.mxu0
    %v3030 = vadd.f32 0.0, %v3029
    %v3031 = vpop.f32.mrf.mxu0
    %v3032 = vadd.f32 0.0, %v3031
    %3033 = vmatmul.bf16.gmra.mxu0 %v2882
    %v3034 = vpop.f32.mrf.mxu0
    %v3035 = vadd.f32 0.0, %v3034
    %v3036 = vpop.f32.mrf.mxu0
    %v3037 = vadd.f32 0.0, %v3036
    %3038 = vmatmul.bf16.gmra.mxu0 %v2885
    %v3039 = vpop.f32.mrf.mxu0
    %v3040 = vadd.f32 0.0, %v3039
    %v3041 = vpop.f32.mrf.mxu0
    %v3042 = vadd.f32 0.0, %v3041
    %3043 = vmatmul.bf16.gmra.mxu0 %v2888
    %v3044 = vpop.f32.mrf.mxu0
    %v3045 = vadd.f32 0.0, %v3044
    %v3046 = vpop.f32.mrf.mxu0
    %v3047 = vadd.f32 0.0, %v3046
    %3048 = vmatmul.bf16.gmra.mxu0 %v2891
    %v3049 = vpop.f32.mrf.mxu0
    %v3050 = vadd.f32 0.0, %v3049
    %v3051 = vpop.f32.mrf.mxu0
    %v3052 = vadd.f32 0.0, %v3051
    %3053 = vmatmul.bf16.gmra.mxu0 %v2894
    %v3054 = vpop.f32.mrf.mxu0
    %v3055 = vadd.f32 0.0, %v3054
    %v3056 = vpop.f32.mrf.mxu0
    %v3057 = vadd.f32 0.0, %v3056
    %3058 = vmatmul.bf16.gmra.mxu0 %v2897
    %v3059 = vpop.f32.mrf.mxu0
    %v3060 = vadd.f32 0.0, %v3059
    %v3061 = vpop.f32.mrf.mxu0
    %v3062 = vadd.f32 0.0, %v3061
    %3063 = vmatmul.bf16.gmra.mxu0 %v2900
    %v3064 = vpop.f32.mrf.mxu0
    %v3065 = vadd.f32 0.0, %v3064
    %v3066 = vpop.f32.mrf.mxu0
    %v3067 = vadd.f32 0.0, %v3066
    %3068 = vmatmul.bf16.gmra.mxu0 %v2903
    %v3069 = vpop.f32.mrf.mxu0
    %v3070 = vadd.f32 0.0, %v3069
    %v3071 = vpop.f32.mrf.mxu0
    %v3072 = vadd.f32 0.0, %v3071
    %3073 = vmatmul.bf16.gmra.mxu0 %v2906
    %v3074 = vpop.f32.mrf.mxu0
    %v3075 = vadd.f32 0.0, %v3074
    %v3076 = vpop.f32.mrf.mxu0
    %v3077 = vadd.f32 0.0, %v3076
    %3078 = vmatmul.bf16.gmra.mxu0 %v2909
    %v3079 = vpop.f32.mrf.mxu0
    %v3080 = vadd.f32 0.0, %v3079
    %v3081 = vpop.f32.mrf.mxu0
    %v3082 = vadd.f32 0.0, %v3081
    %3083 = vmatmul.bf16.gmra.mxu0 %v2912
    %v3084 = vpop.f32.mrf.mxu0
    %v3085 = vadd.f32 0.0, %v3084
    %v3086 = vpop.f32.mrf.mxu0
    %v3087 = vadd.f32 0.0, %v3086
    %3088 = vmatmul.bf16.gmra.mxu0 %v2915
    %v3089 = vpop.f32.mrf.mxu0
    %v3090 = vadd.f32 0.0, %v3089
    %v3091 = vpop.f32.mrf.mxu0
    %v3092 = vadd.f32 0.0, %v3091
    %3093 = vmatmul.bf16.gmra.mxu0 %v2918
    %v3094 = vpop.f32.mrf.mxu0
    %v3095 = vadd.f32 0.0, %v3094
    %v3096 = vpop.f32.mrf.mxu0
    %v3097 = vadd.f32 0.0, %v3096
    %3098 = vmatmul.bf16.gmra.mxu0 %v2921
    %v3099 = vpop.f32.mrf.mxu0
    %v3100 = vadd.f32 0.0, %v3099
    %v3101 = vpop.f32.mrf.mxu0
    %v3102 = vadd.f32 0.0, %v3101
    %3103 = vmatmul.bf16.gmra.mxu0 %v2924
    %v3104 = vpop.f32.mrf.mxu0
    %v3105 = vadd.f32 0.0, %v3104
    %v3106 = vpop.f32.mrf.mxu0
    %v3107 = vadd.f32 0.0, %v3106
    %3108 = vmatmul.bf16.gmra.mxu0 %v2927
    %v3109 = vpop.f32.mrf.mxu0
    %v3110 = vadd.f32 0.0, %v3109
    %v3111 = vpop.f32.mrf.mxu0
    %v3112 = vadd.f32 0.0, %v3111
    %3113 = vmatmul.bf16.gmra.mxu0 %v2930
    %v3114 = vpop.f32.mrf.mxu0
    %v3115 = vadd.f32 0.0, %v3114
    %v3116 = vpop.f32.mrf.mxu0
    %v3117 = vadd.f32 0.0, %v3116
    %3118 = vmatmul.bf16.gmra.mxu0 %v2933
    %v3119 = vpop.f32.mrf.mxu0
    %v3120 = vadd.f32 0.0, %v3119
    %v3121 = vpop.f32.mrf.mxu0
    %v3122 = vadd.f32 0.0, %v3121
    %3123 = vmatmul.bf16.gmra.mxu0 %v2936
    %v3124 = vpop.f32.mrf.mxu0
    %v3125 = vadd.f32 0.0, %v3124
    %v3126 = vpop.f32.mrf.mxu0
    %v3127 = vadd.f32 0.0, %v3126
    %3128 = vmatmul.bf16.gmra.mxu0 %v2939
    %v3129 = vpop.f32.mrf.mxu0
    %v3130 = vadd.f32 0.0, %v3129
    %v3131 = vpop.f32.mrf.mxu0
    %v3132 = vadd.f32 0.0, %v3131
    %3133 = vmatmul.bf16.gmra.mxu0 %v2942
    %v3134 = vpop.f32.mrf.mxu0
    %v3135 = vadd.f32 0.0, %v3134
    %v3136 = vpop.f32.mrf.mxu0
    %v3137 = vadd.f32 0.0, %v3136
    %3138 = vmatmul.bf16.gmra.mxu0 %v2945
    %v3139 = vpop.f32.mrf.mxu0
    %v3140 = vadd.f32 0.0, %v3139
    %v3141 = vpop.f32.mrf.mxu0
    %v3142 = vadd.f32 0.0, %v3141
    %3143 = vmatmul.bf16.gmra.mxu0 %v2948
    %v3144 = vpop.f32.mrf.mxu0
    %v3145 = vadd.f32 0.0, %v3144
    %v3146 = vpop.f32.mrf.mxu0
    %v3147 = vadd.f32 0.0, %v3146
    %3148 = vmatmul.bf16.gmra.mxu0 %v2951
    %v3149 = vpop.f32.mrf.mxu0
    %v3150 = vadd.f32 0.0, %v3149
    %v3151 = vpop.f32.mrf.mxu0
    %v3152 = vadd.f32 0.0, %v3151
    %3153 = vmatmul.bf16.gmra.mxu0 %v2954
    %v3154 = vpop.f32.mrf.mxu0
    %v3155 = vadd.f32 0.0, %v3154
    %v3156 = vpop.f32.mrf.mxu0
    %v3157 = vadd.f32 0.0, %v3156
    %3158 = vmatmul.bf16.gmra.mxu0 %v2957
    %v3159 = vpop.f32.mrf.mxu0
    %v3160 = vadd.f32 0.0, %v3159
    %v3161 = vpop.f32.mrf.mxu0
    %v3162 = vadd.f32 0.0, %v3161
    %3163 = vmatmul.bf16.gmra.mxu0 %v2960
    %v3164 = vpop.f32.mrf.mxu0
    %v3165 = vadd.f32 0.0, %v3164
    %v3166 = vpop.f32.mrf.mxu0
    %3167 = vdwg.mxu0
    %v3168 = vadd.f32 %v2411, %v2975
    %v3169 = vadd.f32 %v2412, %v2977
    %v3170 = vadd.f32 %v2413, %v2980
    %v3171 = vadd.f32 %v2414, %v2982
    %v3172 = vadd.f32 %v2415, %v2985
    %v3173 = vadd.f32 %v2416, %v2987
    %v3174 = vadd.f32 %v2417, %v2990
    %v3175 = vadd.f32 %v2418, %v2992
    %v3176 = vadd.f32 %v2419, %v2995
    %v3177 = vadd.f32 %v2420, %v2997
    %v3178 = vadd.f32 %v2421, %v3000
    %v3179 = vadd.f32 %v2422, %v3002
    %v3180 = vadd.f32 %v2423, %v3005
    %v3181 = vadd.f32 %v2424, %v3007
    %v3182 = vadd.f32 %v2425, %v3010
    %v3183 = vadd.f32 %v2426, %v3012
    %v3184 = vadd.f32 %v2427, %v3015
    %v3185 = vadd.f32 %v2428, %v3017
    %v3186 = vadd.f32 %v2429, %v3020
    %v3187 = vadd.f32 %v2430, %v3022
    %v3188 = vadd.f32 %v2431, %v3025
    %v3189 = vadd.f32 %v2432, %v3027
    %v3190 = vadd.f32 %v2433, %v3030
    %v3191 = vadd.f32 %v2434, %v3032
    %v3192 = vadd.f32 %v2435, %v3035
    %v3193 = vadd.f32 %v2436, %v3037
    %v3194 = vadd.f32 %v2437, %v3040
    %v3195 = vadd.f32 %v2438, %v3042
    %v3196 = vadd.f32 %v2439, %v3045
    %v3197 = vadd.f32 %v2440, %v3047
    %v3198 = vadd.f32 %v2441, %v3050
    %v3199 = vadd.f32 %v2442, %v3052
    %v3200 = vadd.f32 %v2443, %v3055
    %v3201 = vadd.f32 %v2444, %v3057
    %v3202 = vadd.f32 %v2445, %v3060
    %v3203 = vadd.f32 %v2446, %v3062
    %v3204 = vadd.f32 %v2447, %v3065
    %v3205 = vadd.f32 %v2448, %v3067
    %v3206 = vadd.f32 %v2449, %v3070
    %v3207 = vadd.f32 %v2450, %v3072
    %v3208 = vadd.f32 %v2451, %v3075
    %v3209 = vadd.f32 %v2452, %v3077
    %v3210 = vadd.f32 %v2453, %v3080
    %v3211 = vadd.f32 %v2454, %v3082
    %v3212 = vadd.f32 %v2455, %v3085
    %v3213 = vadd.f32 %v2456, %v3087
    %v3214 = vadd.f32 %v2457, %v3090
    %v3215 = vadd.f32 %v2458, %v3092
    %v3216 = vadd.f32 %v2459, %v3095
    %v3217 = vadd.f32 %v2460, %v3097
    %v3218 = vadd.f32 %v2461, %v3100
    %v3219 = vadd.f32 %v2462, %v3102
    %v3220 = vadd.f32 %v2463, %v3105
    %v3221 = vadd.f32 %v2464, %v3107
    %v3222 = vadd.f32 %v2465, %v3110
    %v3223 = vadd.f32 %v2466, %v3112
    %v3224 = vadd.f32 %v2467, %v3115
    %v3225 = vadd.f32 %v2468, %v3117
    %v3226 = vadd.f32 %v2469, %v3120
    %v3227 = vadd.f32 %v2470, %v3122
    %v3228 = vadd.f32 %v2471, %v3125
    %v3229 = vadd.f32 %v2472, %v3127
    %v3230 = vadd.f32 %v2473, %v3130
    %v3231 = vadd.f32 %v2474, %v3132
    %v3232 = vadd.f32 %v2475, %v3135
    %v3233 = vadd.f32 %v2476, %v3137
    %v3234 = vadd.f32 %v2477, %v3140
    %v3235 = vadd.f32 %v2478, %v3142
    %v3236 = vadd.f32 %v2479, %v3145
    %v3237 = vadd.f32 %v2480, %v3147
    %v3238 = vadd.f32 %v2481, %v3150
    %v3239 = vadd.f32 %v2482, %v3152
    %v3240 = vadd.f32 %v2483, %v3155
    %v3241 = vadd.f32 %v2484, %v3157
    %v3242 = vadd.f32 %v2485, %v3160
    %v3243 = vadd.f32 %v2486, %v3162
    %v3244 = vadd.f32 %v2487, %v3165
    %v3245 = vld [vmem:[%s0 + $0x8] sm:$0xc]
    %s3246 = scalar_lea.vmem %s1, 10
    %v3247 = vld [vmem:[%s3246] sm:$0x3]
    %v3249 = vunpack.c.l.b16 %v3245
    %v3250 = vpack.c.b16 %v1896, %v3249
    %vm3251 = vcmask 1045504
    %v3252 = vrot.slane %v3250, 2
    %v3253 = vrot.slane %v1973, 2
    %v3254 = vsel %vm3251, %v3252, %v3253
    %v3255 = vrot.slane %v1974, 2
    %v3256 = vsel %vm3251, %v3253, %v3255
    %v3257 = vrot.slane %v1975, 2
    %v3258 = vsel %vm3251, %v3255, %v3257
    %v3259 = vrot.slane %v1976, 2
    %v3260 = vsel %vm3251, %v3257, %v3259
    %v3261 = vrot.slane %v1977, 2
    %v3262 = vsel %vm3251, %v3259, %v3261
    %v3263 = vrot.slane %v1978, 2
    %v3264 = vsel %vm3251, %v3261, %v3263
    %v3265 = vrot.slane %v1979, 2
    %v3266 = vsel %vm3251, %v3263, %v3265
    %v3267 = vrot.slane %v1980, 2
    %v3268 = vsel %vm3251, %v3265, %v3267
    %v3269 = vrot.slane %v1981, 2
    %v3270 = vsel %vm3251, %v3267, %v3269
    %v3271 = vrot.slane %v1982, 2
    %v3272 = vsel %vm3251, %v3269, %v3271
    %v3273 = vrot.slane %v1983, 2
    %v3274 = vsel %vm3251, %v3271, %v3273
    %v3275 = vrot.slane %v1984, 2
    %v3276 = vsel %vm3251, %v3273, %v3275
    %v3277 = vrot.slane %v1985, 2
    %v3278 = vsel %vm3251, %v3275, %v3277
    %v3279 = vrot.slane %v1986, 2
    %v3280 = vsel %vm3251, %v3277, %v3279
    %v3281 = vrot.slane %v1987, 2
    %v3282 = vsel %vm3251, %v3279, %v3281
    %v3283 = vrot.slane %v1988, 2
    %v3284 = vsel %vm3251, %v3281, %v3283
    %v3285 = vrot.slane %v1989, 2
    %v3286 = vsel %vm3251, %v3283, %v3285
    %v3287 = vrot.slane %v1990, 2
    %v3288 = vsel %vm3251, %v3285, %v3287
    %v3289 = vrot.slane %v1991, 2
    %v3290 = vsel %vm3251, %v3287, %v3289
    %v3291 = vrot.slane %v1992, 2
    %v3292 = vsel %vm3251, %v3289, %v3291
    %v3293 = vrot.slane %v1993, 2
    %v3294 = vsel %vm3251, %v3291, %v3293
    %v3295 = vrot.slane %v1994, 2
    %v3296 = vsel %vm3251, %v3293, %v3295
    %v3297 = vrot.slane %v1995, 2
    %v3298 = vsel %vm3251, %v3295, %v3297
    %v3299 = vrot.slane %v1996, 2
    %v3300 = vsel %vm3251, %v3297, %v3299
    %v3301 = vrot.slane %v1997, 2
    %v3302 = vsel %vm3251, %v3299, %v3301
    %v3303 = vrot.slane %v1998, 2
    %v3304 = vsel %vm3251, %v3301, %v3303
    %v3305 = vrot.slane %v1999, 2
    %v3306 = vsel %vm3251, %v3303, %v3305
    %v3307 = vrot.slane %v2000, 2
    %v3308 = vsel %vm3251, %v3305, %v3307
    %v3309 = vrot.slane %v2001, 2
    %v3310 = vsel %vm3251, %v3307, %v3309
    %v3311 = vrot.slane %v2002, 2
    %v3312 = vsel %vm3251, %v3309, %v3311
    %v3313 = vrot.slane %v2003, 2
    %v3314 = vsel %vm3251, %v3311, %v3313
    %v3315 = vrot.slane %v2004, 2
    %v3316 = vsel %vm3251, %v3313, %v3315
    %v3317 = vrot.slane %v2005, 2
    %v3318 = vsel %vm3251, %v3315, %v3317
    %v3319 = vrot.slane %v2006, 2
    %v3320 = vsel %vm3251, %v3317, %v3319
    %v3321 = vrot.slane %v2007, 2
    %v3322 = vsel %vm3251, %v3319, %v3321
    %v3323 = vrot.slane %v2008, 2
    %v3324 = vsel %vm3251, %v3321, %v3323
    %v3325 = vrot.slane %v2009, 2
    %v3326 = vsel %vm3251, %v3323, %v3325
    %v3327 = vrot.slane %v2493, 2
    %v3328 = vsel %vm3251, %v3325, %v3327
    %v3330 = vsel %vm642, %v3254, 0
    %v3333 = vsel %vm642, %v3256, 0
    %v3336 = vsel %vm642, %v3258, 0
    %v3339 = vsel %vm642, %v3260, 0
    %v3342 = vsel %vm642, %v3262, 0
    %v3345 = vsel %vm642, %v3264, 0
    %v3348 = vsel %vm642, %v3266, 0
    %v3351 = vsel %vm642, %v3268, 0
    %v3354 = vsel %vm642, %v3270, 0
    %v3357 = vsel %vm642, %v3272, 0
    %v3360 = vsel %vm642, %v3274, 0
    %v3363 = vsel %vm642, %v3276, 0
    %v3366 = vsel %vm642, %v3278, 0
    %v3369 = vsel %vm642, %v3280, 0
    %v3372 = vsel %vm642, %v3282, 0
    %v3375 = vsel %vm642, %v3284, 0
    %v3378 = vsel %vm642, %v3286, 0
    %v3381 = vsel %vm642, %v3288, 0
    %v3384 = vsel %vm642, %v3290, 0
    %v3387 = vsel %vm642, %v3292, 0
    %v3390 = vsel %vm642, %v3294, 0
    %v3393 = vsel %vm642, %v3296, 0
    %v3396 = vsel %vm642, %v3298, 0
    %v3399 = vsel %vm642, %v3300, 0
    %v3402 = vsel %vm642, %v3302, 0
    %v3405 = vsel %vm642, %v3304, 0
    %v3408 = vsel %vm642, %v3306, 0
    %v3411 = vsel %vm642, %v3308, 0
    %v3414 = vsel %vm642, %v3310, 0
    %v3417 = vsel %vm642, %v3312, 0
    %v3420 = vsel %vm642, %v3314, 0
    %v3423 = vsel %vm642, %v3316, 0
    %v3426 = vsel %vm642, %v3318, 0
    %v3429 = vsel %vm642, %v3320, 0
    %v3432 = vsel %vm642, %v3322, 0
    %v3435 = vsel %vm642, %v3324, 0
    %v3438 = vsel %vm642, %v3326, 0
    %v3441 = vsel %vm642, %v3328, 0
    %v3444 = vsel %vm642, %v3327, 0
    %v3447 = vsel %vm760, %v3247, 0
    %3449 = vmatpush.bf16.msra.mxu0 0
    %3450 = vmatpush.bf16.msra.mxu0 0
    %3451 = vmatpush.bf16.msra.mxu0 0
    %3452 = vmatpush.bf16.msra.mxu0 0
    %3453 = vmatpush.bf16.msra.mxu0 0
    %3454 = vmatpush.bf16.msra.mxu0 0
    %3455 = vmatpush.bf16.msra.mxu0 0
    %3456 = vmatpush.bf16.msra.mxu0 %v3447
    %3457 = vmatmul.bf16.gmra.mxu0 %v3330
    %v3458 = vpop.f32.mrf.mxu0
    %v3459 = vadd.f32 0.0, %v3458
    %v3460 = vpop.f32.mrf.mxu0
    %v3461 = vadd.f32 0.0, %v3460
    %3462 = vmatmul.bf16.gmra.mxu0 %v3333
    %v3463 = vpop.f32.mrf.mxu0
    %v3464 = vadd.f32 0.0, %v3463
    %v3465 = vpop.f32.mrf.mxu0
    %v3466 = vadd.f32 0.0, %v3465
    %3467 = vmatmul.bf16.gmra.mxu0 %v3336
    %v3468 = vpop.f32.mrf.mxu0
    %v3469 = vadd.f32 0.0, %v3468
    %v3470 = vpop.f32.mrf.mxu0
    %v3471 = vadd.f32 0.0, %v3470
    %3472 = vmatmul.bf16.gmra.mxu0 %v3339
    %v3473 = vpop.f32.mrf.mxu0
    %v3474 = vadd.f32 0.0, %v3473
    %v3475 = vpop.f32.mrf.mxu0
    %v3476 = vadd.f32 0.0, %v3475
    %3477 = vmatmul.bf16.gmra.mxu0 %v3342
    %v3478 = vpop.f32.mrf.mxu0
    %v3479 = vadd.f32 0.0, %v3478
    %v3480 = vpop.f32.mrf.mxu0
    %v3481 = vadd.f32 0.0, %v3480
    %3482 = vmatmul.bf16.gmra.mxu0 %v3345
    %v3483 = vpop.f32.mrf.mxu0
    %v3484 = vadd.f32 0.0, %v3483
    %v3485 = vpop.f32.mrf.mxu0
    %v3486 = vadd.f32 0.0, %v3485
    %3487 = vmatmul.bf16.gmra.mxu0 %v3348
    %v3488 = vpop.f32.mrf.mxu0
    %v3489 = vadd.f32 0.0, %v3488
    %v3490 = vpop.f32.mrf.mxu0
    %v3491 = vadd.f32 0.0, %v3490
    %3492 = vmatmul.bf16.gmra.mxu0 %v3351
    %v3493 = vpop.f32.mrf.mxu0
    %v3494 = vadd.f32 0.0, %v3493
    %v3495 = vpop.f32.mrf.mxu0
    %v3496 = vadd.f32 0.0, %v3495
    %3497 = vmatmul.bf16.gmra.mxu0 %v3354
    %v3498 = vpop.f32.mrf.mxu0
    %v3499 = vadd.f32 0.0, %v3498
    %v3500 = vpop.f32.mrf.mxu0
    %v3501 = vadd.f32 0.0, %v3500
    %3502 = vmatmul.bf16.gmra.mxu0 %v3357
    %v3503 = vpop.f32.mrf.mxu0
    %v3504 = vadd.f32 0.0, %v3503
    %v3505 = vpop.f32.mrf.mxu0
    %v3506 = vadd.f32 0.0, %v3505
    %3507 = vmatmul.bf16.gmra.mxu0 %v3360
    %v3508 = vpop.f32.mrf.mxu0
    %v3509 = vadd.f32 0.0, %v3508
    %v3510 = vpop.f32.mrf.mxu0
    %v3511 = vadd.f32 0.0, %v3510
    %3512 = vmatmul.bf16.gmra.mxu0 %v3363
    %v3513 = vpop.f32.mrf.mxu0
    %v3514 = vadd.f32 0.0, %v3513
    %v3515 = vpop.f32.mrf.mxu0
    %v3516 = vadd.f32 0.0, %v3515
    %3517 = vmatmul.bf16.gmra.mxu0 %v3366
    %v3518 = vpop.f32.mrf.mxu0
    %v3519 = vadd.f32 0.0, %v3518
    %v3520 = vpop.f32.mrf.mxu0
    %v3521 = vadd.f32 0.0, %v3520
    %3522 = vmatmul.bf16.gmra.mxu0 %v3369
    %v3523 = vpop.f32.mrf.mxu0
    %v3524 = vadd.f32 0.0, %v3523
    %v3525 = vpop.f32.mrf.mxu0
    %v3526 = vadd.f32 0.0, %v3525
    %3527 = vmatmul.bf16.gmra.mxu0 %v3372
    %v3528 = vpop.f32.mrf.mxu0
    %v3529 = vadd.f32 0.0, %v3528
    %v3530 = vpop.f32.mrf.mxu0
    %v3531 = vadd.f32 0.0, %v3530
    %3532 = vmatmul.bf16.gmra.mxu0 %v3375
    %v3533 = vpop.f32.mrf.mxu0
    %v3534 = vadd.f32 0.0, %v3533
    %v3535 = vpop.f32.mrf.mxu0
    %v3536 = vadd.f32 0.0, %v3535
    %3537 = vmatmul.bf16.gmra.mxu0 %v3378
    %v3538 = vpop.f32.mrf.mxu0
    %v3539 = vadd.f32 0.0, %v3538
    %v3540 = vpop.f32.mrf.mxu0
    %v3541 = vadd.f32 0.0, %v3540
    %3542 = vmatmul.bf16.gmra.mxu0 %v3381
    %v3543 = vpop.f32.mrf.mxu0
    %v3544 = vadd.f32 0.0, %v3543
    %v3545 = vpop.f32.mrf.mxu0
    %v3546 = vadd.f32 0.0, %v3545
    %3547 = vmatmul.bf16.gmra.mxu0 %v3384
    %v3548 = vpop.f32.mrf.mxu0
    %v3549 = vadd.f32 0.0, %v3548
    %v3550 = vpop.f32.mrf.mxu0
    %v3551 = vadd.f32 0.0, %v3550
    %3552 = vmatmul.bf16.gmra.mxu0 %v3387
    %v3553 = vpop.f32.mrf.mxu0
    %v3554 = vadd.f32 0.0, %v3553
    %v3555 = vpop.f32.mrf.mxu0
    %v3556 = vadd.f32 0.0, %v3555
    %3557 = vmatmul.bf16.gmra.mxu0 %v3390
    %v3558 = vpop.f32.mrf.mxu0
    %v3559 = vadd.f32 0.0, %v3558
    %v3560 = vpop.f32.mrf.mxu0
    %v3561 = vadd.f32 0.0, %v3560
    %3562 = vmatmul.bf16.gmra.mxu0 %v3393
    %v3563 = vpop.f32.mrf.mxu0
    %v3564 = vadd.f32 0.0, %v3563
    %v3565 = vpop.f32.mrf.mxu0
    %v3566 = vadd.f32 0.0, %v3565
    %3567 = vmatmul.bf16.gmra.mxu0 %v3396
    %v3568 = vpop.f32.mrf.mxu0
    %v3569 = vadd.f32 0.0, %v3568
    %v3570 = vpop.f32.mrf.mxu0
    %v3571 = vadd.f32 0.0, %v3570
    %3572 = vmatmul.bf16.gmra.mxu0 %v3399
    %v3573 = vpop.f32.mrf.mxu0
    %v3574 = vadd.f32 0.0, %v3573
    %v3575 = vpop.f32.mrf.mxu0
    %v3576 = vadd.f32 0.0, %v3575
    %3577 = vmatmul.bf16.gmra.mxu0 %v3402
    %v3578 = vpop.f32.mrf.mxu0
    %v3579 = vadd.f32 0.0, %v3578
    %v3580 = vpop.f32.mrf.mxu0
    %v3581 = vadd.f32 0.0, %v3580
    %3582 = vmatmul.bf16.gmra.mxu0 %v3405
    %v3583 = vpop.f32.mrf.mxu0
    %v3584 = vadd.f32 0.0, %v3583
    %v3585 = vpop.f32.mrf.mxu0
    %v3586 = vadd.f32 0.0, %v3585
    %3587 = vmatmul.bf16.gmra.mxu0 %v3408
    %v3588 = vpop.f32.mrf.mxu0
    %v3589 = vadd.f32 0.0, %v3588
    %v3590 = vpop.f32.mrf.mxu0
    %v3591 = vadd.f32 0.0, %v3590
    %3592 = vmatmul.bf16.gmra.mxu0 %v3411
    %v3593 = vpop.f32.mrf.mxu0
    %v3594 = vadd.f32 0.0, %v3593
    %v3595 = vpop.f32.mrf.mxu0
    %v3596 = vadd.f32 0.0, %v3595
    %3597 = vmatmul.bf16.gmra.mxu0 %v3414
    %v3598 = vpop.f32.mrf.mxu0
    %v3599 = vadd.f32 0.0, %v3598
    %v3600 = vpop.f32.mrf.mxu0
    %v3601 = vadd.f32 0.0, %v3600
    %3602 = vmatmul.bf16.gmra.mxu0 %v3417
    %v3603 = vpop.f32.mrf.mxu0
    %v3604 = vadd.f32 0.0, %v3603
    %v3605 = vpop.f32.mrf.mxu0
    %v3606 = vadd.f32 0.0, %v3605
    %3607 = vmatmul.bf16.gmra.mxu0 %v3420
    %v3608 = vpop.f32.mrf.mxu0
    %v3609 = vadd.f32 0.0, %v3608
    %v3610 = vpop.f32.mrf.mxu0
    %v3611 = vadd.f32 0.0, %v3610
    %3612 = vmatmul.bf16.gmra.mxu0 %v3423
    %v3613 = vpop.f32.mrf.mxu0
    %v3614 = vadd.f32 0.0, %v3613
    %v3615 = vpop.f32.mrf.mxu0
    %v3616 = vadd.f32 0.0, %v3615
    %3617 = vmatmul.bf16.gmra.mxu0 %v3426
    %v3618 = vpop.f32.mrf.mxu0
    %v3619 = vadd.f32 0.0, %v3618
    %v3620 = vpop.f32.mrf.mxu0
    %v3621 = vadd.f32 0.0, %v3620
    %3622 = vmatmul.bf16.gmra.mxu0 %v3429
    %v3623 = vpop.f32.mrf.mxu0
    %v3624 = vadd.f32 0.0, %v3623
    %v3625 = vpop.f32.mrf.mxu0
    %v3626 = vadd.f32 0.0, %v3625
    %3627 = vmatmul.bf16.gmra.mxu0 %v3432
    %v3628 = vpop.f32.mrf.mxu0
    %v3629 = vadd.f32 0.0, %v3628
    %v3630 = vpop.f32.mrf.mxu0
    %v3631 = vadd.f32 0.0, %v3630
    %3632 = vmatmul.bf16.gmra.mxu0 %v3435
    %v3633 = vpop.f32.mrf.mxu0
    %v3634 = vadd.f32 0.0, %v3633
    %v3635 = vpop.f32.mrf.mxu0
    %v3636 = vadd.f32 0.0, %v3635
    %3637 = vmatmul.bf16.gmra.mxu0 %v3438
    %v3638 = vpop.f32.mrf.mxu0
    %v3639 = vadd.f32 0.0, %v3638
    %v3640 = vpop.f32.mrf.mxu0
    %v3641 = vadd.f32 0.0, %v3640
    %3642 = vmatmul.bf16.gmra.mxu0 %v3441
    %v3643 = vpop.f32.mrf.mxu0
    %v3644 = vadd.f32 0.0, %v3643
    %v3645 = vpop.f32.mrf.mxu0
    %v3646 = vadd.f32 0.0, %v3645
    %3647 = vmatmul.bf16.gmra.mxu0 %v3444
    %v3648 = vpop.f32.mrf.mxu0
    %v3649 = vadd.f32 0.0, %v3648
    %v3650 = vpop.f32.mrf.mxu0
    %3651 = vdwg.mxu0
    %v3652 = vadd.f32 %v3168, %v3459
    %v3653 = vadd.f32 %v3169, %v3461
    %v3654 = vadd.f32 %v3170, %v3464
    %v3655 = vadd.f32 %v3171, %v3466
    %v3656 = vadd.f32 %v3172, %v3469
    %v3657 = vadd.f32 %v3173, %v3471
    %v3658 = vadd.f32 %v3174, %v3474
    %v3659 = vadd.f32 %v3175, %v3476
    %v3660 = vadd.f32 %v3176, %v3479
    %v3661 = vadd.f32 %v3177, %v3481
    %v3662 = vadd.f32 %v3178, %v3484
    %v3663 = vadd.f32 %v3179, %v3486
    %v3664 = vadd.f32 %v3180, %v3489
    %v3665 = vadd.f32 %v3181, %v3491
    %v3666 = vadd.f32 %v3182, %v3494
    %v3667 = vadd.f32 %v3183, %v3496
    %v3668 = vadd.f32 %v3184, %v3499
    %v3669 = vadd.f32 %v3185, %v3501
    %v3670 = vadd.f32 %v3186, %v3504
    %v3671 = vadd.f32 %v3187, %v3506
    %v3672 = vadd.f32 %v3188, %v3509
    %v3673 = vadd.f32 %v3189, %v3511
    %v3674 = vadd.f32 %v3190, %v3514
    %v3675 = vadd.f32 %v3191, %v3516
    %v3676 = vadd.f32 %v3192, %v3519
    %v3677 = vadd.f32 %v3193, %v3521
    %v3678 = vadd.f32 %v3194, %v3524
    %v3679 = vadd.f32 %v3195, %v3526
    %v3680 = vadd.f32 %v3196, %v3529
    %v3681 = vadd.f32 %v3197, %v3531
    %v3682 = vadd.f32 %v3198, %v3534
    %v3683 = vadd.f32 %v3199, %v3536
    %v3684 = vadd.f32 %v3200, %v3539
    %v3685 = vadd.f32 %v3201, %v3541
    %v3686 = vadd.f32 %v3202, %v3544
    %v3687 = vadd.f32 %v3203, %v3546
    %v3688 = vadd.f32 %v3204, %v3549
    %v3689 = vadd.f32 %v3205, %v3551
    %v3690 = vadd.f32 %v3206, %v3554
    %v3691 = vadd.f32 %v3207, %v3556
    %v3692 = vadd.f32 %v3208, %v3559
    %v3693 = vadd.f32 %v3209, %v3561
    %v3694 = vadd.f32 %v3210, %v3564
    %v3695 = vadd.f32 %v3211, %v3566
    %v3696 = vadd.f32 %v3212, %v3569
    %v3697 = vadd.f32 %v3213, %v3571
    %v3698 = vadd.f32 %v3214, %v3574
    %v3699 = vadd.f32 %v3215, %v3576
    %v3700 = vadd.f32 %v3216, %v3579
    %v3701 = vadd.f32 %v3217, %v3581
    %v3702 = vadd.f32 %v3218, %v3584
    %v3703 = vadd.f32 %v3219, %v3586
    %v3704 = vadd.f32 %v3220, %v3589
    %v3705 = vadd.f32 %v3221, %v3591
    %v3706 = vadd.f32 %v3222, %v3594
    %v3707 = vadd.f32 %v3223, %v3596
    %v3708 = vadd.f32 %v3224, %v3599
    %v3709 = vadd.f32 %v3225, %v3601
    %v3710 = vadd.f32 %v3226, %v3604
    %v3711 = vadd.f32 %v3227, %v3606
    %v3712 = vadd.f32 %v3228, %v3609
    %v3713 = vadd.f32 %v3229, %v3611
    %v3714 = vadd.f32 %v3230, %v3614
    %v3715 = vadd.f32 %v3231, %v3616
    %v3716 = vadd.f32 %v3232, %v3619
    %v3717 = vadd.f32 %v3233, %v3621
    %v3718 = vadd.f32 %v3234, %v3624
    %v3719 = vadd.f32 %v3235, %v3626
    %v3720 = vadd.f32 %v3236, %v3629
    %v3721 = vadd.f32 %v3237, %v3631
    %v3722 = vadd.f32 %v3238, %v3634
    %v3723 = vadd.f32 %v3239, %v3636
    %v3724 = vadd.f32 %v3240, %v3639
    %v3725 = vadd.f32 %v3241, %v3641
    %v3726 = vadd.f32 %v3242, %v3644
    %v3727 = vadd.f32 %v3243, %v3646
    %v3728 = vadd.f32 %v3244, %v3649
    %v3729 = vld [vmem:[%s0 + $0x10] sm:$0xc]
    %v3730 = vld [vmem:[%s0 + $0x14] sm:$0xf]
    %v3731 = vld [vmem:[%s0 + $0x18] sm:$0xf]
    %v3732 = vld [vmem:[%s0 + $0x1c] sm:$0xf]
    %v3733 = vld [vmem:[%s0 + $0x20] sm:$0xf]
    %v3734 = vld [vmem:[%s0 + $0x24] sm:$0xf]
    %v3735 = vld [vmem:[%s0 + $0x28] sm:$0xf]
    %v3736 = vld [vmem:[%s0 + $0x2c] sm:$0xf]
    %v3737 = vld [vmem:[%s0 + $0x30] sm:$0xf]
    %v3738 = vld [vmem:[%s0 + $0x34] sm:$0xf]
    %v3739 = vld [vmem:[%s0 + $0x38] sm:$0xf]
    %v3740 = vld [vmem:[%s0 + $0x3c] sm:$0xf]
    %v3741 = vld [vmem:[%s0 + $0x40] sm:$0xf]
    %v3742 = vld [vmem:[%s0 + $0x44] sm:$0xf]
    %v3743 = vld [vmem:[%s0 + $0x48] sm:$0xf]
    %v3744 = vld [vmem:[%s0 + $0x4c] sm:$0xf]
    %v3745 = vld [vmem:[%s0 + $0x50] sm:$0xf]
    %v3746 = vld [vmem:[%s0 + $0x54] sm:$0xf]
    %v3747 = vld [vmem:[%s0 + $0x58] sm:$0xf]
    %v3748 = vld [vmem:[%s0 + $0x5c] sm:$0xf]
    %v3749 = vld [vmem:[%s0 + $0x60] sm:$0xf]
    %v3750 = vld [vmem:[%s0 + $0x64] sm:$0xf]
    %v3751 = vld [vmem:[%s0 + $0x68] sm:$0xf]
    %v3752 = vld [vmem:[%s0 + $0x6c] sm:$0xf]
    %v3753 = vld [vmem:[%s0 + $0x70] sm:$0xf]
    %v3754 = vld [vmem:[%s0 + $0x74] sm:$0xf]
    %v3755 = vld [vmem:[%s0 + $0x78] sm:$0xf]
    %v3756 = vld [vmem:[%s0 + $0x7c] sm:$0xf]
    %v3757 = vld [vmem:[%s0 + $0x80] sm:$0xf]
    %v3758 = vld [vmem:[%s0 + $0x84] sm:$0xf]
    %v3759 = vld [vmem:[%s0 + $0x88] sm:$0xf]
    %v3760 = vld [vmem:[%s0 + $0x8c] sm:$0xf]
    %v3761 = vld [vmem:[%s0 + $0x90] sm:$0xf]
    %v3762 = vld [vmem:[%s0 + $0x94] sm:$0xf]
    %v3763 = vld [vmem:[%s0 + $0x98] sm:$0xf]
    %v3764 = vld [vmem:[%s0 + $0x9c] sm:$0xf]
    %v3765 = vld [vmem:[%s0 + $0xa0] sm:$0xf]
    %v3766 = vld [vmem:[%s0 + $0xa4] sm:$0xf]
    %v3767 = vld [vmem:[%s0 + $0xa8] sm:$0xf]
    %v3768 = vld [vmem:[%s0 + $0xac] sm:$0xf]
    %v3769 = vld [vmem:[%s0 + $0xb0] sm:$0xf]
    %v3770 = vld [vmem:[%s0 + $0xb4] sm:$0xf]
    %v3771 = vld [vmem:[%s0 + $0xb8] sm:$0xf]
    %v3772 = vld [vmem:[%s0 + $0xbc] sm:$0xf]
    %v3773 = vld [vmem:[%s0 + $0xc0] sm:$0xf]
    %v3774 = vld [vmem:[%s0 + $0xc4] sm:$0xf]
    %v3775 = vld [vmem:[%s0 + $0xc8] sm:$0xf]
    %v3776 = vld [vmem:[%s0 + $0xcc] sm:$0xf]
    %v3777 = vld [vmem:[%s0 + $0xd0] sm:$0xf]
    %v3778 = vld [vmem:[%s0 + $0xd4] sm:$0xf]
    %v3779 = vld [vmem:[%s0 + $0xd8] sm:$0xf]
    %v3780 = vld [vmem:[%s0 + $0xdc] sm:$0xf]
    %v3781 = vld [vmem:[%s0 + $0xe0] sm:$0xf]
    %v3782 = vld [vmem:[%s0 + $0xe4] sm:$0xf]
    %v3783 = vld [vmem:[%s0 + $0xe8] sm:$0xf]
    %v3784 = vld [vmem:[%s0 + $0xec] sm:$0xf]
    %v3785 = vld [vmem:[%s0 + $0xf0] sm:$0xf]
    %v3786 = vld [vmem:[%s0 + $0xf4] sm:$0xf]
    %v3787 = vld [vmem:[%s0 + $0xf8] sm:$0xf]
    %v3788 = vld [vmem:[%s0 + $0xfc] sm:$0xf]
    %v3789 = vld [vmem:[%s0 + $0x100] sm:$0xf]
    %v3790 = vld [vmem:[%s0 + $0x104] sm:$0xf]
    %v3791 = vld [vmem:[%s0 + $0x108] sm:$0xf]
    %v3792 = vld [vmem:[%s0 + $0x10c] sm:$0xf]
    %v3793 = vld [vmem:[%s0 + $0x110] sm:$0xf]
    %v3794 = vld [vmem:[%s0 + $0x114] sm:$0xf]
    %v3795 = vld [vmem:[%s0 + $0x118] sm:$0xf]
    %v3796 = vld [vmem:[%s0 + $0x11c] sm:$0xf]
    %v3797 = vld [vmem:[%s0 + $0x120] sm:$0xf]
    %v3798 = vld [vmem:[%s0 + $0x124] sm:$0xf]
    %v3799 = vld [vmem:[%s0 + $0x128] sm:$0xf]
    %v3800 = vld [vmem:[%s0 + $0x12c] sm:$0xf]
    %v3801 = vld [vmem:[%s0 + $0x130] sm:$0xf]
    %v3802 = vld [vmem:[%s0 + $0x134] sm:$0xf]
    %v3803 = vld [vmem:[%s0 + $0x138] sm:$0xf]
    %v3804 = vld [vmem:[%s0 + $0x13c] sm:$0xf]
    %v3805 = vld [vmem:[%s0 + $0x140] sm:$0x7]
    %s3806 = scalar_lea.vmem %s1, 12
    %v3807 = vld [vmem:[%s3806] sm:$0x3]
    %v3885 = vunpack.c.l.b16 %v3729
    %v3886 = vunpack.c.l.b16 %v3730
    %v3887 = vunpack.c.l.b16 %v3731
    %v3888 = vunpack.c.l.b16 %v3732
    %v3889 = vunpack.c.l.b16 %v3733
    %v3890 = vunpack.c.l.b16 %v3734
    %v3891 = vunpack.c.l.b16 %v3735
    %v3892 = vunpack.c.l.b16 %v3736
    %v3893 = vunpack.c.l.b16 %v3737
    %v3894 = vunpack.c.l.b16 %v3738
    %v3895 = vunpack.c.l.b16 %v3739
    %v3896 = vunpack.c.l.b16 %v3740
    %v3897 = vunpack.c.l.b16 %v3741
    %v3898 = vunpack.c.l.b16 %v3742
    %v3899 = vunpack.c.l.b16 %v3743
    %v3900 = vunpack.c.l.b16 %v3744
    %v3901 = vunpack.c.l.b16 %v3745
    %v3902 = vunpack.c.l.b16 %v3746
    %v3903 = vunpack.c.l.b16 %v3747
    %v3904 = vunpack.c.l.b16 %v3748
    %v3905 = vunpack.c.l.b16 %v3749
    %v3906 = vunpack.c.l.b16 %v3750
    %v3907 = vunpack.c.l.b16 %v3751
    %v3908 = vunpack.c.l.b16 %v3752
    %v3909 = vunpack.c.l.b16 %v3753
    %v3910 = vunpack.c.l.b16 %v3754
    %v3911 = vunpack.c.l.b16 %v3755
    %v3912 = vunpack.c.l.b16 %v3756
    %v3913 = vunpack.c.l.b16 %v3757
    %v3914 = vunpack.c.l.b16 %v3758
    %v3915 = vunpack.c.l.b16 %v3759
    %v3916 = vunpack.c.l.b16 %v3760
    %v3917 = vunpack.c.l.b16 %v3761
    %v3918 = vunpack.c.l.b16 %v3762
    %v3919 = vunpack.c.l.b16 %v3763
    %v3920 = vunpack.c.l.b16 %v3764
    %v3921 = vunpack.c.l.b16 %v3765
    %v3922 = vunpack.c.l.b16 %v3766
    %v3923 = vunpack.c.l.b16 %v3767
    %v3924 = vunpack.c.l.b16 %v3768
    %v3925 = vunpack.c.l.b16 %v3769
    %v3926 = vunpack.c.l.b16 %v3770
    %v3927 = vunpack.c.l.b16 %v3771
    %v3928 = vunpack.c.l.b16 %v3772
    %v3929 = vunpack.c.l.b16 %v3773
    %v3930 = vunpack.c.l.b16 %v3774
    %v3931 = vunpack.c.l.b16 %v3775
    %v3932 = vunpack.c.l.b16 %v3776
    %v3933 = vunpack.c.l.b16 %v3777
    %v3934 = vunpack.c.l.b16 %v3778
    %v3935 = vunpack.c.l.b16 %v3779
    %v3936 = vunpack.c.l.b16 %v3780
    %v3937 = vunpack.c.l.b16 %v3781
    %v3938 = vunpack.c.l.b16 %v3782
    %v3939 = vunpack.c.l.b16 %v3783
    %v3940 = vunpack.c.l.b16 %v3784
    %v3941 = vunpack.c.l.b16 %v3785
    %v3942 = vunpack.c.l.b16 %v3786
    %v3943 = vunpack.c.l.b16 %v3787
    %v3944 = vunpack.c.l.b16 %v3788
    %v3945 = vunpack.c.l.b16 %v3789
    %v3946 = vunpack.c.l.b16 %v3790
    %v3947 = vunpack.c.l.b16 %v3791
    %v3948 = vunpack.c.l.b16 %v3792
    %v3949 = vunpack.c.l.b16 %v3793
    %v3950 = vunpack.c.l.b16 %v3794
    %v3951 = vunpack.c.l.b16 %v3795
    %v3952 = vunpack.c.l.b16 %v3796
    %v3953 = vunpack.c.l.b16 %v3797
    %v3954 = vunpack.c.l.b16 %v3798
    %v3955 = vunpack.c.l.b16 %v3799
    %v3956 = vunpack.c.l.b16 %v3800
    %v3957 = vunpack.c.l.b16 %v3801
    %v3958 = vunpack.c.l.b16 %v3802
    %v3959 = vunpack.c.l.b16 %v3803
    %v3960 = vunpack.c.l.b16 %v3804
    %v3961 = vunpack.c.l.b16 %v3805
    %v3962 = vpack.c.b16 %v3886, %v3885
    %v3963 = vpack.c.b16 %v3888, %v3887
    %v3964 = vpack.c.b16 %v3890, %v3889
    %v3965 = vpack.c.b16 %v3892, %v3891
    %v3966 = vpack.c.b16 %v3894, %v3893
    %v3967 = vpack.c.b16 %v3896, %v3895
    %v3968 = vpack.c.b16 %v3898, %v3897
    %v3969 = vpack.c.b16 %v3900, %v3899
    %v3970 = vpack.c.b16 %v3902, %v3901
    %v3971 = vpack.c.b16 %v3904, %v3903
    %v3972 = vpack.c.b16 %v3906, %v3905
    %v3973 = vpack.c.b16 %v3908, %v3907
    %v3974 = vpack.c.b16 %v3910, %v3909
    %v3975 = vpack.c.b16 %v3912, %v3911
    %v3976 = vpack.c.b16 %v3914, %v3913
    %v3977 = vpack.c.b16 %v3916, %v3915
    %v3978 = vpack.c.b16 %v3918, %v3917
    %v3979 = vpack.c.b16 %v3920, %v3919
    %v3980 = vpack.c.b16 %v3922, %v3921
    %v3981 = vpack.c.b16 %v3924, %v3923
    %v3982 = vpack.c.b16 %v3926, %v3925
    %v3983 = vpack.c.b16 %v3928, %v3927
    %v3984 = vpack.c.b16 %v3930, %v3929
    %v3985 = vpack.c.b16 %v3932, %v3931
    %v3986 = vpack.c.b16 %v3934, %v3933
    %v3987 = vpack.c.b16 %v3936, %v3935
    %v3988 = vpack.c.b16 %v3938, %v3937
    %v3989 = vpack.c.b16 %v3940, %v3939
    %v3990 = vpack.c.b16 %v3942, %v3941
    %v3991 = vpack.c.b16 %v3944, %v3943
    %v3992 = vpack.c.b16 %v3946, %v3945
    %v3993 = vpack.c.b16 %v3948, %v3947
    %v3994 = vpack.c.b16 %v3950, %v3949
    %v3995 = vpack.c.b16 %v3952, %v3951
    %v3996 = vpack.c.b16 %v3954, %v3953
    %v3997 = vpack.c.b16 %v3956, %v3955
    %v3998 = vpack.c.b16 %v3958, %v3957
    %v3999 = vpack.c.b16 %v3960, %v3959
    %v4000 = vpack.c.b16 %v3961, %v3961
    %v4001 = vrot.slane %v3962, 2
    %v4002 = vrot.slane %v3963, 2
    %v4003 = vsel %vm3251, %v4001, %v4002
    %v4004 = vrot.slane %v3964, 2
    %v4005 = vsel %vm3251, %v4002, %v4004
    %v4006 = vrot.slane %v3965, 2
    %v4007 = vsel %vm3251, %v4004, %v4006
    %v4008 = vrot.slane %v3966, 2
    %v4009 = vsel %vm3251, %v4006, %v4008
    %v4010 = vrot.slane %v3967, 2
    %v4011 = vsel %vm3251, %v4008, %v4010
    %v4012 = vrot.slane %v3968, 2
    %v4013 = vsel %vm3251, %v4010, %v4012
    %v4014 = vrot.slane %v3969, 2
    %v4015 = vsel %vm3251, %v4012, %v4014
    %v4016 = vrot.slane %v3970, 2
    %v4017 = vsel %vm3251, %v4014, %v4016
    %v4018 = vrot.slane %v3971, 2
    %v4019 = vsel %vm3251, %v4016, %v4018
    %v4020 = vrot.slane %v3972, 2
    %v4021 = vsel %vm3251, %v4018, %v4020
    %v4022 = vrot.slane %v3973, 2
    %v4023 = vsel %vm3251, %v4020, %v4022
    %v4024 = vrot.slane %v3974, 2
    %v4025 = vsel %vm3251, %v4022, %v4024
    %v4026 = vrot.slane %v3975, 2
    %v4027 = vsel %vm3251, %v4024, %v4026
    %v4028 = vrot.slane %v3976, 2
    %v4029 = vsel %vm3251, %v4026, %v4028
    %v4030 = vrot.slane %v3977, 2
    %v4031 = vsel %vm3251, %v4028, %v4030
    %v4032 = vrot.slane %v3978, 2
    %v4033 = vsel %vm3251, %v4030, %v4032
    %v4034 = vrot.slane %v3979, 2
    %v4035 = vsel %vm3251, %v4032, %v4034
    %v4036 = vrot.slane %v3980, 2
    %v4037 = vsel %vm3251, %v4034, %v4036
    %v4038 = vrot.slane %v3981, 2
    %v4039 = vsel %vm3251, %v4036, %v4038
    %v4040 = vrot.slane %v3982, 2
    %v4041 = vsel %vm3251, %v4038, %v4040
    %v4042 = vrot.slane %v3983, 2
    %v4043 = vsel %vm3251, %v4040, %v4042
    %v4044 = vrot.slane %v3984, 2
    %v4045 = vsel %vm3251, %v4042, %v4044
    %v4046 = vrot.slane %v3985, 2
    %v4047 = vsel %vm3251, %v4044, %v4046
    %v4048 = vrot.slane %v3986, 2
    %v4049 = vsel %vm3251, %v4046, %v4048
    %v4050 = vrot.slane %v3987, 2
    %v4051 = vsel %vm3251, %v4048, %v4050
    %v4052 = vrot.slane %v3988, 2
    %v4053 = vsel %vm3251, %v4050, %v4052
    %v4054 = vrot.slane %v3989, 2
    %v4055 = vsel %vm3251, %v4052, %v4054
    %v4056 = vrot.slane %v3990, 2
    %v4057 = vsel %vm3251, %v4054, %v4056
    %v4058 = vrot.slane %v3991, 2
    %v4059 = vsel %vm3251, %v4056, %v4058
    %v4060 = vrot.slane %v3992, 2
    %v4061 = vsel %vm3251, %v4058, %v4060
    %v4062 = vrot.slane %v3993, 2
    %v4063 = vsel %vm3251, %v4060, %v4062
    %v4064 = vrot.slane %v3994, 2
    %v4065 = vsel %vm3251, %v4062, %v4064
    %v4066 = vrot.slane %v3995, 2
    %v4067 = vsel %vm3251, %v4064, %v4066
    %v4068 = vrot.slane %v3996, 2
    %v4069 = vsel %vm3251, %v4066, %v4068
    %v4070 = vrot.slane %v3997, 2
    %v4071 = vsel %vm3251, %v4068, %v4070
    %v4072 = vrot.slane %v3998, 2
    %v4073 = vsel %vm3251, %v4070, %v4072
    %v4074 = vrot.slane %v3999, 2
    %v4075 = vsel %vm3251, %v4072, %v4074
    %v4076 = vrot.slane %v4000, 2
    %v4077 = vsel %vm3251, %v4074, %v4076
    %v4079 = vsel %vm642, %v4003, 0
    %v4082 = vsel %vm642, %v4005, 0
    %v4085 = vsel %vm642, %v4007, 0
    %v4088 = vsel %vm642, %v4009, 0
    %v4091 = vsel %vm642, %v4011, 0
    %v4094 = vsel %vm642, %v4013, 0
    %v4097 = vsel %vm642, %v4015, 0
    %v4100 = vsel %vm642, %v4017, 0
    %v4103 = vsel %vm642, %v4019, 0
    %v4106 = vsel %vm642, %v4021, 0
    %v4109 = vsel %vm642, %v4023, 0
    %v4112 = vsel %vm642, %v4025, 0
    %v4115 = vsel %vm642, %v4027, 0
    %v4118 = vsel %vm642, %v4029, 0
    %v4121 = vsel %vm642, %v4031, 0
    %v4124 = vsel %vm642, %v4033, 0
    %v4127 = vsel %vm642, %v4035, 0
    %v4130 = vsel %vm642, %v4037, 0
    %v4133 = vsel %vm642, %v4039, 0
    %v4136 = vsel %vm642, %v4041, 0
    %v4139 = vsel %vm642, %v4043, 0
    %v4142 = vsel %vm642, %v4045, 0
    %v4145 = vsel %vm642, %v4047, 0
    %v4148 = vsel %vm642, %v4049, 0
    %v4151 = vsel %vm642, %v4051, 0
    %v4154 = vsel %vm642, %v4053, 0
    %v4157 = vsel %vm642, %v4055, 0
    %v4160 = vsel %vm642, %v4057, 0
    %v4163 = vsel %vm642, %v4059, 0
    %v4166 = vsel %vm642, %v4061, 0
    %v4169 = vsel %vm642, %v4063, 0
    %v4172 = vsel %vm642, %v4065, 0
    %v4175 = vsel %vm642, %v4067, 0
    %v4178 = vsel %vm642, %v4069, 0
    %v4181 = vsel %vm642, %v4071, 0
    %v4184 = vsel %vm642, %v4073, 0
    %v4187 = vsel %vm642, %v4075, 0
    %v4190 = vsel %vm642, %v4077, 0
    %v4193 = vsel %vm642, %v4076, 0
    %v4196 = vsel %vm760, %v3807, 0
    %4198 = vmatpush.bf16.msra.mxu0 0
    %4199 = vmatpush.bf16.msra.mxu0 0
    %4200 = vmatpush.bf16.msra.mxu0 0
    %4201 = vmatpush.bf16.msra.mxu0 0
    %4202 = vmatpush.bf16.msra.mxu0 0
    %4203 = vmatpush.bf16.msra.mxu0 0
    %4204 = vmatpush.bf16.msra.mxu0 0
    %4205 = vmatpush.bf16.msra.mxu0 %v4196
    %4206 = vmatmul.bf16.gmra.mxu0 %v4079
    %v4207 = vpop.f32.mrf.mxu0
    %v4208 = vadd.f32 0.0, %v4207
    %v4209 = vpop.f32.mrf.mxu0
    %v4210 = vadd.f32 0.0, %v4209
    %4211 = vmatmul.bf16.gmra.mxu0 %v4082
    %v4212 = vpop.f32.mrf.mxu0
    %v4213 = vadd.f32 0.0, %v4212
    %v4214 = vpop.f32.mrf.mxu0
    %v4215 = vadd.f32 0.0, %v4214
    %4216 = vmatmul.bf16.gmra.mxu0 %v4085
    %v4217 = vpop.f32.mrf.mxu0
    %v4218 = vadd.f32 0.0, %v4217
    %v4219 = vpop.f32.mrf.mxu0
    %v4220 = vadd.f32 0.0, %v4219
    %4221 = vmatmul.bf16.gmra.mxu0 %v4088
    %v4222 = vpop.f32.mrf.mxu0
    %v4223 = vadd.f32 0.0, %v4222
    %v4224 = vpop.f32.mrf.mxu0
    %v4225 = vadd.f32 0.0, %v4224
    %4226 = vmatmul.bf16.gmra.mxu0 %v4091
    %v4227 = vpop.f32.mrf.mxu0
    %v4228 = vadd.f32 0.0, %v4227
    %v4229 = vpop.f32.mrf.mxu0
    %v4230 = vadd.f32 0.0, %v4229
    %4231 = vmatmul.bf16.gmra.mxu0 %v4094
    %v4232 = vpop.f32.mrf.mxu0
    %v4233 = vadd.f32 0.0, %v4232
    %v4234 = vpop.f32.mrf.mxu0
    %v4235 = vadd.f32 0.0, %v4234
    %4236 = vmatmul.bf16.gmra.mxu0 %v4097
    %v4237 = vpop.f32.mrf.mxu0
    %v4238 = vadd.f32 0.0, %v4237
    %v4239 = vpop.f32.mrf.mxu0
    %v4240 = vadd.f32 0.0, %v4239
    %4241 = vmatmul.bf16.gmra.mxu0 %v4100
    %v4242 = vpop.f32.mrf.mxu0
    %v4243 = vadd.f32 0.0, %v4242
    %v4244 = vpop.f32.mrf.mxu0
    %v4245 = vadd.f32 0.0, %v4244
    %4246 = vmatmul.bf16.gmra.mxu0 %v4103
    %v4247 = vpop.f32.mrf.mxu0
    %v4248 = vadd.f32 0.0, %v4247
    %v4249 = vpop.f32.mrf.mxu0
    %v4250 = vadd.f32 0.0, %v4249
    %4251 = vmatmul.bf16.gmra.mxu0 %v4106
    %v4252 = vpop.f32.mrf.mxu0
    %v4253 = vadd.f32 0.0, %v4252
    %v4254 = vpop.f32.mrf.mxu0
    %v4255 = vadd.f32 0.0, %v4254
    %4256 = vmatmul.bf16.gmra.mxu0 %v4109
    %v4257 = vpop.f32.mrf.mxu0
    %v4258 = vadd.f32 0.0, %v4257
    %v4259 = vpop.f32.mrf.mxu0
    %v4260 = vadd.f32 0.0, %v4259
    %4261 = vmatmul.bf16.gmra.mxu0 %v4112
    %v4262 = vpop.f32.mrf.mxu0
    %v4263 = vadd.f32 0.0, %v4262
    %v4264 = vpop.f32.mrf.mxu0
    %v4265 = vadd.f32 0.0, %v4264
    %4266 = vmatmul.bf16.gmra.mxu0 %v4115
    %v4267 = vpop.f32.mrf.mxu0
    %v4268 = vadd.f32 0.0, %v4267
    %v4269 = vpop.f32.mrf.mxu0
    %v4270 = vadd.f32 0.0, %v4269
    %4271 = vmatmul.bf16.gmra.mxu0 %v4118
    %v4272 = vpop.f32.mrf.mxu0
    %v4273 = vadd.f32 0.0, %v4272
    %v4274 = vpop.f32.mrf.mxu0
    %v4275 = vadd.f32 0.0, %v4274
    %4276 = vmatmul.bf16.gmra.mxu0 %v4121
    %v4277 = vpop.f32.mrf.mxu0
    %v4278 = vadd.f32 0.0, %v4277
    %v4279 = vpop.f32.mrf.mxu0
    %v4280 = vadd.f32 0.0, %v4279
    %4281 = vmatmul.bf16.gmra.mxu0 %v4124
    %v4282 = vpop.f32.mrf.mxu0
    %v4283 = vadd.f32 0.0, %v4282
    %v4284 = vpop.f32.mrf.mxu0
    %v4285 = vadd.f32 0.0, %v4284
    %4286 = vmatmul.bf16.gmra.mxu0 %v4127
    %v4287 = vpop.f32.mrf.mxu0
    %v4288 = vadd.f32 0.0, %v4287
    %v4289 = vpop.f32.mrf.mxu0
    %v4290 = vadd.f32 0.0, %v4289
    %4291 = vmatmul.bf16.gmra.mxu0 %v4130
    %v4292 = vpop.f32.mrf.mxu0
    %v4293 = vadd.f32 0.0, %v4292
    %v4294 = vpop.f32.mrf.mxu0
    %v4295 = vadd.f32 0.0, %v4294
    %4296 = vmatmul.bf16.gmra.mxu0 %v4133
    %v4297 = vpop.f32.mrf.mxu0
    %v4298 = vadd.f32 0.0, %v4297
    %v4299 = vpop.f32.mrf.mxu0
    %v4300 = vadd.f32 0.0, %v4299
    %4301 = vmatmul.bf16.gmra.mxu0 %v4136
    %v4302 = vpop.f32.mrf.mxu0
    %v4303 = vadd.f32 0.0, %v4302
    %v4304 = vpop.f32.mrf.mxu0
    %v4305 = vadd.f32 0.0, %v4304
    %4306 = vmatmul.bf16.gmra.mxu0 %v4139
    %v4307 = vpop.f32.mrf.mxu0
    %v4308 = vadd.f32 0.0, %v4307
    %v4309 = vpop.f32.mrf.mxu0
    %v4310 = vadd.f32 0.0, %v4309
    %4311 = vmatmul.bf16.gmra.mxu0 %v4142
    %v4312 = vpop.f32.mrf.mxu0
    %v4313 = vadd.f32 0.0, %v4312
    %v4314 = vpop.f32.mrf.mxu0
    %v4315 = vadd.f32 0.0, %v4314
    %4316 = vmatmul.bf16.gmra.mxu0 %v4145
    %v4317 = vpop.f32.mrf.mxu0
    %v4318 = vadd.f32 0.0, %v4317
    %v4319 = vpop.f32.mrf.mxu0
    %v4320 = vadd.f32 0.0, %v4319
    %4321 = vmatmul.bf16.gmra.mxu0 %v4148
    %v4322 = vpop.f32.mrf.mxu0
    %v4323 = vadd.f32 0.0, %v4322
    %v4324 = vpop.f32.mrf.mxu0
    %v4325 = vadd.f32 0.0, %v4324
    %4326 = vmatmul.bf16.gmra.mxu0 %v4151
    %v4327 = vpop.f32.mrf.mxu0
    %v4328 = vadd.f32 0.0, %v4327
    %v4329 = vpop.f32.mrf.mxu0
    %v4330 = vadd.f32 0.0, %v4329
    %4331 = vmatmul.bf16.gmra.mxu0 %v4154
    %v4332 = vpop.f32.mrf.mxu0
    %v4333 = vadd.f32 0.0, %v4332
    %v4334 = vpop.f32.mrf.mxu0
    %v4335 = vadd.f32 0.0, %v4334
    %4336 = vmatmul.bf16.gmra.mxu0 %v4157
    %v4337 = vpop.f32.mrf.mxu0
    %v4338 = vadd.f32 0.0, %v4337
    %v4339 = vpop.f32.mrf.mxu0
    %v4340 = vadd.f32 0.0, %v4339
    %4341 = vmatmul.bf16.gmra.mxu0 %v4160
    %v4342 = vpop.f32.mrf.mxu0
    %v4343 = vadd.f32 0.0, %v4342
    %v4344 = vpop.f32.mrf.mxu0
    %v4345 = vadd.f32 0.0, %v4344
    %4346 = vmatmul.bf16.gmra.mxu0 %v4163
    %v4347 = vpop.f32.mrf.mxu0
    %v4348 = vadd.f32 0.0, %v4347
    %v4349 = vpop.f32.mrf.mxu0
    %v4350 = vadd.f32 0.0, %v4349
    %4351 = vmatmul.bf16.gmra.mxu0 %v4166
    %v4352 = vpop.f32.mrf.mxu0
    %v4353 = vadd.f32 0.0, %v4352
    %v4354 = vpop.f32.mrf.mxu0
    %v4355 = vadd.f32 0.0, %v4354
    %4356 = vmatmul.bf16.gmra.mxu0 %v4169
    %v4357 = vpop.f32.mrf.mxu0
    %v4358 = vadd.f32 0.0, %v4357
    %v4359 = vpop.f32.mrf.mxu0
    %v4360 = vadd.f32 0.0, %v4359
    %4361 = vmatmul.bf16.gmra.mxu0 %v4172
    %v4362 = vpop.f32.mrf.mxu0
    %v4363 = vadd.f32 0.0, %v4362
    %v4364 = vpop.f32.mrf.mxu0
    %v4365 = vadd.f32 0.0, %v4364
    %4366 = vmatmul.bf16.gmra.mxu0 %v4175
    %v4367 = vpop.f32.mrf.mxu0
    %v4368 = vadd.f32 0.0, %v4367
    %v4369 = vpop.f32.mrf.mxu0
    %v4370 = vadd.f32 0.0, %v4369
    %4371 = vmatmul.bf16.gmra.mxu0 %v4178
    %v4372 = vpop.f32.mrf.mxu0
    %v4373 = vadd.f32 0.0, %v4372
    %v4374 = vpop.f32.mrf.mxu0
    %v4375 = vadd.f32 0.0, %v4374
    %4376 = vmatmul.bf16.gmra.mxu0 %v4181
    %v4377 = vpop.f32.mrf.mxu0
    %v4378 = vadd.f32 0.0, %v4377
    %v4379 = vpop.f32.mrf.mxu0
    %v4380 = vadd.f32 0.0, %v4379
    %4381 = vmatmul.bf16.gmra.mxu0 %v4184
    %v4382 = vpop.f32.mrf.mxu0
    %v4383 = vadd.f32 0.0, %v4382
    %v4384 = vpop.f32.mrf.mxu0
    %v4385 = vadd.f32 0.0, %v4384
    %4386 = vmatmul.bf16.gmra.mxu0 %v4187
    %v4387 = vpop.f32.mrf.mxu0
    %v4388 = vadd.f32 0.0, %v4387
    %v4389 = vpop.f32.mrf.mxu0
    %v4390 = vadd.f32 0.0, %v4389
    %4391 = vmatmul.bf16.gmra.mxu0 %v4190
    %v4392 = vpop.f32.mrf.mxu0
    %v4393 = vadd.f32 0.0, %v4392
    %v4394 = vpop.f32.mrf.mxu0
    %v4395 = vadd.f32 0.0, %v4394
    %4396 = vmatmul.bf16.gmra.mxu0 %v4193
    %v4397 = vpop.f32.mrf.mxu0
    %v4398 = vadd.f32 0.0, %v4397
    %v4399 = vpop.f32.mrf.mxu0
    %4400 = vdwg.mxu0
    %v4401 = vadd.f32 %v3652, %v4208
    %v4402 = vadd.f32 %v3653, %v4210
    %v4403 = vadd.f32 %v3654, %v4213
    %v4404 = vadd.f32 %v3655, %v4215
    %v4405 = vadd.f32 %v3656, %v4218
    %v4406 = vadd.f32 %v3657, %v4220
    %v4407 = vadd.f32 %v3658, %v4223
    %v4408 = vadd.f32 %v3659, %v4225
    %v4409 = vadd.f32 %v3660, %v4228
    %v4410 = vadd.f32 %v3661, %v4230
    %v4411 = vadd.f32 %v3662, %v4233
    %v4412 = vadd.f32 %v3663, %v4235
    %v4413 = vadd.f32 %v3664, %v4238
    %v4414 = vadd.f32 %v3665, %v4240
    %v4415 = vadd.f32 %v3666, %v4243
    %v4416 = vadd.f32 %v3667, %v4245
    %v4417 = vadd.f32 %v3668, %v4248
    %v4418 = vadd.f32 %v3669, %v4250
    %v4419 = vadd.f32 %v3670, %v4253
    %v4420 = vadd.f32 %v3671, %v4255
    %v4421 = vadd.f32 %v3672, %v4258
    %v4422 = vadd.f32 %v3673, %v4260
    %v4423 = vadd.f32 %v3674, %v4263
    %v4424 = vadd.f32 %v3675, %v4265
    %v4425 = vadd.f32 %v3676, %v4268
    %v4426 = vadd.f32 %v3677, %v4270
    %v4427 = vadd.f32 %v3678, %v4273
    %v4428 = vadd.f32 %v3679, %v4275
    %v4429 = vadd.f32 %v3680, %v4278
    %v4430 = vadd.f32 %v3681, %v4280
    %v4431 = vadd.f32 %v3682, %v4283
    %v4432 = vadd.f32 %v3683, %v4285
    %v4433 = vadd.f32 %v3684, %v4288
    %v4434 = vadd.f32 %v3685, %v4290
    %v4435 = vadd.f32 %v3686, %v4293
    %v4436 = vadd.f32 %v3687, %v4295
    %v4437 = vadd.f32 %v3688, %v4298
    %v4438 = vadd.f32 %v3689, %v4300
    %v4439 = vadd.f32 %v3690, %v4303
    %v4440 = vadd.f32 %v3691, %v4305
    %v4441 = vadd.f32 %v3692, %v4308
    %v4442 = vadd.f32 %v3693, %v4310
    %v4443 = vadd.f32 %v3694, %v4313
    %v4444 = vadd.f32 %v3695, %v4315
    %v4445 = vadd.f32 %v3696, %v4318
    %v4446 = vadd.f32 %v3697, %v4320
    %v4447 = vadd.f32 %v3698, %v4323
    %v4448 = vadd.f32 %v3699, %v4325
    %v4449 = vadd.f32 %v3700, %v4328
    %v4450 = vadd.f32 %v3701, %v4330
    %v4451 = vadd.f32 %v3702, %v4333
    %v4452 = vadd.f32 %v3703, %v4335
    %v4453 = vadd.f32 %v3704, %v4338
    %v4454 = vadd.f32 %v3705, %v4340
    %v4455 = vadd.f32 %v3706, %v4343
    %v4456 = vadd.f32 %v3707, %v4345
    %v4457 = vadd.f32 %v3708, %v4348
    %v4458 = vadd.f32 %v3709, %v4350
    %v4459 = vadd.f32 %v3710, %v4353
    %v4460 = vadd.f32 %v3711, %v4355
    %v4461 = vadd.f32 %v3712, %v4358
    %v4462 = vadd.f32 %v3713, %v4360
    %v4463 = vadd.f32 %v3714, %v4363
    %v4464 = vadd.f32 %v3715, %v4365
    %v4465 = vadd.f32 %v3716, %v4368
    %v4466 = vadd.f32 %v3717, %v4370
    %v4467 = vadd.f32 %v3718, %v4373
    %v4468 = vadd.f32 %v3719, %v4375
    %v4469 = vadd.f32 %v3720, %v4378
    %v4470 = vadd.f32 %v3721, %v4380
    %v4471 = vadd.f32 %v3722, %v4383
    %v4472 = vadd.f32 %v3723, %v4385
    %v4473 = vadd.f32 %v3724, %v4388
    %v4474 = vadd.f32 %v3725, %v4390
    %v4475 = vadd.f32 %v3726, %v4393
    %v4476 = vadd.f32 %v3727, %v4395
    %v4477 = vadd.f32 %v3728, %v4398
    %v4478 = vld [vmem:[%s0 + $0x140] sm:$0xf]
    %s4479 = scalar_lea.vmem %s1, 14
    %v4480 = vld [vmem:[%s4479] sm:$0x3]
    %v4482 = vunpack.c.l.b16 %v4478
    %v4483 = vpack.c.b16 %v4482, %v4482
    %vm4484 = vsmask.f32 5376
    %v4486 = vshrl.u32 %v3962, 16
    %v4488 = vrot.slane %v4486, 2
    %v4489 = vshll.u32 %v3962, 16
    %v4491 = vrot.slane %v4489, 3
    %v4492 = vor.u32 %v4488, %v4491
    %v4494 = vshrl.u32 %v3963, 16
    %v4496 = vrot.slane %v4494, 2
    %v4497 = vshll.u32 %v3963, 16
    %v4499 = vrot.slane %v4497, 3
    %v4500 = vor.u32 %v4496, %v4499
    %v4501 = vsel %vm4484, %v4492, %v4500
    %v4503 = vshrl.u32 %v3964, 16
    %v4505 = vrot.slane %v4503, 2
    %v4506 = vshll.u32 %v3964, 16
    %v4508 = vrot.slane %v4506, 3
    %v4509 = vor.u32 %v4505, %v4508
    %v4510 = vsel %vm4484, %v4500, %v4509
    %v4512 = vshrl.u32 %v3965, 16
    %v4514 = vrot.slane %v4512, 2
    %v4515 = vshll.u32 %v3965, 16
    %v4517 = vrot.slane %v4515, 3
    %v4518 = vor.u32 %v4514, %v4517
    %v4519 = vsel %vm4484, %v4509, %v4518
    %v4521 = vshrl.u32 %v3966, 16
    %v4523 = vrot.slane %v4521, 2
    %v4524 = vshll.u32 %v3966, 16
    %v4526 = vrot.slane %v4524, 3
    %v4527 = vor.u32 %v4523, %v4526
    %v4528 = vsel %vm4484, %v4518, %v4527
    %v4530 = vshrl.u32 %v3967, 16
    %v4532 = vrot.slane %v4530, 2
    %v4533 = vshll.u32 %v3967, 16
    %v4535 = vrot.slane %v4533, 3
    %v4536 = vor.u32 %v4532, %v4535
    %v4537 = vsel %vm4484, %v4527, %v4536
    %v4539 = vshrl.u32 %v3968, 16
    %v4541 = vrot.slane %v4539, 2
    %v4542 = vshll.u32 %v3968, 16
    %v4544 = vrot.slane %v4542, 3
    %v4545 = vor.u32 %v4541, %v4544
    %v4546 = vsel %vm4484, %v4536, %v4545
    %v4548 = vshrl.u32 %v3969, 16
    %v4550 = vrot.slane %v4548, 2
    %v4551 = vshll.u32 %v3969, 16
    %v4553 = vrot.slane %v4551, 3
    %v4554 = vor.u32 %v4550, %v4553
    %v4555 = vsel %vm4484, %v4545, %v4554
    %v4557 = vshrl.u32 %v3970, 16
    %v4559 = vrot.slane %v4557, 2
    %v4560 = vshll.u32 %v3970, 16
    %v4562 = vrot.slane %v4560, 3
    %v4563 = vor.u32 %v4559, %v4562
    %v4564 = vsel %vm4484, %v4554, %v4563
    %v4566 = vshrl.u32 %v3971, 16
    %v4568 = vrot.slane %v4566, 2
    %v4569 = vshll.u32 %v3971, 16
    %v4571 = vrot.slane %v4569, 3
    %v4572 = vor.u32 %v4568, %v4571
    %v4573 = vsel %vm4484, %v4563, %v4572
    %v4575 = vshrl.u32 %v3972, 16
    %v4577 = vrot.slane %v4575, 2
    %v4578 = vshll.u32 %v3972, 16
    %v4580 = vrot.slane %v4578, 3
    %v4581 = vor.u32 %v4577, %v4580
    %v4582 = vsel %vm4484, %v4572, %v4581
    %v4584 = vshrl.u32 %v3973, 16
    %v4586 = vrot.slane %v4584, 2
    %v4587 = vshll.u32 %v3973, 16
    %v4589 = vrot.slane %v4587, 3
    %v4590 = vor.u32 %v4586, %v4589
    %v4591 = vsel %vm4484, %v4581, %v4590
    %v4593 = vshrl.u32 %v3974, 16
    %v4595 = vrot.slane %v4593, 2
    %v4596 = vshll.u32 %v3974, 16
    %v4598 = vrot.slane %v4596, 3
    %v4599 = vor.u32 %v4595, %v4598
    %v4600 = vsel %vm4484, %v4590, %v4599
    %v4602 = vshrl.u32 %v3975, 16
    %v4604 = vrot.slane %v4602, 2
    %v4605 = vshll.u32 %v3975, 16
    %v4607 = vrot.slane %v4605, 3
    %v4608 = vor.u32 %v4604, %v4607
    %v4609 = vsel %vm4484, %v4599, %v4608
    %v4611 = vshrl.u32 %v3976, 16
    %v4613 = vrot.slane %v4611, 2
    %v4614 = vshll.u32 %v3976, 16
    %v4616 = vrot.slane %v4614, 3
    %v4617 = vor.u32 %v4613, %v4616
    %v4618 = vsel %vm4484, %v4608, %v4617
    %v4620 = vshrl.u32 %v3977, 16
    %v4622 = vrot.slane %v4620, 2
    %v4623 = vshll.u32 %v3977, 16
    %v4625 = vrot.slane %v4623, 3
    %v4626 = vor.u32 %v4622, %v4625
    %v4627 = vsel %vm4484, %v4617, %v4626
    %v4629 = vshrl.u32 %v3978, 16
    %v4631 = vrot.slane %v4629, 2
    %v4632 = vshll.u32 %v3978, 16
    %v4634 = vrot.slane %v4632, 3
    %v4635 = vor.u32 %v4631, %v4634
    %v4636 = vsel %vm4484, %v4626, %v4635
    %v4638 = vshrl.u32 %v3979, 16
    %v4640 = vrot.slane %v4638, 2
    %v4641 = vshll.u32 %v3979, 16
    %v4643 = vrot.slane %v4641, 3
    %v4644 = vor.u32 %v4640, %v4643
    %v4645 = vsel %vm4484, %v4635, %v4644
    %v4647 = vshrl.u32 %v3980, 16
    %v4649 = vrot.slane %v4647, 2
    %v4650 = vshll.u32 %v3980, 16
    %v4652 = vrot.slane %v4650, 3
    %v4653 = vor.u32 %v4649, %v4652
    %v4654 = vsel %vm4484, %v4644, %v4653
    %v4656 = vshrl.u32 %v3981, 16
    %v4658 = vrot.slane %v4656, 2
    %v4659 = vshll.u32 %v3981, 16
    %v4661 = vrot.slane %v4659, 3
    %v4662 = vor.u32 %v4658, %v4661
    %v4663 = vsel %vm4484, %v4653, %v4662
    %v4665 = vshrl.u32 %v3982, 16
    %v4667 = vrot.slane %v4665, 2
    %v4668 = vshll.u32 %v3982, 16
    %v4670 = vrot.slane %v4668, 3
    %v4671 = vor.u32 %v4667, %v4670
    %v4672 = vsel %vm4484, %v4662, %v4671
    %v4674 = vshrl.u32 %v3983, 16
    %v4676 = vrot.slane %v4674, 2
    %v4677 = vshll.u32 %v3983, 16
    %v4679 = vrot.slane %v4677, 3
    %v4680 = vor.u32 %v4676, %v4679
    %v4681 = vsel %vm4484, %v4671, %v4680
    %v4683 = vshrl.u32 %v3984, 16
    %v4685 = vrot.slane %v4683, 2
    %v4686 = vshll.u32 %v3984, 16
    %v4688 = vrot.slane %v4686, 3
    %v4689 = vor.u32 %v4685, %v4688
    %v4690 = vsel %vm4484, %v4680, %v4689
    %v4692 = vshrl.u32 %v3985, 16
    %v4694 = vrot.slane %v4692, 2
    %v4695 = vshll.u32 %v3985, 16
    %v4697 = vrot.slane %v4695, 3
    %v4698 = vor.u32 %v4694, %v4697
    %v4699 = vsel %vm4484, %v4689, %v4698
    %v4701 = vshrl.u32 %v3986, 16
    %v4703 = vrot.slane %v4701, 2
    %v4704 = vshll.u32 %v3986, 16
    %v4706 = vrot.slane %v4704, 3
    %v4707 = vor.u32 %v4703, %v4706
    %v4708 = vsel %vm4484, %v4698, %v4707
    %v4710 = vshrl.u32 %v3987, 16
    %v4712 = vrot.slane %v4710, 2
    %v4713 = vshll.u32 %v3987, 16
    %v4715 = vrot.slane %v4713, 3
    %v4716 = vor.u32 %v4712, %v4715
    %v4717 = vsel %vm4484, %v4707, %v4716
    %v4719 = vshrl.u32 %v3988, 16
    %v4721 = vrot.slane %v4719, 2
    %v4722 = vshll.u32 %v3988, 16
    %v4724 = vrot.slane %v4722, 3
    %v4725 = vor.u32 %v4721, %v4724
    %v4726 = vsel %vm4484, %v4716, %v4725
    %v4728 = vshrl.u32 %v3989, 16
    %v4730 = vrot.slane %v4728, 2
    %v4731 = vshll.u32 %v3989, 16
    %v4733 = vrot.slane %v4731, 3
    %v4734 = vor.u32 %v4730, %v4733
    %v4735 = vsel %vm4484, %v4725, %v4734
    %v4737 = vshrl.u32 %v3990, 16
    %v4739 = vrot.slane %v4737, 2
    %v4740 = vshll.u32 %v3990, 16
    %v4742 = vrot.slane %v4740, 3
    %v4743 = vor.u32 %v4739, %v4742
    %v4744 = vsel %vm4484, %v4734, %v4743
    %v4746 = vshrl.u32 %v3991, 16
    %v4748 = vrot.slane %v4746, 2
    %v4749 = vshll.u32 %v3991, 16
    %v4751 = vrot.slane %v4749, 3
    %v4752 = vor.u32 %v4748, %v4751
    %v4753 = vsel %vm4484, %v4743, %v4752
    %v4755 = vshrl.u32 %v3992, 16
    %v4757 = vrot.slane %v4755, 2
    %v4758 = vshll.u32 %v3992, 16
    %v4760 = vrot.slane %v4758, 3
    %v4761 = vor.u32 %v4757, %v4760
    %v4762 = vsel %vm4484, %v4752, %v4761
    %v4764 = vshrl.u32 %v3993, 16
    %v4766 = vrot.slane %v4764, 2
    %v4767 = vshll.u32 %v3993, 16
    %v4769 = vrot.slane %v4767, 3
    %v4770 = vor.u32 %v4766, %v4769
    %v4771 = vsel %vm4484, %v4761, %v4770
    %v4773 = vshrl.u32 %v3994, 16
    %v4775 = vrot.slane %v4773, 2
    %v4776 = vshll.u32 %v3994, 16
    %v4778 = vrot.slane %v4776, 3
    %v4779 = vor.u32 %v4775, %v4778
    %v4780 = vsel %vm4484, %v4770, %v4779
    %v4782 = vshrl.u32 %v3995, 16
    %v4784 = vrot.slane %v4782, 2
    %v4785 = vshll.u32 %v3995, 16
    %v4787 = vrot.slane %v4785, 3
    %v4788 = vor.u32 %v4784, %v4787
    %v4789 = vsel %vm4484, %v4779, %v4788
    %v4791 = vshrl.u32 %v3996, 16
    %v4793 = vrot.slane %v4791, 2
    %v4794 = vshll.u32 %v3996, 16
    %v4796 = vrot.slane %v4794, 3
    %v4797 = vor.u32 %v4793, %v4796
    %v4798 = vsel %vm4484, %v4788, %v4797
    %v4800 = vshrl.u32 %v3997, 16
    %v4802 = vrot.slane %v4800, 2
    %v4803 = vshll.u32 %v3997, 16
    %v4805 = vrot.slane %v4803, 3
    %v4806 = vor.u32 %v4802, %v4805
    %v4807 = vsel %vm4484, %v4797, %v4806
    %v4809 = vshrl.u32 %v3998, 16
    %v4811 = vrot.slane %v4809, 2
    %v4812 = vshll.u32 %v3998, 16
    %v4814 = vrot.slane %v4812, 3
    %v4815 = vor.u32 %v4811, %v4814
    %v4816 = vsel %vm4484, %v4806, %v4815
    %v4818 = vshrl.u32 %v3999, 16
    %v4820 = vrot.slane %v4818, 2
    %v4821 = vshll.u32 %v3999, 16
    %v4823 = vrot.slane %v4821, 3
    %v4824 = vor.u32 %v4820, %v4823
    %v4825 = vsel %vm4484, %v4815, %v4824
    %v4827 = vshrl.u32 %v4483, 16
    %v4829 = vrot.slane %v4827, 2
    %v4830 = vshll.u32 %v4483, 16
    %v4832 = vrot.slane %v4830, 3
    %v4833 = vor.u32 %v4829, %v4832
    %v4834 = vsel %vm4484, %v4824, %v4833
    %v4836 = vsel %vm642, %v4501, 0
    %v4839 = vsel %vm642, %v4510, 0
    %v4842 = vsel %vm642, %v4519, 0
    %v4845 = vsel %vm642, %v4528, 0
    %v4848 = vsel %vm642, %v4537, 0
    %v4851 = vsel %vm642, %v4546, 0
    %v4854 = vsel %vm642, %v4555, 0
    %v4857 = vsel %vm642, %v4564, 0
    %v4860 = vsel %vm642, %v4573, 0
    %v4863 = vsel %vm642, %v4582, 0
    %v4866 = vsel %vm642, %v4591, 0
    %v4869 = vsel %vm642, %v4600, 0
    %v4872 = vsel %vm642, %v4609, 0
    %v4875 = vsel %vm642, %v4618, 0
    %v4878 = vsel %vm642, %v4627, 0
    %v4881 = vsel %vm642, %v4636, 0
    %v4884 = vsel %vm642, %v4645, 0
    %v4887 = vsel %vm642, %v4654, 0
    %v4890 = vsel %vm642, %v4663, 0
    %v4893 = vsel %vm642, %v4672, 0
    %v4896 = vsel %vm642, %v4681, 0
    %v4899 = vsel %vm642, %v4690, 0
    %v4902 = vsel %vm642, %v4699, 0
    %v4905 = vsel %vm642, %v4708, 0
    %v4908 = vsel %vm642, %v4717, 0
    %v4911 = vsel %vm642, %v4726, 0
    %v4914 = vsel %vm642, %v4735, 0
    %v4917 = vsel %vm642, %v4744, 0
    %v4920 = vsel %vm642, %v4753, 0
    %v4923 = vsel %vm642, %v4762, 0
    %v4926 = vsel %vm642, %v4771, 0
    %v4929 = vsel %vm642, %v4780, 0
    %v4932 = vsel %vm642, %v4789, 0
    %v4935 = vsel %vm642, %v4798, 0
    %v4938 = vsel %vm642, %v4807, 0
    %v4941 = vsel %vm642, %v4816, 0
    %v4944 = vsel %vm642, %v4825, 0
    %v4947 = vsel %vm642, %v4834, 0
    %v4950 = vsel %vm642, %v4833, 0
    %v4953 = vsel %vm760, %v4480, 0
    %4955 = vmatpush.bf16.msra.mxu0 0
    %4956 = vmatpush.bf16.msra.mxu0 0
    %4957 = vmatpush.bf16.msra.mxu0 0
    %4958 = vmatpush.bf16.msra.mxu0 0
    %4959 = vmatpush.bf16.msra.mxu0 0
    %4960 = vmatpush.bf16.msra.mxu0 0
    %4961 = vmatpush.bf16.msra.mxu0 0
    %4962 = vmatpush.bf16.msra.mxu0 %v4953
    %4963 = vmatmul.bf16.gmra.mxu0 %v4836
    %v4964 = vpop.f32.mrf.mxu0
    %v4965 = vadd.f32 0.0, %v4964
    %v4966 = vpop.f32.mrf.mxu0
    %v4967 = vadd.f32 0.0, %v4966
    %4968 = vmatmul.bf16.gmra.mxu0 %v4839
    %v4969 = vpop.f32.mrf.mxu0
    %v4970 = vadd.f32 0.0, %v4969
    %v4971 = vpop.f32.mrf.mxu0
    %v4972 = vadd.f32 0.0, %v4971
    %4973 = vmatmul.bf16.gmra.mxu0 %v4842
    %v4974 = vpop.f32.mrf.mxu0
    %v4975 = vadd.f32 0.0, %v4974
    %v4976 = vpop.f32.mrf.mxu0
    %v4977 = vadd.f32 0.0, %v4976
    %4978 = vmatmul.bf16.gmra.mxu0 %v4845
    %v4979 = vpop.f32.mrf.mxu0
    %v4980 = vadd.f32 0.0, %v4979
    %v4981 = vpop.f32.mrf.mxu0
    %v4982 = vadd.f32 0.0, %v4981
    %4983 = vmatmul.bf16.gmra.mxu0 %v4848
    %v4984 = vpop.f32.mrf.mxu0
    %v4985 = vadd.f32 0.0, %v4984
    %v4986 = vpop.f32.mrf.mxu0
    %v4987 = vadd.f32 0.0, %v4986
    %4988 = vmatmul.bf16.gmra.mxu0 %v4851
    %v4989 = vpop.f32.mrf.mxu0
    %v4990 = vadd.f32 0.0, %v4989
    %v4991 = vpop.f32.mrf.mxu0
    %v4992 = vadd.f32 0.0, %v4991
    %4993 = vmatmul.bf16.gmra.mxu0 %v4854
    %v4994 = vpop.f32.mrf.mxu0
    %v4995 = vadd.f32 0.0, %v4994
    %v4996 = vpop.f32.mrf.mxu0
    %v4997 = vadd.f32 0.0, %v4996
    %4998 = vmatmul.bf16.gmra.mxu0 %v4857
    %v4999 = vpop.f32.mrf.mxu0
    %v5000 = vadd.f32 0.0, %v4999
    %v5001 = vpop.f32.mrf.mxu0
    %v5002 = vadd.f32 0.0, %v5001
    %5003 = vmatmul.bf16.gmra.mxu0 %v4860
    %v5004 = vpop.f32.mrf.mxu0
    %v5005 = vadd.f32 0.0, %v5004
    %v5006 = vpop.f32.mrf.mxu0
    %v5007 = vadd.f32 0.0, %v5006
    %5008 = vmatmul.bf16.gmra.mxu0 %v4863
    %v5009 = vpop.f32.mrf.mxu0
    %v5010 = vadd.f32 0.0, %v5009
    %v5011 = vpop.f32.mrf.mxu0
    %v5012 = vadd.f32 0.0, %v5011
    %5013 = vmatmul.bf16.gmra.mxu0 %v4866
    %v5014 = vpop.f32.mrf.mxu0
    %v5015 = vadd.f32 0.0, %v5014
    %v5016 = vpop.f32.mrf.mxu0
    %v5017 = vadd.f32 0.0, %v5016
    %5018 = vmatmul.bf16.gmra.mxu0 %v4869
    %v5019 = vpop.f32.mrf.mxu0
    %v5020 = vadd.f32 0.0, %v5019
    %v5021 = vpop.f32.mrf.mxu0
    %v5022 = vadd.f32 0.0, %v5021
    %5023 = vmatmul.bf16.gmra.mxu0 %v4872
    %v5024 = vpop.f32.mrf.mxu0
    %v5025 = vadd.f32 0.0, %v5024
    %v5026 = vpop.f32.mrf.mxu0
    %v5027 = vadd.f32 0.0, %v5026
    %5028 = vmatmul.bf16.gmra.mxu0 %v4875
    %v5029 = vpop.f32.mrf.mxu0
    %v5030 = vadd.f32 0.0, %v5029
    %v5031 = vpop.f32.mrf.mxu0
    %v5032 = vadd.f32 0.0, %v5031
    %5033 = vmatmul.bf16.gmra.mxu0 %v4878
    %v5034 = vpop.f32.mrf.mxu0
    %v5035 = vadd.f32 0.0, %v5034
    %v5036 = vpop.f32.mrf.mxu0
    %v5037 = vadd.f32 0.0, %v5036
    %5038 = vmatmul.bf16.gmra.mxu0 %v4881
    %v5039 = vpop.f32.mrf.mxu0
    %v5040 = vadd.f32 0.0, %v5039
    %v5041 = vpop.f32.mrf.mxu0
    %v5042 = vadd.f32 0.0, %v5041
    %5043 = vmatmul.bf16.gmra.mxu0 %v4884
    %v5044 = vpop.f32.mrf.mxu0
    %v5045 = vadd.f32 0.0, %v5044
    %v5046 = vpop.f32.mrf.mxu0
    %v5047 = vadd.f32 0.0, %v5046
    %5048 = vmatmul.bf16.gmra.mxu0 %v4887
    %v5049 = vpop.f32.mrf.mxu0
    %v5050 = vadd.f32 0.0, %v5049
    %v5051 = vpop.f32.mrf.mxu0
    %v5052 = vadd.f32 0.0, %v5051
    %5053 = vmatmul.bf16.gmra.mxu0 %v4890
    %v5054 = vpop.f32.mrf.mxu0
    %v5055 = vadd.f32 0.0, %v5054
    %v5056 = vpop.f32.mrf.mxu0
    %v5057 = vadd.f32 0.0, %v5056
    %5058 = vmatmul.bf16.gmra.mxu0 %v4893
    %v5059 = vpop.f32.mrf.mxu0
    %v5060 = vadd.f32 0.0, %v5059
    %v5061 = vpop.f32.mrf.mxu0
    %v5062 = vadd.f32 0.0, %v5061
    %5063 = vmatmul.bf16.gmra.mxu0 %v4896
    %v5064 = vpop.f32.mrf.mxu0
    %v5065 = vadd.f32 0.0, %v5064
    %v5066 = vpop.f32.mrf.mxu0
    %v5067 = vadd.f32 0.0, %v5066
    %5068 = vmatmul.bf16.gmra.mxu0 %v4899
    %v5069 = vpop.f32.mrf.mxu0
    %v5070 = vadd.f32 0.0, %v5069
    %v5071 = vpop.f32.mrf.mxu0
    %v5072 = vadd.f32 0.0, %v5071
    %5073 = vmatmul.bf16.gmra.mxu0 %v4902
    %v5074 = vpop.f32.mrf.mxu0
    %v5075 = vadd.f32 0.0, %v5074
    %v5076 = vpop.f32.mrf.mxu0
    %v5077 = vadd.f32 0.0, %v5076
    %5078 = vmatmul.bf16.gmra.mxu0 %v4905
    %v5079 = vpop.f32.mrf.mxu0
    %v5080 = vadd.f32 0.0, %v5079
    %v5081 = vpop.f32.mrf.mxu0
    %v5082 = vadd.f32 0.0, %v5081
    %5083 = vmatmul.bf16.gmra.mxu0 %v4908
    %v5084 = vpop.f32.mrf.mxu0
    %v5085 = vadd.f32 0.0, %v5084
    %v5086 = vpop.f32.mrf.mxu0
    %v5087 = vadd.f32 0.0, %v5086
    %5088 = vmatmul.bf16.gmra.mxu0 %v4911
    %v5089 = vpop.f32.mrf.mxu0
    %v5090 = vadd.f32 0.0, %v5089
    %v5091 = vpop.f32.mrf.mxu0
    %v5092 = vadd.f32 0.0, %v5091
    %5093 = vmatmul.bf16.gmra.mxu0 %v4914
    %v5094 = vpop.f32.mrf.mxu0
    %v5095 = vadd.f32 0.0, %v5094
    %v5096 = vpop.f32.mrf.mxu0
    %v5097 = vadd.f32 0.0, %v5096
    %5098 = vmatmul.bf16.gmra.mxu0 %v4917
    %v5099 = vpop.f32.mrf.mxu0
    %v5100 = vadd.f32 0.0, %v5099
    %v5101 = vpop.f32.mrf.mxu0
    %v5102 = vadd.f32 0.0, %v5101
    %5103 = vmatmul.bf16.gmra.mxu0 %v4920
    %v5104 = vpop.f32.mrf.mxu0
    %v5105 = vadd.f32 0.0, %v5104
    %v5106 = vpop.f32.mrf.mxu0
    %v5107 = vadd.f32 0.0, %v5106
    %5108 = vmatmul.bf16.gmra.mxu0 %v4923
    %v5109 = vpop.f32.mrf.mxu0
    %v5110 = vadd.f32 0.0, %v5109
    %v5111 = vpop.f32.mrf.mxu0
    %v5112 = vadd.f32 0.0, %v5111
    %5113 = vmatmul.bf16.gmra.mxu0 %v4926
    %v5114 = vpop.f32.mrf.mxu0
    %v5115 = vadd.f32 0.0, %v5114
    %v5116 = vpop.f32.mrf.mxu0
    %v5117 = vadd.f32 0.0, %v5116
    %5118 = vmatmul.bf16.gmra.mxu0 %v4929
    %v5119 = vpop.f32.mrf.mxu0
    %v5120 = vadd.f32 0.0, %v5119
    %v5121 = vpop.f32.mrf.mxu0
    %v5122 = vadd.f32 0.0, %v5121
    %5123 = vmatmul.bf16.gmra.mxu0 %v4932
    %v5124 = vpop.f32.mrf.mxu0
    %v5125 = vadd.f32 0.0, %v5124
    %v5126 = vpop.f32.mrf.mxu0
    %v5127 = vadd.f32 0.0, %v5126
    %5128 = vmatmul.bf16.gmra.mxu0 %v4935
    %v5129 = vpop.f32.mrf.mxu0
    %v5130 = vadd.f32 0.0, %v5129
    %v5131 = vpop.f32.mrf.mxu0
    %v5132 = vadd.f32 0.0, %v5131
    %5133 = vmatmul.bf16.gmra.mxu0 %v4938
    %v5134 = vpop.f32.mrf.mxu0
    %v5135 = vadd.f32 0.0, %v5134
    %v5136 = vpop.f32.mrf.mxu0
    %v5137 = vadd.f32 0.0, %v5136
    %5138 = vmatmul.bf16.gmra.mxu0 %v4941
    %v5139 = vpop.f32.mrf.mxu0
    %v5140 = vadd.f32 0.0, %v5139
    %v5141 = vpop.f32.mrf.mxu0
    %v5142 = vadd.f32 0.0, %v5141
    %5143 = vmatmul.bf16.gmra.mxu0 %v4944
    %v5144 = vpop.f32.mrf.mxu0
    %v5145 = vadd.f32 0.0, %v5144
    %v5146 = vpop.f32.mrf.mxu0
    %v5147 = vadd.f32 0.0, %v5146
    %5148 = vmatmul.bf16.gmra.mxu0 %v4947
    %v5149 = vpop.f32.mrf.mxu0
    %v5150 = vadd.f32 0.0, %v5149
    %v5151 = vpop.f32.mrf.mxu0
    %v5152 = vadd.f32 0.0, %v5151
    %5153 = vmatmul.bf16.gmra.mxu0 %v4950
    %v5154 = vpop.f32.mrf.mxu0
    %v5155 = vadd.f32 0.0, %v5154
    %v5156 = vpop.f32.mrf.mxu0
    %5157 = vdwg.mxu0
    %v5158 = vadd.f32 %v4401, %v4965
    %v5159 = vadd.f32 %v4402, %v4967
    %v5160 = vadd.f32 %v4403, %v4970
    %v5161 = vadd.f32 %v4404, %v4972
    %v5162 = vadd.f32 %v4405, %v4975
    %v5163 = vadd.f32 %v4406, %v4977
    %v5164 = vadd.f32 %v4407, %v4980
    %v5165 = vadd.f32 %v4408, %v4982
    %v5166 = vadd.f32 %v4409, %v4985
    %v5167 = vadd.f32 %v4410, %v4987
    %v5168 = vadd.f32 %v4411, %v4990
    %v5169 = vadd.f32 %v4412, %v4992
    %v5170 = vadd.f32 %v4413, %v4995
    %v5171 = vadd.f32 %v4414, %v4997
    %v5172 = vadd.f32 %v4415, %v5000
    %v5173 = vadd.f32 %v4416, %v5002
    %v5174 = vadd.f32 %v4417, %v5005
    %v5175 = vadd.f32 %v4418, %v5007
    %v5176 = vadd.f32 %v4419, %v5010
    %v5177 = vadd.f32 %v4420, %v5012
    %v5178 = vadd.f32 %v4421, %v5015
    %v5179 = vadd.f32 %v4422, %v5017
    %v5180 = vadd.f32 %v4423, %v5020
    %v5181 = vadd.f32 %v4424, %v5022
    %v5182 = vadd.f32 %v4425, %v5025
    %v5183 = vadd.f32 %v4426, %v5027
    %v5184 = vadd.f32 %v4427, %v5030
    %v5185 = vadd.f32 %v4428, %v5032
    %v5186 = vadd.f32 %v4429, %v5035
    %v5187 = vadd.f32 %v4430, %v5037
    %v5188 = vadd.f32 %v4431, %v5040
    %v5189 = vadd.f32 %v4432, %v5042
    %v5190 = vadd.f32 %v4433, %v5045
    %v5191 = vadd.f32 %v4434, %v5047
    %v5192 = vadd.f32 %v4435, %v5050
    %v5193 = vadd.f32 %v4436, %v5052
    %v5194 = vadd.f32 %v4437, %v5055
    %v5195 = vadd.f32 %v4438, %v5057
    %v5196 = vadd.f32 %v4439, %v5060
    %v5197 = vadd.f32 %v4440, %v5062
    %v5198 = vadd.f32 %v4441, %v5065
    %v5199 = vadd.f32 %v4442, %v5067
    %v5200 = vadd.f32 %v4443, %v5070
    %v5201 = vadd.f32 %v4444, %v5072
    %v5202 = vadd.f32 %v4445, %v5075
    %v5203 = vadd.f32 %v4446, %v5077
    %v5204 = vadd.f32 %v4447, %v5080
    %v5205 = vadd.f32 %v4448, %v5082
    %v5206 = vadd.f32 %v4449, %v5085
    %v5207 = vadd.f32 %v4450, %v5087
    %v5208 = vadd.f32 %v4451, %v5090
    %v5209 = vadd.f32 %v4452, %v5092
    %v5210 = vadd.f32 %v4453, %v5095
    %v5211 = vadd.f32 %v4454, %v5097
    %v5212 = vadd.f32 %v4455, %v5100
    %v5213 = vadd.f32 %v4456, %v5102
    %v5214 = vadd.f32 %v4457, %v5105
    %v5215 = vadd.f32 %v4458, %v5107
    %v5216 = vadd.f32 %v4459, %v5110
    %v5217 = vadd.f32 %v4460, %v5112
    %v5218 = vadd.f32 %v4461, %v5115
    %v5219 = vadd.f32 %v4462, %v5117
    %v5220 = vadd.f32 %v4463, %v5120
    %v5221 = vadd.f32 %v4464, %v5122
    %v5222 = vadd.f32 %v4465, %v5125
    %v5223 = vadd.f32 %v4466, %v5127
    %v5224 = vadd.f32 %v4467, %v5130
    %v5225 = vadd.f32 %v4468, %v5132
    %v5226 = vadd.f32 %v4469, %v5135
    %v5227 = vadd.f32 %v4470, %v5137
    %v5228 = vadd.f32 %v4471, %v5140
    %v5229 = vadd.f32 %v4472, %v5142
    %v5230 = vadd.f32 %v4473, %v5145
    %v5231 = vadd.f32 %v4474, %v5147
    %v5232 = vadd.f32 %v4475, %v5150
    %v5233 = vadd.f32 %v4476, %v5152
    %v5234 = vadd.f32 %v4477, %v5155
    %v5235 = vld [vmem:[%s0 + $0x10] sm:$0x8]
    %s5236 = scalar_lea.vmem %s1, 16
    %v5237 = vld [vmem:[%s5236] sm:$0x3]
    %v5239 = vunpack.c.l.b16 %v5235
    %v5240 = vpack.c.b16 %v3886, %v5239
    %vm5241 = vcmask 1044480
    %v5242 = vrot.slane %v5240, 3
    %v5243 = vrot.slane %v3963, 3
    %v5244 = vsel %vm5241, %v5242, %v5243
    %v5245 = vrot.slane %v3964, 3
    %v5246 = vsel %vm5241, %v5243, %v5245
    %v5247 = vrot.slane %v3965, 3
    %v5248 = vsel %vm5241, %v5245, %v5247
    %v5249 = vrot.slane %v3966, 3
    %v5250 = vsel %vm5241, %v5247, %v5249
    %v5251 = vrot.slane %v3967, 3
    %v5252 = vsel %vm5241, %v5249, %v5251
    %v5253 = vrot.slane %v3968, 3
    %v5254 = vsel %vm5241, %v5251, %v5253
    %v5255 = vrot.slane %v3969, 3
    %v5256 = vsel %vm5241, %v5253, %v5255
    %v5257 = vrot.slane %v3970, 3
    %v5258 = vsel %vm5241, %v5255, %v5257
    %v5259 = vrot.slane %v3971, 3
    %v5260 = vsel %vm5241, %v5257, %v5259
    %v5261 = vrot.slane %v3972, 3
    %v5262 = vsel %vm5241, %v5259, %v5261
    %v5263 = vrot.slane %v3973, 3
    %v5264 = vsel %vm5241, %v5261, %v5263
    %v5265 = vrot.slane %v3974, 3
    %v5266 = vsel %vm5241, %v5263, %v5265
    %v5267 = vrot.slane %v3975, 3
    %v5268 = vsel %vm5241, %v5265, %v5267
    %v5269 = vrot.slane %v3976, 3
    %v5270 = vsel %vm5241, %v5267, %v5269
    %v5271 = vrot.slane %v3977, 3
    %v5272 = vsel %vm5241, %v5269, %v5271
    %v5273 = vrot.slane %v3978, 3
    %v5274 = vsel %vm5241, %v5271, %v5273
    %v5275 = vrot.slane %v3979, 3
    %v5276 = vsel %vm5241, %v5273, %v5275
    %v5277 = vrot.slane %v3980, 3
    %v5278 = vsel %vm5241, %v5275, %v5277
    %v5279 = vrot.slane %v3981, 3
    %v5280 = vsel %vm5241, %v5277, %v5279
    %v5281 = vrot.slane %v3982, 3
    %v5282 = vsel %vm5241, %v5279, %v5281
    %v5283 = vrot.slane %v3983, 3
    %v5284 = vsel %vm5241, %v5281, %v5283
    %v5285 = vrot.slane %v3984, 3
    %v5286 = vsel %vm5241, %v5283, %v5285
    %v5287 = vrot.slane %v3985, 3
    %v5288 = vsel %vm5241, %v5285, %v5287
    %v5289 = vrot.slane %v3986, 3
    %v5290 = vsel %vm5241, %v5287, %v5289
    %v5291 = vrot.slane %v3987, 3
    %v5292 = vsel %vm5241, %v5289, %v5291
    %v5293 = vrot.slane %v3988, 3
    %v5294 = vsel %vm5241, %v5291, %v5293
    %v5295 = vrot.slane %v3989, 3
    %v5296 = vsel %vm5241, %v5293, %v5295
    %v5297 = vrot.slane %v3990, 3
    %v5298 = vsel %vm5241, %v5295, %v5297
    %v5299 = vrot.slane %v3991, 3
    %v5300 = vsel %vm5241, %v5297, %v5299
    %v5301 = vrot.slane %v3992, 3
    %v5302 = vsel %vm5241, %v5299, %v5301
    %v5303 = vrot.slane %v3993, 3
    %v5304 = vsel %vm5241, %v5301, %v5303
    %v5305 = vrot.slane %v3994, 3
    %v5306 = vsel %vm5241, %v5303, %v5305
    %v5307 = vrot.slane %v3995, 3
    %v5308 = vsel %vm5241, %v5305, %v5307
    %v5309 = vrot.slane %v3996, 3
    %v5310 = vsel %vm5241, %v5307, %v5309
    %v5311 = vrot.slane %v3997, 3
    %v5312 = vsel %vm5241, %v5309, %v5311
    %v5313 = vrot.slane %v3998, 3
    %v5314 = vsel %vm5241, %v5311, %v5313
    %v5315 = vrot.slane %v3999, 3
    %v5316 = vsel %vm5241, %v5313, %v5315
    %v5317 = vrot.slane %v4483, 3
    %v5318 = vsel %vm5241, %v5315, %v5317
    %v5320 = vsel %vm642, %v5244, 0
    %v5323 = vsel %vm642, %v5246, 0
    %v5326 = vsel %vm642, %v5248, 0
    %v5329 = vsel %vm642, %v5250, 0
    %v5332 = vsel %vm642, %v5252, 0
    %v5335 = vsel %vm642, %v5254, 0
    %v5338 = vsel %vm642, %v5256, 0
    %v5341 = vsel %vm642, %v5258, 0
    %v5344 = vsel %vm642, %v5260, 0
    %v5347 = vsel %vm642, %v5262, 0
    %v5350 = vsel %vm642, %v5264, 0
    %v5353 = vsel %vm642, %v5266, 0
    %v5356 = vsel %vm642, %v5268, 0
    %v5359 = vsel %vm642, %v5270, 0
    %v5362 = vsel %vm642, %v5272, 0
    %v5365 = vsel %vm642, %v5274, 0
    %v5368 = vsel %vm642, %v5276, 0
    %v5371 = vsel %vm642, %v5278, 0
    %v5374 = vsel %vm642, %v5280, 0
    %v5377 = vsel %vm642, %v5282, 0
    %v5380 = vsel %vm642, %v5284, 0
    %v5383 = vsel %vm642, %v5286, 0
    %v5386 = vsel %vm642, %v5288, 0
    %v5389 = vsel %vm642, %v5290, 0
    %v5392 = vsel %vm642, %v5292, 0
    %v5395 = vsel %vm642, %v5294, 0
    %v5398 = vsel %vm642, %v5296, 0
    %v5401 = vsel %vm642, %v5298, 0
    %v5404 = vsel %vm642, %v5300, 0
    %v5407 = vsel %vm642, %v5302, 0
    %v5410 = vsel %vm642, %v5304, 0
    %v5413 = vsel %vm642, %v5306, 0
    %v5416 = vsel %vm642, %v5308, 0
    %v5419 = vsel %vm642, %v5310, 0
    %v5422 = vsel %vm642, %v5312, 0
    %v5425 = vsel %vm642, %v5314, 0
    %v5428 = vsel %vm642, %v5316, 0
    %v5431 = vsel %vm642, %v5318, 0
    %v5434 = vsel %vm642, %v5317, 0
    %v5437 = vsel %vm760, %v5237, 0
    %5439 = vmatpush.bf16.msra.mxu0 0
    %5440 = vmatpush.bf16.msra.mxu0 0
    %5441 = vmatpush.bf16.msra.mxu0 0
    %5442 = vmatpush.bf16.msra.mxu0 0
    %5443 = vmatpush.bf16.msra.mxu0 0
    %5444 = vmatpush.bf16.msra.mxu0 0
    %5445 = vmatpush.bf16.msra.mxu0 0
    %5446 = vmatpush.bf16.msra.mxu0 %v5437
    %5447 = vmatmul.bf16.gmra.mxu0 %v5320
    %v5448 = vpop.f32.mrf.mxu0
    %v5449 = vadd.f32 0.0, %v5448
    %v5450 = vpop.f32.mrf.mxu0
    %v5451 = vadd.f32 0.0, %v5450
    %5452 = vmatmul.bf16.gmra.mxu0 %v5323
    %v5453 = vpop.f32.mrf.mxu0
    %v5454 = vadd.f32 0.0, %v5453
    %v5455 = vpop.f32.mrf.mxu0
    %v5456 = vadd.f32 0.0, %v5455
    %5457 = vmatmul.bf16.gmra.mxu0 %v5326
    %v5458 = vpop.f32.mrf.mxu0
    %v5459 = vadd.f32 0.0, %v5458
    %v5460 = vpop.f32.mrf.mxu0
    %v5461 = vadd.f32 0.0, %v5460
    %5462 = vmatmul.bf16.gmra.mxu0 %v5329
    %v5463 = vpop.f32.mrf.mxu0
    %v5464 = vadd.f32 0.0, %v5463
    %v5465 = vpop.f32.mrf.mxu0
    %v5466 = vadd.f32 0.0, %v5465
    %5467 = vmatmul.bf16.gmra.mxu0 %v5332
    %v5468 = vpop.f32.mrf.mxu0
    %v5469 = vadd.f32 0.0, %v5468
    %v5470 = vpop.f32.mrf.mxu0
    %v5471 = vadd.f32 0.0, %v5470
    %5472 = vmatmul.bf16.gmra.mxu0 %v5335
    %v5473 = vpop.f32.mrf.mxu0
    %v5474 = vadd.f32 0.0, %v5473
    %v5475 = vpop.f32.mrf.mxu0
    %v5476 = vadd.f32 0.0, %v5475
    %5477 = vmatmul.bf16.gmra.mxu0 %v5338
    %v5478 = vpop.f32.mrf.mxu0
    %v5479 = vadd.f32 0.0, %v5478
    %v5480 = vpop.f32.mrf.mxu0
    %v5481 = vadd.f32 0.0, %v5480
    %5482 = vmatmul.bf16.gmra.mxu0 %v5341
    %v5483 = vpop.f32.mrf.mxu0
    %v5484 = vadd.f32 0.0, %v5483
    %v5485 = vpop.f32.mrf.mxu0
    %v5486 = vadd.f32 0.0, %v5485
    %5487 = vmatmul.bf16.gmra.mxu0 %v5344
    %v5488 = vpop.f32.mrf.mxu0
    %v5489 = vadd.f32 0.0, %v5488
    %v5490 = vpop.f32.mrf.mxu0
    %v5491 = vadd.f32 0.0, %v5490
    %5492 = vmatmul.bf16.gmra.mxu0 %v5347
    %v5493 = vpop.f32.mrf.mxu0
    %v5494 = vadd.f32 0.0, %v5493
    %v5495 = vpop.f32.mrf.mxu0
    %v5496 = vadd.f32 0.0, %v5495
    %5497 = vmatmul.bf16.gmra.mxu0 %v5350
    %v5498 = vpop.f32.mrf.mxu0
    %v5499 = vadd.f32 0.0, %v5498
    %v5500 = vpop.f32.mrf.mxu0
    %v5501 = vadd.f32 0.0, %v5500
    %5502 = vmatmul.bf16.gmra.mxu0 %v5353
    %v5503 = vpop.f32.mrf.mxu0
    %v5504 = vadd.f32 0.0, %v5503
    %v5505 = vpop.f32.mrf.mxu0
    %v5506 = vadd.f32 0.0, %v5505
    %5507 = vmatmul.bf16.gmra.mxu0 %v5356
    %v5508 = vpop.f32.mrf.mxu0
    %v5509 = vadd.f32 0.0, %v5508
    %v5510 = vpop.f32.mrf.mxu0
    %v5511 = vadd.f32 0.0, %v5510
    %5512 = vmatmul.bf16.gmra.mxu0 %v5359
    %v5513 = vpop.f32.mrf.mxu0
    %v5514 = vadd.f32 0.0, %v5513
    %v5515 = vpop.f32.mrf.mxu0
    %v5516 = vadd.f32 0.0, %v5515
    %5517 = vmatmul.bf16.gmra.mxu0 %v5362
    %v5518 = vpop.f32.mrf.mxu0
    %v5519 = vadd.f32 0.0, %v5518
    %v5520 = vpop.f32.mrf.mxu0
    %v5521 = vadd.f32 0.0, %v5520
    %5522 = vmatmul.bf16.gmra.mxu0 %v5365
    %v5523 = vpop.f32.mrf.mxu0
    %v5524 = vadd.f32 0.0, %v5523
    %v5525 = vpop.f32.mrf.mxu0
    %v5526 = vadd.f32 0.0, %v5525
    %5527 = vmatmul.bf16.gmra.mxu0 %v5368
    %v5528 = vpop.f32.mrf.mxu0
    %v5529 = vadd.f32 0.0, %v5528
    %v5530 = vpop.f32.mrf.mxu0
    %v5531 = vadd.f32 0.0, %v5530
    %5532 = vmatmul.bf16.gmra.mxu0 %v5371
    %v5533 = vpop.f32.mrf.mxu0
    %v5534 = vadd.f32 0.0, %v5533
    %v5535 = vpop.f32.mrf.mxu0
    %v5536 = vadd.f32 0.0, %v5535
    %5537 = vmatmul.bf16.gmra.mxu0 %v5374
    %v5538 = vpop.f32.mrf.mxu0
    %v5539 = vadd.f32 0.0, %v5538
    %v5540 = vpop.f32.mrf.mxu0
    %v5541 = vadd.f32 0.0, %v5540
    %5542 = vmatmul.bf16.gmra.mxu0 %v5377
    %v5543 = vpop.f32.mrf.mxu0
    %v5544 = vadd.f32 0.0, %v5543
    %v5545 = vpop.f32.mrf.mxu0
    %v5546 = vadd.f32 0.0, %v5545
    %5547 = vmatmul.bf16.gmra.mxu0 %v5380
    %v5548 = vpop.f32.mrf.mxu0
    %v5549 = vadd.f32 0.0, %v5548
    %v5550 = vpop.f32.mrf.mxu0
    %v5551 = vadd.f32 0.0, %v5550
    %5552 = vmatmul.bf16.gmra.mxu0 %v5383
    %v5553 = vpop.f32.mrf.mxu0
    %v5554 = vadd.f32 0.0, %v5553
    %v5555 = vpop.f32.mrf.mxu0
    %v5556 = vadd.f32 0.0, %v5555
    %5557 = vmatmul.bf16.gmra.mxu0 %v5386
    %v5558 = vpop.f32.mrf.mxu0
    %v5559 = vadd.f32 0.0, %v5558
    %v5560 = vpop.f32.mrf.mxu0
    %v5561 = vadd.f32 0.0, %v5560
    %5562 = vmatmul.bf16.gmra.mxu0 %v5389
    %v5563 = vpop.f32.mrf.mxu0
    %v5564 = vadd.f32 0.0, %v5563
    %v5565 = vpop.f32.mrf.mxu0
    %v5566 = vadd.f32 0.0, %v5565
    %5567 = vmatmul.bf16.gmra.mxu0 %v5392
    %v5568 = vpop.f32.mrf.mxu0
    %v5569 = vadd.f32 0.0, %v5568
    %v5570 = vpop.f32.mrf.mxu0
    %v5571 = vadd.f32 0.0, %v5570
    %5572 = vmatmul.bf16.gmra.mxu0 %v5395
    %v5573 = vpop.f32.mrf.mxu0
    %v5574 = vadd.f32 0.0, %v5573
    %v5575 = vpop.f32.mrf.mxu0
    %v5576 = vadd.f32 0.0, %v5575
    %5577 = vmatmul.bf16.gmra.mxu0 %v5398
    %v5578 = vpop.f32.mrf.mxu0
    %v5579 = vadd.f32 0.0, %v5578
    %v5580 = vpop.f32.mrf.mxu0
    %v5581 = vadd.f32 0.0, %v5580
    %5582 = vmatmul.bf16.gmra.mxu0 %v5401
    %v5583 = vpop.f32.mrf.mxu0
    %v5584 = vadd.f32 0.0, %v5583
    %v5585 = vpop.f32.mrf.mxu0
    %v5586 = vadd.f32 0.0, %v5585
    %5587 = vmatmul.bf16.gmra.mxu0 %v5404
    %v5588 = vpop.f32.mrf.mxu0
    %v5589 = vadd.f32 0.0, %v5588
    %v5590 = vpop.f32.mrf.mxu0
    %v5591 = vadd.f32 0.0, %v5590
    %5592 = vmatmul.bf16.gmra.mxu0 %v5407
    %v5593 = vpop.f32.mrf.mxu0
    %v5594 = vadd.f32 0.0, %v5593
    %v5595 = vpop.f32.mrf.mxu0
    %v5596 = vadd.f32 0.0, %v5595
    %5597 = vmatmul.bf16.gmra.mxu0 %v5410
    %v5598 = vpop.f32.mrf.mxu0
    %v5599 = vadd.f32 0.0, %v5598
    %v5600 = vpop.f32.mrf.mxu0
    %v5601 = vadd.f32 0.0, %v5600
    %5602 = vmatmul.bf16.gmra.mxu0 %v5413
    %v5603 = vpop.f32.mrf.mxu0
    %v5604 = vadd.f32 0.0, %v5603
    %v5605 = vpop.f32.mrf.mxu0
    %v5606 = vadd.f32 0.0, %v5605
    %5607 = vmatmul.bf16.gmra.mxu0 %v5416
    %v5608 = vpop.f32.mrf.mxu0
    %v5609 = vadd.f32 0.0, %v5608
    %v5610 = vpop.f32.mrf.mxu0
    %v5611 = vadd.f32 0.0, %v5610
    %5612 = vmatmul.bf16.gmra.mxu0 %v5419
    %v5613 = vpop.f32.mrf.mxu0
    %v5614 = vadd.f32 0.0, %v5613
    %v5615 = vpop.f32.mrf.mxu0
    %v5616 = vadd.f32 0.0, %v5615
    %5617 = vmatmul.bf16.gmra.mxu0 %v5422
    %v5618 = vpop.f32.mrf.mxu0
    %v5619 = vadd.f32 0.0, %v5618
    %v5620 = vpop.f32.mrf.mxu0
    %v5621 = vadd.f32 0.0, %v5620
    %5622 = vmatmul.bf16.gmra.mxu0 %v5425
    %v5623 = vpop.f32.mrf.mxu0
    %v5624 = vadd.f32 0.0, %v5623
    %v5625 = vpop.f32.mrf.mxu0
    %v5626 = vadd.f32 0.0, %v5625
    %5627 = vmatmul.bf16.gmra.mxu0 %v5428
    %v5628 = vpop.f32.mrf.mxu0
    %v5629 = vadd.f32 0.0, %v5628
    %v5630 = vpop.f32.mrf.mxu0
    %v5631 = vadd.f32 0.0, %v5630
    %5632 = vmatmul.bf16.gmra.mxu0 %v5431
    %v5633 = vpop.f32.mrf.mxu0
    %v5634 = vadd.f32 0.0, %v5633
    %v5635 = vpop.f32.mrf.mxu0
    %v5636 = vadd.f32 0.0, %v5635
    %5637 = vmatmul.bf16.gmra.mxu0 %v5434
    %v5638 = vpop.f32.mrf.mxu0
    %v5639 = vadd.f32 0.0, %v5638
    %v5640 = vpop.f32.mrf.mxu0
    %5641 = vdwg.mxu0
    %v5642 = vadd.f32 %v5158, %v5449
    %v5643 = vadd.f32 %v5159, %v5451
    %v5644 = vadd.f32 %v5160, %v5454
    %v5645 = vadd.f32 %v5161, %v5456
    %v5646 = vadd.f32 %v5162, %v5459
    %v5647 = vadd.f32 %v5163, %v5461
    %v5648 = vadd.f32 %v5164, %v5464
    %v5649 = vadd.f32 %v5165, %v5466
    %v5650 = vadd.f32 %v5166, %v5469
    %v5651 = vadd.f32 %v5167, %v5471
    %v5652 = vadd.f32 %v5168, %v5474
    %v5653 = vadd.f32 %v5169, %v5476
    %v5654 = vadd.f32 %v5170, %v5479
    %v5655 = vadd.f32 %v5171, %v5481
    %v5656 = vadd.f32 %v5172, %v5484
    %v5657 = vadd.f32 %v5173, %v5486
    %v5658 = vadd.f32 %v5174, %v5489
    %v5659 = vadd.f32 %v5175, %v5491
    %v5660 = vadd.f32 %v5176, %v5494
    %v5661 = vadd.f32 %v5177, %v5496
    %v5662 = vadd.f32 %v5178, %v5499
    %v5663 = vadd.f32 %v5179, %v5501
    %v5664 = vadd.f32 %v5180, %v5504
    %v5665 = vadd.f32 %v5181, %v5506
    %v5666 = vadd.f32 %v5182, %v5509
    %v5667 = vadd.f32 %v5183, %v5511
    %v5668 = vadd.f32 %v5184, %v5514
    %v5669 = vadd.f32 %v5185, %v5516
    %v5670 = vadd.f32 %v5186, %v5519
    %v5671 = vadd.f32 %v5187, %v5521
    %v5672 = vadd.f32 %v5188, %v5524
    %v5673 = vadd.f32 %v5189, %v5526
    %v5674 = vadd.f32 %v5190, %v5529
    %v5675 = vadd.f32 %v5191, %v5531
    %v5676 = vadd.f32 %v5192, %v5534
    %v5677 = vadd.f32 %v5193, %v5536
    %v5678 = vadd.f32 %v5194, %v5539
    %v5679 = vadd.f32 %v5195, %v5541
    %v5680 = vadd.f32 %v5196, %v5544
    %v5681 = vadd.f32 %v5197, %v5546
    %v5682 = vadd.f32 %v5198, %v5549
    %v5683 = vadd.f32 %v5199, %v5551
    %v5684 = vadd.f32 %v5200, %v5554
    %v5685 = vadd.f32 %v5201, %v5556
    %v5686 = vadd.f32 %v5202, %v5559
    %v5687 = vadd.f32 %v5203, %v5561
    %v5688 = vadd.f32 %v5204, %v5564
    %v5689 = vadd.f32 %v5205, %v5566
    %v5690 = vadd.f32 %v5206, %v5569
    %v5691 = vadd.f32 %v5207, %v5571
    %v5692 = vadd.f32 %v5208, %v5574
    %v5693 = vadd.f32 %v5209, %v5576
    %v5694 = vadd.f32 %v5210, %v5579
    %v5695 = vadd.f32 %v5211, %v5581
    %v5696 = vadd.f32 %v5212, %v5584
    %v5697 = vadd.f32 %v5213, %v5586
    %v5698 = vadd.f32 %v5214, %v5589
    %v5699 = vadd.f32 %v5215, %v5591
    %v5700 = vadd.f32 %v5216, %v5594
    %v5701 = vadd.f32 %v5217, %v5596
    %v5702 = vadd.f32 %v5218, %v5599
    %v5703 = vadd.f32 %v5219, %v5601
    %v5704 = vadd.f32 %v5220, %v5604
    %v5705 = vadd.f32 %v5221, %v5606
    %v5706 = vadd.f32 %v5222, %v5609
    %v5707 = vadd.f32 %v5223, %v5611
    %v5708 = vadd.f32 %v5224, %v5614
    %v5709 = vadd.f32 %v5225, %v5616
    %v5710 = vadd.f32 %v5226, %v5619
    %v5711 = vadd.f32 %v5227, %v5621
    %v5712 = vadd.f32 %v5228, %v5624
    %v5713 = vadd.f32 %v5229, %v5626
    %v5714 = vadd.f32 %v5230, %v5629
    %v5715 = vadd.f32 %v5231, %v5631
    %v5716 = vadd.f32 %v5232, %v5634
    %v5717 = vadd.f32 %v5233, %v5636
    %v5718 = vadd.f32 %v5234, %v5639
    %v5719 = vld [vmem:[%s2] sm:$0x1]
    %v5721 = vperm.slane %v5719, 0
    %v5723 = vadd.f32 %v5642, %v5721
    %v5724 = vadd.f32 %v5643, %v5721
    %v5725 = vadd.f32 %v5644, %v5721
    %v5726 = vadd.f32 %v5645, %v5721
    %v5727 = vadd.f32 %v5646, %v5721
    %v5728 = vadd.f32 %v5647, %v5721
    %v5729 = vadd.f32 %v5648, %v5721
    %v5730 = vadd.f32 %v5649, %v5721
    %v5731 = vadd.f32 %v5650, %v5721
    %v5732 = vadd.f32 %v5651, %v5721
    %v5733 = vadd.f32 %v5652, %v5721
    %v5734 = vadd.f32 %v5653, %v5721
    %v5735 = vadd.f32 %v5654, %v5721
    %v5736 = vadd.f32 %v5655, %v5721
    %v5737 = vadd.f32 %v5656, %v5721
    %v5738 = vadd.f32 %v5657, %v5721
    %v5739 = vadd.f32 %v5658, %v5721
    %v5740 = vadd.f32 %v5659, %v5721
    %v5741 = vadd.f32 %v5660, %v5721
    %v5742 = vadd.f32 %v5661, %v5721
    %v5743 = vadd.f32 %v5662, %v5721
    %v5744 = vadd.f32 %v5663, %v5721
    %v5745 = vadd.f32 %v5664, %v5721
    %v5746 = vadd.f32 %v5665, %v5721
    %v5747 = vadd.f32 %v5666, %v5721
    %v5748 = vadd.f32 %v5667, %v5721
    %v5749 = vadd.f32 %v5668, %v5721
    %v5750 = vadd.f32 %v5669, %v5721
    %v5751 = vadd.f32 %v5670, %v5721
    %v5752 = vadd.f32 %v5671, %v5721
    %v5753 = vadd.f32 %v5672, %v5721
    %v5754 = vadd.f32 %v5673, %v5721
    %v5755 = vadd.f32 %v5674, %v5721
    %v5756 = vadd.f32 %v5675, %v5721
    %v5757 = vadd.f32 %v5676, %v5721
    %v5758 = vadd.f32 %v5677, %v5721
    %v5759 = vadd.f32 %v5678, %v5721
    %v5760 = vadd.f32 %v5679, %v5721
    %v5761 = vadd.f32 %v5680, %v5721
    %v5762 = vadd.f32 %v5681, %v5721
    %v5763 = vadd.f32 %v5682, %v5721
    %v5764 = vadd.f32 %v5683, %v5721
    %v5765 = vadd.f32 %v5684, %v5721
    %v5766 = vadd.f32 %v5685, %v5721
    %v5767 = vadd.f32 %v5686, %v5721
    %v5768 = vadd.f32 %v5687, %v5721
    %v5769 = vadd.f32 %v5688, %v5721
    %v5770 = vadd.f32 %v5689, %v5721
    %v5771 = vadd.f32 %v5690, %v5721
    %v5772 = vadd.f32 %v5691, %v5721
    %v5773 = vadd.f32 %v5692, %v5721
    %v5774 = vadd.f32 %v5693, %v5721
    %v5775 = vadd.f32 %v5694, %v5721
    %v5776 = vadd.f32 %v5695, %v5721
    %v5777 = vadd.f32 %v5696, %v5721
    %v5778 = vadd.f32 %v5697, %v5721
    %v5779 = vadd.f32 %v5698, %v5721
    %v5780 = vadd.f32 %v5699, %v5721
    %v5781 = vadd.f32 %v5700, %v5721
    %v5782 = vadd.f32 %v5701, %v5721
    %v5783 = vadd.f32 %v5702, %v5721
    %v5784 = vadd.f32 %v5703, %v5721
    %v5785 = vadd.f32 %v5704, %v5721
    %v5786 = vadd.f32 %v5705, %v5721
    %v5787 = vadd.f32 %v5706, %v5721
    %v5788 = vadd.f32 %v5707, %v5721
    %v5789 = vadd.f32 %v5708, %v5721
    %v5790 = vadd.f32 %v5709, %v5721
    %v5791 = vadd.f32 %v5710, %v5721
    %v5792 = vadd.f32 %v5711, %v5721
    %v5793 = vadd.f32 %v5712, %v5721
    %v5794 = vadd.f32 %v5713, %v5721
    %v5795 = vadd.f32 %v5714, %v5721
    %v5796 = vadd.f32 %v5715, %v5721
    %v5797 = vadd.f32 %v5716, %v5721
    %v5798 = vadd.f32 %v5717, %v5721
    %v5799 = vadd.f32 %v5718, %v5721
    %v5800 = vmax.f32 %v5723, 0.0
    %v5801 = vmax.f32 %v5724, 0.0
    %v5802 = vmax.f32 %v5725, 0.0
    %v5803 = vmax.f32 %v5726, 0.0
    %v5804 = vmax.f32 %v5727, 0.0
    %v5805 = vmax.f32 %v5728, 0.0
    %v5806 = vmax.f32 %v5729, 0.0
    %v5807 = vmax.f32 %v5730, 0.0
    %v5808 = vmax.f32 %v5731, 0.0
    %v5809 = vmax.f32 %v5732, 0.0
    %v5810 = vmax.f32 %v5733, 0.0
    %v5811 = vmax.f32 %v5734, 0.0
    %v5812 = vmax.f32 %v5735, 0.0
    %v5813 = vmax.f32 %v5736, 0.0
    %v5814 = vmax.f32 %v5737, 0.0
    %v5815 = vmax.f32 %v5738, 0.0
    %v5816 = vmax.f32 %v5739, 0.0
    %v5817 = vmax.f32 %v5740, 0.0
    %v5818 = vmax.f32 %v5741, 0.0
    %v5819 = vmax.f32 %v5742, 0.0
    %v5820 = vmax.f32 %v5743, 0.0
    %v5821 = vmax.f32 %v5744, 0.0
    %v5822 = vmax.f32 %v5745, 0.0
    %v5823 = vmax.f32 %v5746, 0.0
    %v5824 = vmax.f32 %v5747, 0.0
    %v5825 = vmax.f32 %v5748, 0.0
    %v5826 = vmax.f32 %v5749, 0.0
    %v5827 = vmax.f32 %v5750, 0.0
    %v5828 = vmax.f32 %v5751, 0.0
    %v5829 = vmax.f32 %v5752, 0.0
    %v5830 = vmax.f32 %v5753, 0.0
    %v5831 = vmax.f32 %v5754, 0.0
    %v5832 = vmax.f32 %v5755, 0.0
    %v5833 = vmax.f32 %v5756, 0.0
    %v5834 = vmax.f32 %v5757, 0.0
    %v5835 = vmax.f32 %v5758, 0.0
    %v5836 = vmax.f32 %v5759, 0.0
    %v5837 = vmax.f32 %v5760, 0.0
    %v5838 = vmax.f32 %v5761, 0.0
    %v5839 = vmax.f32 %v5762, 0.0
    %v5840 = vmax.f32 %v5763, 0.0
    %v5841 = vmax.f32 %v5764, 0.0
    %v5842 = vmax.f32 %v5765, 0.0
    %v5843 = vmax.f32 %v5766, 0.0
    %v5844 = vmax.f32 %v5767, 0.0
    %v5845 = vmax.f32 %v5768, 0.0
    %v5846 = vmax.f32 %v5769, 0.0
    %v5847 = vmax.f32 %v5770, 0.0
    %v5848 = vmax.f32 %v5771, 0.0
    %v5849 = vmax.f32 %v5772, 0.0
    %v5850 = vmax.f32 %v5773, 0.0
    %v5851 = vmax.f32 %v5774, 0.0
    %v5852 = vmax.f32 %v5775, 0.0
    %v5853 = vmax.f32 %v5776, 0.0
    %v5854 = vmax.f32 %v5777, 0.0
    %v5855 = vmax.f32 %v5778, 0.0
    %v5856 = vmax.f32 %v5779, 0.0
    %v5857 = vmax.f32 %v5780, 0.0
    %v5858 = vmax.f32 %v5781, 0.0
    %v5859 = vmax.f32 %v5782, 0.0
    %v5860 = vmax.f32 %v5783, 0.0
    %v5861 = vmax.f32 %v5784, 0.0
    %v5862 = vmax.f32 %v5785, 0.0
    %v5863 = vmax.f32 %v5786, 0.0
    %v5864 = vmax.f32 %v5787, 0.0
    %v5865 = vmax.f32 %v5788, 0.0
    %v5866 = vmax.f32 %v5789, 0.0
    %v5867 = vmax.f32 %v5790, 0.0
    %v5868 = vmax.f32 %v5791, 0.0
    %v5869 = vmax.f32 %v5792, 0.0
    %v5870 = vmax.f32 %v5793, 0.0
    %v5871 = vmax.f32 %v5794, 0.0
    %v5872 = vmax.f32 %v5795, 0.0
    %v5873 = vmax.f32 %v5796, 0.0
    %v5874 = vmax.f32 %v5797, 0.0
    %v5875 = vmax.f32 %v5798, 0.0
    %v5876 = vmax.f32 %v5799, 0.0
    %vm5877 = vcmask 261120
    %5878 = vst.msk [vmem:[#allocation2] sm:$0xff] %vm5877, %v5800
    %5879 = vst.msk [vmem:[#allocation2 + $0x8] sm:$0xff] %vm5877, %v5801
    %5880 = vst.msk [vmem:[#allocation2 + $0x10] sm:$0xff] %vm5877, %v5802
    %5881 = vst.msk [vmem:[#allocation2 + $0x18] sm:$0xff] %vm5877, %v5803
    %5882 = vst.msk [vmem:[#allocation2 + $0x20] sm:$0xff] %vm5877, %v5804
    %5883 = vst.msk [vmem:[#allocation2 + $0x28] sm:$0xff] %vm5877, %v5805
    %5884 = vst.msk [vmem:[#allocation2 + $0x30] sm:$0xff] %vm5877, %v5806
    %5885 = vst.msk [vmem:[#allocation2 + $0x38] sm:$0xff] %vm5877, %v5807
    %5886 = vst.msk [vmem:[#allocation2 + $0x40] sm:$0xff] %vm5877, %v5808
    %5887 = vst.msk [vmem:[#allocation2 + $0x48] sm:$0xff] %vm5877, %v5809
    %5888 = vst.msk [vmem:[#allocation2 + $0x50] sm:$0xff] %vm5877, %v5810
    %5889 = vst.msk [vmem:[#allocation2 + $0x58] sm:$0xff] %vm5877, %v5811
    %5890 = vst.msk [vmem:[#allocation2 + $0x60] sm:$0xff] %vm5877, %v5812
    %5891 = vst.msk [vmem:[#allocation2 + $0x68] sm:$0xff] %vm5877, %v5813
    %5892 = vst.msk [vmem:[#allocation2 + $0x70] sm:$0xff] %vm5877, %v5814
    %5893 = vst.msk [vmem:[#allocation2 + $0x78] sm:$0xff] %vm5877, %v5815
    %5894 = vst.msk [vmem:[#allocation2 + $0x80] sm:$0xff] %vm5877, %v5816
    %5895 = vst.msk [vmem:[#allocation2 + $0x88] sm:$0xff] %vm5877, %v5817
    %5896 = vst.msk [vmem:[#allocation2 + $0x90] sm:$0xff] %vm5877, %v5818
    %5897 = vst.msk [vmem:[#allocation2 + $0x98] sm:$0xff] %vm5877, %v5819
    %5898 = vst.msk [vmem:[#allocation2 + $0xa0] sm:$0xff] %vm5877, %v5820
    %5899 = vst.msk [vmem:[#allocation2 + $0xa8] sm:$0xff] %vm5877, %v5821
    %5900 = vst.msk [vmem:[#allocation2 + $0xb0] sm:$0xff] %vm5877, %v5822
    %5901 = vst.msk [vmem:[#allocation2 + $0xb8] sm:$0xff] %vm5877, %v5823
    %5902 = vst.msk [vmem:[#allocation2 + $0xc0] sm:$0xff] %vm5877, %v5824
    %5903 = vst.msk [vmem:[#allocation2 + $0xc8] sm:$0xff] %vm5877, %v5825
    %5904 = vst.msk [vmem:[#allocation2 + $0xd0] sm:$0xff] %vm5877, %v5826
    %5905 = vst.msk [vmem:[#allocation2 + $0xd8] sm:$0xff] %vm5877, %v5827
    %5906 = vst.msk [vmem:[#allocation2 + $0xe0] sm:$0xff] %vm5877, %v5828
    %5907 = vst.msk [vmem:[#allocation2 + $0xe8] sm:$0xff] %vm5877, %v5829
    %5908 = vst.msk [vmem:[#allocation2 + $0xf0] sm:$0xff] %vm5877, %v5830
    %5909 = vst.msk [vmem:[#allocation2 + $0xf8] sm:$0xff] %vm5877, %v5831
    %5910 = vst.msk [vmem:[#allocation2 + $0x100] sm:$0xff] %vm5877, %v5832
    %5911 = vst.msk [vmem:[#allocation2 + $0x108] sm:$0xff] %vm5877, %v5833
    %5912 = vst.msk [vmem:[#allocation2 + $0x110] sm:$0xff] %vm5877, %v5834
    %5913 = vst.msk [vmem:[#allocation2 + $0x118] sm:$0xff] %vm5877, %v5835
    %5914 = vst.msk [vmem:[#allocation2 + $0x120] sm:$0xff] %vm5877, %v5836
    %5915 = vst.msk [vmem:[#allocation2 + $0x128] sm:$0xff] %vm5877, %v5837
    %5916 = vst.msk [vmem:[#allocation2 + $0x130] sm:$0xff] %vm5877, %v5838
    %5917 = vst.msk [vmem:[#allocation2 + $0x138] sm:$0xff] %vm5877, %v5839
    %5918 = vst.msk [vmem:[#allocation2 + $0x140] sm:$0xff] %vm5877, %v5840
    %5919 = vst.msk [vmem:[#allocation2 + $0x148] sm:$0xff] %vm5877, %v5841
    %5920 = vst.msk [vmem:[#allocation2 + $0x150] sm:$0xff] %vm5877, %v5842
    %5921 = vst.msk [vmem:[#allocation2 + $0x158] sm:$0xff] %vm5877, %v5843
    %5922 = vst.msk [vmem:[#allocation2 + $0x160] sm:$0xff] %vm5877, %v5844
    %5923 = vst.msk [vmem:[#allocation2 + $0x168] sm:$0xff] %vm5877, %v5845
    %5924 = vst.msk [vmem:[#allocation2 + $0x170] sm:$0xff] %vm5877, %v5846
    %5925 = vst.msk [vmem:[#allocation2 + $0x178] sm:$0xff] %vm5877, %v5847
    %5926 = vst.msk [vmem:[#allocation2 + $0x180] sm:$0xff] %vm5877, %v5848
    %5927 = vst.msk [vmem:[#allocation2 + $0x188] sm:$0xff] %vm5877, %v5849
    %5928 = vst.msk [vmem:[#allocation2 + $0x190] sm:$0xff] %vm5877, %v5850
    %5929 = vst.msk [vmem:[#allocation2 + $0x198] sm:$0xff] %vm5877, %v5851
    %5930 = vst.msk [vmem:[#allocation2 + $0x1a0] sm:$0xff] %vm5877, %v5852
    %5931 = vst.msk [vmem:[#allocation2 + $0x1a8] sm:$0xff] %vm5877, %v5853
    %5932 = vst.msk [vmem:[#allocation2 + $0x1b0] sm:$0xff] %vm5877, %v5854
    %5933 = vst.msk [vmem:[#allocation2 + $0x1b8] sm:$0xff] %vm5877, %v5855
    %5934 = vst.msk [vmem:[#allocation2 + $0x1c0] sm:$0xff] %vm5877, %v5856
    %5935 = vst.msk [vmem:[#allocation2 + $0x1c8] sm:$0xff] %vm5877, %v5857
    %5936 = vst.msk [vmem:[#allocation2 + $0x1d0] sm:$0xff] %vm5877, %v5858
    %5937 = vst.msk [vmem:[#allocation2 + $0x1d8] sm:$0xff] %vm5877, %v5859
    %5938 = vst.msk [vmem:[#allocation2 + $0x1e0] sm:$0xff] %vm5877, %v5860
    %5939 = vst.msk [vmem:[#allocation2 + $0x1e8] sm:$0xff] %vm5877, %v5861
    %5940 = vst.msk [vmem:[#allocation2 + $0x1f0] sm:$0xff] %vm5877, %v5862
    %5941 = vst.msk [vmem:[#allocation2 + $0x1f8] sm:$0xff] %vm5877, %v5863
    %5942 = vst.msk [vmem:[#allocation2 + $0x200] sm:$0xff] %vm5877, %v5864
    %5943 = vst.msk [vmem:[#allocation2 + $0x208] sm:$0xff] %vm5877, %v5865
    %5944 = vst.msk [vmem:[#allocation2 + $0x210] sm:$0xff] %vm5877, %v5866
    %5945 = vst.msk [vmem:[#allocation2 + $0x218] sm:$0xff] %vm5877, %v5867
    %5946 = vst.msk [vmem:[#allocation2 + $0x220] sm:$0xff] %vm5877, %v5868
    %5947 = vst.msk [vmem:[#allocation2 + $0x228] sm:$0xff] %vm5877, %v5869
    %5948 = vst.msk [vmem:[#allocation2 + $0x230] sm:$0xff] %vm5877, %v5870
    %5949 = vst.msk [vmem:[#allocation2 + $0x238] sm:$0xff] %vm5877, %v5871
    %5950 = vst.msk [vmem:[#allocation2 + $0x240] sm:$0xff] %vm5877, %v5872
    %5951 = vst.msk [vmem:[#allocation2 + $0x248] sm:$0xff] %vm5877, %v5873
    %5952 = vst.msk [vmem:[#allocation2 + $0x250] sm:$0xff] %vm5877, %v5874
    %5953 = vst.msk [vmem:[#allocation2 + $0x258] sm:$0xff] %vm5877, %v5875
    %vm5954 = vcmask 254976
    %5955 = vst.msk [vmem:[#allocation2 + $0x260] sm:$0x3] %vm5954, %v5876
    %v5956 = vld [vmem:[#allocation2] ss:$2 sm:$0xff]
    %s5957 = scalar_lea.vmem [#allocation2], 16
    %v5958 = vld [vmem:[%s5957] ss:$2 sm:$0xff]
    %s5959 = scalar_lea.vmem [#allocation2], 32
    %v5960 = vld [vmem:[%s5959] ss:$2 sm:$0xff]
    %s5961 = scalar_lea.vmem [#allocation2], 48
    %v5962 = vld [vmem:[%s5961] ss:$2 sm:$0xff]
    %s5963 = scalar_lea.vmem [#allocation2], 64
    %v5964 = vld [vmem:[%s5963] ss:$2 sm:$0xff]
    %s5965 = scalar_lea.vmem [#allocation2], 80
    %v5966 = vld [vmem:[%s5965] ss:$2 sm:$0xff]
    %s5967 = scalar_lea.vmem [#allocation2], 96
    %v5968 = vld [vmem:[%s5967] ss:$2 sm:$0xff]
    %s5969 = scalar_lea.vmem [#allocation2], 112
    %v5970 = vld [vmem:[%s5969] ss:$2 sm:$0xff]
    %s5971 = scalar_lea.vmem [#allocation2], 128
    %v5972 = vld [vmem:[%s5971] ss:$2 sm:$0xff]
    %s5973 = scalar_lea.vmem [#allocation2], 144
    %v5974 = vld [vmem:[%s5973] ss:$2 sm:$0xff]
    %s5975 = scalar_lea.vmem [#allocation2], 160
    %v5976 = vld [vmem:[%s5975] ss:$2 sm:$0xff]
    %s5977 = scalar_lea.vmem [#allocation2], 176
    %v5978 = vld [vmem:[%s5977] ss:$2 sm:$0xff]
    %s5979 = scalar_lea.vmem [#allocation2], 192
    %v5980 = vld [vmem:[%s5979] ss:$2 sm:$0xff]
    %s5981 = scalar_lea.vmem [#allocation2], 208
    %v5982 = vld [vmem:[%s5981] ss:$2 sm:$0xff]
    %s5983 = scalar_lea.vmem [#allocation2], 224
    %v5984 = vld [vmem:[%s5983] ss:$2 sm:$0xff]
    %s5985 = scalar_lea.vmem [#allocation2], 240
    %v5986 = vld [vmem:[%s5985] ss:$2 sm:$0xff]
    %s5987 = scalar_lea.vmem [#allocation2], 256
    %v5988 = vld [vmem:[%s5987] ss:$2 sm:$0xff]
    %s5989 = scalar_lea.vmem [#allocation2], 272
    %v5990 = vld [vmem:[%s5989] ss:$2 sm:$0xff]
    %s5991 = scalar_lea.vmem [#allocation2], 288
    %v5992 = vld [vmem:[%s5991] ss:$2 sm:$0xff]
    %s5993 = scalar_lea.vmem [#allocation2], 320
    %v5994 = vld [vmem:[%s5993] ss:$2 sm:$0xff]
    %s5995 = scalar_lea.vmem [#allocation2], 336
    %v5996 = vld [vmem:[%s5995] ss:$2 sm:$0xff]
    %s5997 = scalar_lea.vmem [#allocation2], 352
    %v5998 = vld [vmem:[%s5997] ss:$2 sm:$0xff]
    %s5999 = scalar_lea.vmem [#allocation2], 368
    %v6000 = vld [vmem:[%s5999] ss:$2 sm:$0xff]
    %s6001 = scalar_lea.vmem [#allocation2], 384
    %v6002 = vld [vmem:[%s6001] ss:$2 sm:$0xff]
    %s6003 = scalar_lea.vmem [#allocation2], 400
    %v6004 = vld [vmem:[%s6003] ss:$2 sm:$0xff]
    %s6005 = scalar_lea.vmem [#allocation2], 416
    %v6006 = vld [vmem:[%s6005] ss:$2 sm:$0xff]
    %s6007 = scalar_lea.vmem [#allocation2], 432
    %v6008 = vld [vmem:[%s6007] ss:$2 sm:$0xff]
    %s6009 = scalar_lea.vmem [#allocation2], 448
    %v6010 = vld [vmem:[%s6009] ss:$2 sm:$0xff]
    %s6011 = scalar_lea.vmem [#allocation2], 464
    %v6012 = vld [vmem:[%s6011] ss:$2 sm:$0xff]
    %s6013 = scalar_lea.vmem [#allocation2], 480
    %v6014 = vld [vmem:[%s6013] ss:$2 sm:$0xff]
    %s6015 = scalar_lea.vmem [#allocation2], 496
    %v6016 = vld [vmem:[%s6015] ss:$2 sm:$0xff]
    %s6017 = scalar_lea.vmem [#allocation2], 512
    %v6018 = vld [vmem:[%s6017] ss:$2 sm:$0xff]
    %s6019 = scalar_lea.vmem [#allocation2], 528
    %v6020 = vld [vmem:[%s6019] ss:$2 sm:$0xff]
    %s6021 = scalar_lea.vmem [#allocation2], 544
    %v6022 = vld [vmem:[%s6021] ss:$2 sm:$0xff]
    %s6023 = scalar_lea.vmem [#allocation2], 560
    %v6024 = vld [vmem:[%s6023] ss:$2 sm:$0xff]
    %s6025 = scalar_lea.vmem [#allocation2], 576
    %v6026 = vld [vmem:[%s6025] ss:$2 sm:$0xff]
    %s6027 = scalar_lea.vmem [#allocation2], 592
    %v6028 = vld [vmem:[%s6027] ss:$2 sm:$0xff]
    %s6029 = scalar_lea.vmem [#allocation2], 608
    %v6030 = vld [vmem:[%s6029] ss:$2 sm:$0x1]
    %s6031 = scalar_lea.vmem [#allocation2], 1
    %v6032 = vld [vmem:[%s6031] ss:$2 sm:$0xff]
    %s6033 = scalar_lea.vmem [#allocation2], 17
    %v6034 = vld [vmem:[%s6033] ss:$2 sm:$0xff]
    %s6035 = scalar_lea.vmem [#allocation2], 33
    %v6036 = vld [vmem:[%s6035] ss:$2 sm:$0xff]
    %s6037 = scalar_lea.vmem [#allocation2], 49
    %v6038 = vld [vmem:[%s6037] ss:$2 sm:$0xff]
    %s6039 = scalar_lea.vmem [#allocation2], 65
    %v6040 = vld [vmem:[%s6039] ss:$2 sm:$0xff]
    %s6041 = scalar_lea.vmem [#allocation2], 81
    %v6042 = vld [vmem:[%s6041] ss:$2 sm:$0xff]
    %s6043 = scalar_lea.vmem [#allocation2], 97
    %v6044 = vld [vmem:[%s6043] ss:$2 sm:$0xff]
    %s6045 = scalar_lea.vmem [#allocation2], 113
    %v6046 = vld [vmem:[%s6045] ss:$2 sm:$0xff]
    %s6047 = scalar_lea.vmem [#allocation2], 129
    %v6048 = vld [vmem:[%s6047] ss:$2 sm:$0xff]
    %s6049 = scalar_lea.vmem [#allocation2], 145
    %v6050 = vld [vmem:[%s6049] ss:$2 sm:$0xff]
    %s6051 = scalar_lea.vmem [#allocation2], 161
    %v6052 = vld [vmem:[%s6051] ss:$2 sm:$0xff]
    %s6053 = scalar_lea.vmem [#allocation2], 177
    %v6054 = vld [vmem:[%s6053] ss:$2 sm:$0xff]
    %s6055 = scalar_lea.vmem [#allocation2], 193
    %v6056 = vld [vmem:[%s6055] ss:$2 sm:$0xff]
    %s6057 = scalar_lea.vmem [#allocation2], 209
    %v6058 = vld [vmem:[%s6057] ss:$2 sm:$0xff]
    %s6059 = scalar_lea.vmem [#allocation2], 225
    %v6060 = vld [vmem:[%s6059] ss:$2 sm:$0xff]
    %s6061 = scalar_lea.vmem [#allocation2], 241
    %v6062 = vld [vmem:[%s6061] ss:$2 sm:$0xff]
    %s6063 = scalar_lea.vmem [#allocation2], 257
    %v6064 = vld [vmem:[%s6063] ss:$2 sm:$0xff]
    %s6065 = scalar_lea.vmem [#allocation2], 273
    %v6066 = vld [vmem:[%s6065] ss:$2 sm:$0xff]
    %s6067 = scalar_lea.vmem [#allocation2], 289
    %v6068 = vld [vmem:[%s6067] ss:$2 sm:$0xff]
    %s6069 = scalar_lea.vmem [#allocation2], 321
    %v6070 = vld [vmem:[%s6069] ss:$2 sm:$0xff]
    %s6071 = scalar_lea.vmem [#allocation2], 337
    %v6072 = vld [vmem:[%s6071] ss:$2 sm:$0xff]
    %s6073 = scalar_lea.vmem [#allocation2], 353
    %v6074 = vld [vmem:[%s6073] ss:$2 sm:$0xff]
    %s6075 = scalar_lea.vmem [#allocation2], 369
    %v6076 = vld [vmem:[%s6075] ss:$2 sm:$0xff]
    %s6077 = scalar_lea.vmem [#allocation2], 385
    %v6078 = vld [vmem:[%s6077] ss:$2 sm:$0xff]
    %s6079 = scalar_lea.vmem [#allocation2], 401
    %v6080 = vld [vmem:[%s6079] ss:$2 sm:$0xff]
    %s6081 = scalar_lea.vmem [#allocation2], 417
    %v6082 = vld [vmem:[%s6081] ss:$2 sm:$0xff]
    %s6083 = scalar_lea.vmem [#allocation2], 433
    %v6084 = vld [vmem:[%s6083] ss:$2 sm:$0xff]
    %s6085 = scalar_lea.vmem [#allocation2], 449
    %v6086 = vld [vmem:[%s6085] ss:$2 sm:$0xff]
    %s6087 = scalar_lea.vmem [#allocation2], 465
    %v6088 = vld [vmem:[%s6087] ss:$2 sm:$0xff]
    %s6089 = scalar_lea.vmem [#allocation2], 481
    %v6090 = vld [vmem:[%s6089] ss:$2 sm:$0xff]
    %s6091 = scalar_lea.vmem [#allocation2], 497
    %v6092 = vld [vmem:[%s6091] ss:$2 sm:$0xff]
    %s6093 = scalar_lea.vmem [#allocation2], 513
    %v6094 = vld [vmem:[%s6093] ss:$2 sm:$0xff]
    %s6095 = scalar_lea.vmem [#allocation2], 529
    %v6096 = vld [vmem:[%s6095] ss:$2 sm:$0xff]
    %s6097 = scalar_lea.vmem [#allocation2], 545
    %v6098 = vld [vmem:[%s6097] ss:$2 sm:$0xff]
    %s6099 = scalar_lea.vmem [#allocation2], 561
    %v6100 = vld [vmem:[%s6099] ss:$2 sm:$0xff]
    %s6101 = scalar_lea.vmem [#allocation2], 577
    %v6102 = vld [vmem:[%s6101] ss:$2 sm:$0xff]
    %s6103 = scalar_lea.vmem [#allocation2], 593
    %v6104 = vld [vmem:[%s6103] ss:$2 sm:$0xff]
    %s6105 = scalar_lea.vmem [#allocation2], 609
    %v6106 = vld [vmem:[%s6105] ss:$2 sm:$0x1]
    %v6107 = vmax.f32 %v5956, %v6032
    %v6108 = vmax.f32 %v5958, %v6034
    %v6109 = vmax.f32 %v5960, %v6036
    %v6110 = vmax.f32 %v5962, %v6038
    %v6111 = vmax.f32 %v5964, %v6040
    %v6112 = vmax.f32 %v5966, %v6042
    %v6113 = vmax.f32 %v5968, %v6044
    %v6114 = vmax.f32 %v5970, %v6046
    %v6115 = vmax.f32 %v5972, %v6048
    %v6116 = vmax.f32 %v5974, %v6050
    %v6117 = vmax.f32 %v5976, %v6052
    %v6118 = vmax.f32 %v5978, %v6054
    %v6119 = vmax.f32 %v5980, %v6056
    %v6120 = vmax.f32 %v5982, %v6058
    %v6121 = vmax.f32 %v5984, %v6060
    %v6122 = vmax.f32 %v5986, %v6062
    %v6123 = vmax.f32 %v5988, %v6064
    %v6124 = vmax.f32 %v5990, %v6066
    %v6125 = vmax.f32 %v5992, %v6068
    %v6126 = vmax.f32 %v5994, %v6070
    %v6127 = vmax.f32 %v5996, %v6072
    %v6128 = vmax.f32 %v5998, %v6074
    %v6129 = vmax.f32 %v6000, %v6076
    %v6130 = vmax.f32 %v6002, %v6078
    %v6131 = vmax.f32 %v6004, %v6080
    %v6132 = vmax.f32 %v6006, %v6082
    %v6133 = vmax.f32 %v6008, %v6084
    %v6134 = vmax.f32 %v6010, %v6086
    %v6135 = vmax.f32 %v6012, %v6088
    %v6136 = vmax.f32 %v6014, %v6090
    %v6137 = vmax.f32 %v6016, %v6092
    %v6138 = vmax.f32 %v6018, %v6094
    %v6139 = vmax.f32 %v6020, %v6096
    %v6140 = vmax.f32 %v6022, %v6098
    %v6141 = vmax.f32 %v6024, %v6100
    %v6142 = vmax.f32 %v6026, %v6102
    %v6143 = vmax.f32 %v6028, %v6104
    %v6144 = vmax.f32 %v6030, %v6106
    %vm6181 = vcmask 1046528
    %v6182 = vrot.slane %v6108, 1
    %v6183 = vrot.slane %v6109, 1
    %v6184 = vsel %vm6181, %v6182, %v6183
    %v6185 = vrot.slane %v6110, 1
    %v6186 = vrot.slane %v6111, 1
    %v6187 = vsel %vm6181, %v6185, %v6186
    %v6188 = vrot.slane %v6112, 1
    %v6189 = vsel %vm6181, %v6186, %v6188
    %v6190 = vrot.slane %v6113, 1
    %v6191 = vsel %vm6181, %v6188, %v6190
    %v6192 = vrot.slane %v6114, 1
    %v6193 = vsel %vm6181, %v6190, %v6192
    %v6194 = vrot.slane %v6115, 1
    %v6195 = vsel %vm6181, %v6192, %v6194
    %v6196 = vrot.slane %v6116, 1
    %v6197 = vsel %vm6181, %v6194, %v6196
    %v6198 = vrot.slane %v6117, 1
    %v6199 = vrot.slane %v6118, 1
    %v6200 = vsel %vm6181, %v6198, %v6199
    %v6201 = vrot.slane %v6119, 1
    %v6202 = vrot.slane %v6120, 1
    %v6203 = vsel %vm6181, %v6201, %v6202
    %v6204 = vrot.slane %v6121, 1
    %v6205 = vsel %vm6181, %v6202, %v6204
    %v6206 = vrot.slane %v6122, 1
    %v6207 = vsel %vm6181, %v6204, %v6206
    %v6208 = vrot.slane %v6123, 1
    %v6209 = vsel %vm6181, %v6206, %v6208
    %v6210 = vrot.slane %v6124, 1
    %v6211 = vsel %vm6181, %v6208, %v6210
    %v6212 = vrot.slane %v6125, 1
    %v6213 = vsel %vm6181, %v6210, %v6212
    %v6214 = vrot.slane %v6127, 1
    %v6215 = vrot.slane %v6128, 1
    %v6216 = vsel %vm6181, %v6214, %v6215
    %v6217 = vrot.slane %v6129, 1
    %v6218 = vsel %vm6181, %v6215, %v6217
    %v6219 = vrot.slane %v6130, 1
    %v6220 = vsel %vm6181, %v6217, %v6219
    %v6221 = vrot.slane %v6131, 1
    %v6222 = vsel %vm6181, %v6219, %v6221
    %v6223 = vrot.slane %v6132, 1
    %v6224 = vsel %vm6181, %v6221, %v6223
    %v6225 = vrot.slane %v6133, 1
    %v6226 = vsel %vm6181, %v6223, %v6225
    %v6227 = vrot.slane %v6134, 1
    %v6228 = vrot.slane %v6135, 1
    %v6229 = vsel %vm6181, %v6227, %v6228
    %v6230 = vrot.slane %v6136, 1
    %v6231 = vrot.slane %v6137, 1
    %v6232 = vsel %vm6181, %v6230, %v6231
    %v6233 = vrot.slane %v6138, 1
    %v6234 = vsel %vm6181, %v6231, %v6233
    %v6235 = vrot.slane %v6139, 1
    %v6236 = vsel %vm6181, %v6233, %v6235
    %v6237 = vrot.slane %v6140, 1
    %v6238 = vsel %vm6181, %v6235, %v6237
    %v6239 = vrot.slane %v6141, 1
    %v6240 = vsel %vm6181, %v6237, %v6239
    %v6241 = vrot.slane %v6142, 1
    %v6242 = vsel %vm6181, %v6239, %v6241
    %v6243 = vrot.slane %v6143, 1
    %v6244 = vrot.slane %v6144, 1
    %v6245 = vsel %vm6181, %v6243, %v6244
    %v6274 = vmax.f32 %v6107, %v6184
    %v6275 = vmax.f32 %v6109, %v6187
    %v6276 = vmax.f32 %v6110, %v6189
    %v6277 = vmax.f32 %v6111, %v6191
    %v6278 = vmax.f32 %v6112, %v6193
    %v6279 = vmax.f32 %v6113, %v6195
    %v6280 = vmax.f32 %v6114, %v6197
    %v6281 = vmax.f32 %v6116, %v6200
    %v6282 = vmax.f32 %v6118, %v6203
    %v6283 = vmax.f32 %v6119, %v6205
    %v6284 = vmax.f32 %v6120, %v6207
    %v6285 = vmax.f32 %v6121, %v6209
    %v6286 = vmax.f32 %v6122, %v6211
    %v6287 = vmax.f32 %v6123, %v6213
    %v6288 = vmax.f32 %v6126, %v6216
    %v6289 = vmax.f32 %v6127, %v6218
    %v6290 = vmax.f32 %v6128, %v6220
    %v6291 = vmax.f32 %v6129, %v6222
    %v6292 = vmax.f32 %v6130, %v6224
    %v6293 = vmax.f32 %v6131, %v6226
    %v6294 = vmax.f32 %v6133, %v6229
    %v6295 = vmax.f32 %v6135, %v6232
    %v6296 = vmax.f32 %v6136, %v6234
    %v6297 = vmax.f32 %v6137, %v6236
    %v6298 = vmax.f32 %v6138, %v6238
    %v6299 = vmax.f32 %v6139, %v6240
    %v6300 = vmax.f32 %v6140, %v6242
    %v6301 = vmax.f32 %v6142, %v6245
    %v6303 = vrot.slane %v6274, 5
    %vm6307 = vcmask 1042432
    %v6308 = vrot.slane %v6275, 5
    %v6309 = vrot.slane %v6276, 5
    %v6310 = vsel %vm6307, %v6308, %v6309
    %v6315 = vrot.slane %v6277, 5
    %v6316 = vrot.slane %v6278, 5
    %v6317 = vsel %vm6307, %v6315, %v6316
    %v6322 = vrot.slane %v6279, 5
    %v6323 = vrot.slane %v6280, 5
    %v6324 = vsel %vm6307, %v6322, %v6323
    %v6328 = vrot.slane %v6281, 5
    %v6332 = vrot.slane %v6282, 5
    %v6333 = vrot.slane %v6283, 5
    %v6334 = vsel %vm6307, %v6332, %v6333
    %v6339 = vrot.slane %v6284, 5
    %v6340 = vrot.slane %v6285, 5
    %v6341 = vsel %vm6307, %v6339, %v6340
    %v6346 = vrot.slane %v6286, 5
    %v6347 = vrot.slane %v6287, 5
    %v6348 = vsel %vm6307, %v6346, %v6347
    %v6351 = vsel %vm6307, 0.0, %v6303
    %v6352 = vsel %vm6307, %v6303, 0.0
    %vm6353 = vcmask 1044480
    %v6354 = vsel %vm6353, %v6352, %v6308
    %v6355 = vsel %vm6353, %v6310, 0.0
    %v6356 = vsel %vm6181, %v6355, %v6315
    %v6357 = vsel %vm6181, %v6317, 0.0
    %vm6358 = vcmask 1040384
    %v6359 = vsel %vm6358, 0.0, %v6324
    %v6360 = vsel %vm6358, %v6323, 0.0
    %v6361 = vsel %vm6307, %v6360, %v6328
    %v6362 = vsel %vm6307, %v6328, 0.0
    %v6363 = vsel %vm6353, %v6362, %v6332
    %v6364 = vsel %vm6353, %v6334, 0.0
    %v6365 = vsel %vm6181, %v6364, %v6339
    %v6366 = vsel %vm6181, %v6341, 0.0
    %v6367 = vsel %vm6358, 0.0, %v6348
    %v6368 = vsel %vm6358, %v6347, 0.0
    %6369 = vst.msk [vmem:[#allocation5] sm:$0xff] %vm5877, 0.0
    %6370 = vst.msk [vmem:[#allocation5 + $0x8] sm:$0xff] %vm5877, %v6351
    %6371 = vst.msk [vmem:[#allocation5 + $0x10] sm:$0xff] %vm5877, %v6354
    %6372 = vst.msk [vmem:[#allocation5 + $0x18] sm:$0xff] %vm5877, %v6356
    %6373 = vst.msk [vmem:[#allocation5 + $0x20] sm:$0xff] %vm5877, %v6357
    %6374 = vst.msk [vmem:[#allocation5 + $0x28] sm:$0xff] %vm5877, %v6359
    %6375 = vst.msk [vmem:[#allocation5 + $0x30] sm:$0xff] %vm5877, %v6361
    %6376 = vst.msk [vmem:[#allocation5 + $0x38] sm:$0xff] %vm5877, %v6363
    %6377 = vst.msk [vmem:[#allocation5 + $0x40] sm:$0xff] %vm5877, %v6365
    %6378 = vst.msk [vmem:[#allocation5 + $0x48] sm:$0xff] %vm5877, %v6366
    %6379 = vst.msk [vmem:[#allocation5 + $0x50] sm:$0xff] %vm5877, %v6367
    %6380 = vst.msk [vmem:[#allocation5 + $0x58] sm:$0xff] %vm5877, %v6368
    %vm6381 = vcmask 257024
    %6382 = vst.msk [vmem:[#allocation5 + $0x60] sm:$0xf] %vm6381, 0.0
    %v6385 = vrot.slane %v6288, 7
    %v6386 = vrot.slane %v6289, 7
    %v6387 = vsel %vm6358, %v6385, %v6386
    %v6392 = vrot.slane %v6290, 7
    %v6393 = vrot.slane %v6291, 7
    %v6394 = vsel %vm6358, %v6392, %v6393
    %v6399 = vrot.slane %v6292, 7
    %v6400 = vrot.slane %v6293, 7
    %v6401 = vsel %vm6358, %v6399, %v6400
    %v6405 = vrot.slane %v6294, 7
    %v6409 = vrot.slane %v6295, 7
    %v6410 = vrot.slane %v6296, 7
    %v6411 = vsel %vm6358, %v6409, %v6410
    %v6416 = vrot.slane %v6297, 7
    %v6417 = vrot.slane %v6298, 7
    %v6418 = vsel %vm6358, %v6416, %v6417
    %v6423 = vrot.slane %v6299, 7
    %v6424 = vrot.slane %v6300, 7
    %v6425 = vsel %vm6358, %v6423, %v6424
    %v6429 = vrot.slane %v6301, 7
    %v6431 = vsel %vm6307, 0.0, %v6385
    %v6432 = vsel %vm6307, %v6387, 0.0
    %v6433 = vsel %vm6353, %v6432, %v6392
    %v6434 = vsel %vm6353, %v6394, 0.0
    %v6435 = vsel %vm6181, %v6434, %v6399
    %v6436 = vsel %vm6181, %v6401, 0.0
    %v6437 = vsel %vm6358, 0.0, %v6405
    %v6438 = vsel %vm6358, %v6405, 0.0
    %v6439 = vsel %vm6307, %v6438, %v6409
    %v6440 = vsel %vm6307, %v6411, 0.0
    %v6441 = vsel %vm6353, %v6440, %v6416
    %v6442 = vsel %vm6353, %v6418, 0.0
    %v6443 = vsel %vm6181, %v6442, %v6423
    %v6444 = vsel %vm6181, %v6425, 0.0
    %v6445 = vsel %vm6358, 0.0, %v6429
    %v6446 = vsel %vm6358, %v6429, 0.0
    %6447 = vst.msk [vmem:[#allocation5 + $0x64] sm:$0xff] %vm5877, 0.0
    %6448 = vst.msk [vmem:[#allocation5 + $0x6c] sm:$0xff] %vm5877, %v6431
    %6449 = vst.msk [vmem:[#allocation5 + $0x74] sm:$0xff] %vm5877, %v6433
    %6450 = vst.msk [vmem:[#allocation5 + $0x7c] sm:$0xff] %vm5877, %v6435
    %6451 = vst.msk [vmem:[#allocation5 + $0x84] sm:$0xff] %vm5877, %v6436
    %6452 = vst.msk [vmem:[#allocation5 + $0x8c] sm:$0xff] %vm5877, %v6437
    %6453 = vst.msk [vmem:[#allocation5 + $0x94] sm:$0xff] %vm5877, %v6439
    %6454 = vst.msk [vmem:[#allocation5 + $0x9c] sm:$0xff] %vm5877, %v6441
    %6455 = vst.msk [vmem:[#allocation5 + $0xa4] sm:$0xff] %vm5877, %v6443
    %6456 = vst.msk [vmem:[#allocation5 + $0xac] sm:$0xff] %vm5877, %v6444
    %6457 = vst.msk [vmem:[#allocation5 + $0xb4] sm:$0xff] %vm5877, %v6445
    %6458 = vst.msk [vmem:[#allocation5 + $0xbc] sm:$0xff] %vm5877, %v6446
    %6459 = vst.msk [vmem:[#allocation5 + $0xc4] sm:$0xf] %vm6381, 0.0
    %v6460 = vld [vmem:[#allocation5] sm:$0xff]
    %v6461 = vld [vmem:[#allocation5 + $0x8] sm:$0xff]
    %v6462 = vld [vmem:[#allocation5 + $0x10] sm:$0xff]
    %v6463 = vld [vmem:[#allocation5 + $0x18] sm:$0xff]
    %v6464 = vld [vmem:[#allocation5 + $0x20] sm:$0xff]
    %v6465 = vld [vmem:[#allocation5 + $0x28] sm:$0xff]
    %v6466 = vld [vmem:[#allocation5 + $0x30] sm:$0xff]
    %v6467 = vld [vmem:[#allocation5 + $0x38] sm:$0xff]
    %v6468 = vld [vmem:[#allocation5 + $0x40] sm:$0xff]
    %v6469 = vld [vmem:[#allocation5 + $0x48] sm:$0xff]
    %v6470 = vld [vmem:[#allocation5 + $0x50] sm:$0xff]
    %v6471 = vld [vmem:[#allocation5 + $0x58] sm:$0xff]
    %v6472 = vld [vmem:[#allocation5 + $0x60] sm:$0xff]
    %v6473 = vld [vmem:[#allocation5 + $0x68] sm:$0xff]
    %v6474 = vld [vmem:[#allocation5 + $0x70] sm:$0xff]
    %v6475 = vld [vmem:[#allocation5 + $0x78] sm:$0xff]
    %v6476 = vld [vmem:[#allocation5 + $0x80] sm:$0xff]
    %v6477 = vld [vmem:[#allocation5 + $0x88] sm:$0xff]
    %v6478 = vld [vmem:[#allocation5 + $0x90] sm:$0xff]
    %v6479 = vld [vmem:[#allocation5 + $0x98] sm:$0xff]
    %v6480 = vld [vmem:[#allocation5 + $0xa0] sm:$0xff]
    %v6481 = vld [vmem:[#allocation5 + $0xa8] sm:$0xff]
    %v6482 = vld [vmem:[#allocation5 + $0xb0] sm:$0x3]
    %v6483 = vpack.c.bf16 %v6461, %v6460
    %v6484 = vpack.c.bf16 %v6463, %v6462
    %v6485 = vpack.c.bf16 %v6465, %v6464
    %v6486 = vpack.c.bf16 %v6467, %v6466
    %v6487 = vpack.c.bf16 %v6469, %v6468
    %v6488 = vpack.c.bf16 %v6471, %v6470
    %v6489 = vpack.c.bf16 %v6473, %v6472
    %v6490 = vpack.c.bf16 %v6475, %v6474
    %v6491 = vpack.c.bf16 %v6477, %v6476
    %v6492 = vpack.c.bf16 %v6479, %v6478
    %v6493 = vpack.c.bf16 %v6481, %v6480
    %v6494 = vpack.c.bf16 %v6482, %v6482
    %v6495 = vld [vmem:[%s3] sm:$0xf]
    %v6496 = vld [vmem:[%s3 + $0x4] sm:$0xf]
    %v6497 = vld [vmem:[%s3 + $0x8] sm:$0xf]
    %v6498 = vld [vmem:[%s3 + $0xc] sm:$0xf]
    %v6499 = vld [vmem:[#allocation5 + $0x1] sm:$0xff]
    %v6500 = vld [vmem:[#allocation5 + $0x9] sm:$0xff]
    %v6501 = vld [vmem:[#allocation5 + $0x11] sm:$0xff]
    %v6502 = vld [vmem:[#allocation5 + $0x19] sm:$0xff]
    %v6503 = vld [vmem:[#allocation5 + $0x21] sm:$0xff]
    %v6504 = vld [vmem:[#allocation5 + $0x29] sm:$0xff]
    %v6505 = vld [vmem:[#allocation5 + $0x31] sm:$0xff]
    %v6506 = vld [vmem:[#allocation5 + $0x39] sm:$0xff]
    %v6507 = vld [vmem:[#allocation5 + $0x41] sm:$0xff]
    %v6508 = vld [vmem:[#allocation5 + $0x49] sm:$0xff]
    %v6509 = vld [vmem:[#allocation5 + $0x51] sm:$0xff]
    %v6510 = vld [vmem:[#allocation5 + $0x59] sm:$0xff]
    %v6511 = vld [vmem:[#allocation5 + $0x61] sm:$0xff]
    %v6512 = vld [vmem:[#allocation5 + $0x69] sm:$0xff]
    %v6513 = vld [vmem:[#allocation5 + $0x71] sm:$0xff]
    %v6514 = vld [vmem:[#allocation5 + $0x79] sm:$0xff]
    %v6515 = vld [vmem:[#allocation5 + $0x81] sm:$0xff]
    %v6516 = vld [vmem:[#allocation5 + $0x89] sm:$0xff]
    %v6517 = vld [vmem:[#allocation5 + $0x91] sm:$0xff]
    %v6518 = vld [vmem:[#allocation5 + $0x99] sm:$0xff]
    %v6519 = vld [vmem:[#allocation5 + $0xa1] sm:$0xff]
    %v6520 = vld [vmem:[#allocation5 + $0xa9] sm:$0xff]
    %v6521 = vld [vmem:[#allocation5 + $0xb1] sm:$0x3]
    %v6522 = vpack.c.bf16 %v6500, %v6499
    %v6523 = vpack.c.bf16 %v6502, %v6501
    %v6524 = vpack.c.bf16 %v6504, %v6503
    %v6525 = vpack.c.bf16 %v6506, %v6505
    %v6526 = vpack.c.bf16 %v6508, %v6507
    %v6527 = vpack.c.bf16 %v6510, %v6509
    %v6528 = vpack.c.bf16 %v6512, %v6511
    %v6529 = vpack.c.bf16 %v6514, %v6513
    %v6530 = vpack.c.bf16 %v6516, %v6515
    %v6531 = vpack.c.bf16 %v6518, %v6517
    %v6532 = vpack.c.bf16 %v6520, %v6519
    %v6533 = vpack.c.bf16 %v6521, %v6521
    %s6534 = scalar_lea.vmem %s3, 16
    %v6535 = vld [vmem:[%s6534] sm:$0xf]
    %v6536 = vld [vmem:[%s6534 + $0x4] sm:$0xf]
    %v6537 = vld [vmem:[%s6534 + $0x8] sm:$0xf]
    %v6538 = vld [vmem:[%s6534 + $0xc] sm:$0xf]
    %v6543 = vunpack.c.l.b16 %v6535
    %v6544 = vunpack.c.l.b16 %v6536
    %v6545 = vunpack.c.l.b16 %v6537
    %v6546 = vunpack.c.l.b16 %v6538
    %v6547 = vpack.c.b16 %v6544, %v6543
    %v6548 = vpack.c.b16 %v6546, %v6545
    %v6552 = vsel %vm5877, %v6522, 0
    %v6555 = vsel %vm5877, %v6523, 0
    %v6558 = vsel %vm5877, %v6524, 0
    %v6561 = vsel %vm5877, %v6525, 0
    %v6564 = vsel %vm5877, %v6526, 0
    %v6567 = vsel %vm5877, %v6527, 0
    %v6570 = vsel %vm5877, %v6528, 0
    %v6573 = vsel %vm5877, %v6529, 0
    %v6576 = vsel %vm5877, %v6530, 0
    %v6579 = vsel %vm5877, %v6531, 0
    %v6582 = vsel %vm5877, %v6532, 0
    %v6585 = vsel %vm5877, %v6533, 0
    %6587 = vmatpush.bf16.msra.mxu0 0
    %6588 = vmatpush.bf16.msra.mxu0 0
    %6589 = vmatpush.bf16.msra.mxu0 0
    %6590 = vmatpush.bf16.msra.mxu0 0
    %6591 = vmatpush.bf16.msra.mxu0 0
    %6592 = vmatpush.bf16.msra.mxu0 0
    %6593 = vmatpush.bf16.msra.mxu0 %v6548
    %6594 = vmatpush.bf16.msra.mxu0 %v6547
    %6595 = vmatmul.bf16.gmra.mxu0 %v6552
    %v6596 = vpop.f32.mrf.mxu0
    %v6597 = vadd.f32 0.0, %v6596
    %v6598 = vpop.f32.mrf.mxu0
    %v6599 = vadd.f32 0.0, %v6598
    %6600 = vmatmul.bf16.gmra.mxu0 %v6555
    %v6601 = vpop.f32.mrf.mxu0
    %v6602 = vadd.f32 0.0, %v6601
    %v6603 = vpop.f32.mrf.mxu0
    %v6604 = vadd.f32 0.0, %v6603
    %6605 = vmatmul.bf16.gmra.mxu0 %v6558
    %v6606 = vpop.f32.mrf.mxu0
    %v6607 = vadd.f32 0.0, %v6606
    %v6608 = vpop.f32.mrf.mxu0
    %v6609 = vadd.f32 0.0, %v6608
    %6610 = vmatmul.bf16.gmra.mxu0 %v6561
    %v6611 = vpop.f32.mrf.mxu0
    %v6612 = vadd.f32 0.0, %v6611
    %v6613 = vpop.f32.mrf.mxu0
    %v6614 = vadd.f32 0.0, %v6613
    %6615 = vmatmul.bf16.gmra.mxu0 %v6564
    %v6616 = vpop.f32.mrf.mxu0
    %v6617 = vadd.f32 0.0, %v6616
    %v6618 = vpop.f32.mrf.mxu0
    %v6619 = vadd.f32 0.0, %v6618
    %6620 = vmatmul.bf16.gmra.mxu0 %v6567
    %v6621 = vpop.f32.mrf.mxu0
    %v6622 = vadd.f32 0.0, %v6621
    %v6623 = vpop.f32.mrf.mxu0
    %v6624 = vadd.f32 0.0, %v6623
    %6625 = vmatmul.bf16.gmra.mxu0 %v6570
    %v6626 = vpop.f32.mrf.mxu0
    %v6627 = vadd.f32 0.0, %v6626
    %v6628 = vpop.f32.mrf.mxu0
    %v6629 = vadd.f32 0.0, %v6628
    %6630 = vmatmul.bf16.gmra.mxu0 %v6573
    %v6631 = vpop.f32.mrf.mxu0
    %v6632 = vadd.f32 0.0, %v6631
    %v6633 = vpop.f32.mrf.mxu0
    %v6634 = vadd.f32 0.0, %v6633
    %6635 = vmatmul.bf16.gmra.mxu0 %v6576
    %v6636 = vpop.f32.mrf.mxu0
    %v6637 = vadd.f32 0.0, %v6636
    %v6638 = vpop.f32.mrf.mxu0
    %v6639 = vadd.f32 0.0, %v6638
    %6640 = vmatmul.bf16.gmra.mxu0 %v6579
    %v6641 = vpop.f32.mrf.mxu0
    %v6642 = vadd.f32 0.0, %v6641
    %v6643 = vpop.f32.mrf.mxu0
    %v6644 = vadd.f32 0.0, %v6643
    %6645 = vmatmul.bf16.gmra.mxu0 %v6582
    %v6646 = vpop.f32.mrf.mxu0
    %v6647 = vadd.f32 0.0, %v6646
    %v6648 = vpop.f32.mrf.mxu0
    %v6649 = vadd.f32 0.0, %v6648
    %6650 = vmatmul.bf16.gmra.mxu0 %v6585
    %v6651 = vpop.f32.mrf.mxu0
    %v6652 = vadd.f32 0.0, %v6651
    %v6653 = vpop.f32.mrf.mxu0
    %6654 = vdwg.mxu0
    %v6659 = vunpack.c.l.b16 %v6495
    %v6660 = vunpack.c.l.b16 %v6496
    %v6661 = vunpack.c.l.b16 %v6497
    %v6662 = vunpack.c.l.b16 %v6498
    %v6663 = vpack.c.b16 %v6660, %v6659
    %v6664 = vpack.c.b16 %v6662, %v6661
    %v6668 = vsel %vm5877, %v6483, 0
    %v6671 = vsel %vm5877, %v6484, 0
    %v6674 = vsel %vm5877, %v6485, 0
    %v6677 = vsel %vm5877, %v6486, 0
    %v6680 = vsel %vm5877, %v6487, 0
    %v6683 = vsel %vm5877, %v6488, 0
    %v6686 = vsel %vm5877, %v6489, 0
    %v6689 = vsel %vm5877, %v6490, 0
    %v6692 = vsel %vm5877, %v6491, 0
    %v6695 = vsel %vm5877, %v6492, 0
    %v6698 = vsel %vm5877, %v6493, 0
    %v6701 = vsel %vm5877, %v6494, 0
    %6703 = vmatpush.bf16.msra.mxu0 0
    %6704 = vmatpush.bf16.msra.mxu0 0
    %6705 = vmatpush.bf16.msra.mxu0 0
    %6706 = vmatpush.bf16.msra.mxu0 0
    %6707 = vmatpush.bf16.msra.mxu0 0
    %6708 = vmatpush.bf16.msra.mxu0 0
    %6709 = vmatpush.bf16.msra.mxu0 %v6664
    %6710 = vmatpush.bf16.msra.mxu0 %v6663
    %6711 = vmatmul.bf16.gmra.mxu0 %v6668
    %v6712 = vpop.f32.mrf.mxu0
    %v6713 = vadd.f32 %v6597, %v6712
    %v6714 = vpop.f32.mrf.mxu0
    %v6715 = vadd.f32 %v6599, %v6714
    %6716 = vmatmul.bf16.gmra.mxu0 %v6671
    %v6717 = vpop.f32.mrf.mxu0
    %v6718 = vadd.f32 %v6602, %v6717
    %v6719 = vpop.f32.mrf.mxu0
    %v6720 = vadd.f32 %v6604, %v6719
    %6721 = vmatmul.bf16.gmra.mxu0 %v6674
    %v6722 = vpop.f32.mrf.mxu0
    %v6723 = vadd.f32 %v6607, %v6722
    %v6724 = vpop.f32.mrf.mxu0
    %v6725 = vadd.f32 %v6609, %v6724
    %6726 = vmatmul.bf16.gmra.mxu0 %v6677
    %v6727 = vpop.f32.mrf.mxu0
    %v6728 = vadd.f32 %v6612, %v6727
    %v6729 = vpop.f32.mrf.mxu0
    %v6730 = vadd.f32 %v6614, %v6729
    %6731 = vmatmul.bf16.gmra.mxu0 %v6680
    %v6732 = vpop.f32.mrf.mxu0
    %v6733 = vadd.f32 %v6617, %v6732
    %v6734 = vpop.f32.mrf.mxu0
    %v6735 = vadd.f32 %v6619, %v6734
    %6736 = vmatmul.bf16.gmra.mxu0 %v6683
    %v6737 = vpop.f32.mrf.mxu0
    %v6738 = vadd.f32 %v6622, %v6737
    %v6739 = vpop.f32.mrf.mxu0
    %v6740 = vadd.f32 %v6624, %v6739
    %6741 = vmatmul.bf16.gmra.mxu0 %v6686
    %v6742 = vpop.f32.mrf.mxu0
    %v6743 = vadd.f32 %v6627, %v6742
    %v6744 = vpop.f32.mrf.mxu0
    %v6745 = vadd.f32 %v6629, %v6744
    %6746 = vmatmul.bf16.gmra.mxu0 %v6689
    %v6747 = vpop.f32.mrf.mxu0
    %v6748 = vadd.f32 %v6632, %v6747
    %v6749 = vpop.f32.mrf.mxu0
    %v6750 = vadd.f32 %v6634, %v6749
    %6751 = vmatmul.bf16.gmra.mxu0 %v6692
    %v6752 = vpop.f32.mrf.mxu0
    %v6753 = vadd.f32 %v6637, %v6752
    %v6754 = vpop.f32.mrf.mxu0
    %v6755 = vadd.f32 %v6639, %v6754
    %6756 = vmatmul.bf16.gmra.mxu0 %v6695
    %v6757 = vpop.f32.mrf.mxu0
    %v6758 = vadd.f32 %v6642, %v6757
    %v6759 = vpop.f32.mrf.mxu0
    %v6760 = vadd.f32 %v6644, %v6759
    %6761 = vmatmul.bf16.gmra.mxu0 %v6698
    %v6762 = vpop.f32.mrf.mxu0
    %v6763 = vadd.f32 %v6647, %v6762
    %v6764 = vpop.f32.mrf.mxu0
    %v6765 = vadd.f32 %v6649, %v6764
    %6766 = vmatmul.bf16.gmra.mxu0 %v6701
    %v6767 = vpop.f32.mrf.mxu0
    %v6768 = vadd.f32 %v6652, %v6767
    %v6769 = vpop.f32.mrf.mxu0
    %6770 = vdwg.mxu0
    %v6771 = vld [vmem:[#allocation5 + $0x2] sm:$0xff]
    %v6772 = vld [vmem:[#allocation5 + $0xa] sm:$0xff]
    %v6773 = vld [vmem:[#allocation5 + $0x12] sm:$0xff]
    %v6774 = vld [vmem:[#allocation5 + $0x1a] sm:$0xff]
    %v6775 = vld [vmem:[#allocation5 + $0x22] sm:$0xff]
    %v6776 = vld [vmem:[#allocation5 + $0x2a] sm:$0xff]
    %v6777 = vld [vmem:[#allocation5 + $0x32] sm:$0xff]
    %v6778 = vld [vmem:[#allocation5 + $0x3a] sm:$0xff]
    %v6779 = vld [vmem:[#allocation5 + $0x42] sm:$0xff]
    %v6780 = vld [vmem:[#allocation5 + $0x4a] sm:$0xff]
    %v6781 = vld [vmem:[#allocation5 + $0x52] sm:$0xff]
    %v6782 = vld [vmem:[#allocation5 + $0x5a] sm:$0xff]
    %v6783 = vld [vmem:[#allocation5 + $0x62] sm:$0xff]
    %v6784 = vld [vmem:[#allocation5 + $0x6a] sm:$0xff]
    %v6785 = vld [vmem:[#allocation5 + $0x72] sm:$0xff]
    %v6786 = vld [vmem:[#allocation5 + $0x7a] sm:$0xff]
    %v6787 = vld [vmem:[#allocation5 + $0x82] sm:$0xff]
    %v6788 = vld [vmem:[#allocation5 + $0x8a] sm:$0xff]
    %v6789 = vld [vmem:[#allocation5 + $0x92] sm:$0xff]
    %v6790 = vld [vmem:[#allocation5 + $0x9a] sm:$0xff]
    %v6791 = vld [vmem:[#allocation5 + $0xa2] sm:$0xff]
    %v6792 = vld [vmem:[#allocation5 + $0xaa] sm:$0xff]
    %v6793 = vld [vmem:[#allocation5 + $0xb2] sm:$0x3]
    %v6794 = vpack.c.bf16 %v6772, %v6771
    %v6795 = vpack.c.bf16 %v6774, %v6773
    %v6796 = vpack.c.bf16 %v6776, %v6775
    %v6797 = vpack.c.bf16 %v6778, %v6777
    %v6798 = vpack.c.bf16 %v6780, %v6779
    %v6799 = vpack.c.bf16 %v6782, %v6781
    %v6800 = vpack.c.bf16 %v6784, %v6783
    %v6801 = vpack.c.bf16 %v6786, %v6785
    %v6802 = vpack.c.bf16 %v6788, %v6787
    %v6803 = vpack.c.bf16 %v6790, %v6789
    %v6804 = vpack.c.bf16 %v6792, %v6791
    %v6805 = vpack.c.bf16 %v6793, %v6793
    %s6806 = scalar_lea.vmem %s3, 32
    %v6807 = vld [vmem:[%s6806] sm:$0xf]
    %v6808 = vld [vmem:[%s6806 + $0x4] sm:$0xf]
    %v6809 = vld [vmem:[%s6806 + $0x8] sm:$0xf]
    %v6810 = vld [vmem:[%s6806 + $0xc] sm:$0xf]
    %v6815 = vunpack.c.l.b16 %v6807
    %v6816 = vunpack.c.l.b16 %v6808
    %v6817 = vunpack.c.l.b16 %v6809
    %v6818 = vunpack.c.l.b16 %v6810
    %v6819 = vpack.c.b16 %v6816, %v6815
    %v6820 = vpack.c.b16 %v6818, %v6817
    %v6824 = vsel %vm5877, %v6794, 0
    %v6827 = vsel %vm5877, %v6795, 0
    %v6830 = vsel %vm5877, %v6796, 0
    %v6833 = vsel %vm5877, %v6797, 0
    %v6836 = vsel %vm5877, %v6798, 0
    %v6839 = vsel %vm5877, %v6799, 0
    %v6842 = vsel %vm5877, %v6800, 0
    %v6845 = vsel %vm5877, %v6801, 0
    %v6848 = vsel %vm5877, %v6802, 0
    %v6851 = vsel %vm5877, %v6803, 0
    %v6854 = vsel %vm5877, %v6804, 0
    %v6857 = vsel %vm5877, %v6805, 0
    %6859 = vmatpush.bf16.msra.mxu0 0
    %6860 = vmatpush.bf16.msra.mxu0 0
    %6861 = vmatpush.bf16.msra.mxu0 0
    %6862 = vmatpush.bf16.msra.mxu0 0
    %6863 = vmatpush.bf16.msra.mxu0 0
    %6864 = vmatpush.bf16.msra.mxu0 0
    %6865 = vmatpush.bf16.msra.mxu0 %v6820
    %6866 = vmatpush.bf16.msra.mxu0 %v6819
    %6867 = vmatmul.bf16.gmra.mxu0 %v6824
    %v6868 = vpop.f32.mrf.mxu0
    %v6869 = vadd.f32 0.0, %v6868
    %v6870 = vpop.f32.mrf.mxu0
    %v6871 = vadd.f32 0.0, %v6870
    %6872 = vmatmul.bf16.gmra.mxu0 %v6827
    %v6873 = vpop.f32.mrf.mxu0
    %v6874 = vadd.f32 0.0, %v6873
    %v6875 = vpop.f32.mrf.mxu0
    %v6876 = vadd.f32 0.0, %v6875
    %6877 = vmatmul.bf16.gmra.mxu0 %v6830
    %v6878 = vpop.f32.mrf.mxu0
    %v6879 = vadd.f32 0.0, %v6878
    %v6880 = vpop.f32.mrf.mxu0
    %v6881 = vadd.f32 0.0, %v6880
    %6882 = vmatmul.bf16.gmra.mxu0 %v6833
    %v6883 = vpop.f32.mrf.mxu0
    %v6884 = vadd.f32 0.0, %v6883
    %v6885 = vpop.f32.mrf.mxu0
    %v6886 = vadd.f32 0.0, %v6885
    %6887 = vmatmul.bf16.gmra.mxu0 %v6836
    %v6888 = vpop.f32.mrf.mxu0
    %v6889 = vadd.f32 0.0, %v6888
    %v6890 = vpop.f32.mrf.mxu0
    %v6891 = vadd.f32 0.0, %v6890
    %6892 = vmatmul.bf16.gmra.mxu0 %v6839
    %v6893 = vpop.f32.mrf.mxu0
    %v6894 = vadd.f32 0.0, %v6893
    %v6895 = vpop.f32.mrf.mxu0
    %v6896 = vadd.f32 0.0, %v6895
    %6897 = vmatmul.bf16.gmra.mxu0 %v6842
    %v6898 = vpop.f32.mrf.mxu0
    %v6899 = vadd.f32 0.0, %v6898
    %v6900 = vpop.f32.mrf.mxu0
    %v6901 = vadd.f32 0.0, %v6900
    %6902 = vmatmul.bf16.gmra.mxu0 %v6845
    %v6903 = vpop.f32.mrf.mxu0
    %v6904 = vadd.f32 0.0, %v6903
    %v6905 = vpop.f32.mrf.mxu0
    %v6906 = vadd.f32 0.0, %v6905
    %6907 = vmatmul.bf16.gmra.mxu0 %v6848
    %v6908 = vpop.f32.mrf.mxu0
    %v6909 = vadd.f32 0.0, %v6908
    %v6910 = vpop.f32.mrf.mxu0
    %v6911 = vadd.f32 0.0, %v6910
    %6912 = vmatmul.bf16.gmra.mxu0 %v6851
    %v6913 = vpop.f32.mrf.mxu0
    %v6914 = vadd.f32 0.0, %v6913
    %v6915 = vpop.f32.mrf.mxu0
    %v6916 = vadd.f32 0.0, %v6915
    %6917 = vmatmul.bf16.gmra.mxu0 %v6854
    %v6918 = vpop.f32.mrf.mxu0
    %v6919 = vadd.f32 0.0, %v6918
    %v6920 = vpop.f32.mrf.mxu0
    %v6921 = vadd.f32 0.0, %v6920
    %6922 = vmatmul.bf16.gmra.mxu0 %v6857
    %v6923 = vpop.f32.mrf.mxu0
    %v6924 = vadd.f32 0.0, %v6923
    %v6925 = vpop.f32.mrf.mxu0
    %6926 = vdwg.mxu0
    %v6927 = vadd.f32 %v6713, %v6869
    %v6928 = vadd.f32 %v6715, %v6871
    %v6929 = vadd.f32 %v6718, %v6874
    %v6930 = vadd.f32 %v6720, %v6876
    %v6931 = vadd.f32 %v6723, %v6879
    %v6932 = vadd.f32 %v6725, %v6881
    %v6933 = vadd.f32 %v6728, %v6884
    %v6934 = vadd.f32 %v6730, %v6886
    %v6935 = vadd.f32 %v6733, %v6889
    %v6936 = vadd.f32 %v6735, %v6891
    %v6937 = vadd.f32 %v6738, %v6894
    %v6938 = vadd.f32 %v6740, %v6896
    %v6939 = vadd.f32 %v6743, %v6899
    %v6940 = vadd.f32 %v6745, %v6901
    %v6941 = vadd.f32 %v6748, %v6904
    %v6942 = vadd.f32 %v6750, %v6906
    %v6943 = vadd.f32 %v6753, %v6909
    %v6944 = vadd.f32 %v6755, %v6911
    %v6945 = vadd.f32 %v6758, %v6914
    %v6946 = vadd.f32 %v6760, %v6916
    %v6947 = vadd.f32 %v6763, %v6919
    %v6948 = vadd.f32 %v6765, %v6921
    %v6949 = vadd.f32 %v6768, %v6924
    %v6950 = vld [vmem:[#allocation5 + $0xa] sm:$0xff]
    %v6951 = vld [vmem:[#allocation5 + $0x12] sm:$0xff]
    %v6952 = vld [vmem:[#allocation5 + $0x1a] sm:$0xff]
    %v6953 = vld [vmem:[#allocation5 + $0x22] sm:$0xff]
    %v6954 = vld [vmem:[#allocation5 + $0x2a] sm:$0xff]
    %v6955 = vld [vmem:[#allocation5 + $0x32] sm:$0xff]
    %v6956 = vld [vmem:[#allocation5 + $0x3a] sm:$0xff]
    %v6957 = vld [vmem:[#allocation5 + $0x42] sm:$0xff]
    %v6958 = vld [vmem:[#allocation5 + $0x4a] sm:$0xff]
    %v6959 = vld [vmem:[#allocation5 + $0x52] sm:$0xff]
    %v6960 = vld [vmem:[#allocation5 + $0x5a] sm:$0xff]
    %v6961 = vld [vmem:[#allocation5 + $0x62] sm:$0xff]
    %v6962 = vld [vmem:[#allocation5 + $0x6a] sm:$0xff]
    %v6963 = vld [vmem:[#allocation5 + $0x72] sm:$0xff]
    %v6964 = vld [vmem:[#allocation5 + $0x7a] sm:$0xff]
    %v6965 = vld [vmem:[#allocation5 + $0x82] sm:$0xff]
    %v6966 = vld [vmem:[#allocation5 + $0x8a] sm:$0xff]
    %v6967 = vld [vmem:[#allocation5 + $0x92] sm:$0xff]
    %v6968 = vld [vmem:[#allocation5 + $0x9a] sm:$0xff]
    %v6969 = vld [vmem:[#allocation5 + $0xa2] sm:$0xff]
    %v6970 = vld [vmem:[#allocation5 + $0xaa] sm:$0xff]
    %v6971 = vld [vmem:[#allocation5 + $0xb2] sm:$0xff]
    %v6972 = vld [vmem:[#allocation5 + $0xba] sm:$0x3]
    %v6973 = vpack.c.bf16 %v6951, %v6950
    %v6974 = vpack.c.bf16 %v6953, %v6952
    %v6975 = vpack.c.bf16 %v6955, %v6954
    %v6976 = vpack.c.bf16 %v6957, %v6956
    %v6977 = vpack.c.bf16 %v6959, %v6958
    %v6978 = vpack.c.bf16 %v6961, %v6960
    %v6979 = vpack.c.bf16 %v6963, %v6962
    %v6980 = vpack.c.bf16 %v6965, %v6964
    %v6981 = vpack.c.bf16 %v6967, %v6966
    %v6982 = vpack.c.bf16 %v6969, %v6968
    %v6983 = vpack.c.bf16 %v6971, %v6970
    %v6984 = vpack.c.bf16 %v6972, %v6972
    %s6985 = scalar_lea.vmem %s3, 48
    %v6986 = vld [vmem:[%s6985] sm:$0xf]
    %v6987 = vld [vmem:[%s6985 + $0x4] sm:$0xf]
    %v6988 = vld [vmem:[%s6985 + $0x8] sm:$0xf]
    %v6989 = vld [vmem:[%s6985 + $0xc] sm:$0xf]
    %v6994 = vunpack.c.l.b16 %v6986
    %v6995 = vunpack.c.l.b16 %v6987
    %v6996 = vunpack.c.l.b16 %v6988
    %v6997 = vunpack.c.l.b16 %v6989
    %v6998 = vpack.c.b16 %v6995, %v6994
    %v6999 = vpack.c.b16 %v6997, %v6996
    %v7003 = vsel %vm5877, %v6973, 0
    %v7006 = vsel %vm5877, %v6974, 0
    %v7009 = vsel %vm5877, %v6975, 0
    %v7012 = vsel %vm5877, %v6976, 0
    %v7015 = vsel %vm5877, %v6977, 0
    %v7018 = vsel %vm5877, %v6978, 0
    %v7021 = vsel %vm5877, %v6979, 0
    %v7024 = vsel %vm5877, %v6980, 0
    %v7027 = vsel %vm5877, %v6981, 0
    %v7030 = vsel %vm5877, %v6982, 0
    %v7033 = vsel %vm5877, %v6983, 0
    %v7036 = vsel %vm5877, %v6984, 0
    %7038 = vmatpush.bf16.msra.mxu0 0
    %7039 = vmatpush.bf16.msra.mxu0 0
    %7040 = vmatpush.bf16.msra.mxu0 0
    %7041 = vmatpush.bf16.msra.mxu0 0
    %7042 = vmatpush.bf16.msra.mxu0 0
    %7043 = vmatpush.bf16.msra.mxu0 0
    %7044 = vmatpush.bf16.msra.mxu0 %v6999
    %7045 = vmatpush.bf16.msra.mxu0 %v6998
    %7046 = vmatmul.bf16.gmra.mxu0 %v7003
    %v7047 = vpop.f32.mrf.mxu0
    %v7048 = vadd.f32 0.0, %v7047
    %v7049 = vpop.f32.mrf.mxu0
    %v7050 = vadd.f32 0.0, %v7049
    %7051 = vmatmul.bf16.gmra.mxu0 %v7006
    %v7052 = vpop.f32.mrf.mxu0
    %v7053 = vadd.f32 0.0, %v7052
    %v7054 = vpop.f32.mrf.mxu0
    %v7055 = vadd.f32 0.0, %v7054
    %7056 = vmatmul.bf16.gmra.mxu0 %v7009
    %v7057 = vpop.f32.mrf.mxu0
    %v7058 = vadd.f32 0.0, %v7057
    %v7059 = vpop.f32.mrf.mxu0
    %v7060 = vadd.f32 0.0, %v7059
    %7061 = vmatmul.bf16.gmra.mxu0 %v7012
    %v7062 = vpop.f32.mrf.mxu0
    %v7063 = vadd.f32 0.0, %v7062
    %v7064 = vpop.f32.mrf.mxu0
    %v7065 = vadd.f32 0.0, %v7064
    %7066 = vmatmul.bf16.gmra.mxu0 %v7015
    %v7067 = vpop.f32.mrf.mxu0
    %v7068 = vadd.f32 0.0, %v7067
    %v7069 = vpop.f32.mrf.mxu0
    %v7070 = vadd.f32 0.0, %v7069
    %7071 = vmatmul.bf16.gmra.mxu0 %v7018
    %v7072 = vpop.f32.mrf.mxu0
    %v7073 = vadd.f32 0.0, %v7072
    %v7074 = vpop.f32.mrf.mxu0
    %v7075 = vadd.f32 0.0, %v7074
    %7076 = vmatmul.bf16.gmra.mxu0 %v7021
    %v7077 = vpop.f32.mrf.mxu0
    %v7078 = vadd.f32 0.0, %v7077
    %v7079 = vpop.f32.mrf.mxu0
    %v7080 = vadd.f32 0.0, %v7079
    %7081 = vmatmul.bf16.gmra.mxu0 %v7024
    %v7082 = vpop.f32.mrf.mxu0
    %v7083 = vadd.f32 0.0, %v7082
    %v7084 = vpop.f32.mrf.mxu0
    %v7085 = vadd.f32 0.0, %v7084
    %7086 = vmatmul.bf16.gmra.mxu0 %v7027
    %v7087 = vpop.f32.mrf.mxu0
    %v7088 = vadd.f32 0.0, %v7087
    %v7089 = vpop.f32.mrf.mxu0
    %v7090 = vadd.f32 0.0, %v7089
    %7091 = vmatmul.bf16.gmra.mxu0 %v7030
    %v7092 = vpop.f32.mrf.mxu0
    %v7093 = vadd.f32 0.0, %v7092
    %v7094 = vpop.f32.mrf.mxu0
    %v7095 = vadd.f32 0.0, %v7094
    %7096 = vmatmul.bf16.gmra.mxu0 %v7033
    %v7097 = vpop.f32.mrf.mxu0
    %v7098 = vadd.f32 0.0, %v7097
    %v7099 = vpop.f32.mrf.mxu0
    %v7100 = vadd.f32 0.0, %v7099
    %7101 = vmatmul.bf16.gmra.mxu0 %v7036
    %v7102 = vpop.f32.mrf.mxu0
    %v7103 = vadd.f32 0.0, %v7102
    %v7104 = vpop.f32.mrf.mxu0
    %7105 = vdwg.mxu0
    %v7106 = vadd.f32 %v6927, %v7048
    %v7107 = vadd.f32 %v6928, %v7050
    %v7108 = vadd.f32 %v6929, %v7053
    %v7109 = vadd.f32 %v6930, %v7055
    %v7110 = vadd.f32 %v6931, %v7058
    %v7111 = vadd.f32 %v6932, %v7060
    %v7112 = vadd.f32 %v6933, %v7063
    %v7113 = vadd.f32 %v6934, %v7065
    %v7114 = vadd.f32 %v6935, %v7068
    %v7115 = vadd.f32 %v6936, %v7070
    %v7116 = vadd.f32 %v6937, %v7073
    %v7117 = vadd.f32 %v6938, %v7075
    %v7118 = vadd.f32 %v6939, %v7078
    %v7119 = vadd.f32 %v6940, %v7080
    %v7120 = vadd.f32 %v6941, %v7083
    %v7121 = vadd.f32 %v6942, %v7085
    %v7122 = vadd.f32 %v6943, %v7088
    %v7123 = vadd.f32 %v6944, %v7090
    %v7124 = vadd.f32 %v6945, %v7093
    %v7125 = vadd.f32 %v6946, %v7095
    %v7126 = vadd.f32 %v6947, %v7098
    %v7127 = vadd.f32 %v6948, %v7100
    %v7128 = vadd.f32 %v6949, %v7103
    %v7129 = vld [vmem:[#allocation5 + $0xb] sm:$0xff]
    %v7130 = vld [vmem:[#allocation5 + $0x13] sm:$0xff]
    %v7131 = vld [vmem:[#allocation5 + $0x1b] sm:$0xff]
    %v7132 = vld [vmem:[#allocation5 + $0x23] sm:$0xff]
    %v7133 = vld [vmem:[#allocation5 + $0x2b] sm:$0xff]
    %v7134 = vld [vmem:[#allocation5 + $0x33] sm:$0xff]
    %v7135 = vld [vmem:[#allocation5 + $0x3b] sm:$0xff]
    %v7136 = vld [vmem:[#allocation5 + $0x43] sm:$0xff]
    %v7137 = vld [vmem:[#allocation5 + $0x4b] sm:$0xff]
    %v7138 = vld [vmem:[#allocation5 + $0x53] sm:$0xff]
    %v7139 = vld [vmem:[#allocation5 + $0x5b] sm:$0xff]
    %v7140 = vld [vmem:[#allocation5 + $0x63] sm:$0xff]
    %v7141 = vld [vmem:[#allocation5 + $0x6b] sm:$0xff]
    %v7142 = vld [vmem:[#allocation5 + $0x73] sm:$0xff]
    %v7143 = vld [vmem:[#allocation5 + $0x7b] sm:$0xff]
    %v7144 = vld [vmem:[#allocation5 + $0x83] sm:$0xff]
    %v7145 = vld [vmem:[#allocation5 + $0x8b] sm:$0xff]
    %v7146 = vld [vmem:[#allocation5 + $0x93] sm:$0xff]
    %v7147 = vld [vmem:[#allocation5 + $0x9b] sm:$0xff]
    %v7148 = vld [vmem:[#allocation5 + $0xa3] sm:$0xff]
    %v7149 = vld [vmem:[#allocation5 + $0xab] sm:$0xff]
    %v7150 = vld [vmem:[#allocation5 + $0xb3] sm:$0xff]
    %v7151 = vld [vmem:[#allocation5 + $0xbb] sm:$0x3]
    %v7152 = vpack.c.bf16 %v7130, %v7129
    %v7153 = vpack.c.bf16 %v7132, %v7131
    %v7154 = vpack.c.bf16 %v7134, %v7133
    %v7155 = vpack.c.bf16 %v7136, %v7135
    %v7156 = vpack.c.bf16 %v7138, %v7137
    %v7157 = vpack.c.bf16 %v7140, %v7139
    %v7158 = vpack.c.bf16 %v7142, %v7141
    %v7159 = vpack.c.bf16 %v7144, %v7143
    %v7160 = vpack.c.bf16 %v7146, %v7145
    %v7161 = vpack.c.bf16 %v7148, %v7147
    %v7162 = vpack.c.bf16 %v7150, %v7149
    %v7163 = vpack.c.bf16 %v7151, %v7151
    %s7164 = scalar_lea.vmem %s3, 64
    %v7165 = vld [vmem:[%s7164] sm:$0xf]
    %v7166 = vld [vmem:[%s7164 + $0x4] sm:$0xf]
    %v7167 = vld [vmem:[%s7164 + $0x8] sm:$0xf]
    %v7168 = vld [vmem:[%s7164 + $0xc] sm:$0xf]
    %v7173 = vunpack.c.l.b16 %v7165
    %v7174 = vunpack.c.l.b16 %v7166
    %v7175 = vunpack.c.l.b16 %v7167
    %v7176 = vunpack.c.l.b16 %v7168
    %v7177 = vpack.c.b16 %v7174, %v7173
    %v7178 = vpack.c.b16 %v7176, %v7175
    %v7182 = vsel %vm5877, %v7152, 0
    %v7185 = vsel %vm5877, %v7153, 0
    %v7188 = vsel %vm5877, %v7154, 0
    %v7191 = vsel %vm5877, %v7155, 0
    %v7194 = vsel %vm5877, %v7156, 0
    %v7197 = vsel %vm5877, %v7157, 0
    %v7200 = vsel %vm5877, %v7158, 0
    %v7203 = vsel %vm5877, %v7159, 0
    %v7206 = vsel %vm5877, %v7160, 0
    %v7209 = vsel %vm5877, %v7161, 0
    %v7212 = vsel %vm5877, %v7162, 0
    %v7215 = vsel %vm5877, %v7163, 0
    %7217 = vmatpush.bf16.msra.mxu0 0
    %7218 = vmatpush.bf16.msra.mxu0 0
    %7219 = vmatpush.bf16.msra.mxu0 0
    %7220 = vmatpush.bf16.msra.mxu0 0
    %7221 = vmatpush.bf16.msra.mxu0 0
    %7222 = vmatpush.bf16.msra.mxu0 0
    %7223 = vmatpush.bf16.msra.mxu0 %v7178
    %7224 = vmatpush.bf16.msra.mxu0 %v7177
    %7225 = vmatmul.bf16.gmra.mxu0 %v7182
    %v7226 = vpop.f32.mrf.mxu0
    %v7227 = vadd.f32 0.0, %v7226
    %v7228 = vpop.f32.mrf.mxu0
    %v7229 = vadd.f32 0.0, %v7228
    %7230 = vmatmul.bf16.gmra.mxu0 %v7185
    %v7231 = vpop.f32.mrf.mxu0
    %v7232 = vadd.f32 0.0, %v7231
    %v7233 = vpop.f32.mrf.mxu0
    %v7234 = vadd.f32 0.0, %v7233
    %7235 = vmatmul.bf16.gmra.mxu0 %v7188
    %v7236 = vpop.f32.mrf.mxu0
    %v7237 = vadd.f32 0.0, %v7236
    %v7238 = vpop.f32.mrf.mxu0
    %v7239 = vadd.f32 0.0, %v7238
    %7240 = vmatmul.bf16.gmra.mxu0 %v7191
    %v7241 = vpop.f32.mrf.mxu0
    %v7242 = vadd.f32 0.0, %v7241
    %v7243 = vpop.f32.mrf.mxu0
    %v7244 = vadd.f32 0.0, %v7243
    %7245 = vmatmul.bf16.gmra.mxu0 %v7194
    %v7246 = vpop.f32.mrf.mxu0
    %v7247 = vadd.f32 0.0, %v7246
    %v7248 = vpop.f32.mrf.mxu0
    %v7249 = vadd.f32 0.0, %v7248
    %7250 = vmatmul.bf16.gmra.mxu0 %v7197
    %v7251 = vpop.f32.mrf.mxu0
    %v7252 = vadd.f32 0.0, %v7251
    %v7253 = vpop.f32.mrf.mxu0
    %v7254 = vadd.f32 0.0, %v7253
    %7255 = vmatmul.bf16.gmra.mxu0 %v7200
    %v7256 = vpop.f32.mrf.mxu0
    %v7257 = vadd.f32 0.0, %v7256
    %v7258 = vpop.f32.mrf.mxu0
    %v7259 = vadd.f32 0.0, %v7258
    %7260 = vmatmul.bf16.gmra.mxu0 %v7203
    %v7261 = vpop.f32.mrf.mxu0
    %v7262 = vadd.f32 0.0, %v7261
    %v7263 = vpop.f32.mrf.mxu0
    %v7264 = vadd.f32 0.0, %v7263
    %7265 = vmatmul.bf16.gmra.mxu0 %v7206
    %v7266 = vpop.f32.mrf.mxu0
    %v7267 = vadd.f32 0.0, %v7266
    %v7268 = vpop.f32.mrf.mxu0
    %v7269 = vadd.f32 0.0, %v7268
    %7270 = vmatmul.bf16.gmra.mxu0 %v7209
    %v7271 = vpop.f32.mrf.mxu0
    %v7272 = vadd.f32 0.0, %v7271
    %v7273 = vpop.f32.mrf.mxu0
    %v7274 = vadd.f32 0.0, %v7273
    %7275 = vmatmul.bf16.gmra.mxu0 %v7212
    %v7276 = vpop.f32.mrf.mxu0
    %v7277 = vadd.f32 0.0, %v7276
    %v7278 = vpop.f32.mrf.mxu0
    %v7279 = vadd.f32 0.0, %v7278
    %7280 = vmatmul.bf16.gmra.mxu0 %v7215
    %v7281 = vpop.f32.mrf.mxu0
    %v7282 = vadd.f32 0.0, %v7281
    %v7283 = vpop.f32.mrf.mxu0
    %7284 = vdwg.mxu0
    %v7285 = vadd.f32 %v7106, %v7227
    %v7286 = vadd.f32 %v7107, %v7229
    %v7287 = vadd.f32 %v7108, %v7232
    %v7288 = vadd.f32 %v7109, %v7234
    %v7289 = vadd.f32 %v7110, %v7237
    %v7290 = vadd.f32 %v7111, %v7239
    %v7291 = vadd.f32 %v7112, %v7242
    %v7292 = vadd.f32 %v7113, %v7244
    %v7293 = vadd.f32 %v7114, %v7247
    %v7294 = vadd.f32 %v7115, %v7249
    %v7295 = vadd.f32 %v7116, %v7252
    %v7296 = vadd.f32 %v7117, %v7254
    %v7297 = vadd.f32 %v7118, %v7257
    %v7298 = vadd.f32 %v7119, %v7259
    %v7299 = vadd.f32 %v7120, %v7262
    %v7300 = vadd.f32 %v7121, %v7264
    %v7301 = vadd.f32 %v7122, %v7267
    %v7302 = vadd.f32 %v7123, %v7269
    %v7303 = vadd.f32 %v7124, %v7272
    %v7304 = vadd.f32 %v7125, %v7274
    %v7305 = vadd.f32 %v7126, %v7277
    %v7306 = vadd.f32 %v7127, %v7279
    %v7307 = vadd.f32 %v7128, %v7282
    %v7308 = vld [vmem:[#allocation5 + $0xc] sm:$0xff]
    %v7309 = vld [vmem:[#allocation5 + $0x14] sm:$0xff]
    %v7310 = vld [vmem:[#allocation5 + $0x1c] sm:$0xff]
    %v7311 = vld [vmem:[#allocation5 + $0x24] sm:$0xff]
    %v7312 = vld [vmem:[#allocation5 + $0x2c] sm:$0xff]
    %v7313 = vld [vmem:[#allocation5 + $0x34] sm:$0xff]
    %v7314 = vld [vmem:[#allocation5 + $0x3c] sm:$0xff]
    %v7315 = vld [vmem:[#allocation5 + $0x44] sm:$0xff]
    %v7316 = vld [vmem:[#allocation5 + $0x4c] sm:$0xff]
    %v7317 = vld [vmem:[#allocation5 + $0x54] sm:$0xff]
    %v7318 = vld [vmem:[#allocation5 + $0x5c] sm:$0xff]
    %v7319 = vld [vmem:[#allocation5 + $0x64] sm:$0xff]
    %v7320 = vld [vmem:[#allocation5 + $0x6c] sm:$0xff]
    %v7321 = vld [vmem:[#allocation5 + $0x74] sm:$0xff]
    %v7322 = vld [vmem:[#allocation5 + $0x7c] sm:$0xff]
    %v7323 = vld [vmem:[#allocation5 + $0x84] sm:$0xff]
    %v7324 = vld [vmem:[#allocation5 + $0x8c] sm:$0xff]
    %v7325 = vld [vmem:[#allocation5 + $0x94] sm:$0xff]
    %v7326 = vld [vmem:[#allocation5 + $0x9c] sm:$0xff]
    %v7327 = vld [vmem:[#allocation5 + $0xa4] sm:$0xff]
    %v7328 = vld [vmem:[#allocation5 + $0xac] sm:$0xff]
    %v7329 = vld [vmem:[#allocation5 + $0xb4] sm:$0xff]
    %v7330 = vld [vmem:[#allocation5 + $0xbc] sm:$0x3]
    %v7331 = vpack.c.bf16 %v7309, %v7308
    %v7332 = vpack.c.bf16 %v7311, %v7310
    %v7333 = vpack.c.bf16 %v7313, %v7312
    %v7334 = vpack.c.bf16 %v7315, %v7314
    %v7335 = vpack.c.bf16 %v7317, %v7316
    %v7336 = vpack.c.bf16 %v7319, %v7318
    %v7337 = vpack.c.bf16 %v7321, %v7320
    %v7338 = vpack.c.bf16 %v7323, %v7322
    %v7339 = vpack.c.bf16 %v7325, %v7324
    %v7340 = vpack.c.bf16 %v7327, %v7326
    %v7341 = vpack.c.bf16 %v7329, %v7328
    %v7342 = vpack.c.bf16 %v7330, %v7330
    %s7343 = scalar_lea.vmem %s3, 80
    %v7344 = vld [vmem:[%s7343] sm:$0xf]
    %v7345 = vld [vmem:[%s7343 + $0x4] sm:$0xf]
    %v7346 = vld [vmem:[%s7343 + $0x8] sm:$0xf]
    %v7347 = vld [vmem:[%s7343 + $0xc] sm:$0xf]
    %v7352 = vunpack.c.l.b16 %v7344
    %v7353 = vunpack.c.l.b16 %v7345
    %v7354 = vunpack.c.l.b16 %v7346
    %v7355 = vunpack.c.l.b16 %v7347
    %v7356 = vpack.c.b16 %v7353, %v7352
    %v7357 = vpack.c.b16 %v7355, %v7354
    %v7361 = vsel %vm5877, %v7331, 0
    %v7364 = vsel %vm5877, %v7332, 0
    %v7367 = vsel %vm5877, %v7333, 0
    %v7370 = vsel %vm5877, %v7334, 0
    %v7373 = vsel %vm5877, %v7335, 0
    %v7376 = vsel %vm5877, %v7336, 0
    %v7379 = vsel %vm5877, %v7337, 0
    %v7382 = vsel %vm5877, %v7338, 0
    %v7385 = vsel %vm5877, %v7339, 0
    %v7388 = vsel %vm5877, %v7340, 0
    %v7391 = vsel %vm5877, %v7341, 0
    %v7394 = vsel %vm5877, %v7342, 0
    %7396 = vmatpush.bf16.msra.mxu0 0
    %7397 = vmatpush.bf16.msra.mxu0 0
    %7398 = vmatpush.bf16.msra.mxu0 0
    %7399 = vmatpush.bf16.msra.mxu0 0
    %7400 = vmatpush.bf16.msra.mxu0 0
    %7401 = vmatpush.bf16.msra.mxu0 0
    %7402 = vmatpush.bf16.msra.mxu0 %v7357
    %7403 = vmatpush.bf16.msra.mxu0 %v7356
    %7404 = vmatmul.bf16.gmra.mxu0 %v7361
    %v7405 = vpop.f32.mrf.mxu0
    %v7406 = vadd.f32 0.0, %v7405
    %v7407 = vpop.f32.mrf.mxu0
    %v7408 = vadd.f32 0.0, %v7407
    %7409 = vmatmul.bf16.gmra.mxu0 %v7364
    %v7410 = vpop.f32.mrf.mxu0
    %v7411 = vadd.f32 0.0, %v7410
    %v7412 = vpop.f32.mrf.mxu0
    %v7413 = vadd.f32 0.0, %v7412
    %7414 = vmatmul.bf16.gmra.mxu0 %v7367
    %v7415 = vpop.f32.mrf.mxu0
    %v7416 = vadd.f32 0.0, %v7415
    %v7417 = vpop.f32.mrf.mxu0
    %v7418 = vadd.f32 0.0, %v7417
    %7419 = vmatmul.bf16.gmra.mxu0 %v7370
    %v7420 = vpop.f32.mrf.mxu0
    %v7421 = vadd.f32 0.0, %v7420
    %v7422 = vpop.f32.mrf.mxu0
    %v7423 = vadd.f32 0.0, %v7422
    %7424 = vmatmul.bf16.gmra.mxu0 %v7373
    %v7425 = vpop.f32.mrf.mxu0
    %v7426 = vadd.f32 0.0, %v7425
    %v7427 = vpop.f32.mrf.mxu0
    %v7428 = vadd.f32 0.0, %v7427
    %7429 = vmatmul.bf16.gmra.mxu0 %v7376
    %v7430 = vpop.f32.mrf.mxu0
    %v7431 = vadd.f32 0.0, %v7430
    %v7432 = vpop.f32.mrf.mxu0
    %v7433 = vadd.f32 0.0, %v7432
    %7434 = vmatmul.bf16.gmra.mxu0 %v7379
    %v7435 = vpop.f32.mrf.mxu0
    %v7436 = vadd.f32 0.0, %v7435
    %v7437 = vpop.f32.mrf.mxu0
    %v7438 = vadd.f32 0.0, %v7437
    %7439 = vmatmul.bf16.gmra.mxu0 %v7382
    %v7440 = vpop.f32.mrf.mxu0
    %v7441 = vadd.f32 0.0, %v7440
    %v7442 = vpop.f32.mrf.mxu0
    %v7443 = vadd.f32 0.0, %v7442
    %7444 = vmatmul.bf16.gmra.mxu0 %v7385
    %v7445 = vpop.f32.mrf.mxu0
    %v7446 = vadd.f32 0.0, %v7445
    %v7447 = vpop.f32.mrf.mxu0
    %v7448 = vadd.f32 0.0, %v7447
    %7449 = vmatmul.bf16.gmra.mxu0 %v7388
    %v7450 = vpop.f32.mrf.mxu0
    %v7451 = vadd.f32 0.0, %v7450
    %v7452 = vpop.f32.mrf.mxu0
    %v7453 = vadd.f32 0.0, %v7452
    %7454 = vmatmul.bf16.gmra.mxu0 %v7391
    %v7455 = vpop.f32.mrf.mxu0
    %v7456 = vadd.f32 0.0, %v7455
    %v7457 = vpop.f32.mrf.mxu0
    %v7458 = vadd.f32 0.0, %v7457
    %7459 = vmatmul.bf16.gmra.mxu0 %v7394
    %v7460 = vpop.f32.mrf.mxu0
    %v7461 = vadd.f32 0.0, %v7460
    %v7462 = vpop.f32.mrf.mxu0
    %7463 = vdwg.mxu0
    %v7464 = vadd.f32 %v7285, %v7406
    %v7465 = vadd.f32 %v7286, %v7408
    %v7466 = vadd.f32 %v7287, %v7411
    %v7467 = vadd.f32 %v7288, %v7413
    %v7468 = vadd.f32 %v7289, %v7416
    %v7469 = vadd.f32 %v7290, %v7418
    %v7470 = vadd.f32 %v7291, %v7421
    %v7471 = vadd.f32 %v7292, %v7423
    %v7472 = vadd.f32 %v7293, %v7426
    %v7473 = vadd.f32 %v7294, %v7428
    %v7474 = vadd.f32 %v7295, %v7431
    %v7475 = vadd.f32 %v7296, %v7433
    %v7476 = vadd.f32 %v7297, %v7436
    %v7477 = vadd.f32 %v7298, %v7438
    %v7478 = vadd.f32 %v7299, %v7441
    %v7479 = vadd.f32 %v7300, %v7443
    %v7480 = vadd.f32 %v7301, %v7446
    %v7481 = vadd.f32 %v7302, %v7448
    %v7482 = vadd.f32 %v7303, %v7451
    %v7483 = vadd.f32 %v7304, %v7453
    %v7484 = vadd.f32 %v7305, %v7456
    %v7485 = vadd.f32 %v7306, %v7458
    %v7486 = vadd.f32 %v7307, %v7461
    %v7487 = vld [vmem:[#allocation5 + $0x14] sm:$0xff]
    %v7488 = vld [vmem:[#allocation5 + $0x1c] sm:$0xff]
    %v7489 = vld [vmem:[#allocation5 + $0x24] sm:$0xff]
    %v7490 = vld [vmem:[#allocation5 + $0x2c] sm:$0xff]
    %v7491 = vld [vmem:[#allocation5 + $0x34] sm:$0xff]
    %v7492 = vld [vmem:[#allocation5 + $0x3c] sm:$0xff]
    %v7493 = vld [vmem:[#allocation5 + $0x44] sm:$0xff]
    %v7494 = vld [vmem:[#allocation5 + $0x4c] sm:$0xff]
    %v7495 = vld [vmem:[#allocation5 + $0x54] sm:$0xff]
    %v7496 = vld [vmem:[#allocation5 + $0x5c] sm:$0xff]
    %v7497 = vld [vmem:[#allocation5 + $0x64] sm:$0xff]
    %v7498 = vld [vmem:[#allocation5 + $0x6c] sm:$0xff]
    %v7499 = vld [vmem:[#allocation5 + $0x74] sm:$0xff]
    %v7500 = vld [vmem:[#allocation5 + $0x7c] sm:$0xff]
    %v7501 = vld [vmem:[#allocation5 + $0x84] sm:$0xff]
    %v7502 = vld [vmem:[#allocation5 + $0x8c] sm:$0xff]
    %v7503 = vld [vmem:[#allocation5 + $0x94] sm:$0xff]
    %v7504 = vld [vmem:[#allocation5 + $0x9c] sm:$0xff]
    %v7505 = vld [vmem:[#allocation5 + $0xa4] sm:$0xff]
    %v7506 = vld [vmem:[#allocation5 + $0xac] sm:$0xff]
    %v7507 = vld [vmem:[#allocation5 + $0xb4] sm:$0xff]
    %v7508 = vld [vmem:[#allocation5 + $0xbc] sm:$0xff]
    %v7509 = vld [vmem:[#allocation5 + $0xc4] sm:$0x3]
    %v7510 = vpack.c.bf16 %v7488, %v7487
    %v7511 = vpack.c.bf16 %v7490, %v7489
    %v7512 = vpack.c.bf16 %v7492, %v7491
    %v7513 = vpack.c.bf16 %v7494, %v7493
    %v7514 = vpack.c.bf16 %v7496, %v7495
    %v7515 = vpack.c.bf16 %v7498, %v7497
    %v7516 = vpack.c.bf16 %v7500, %v7499
    %v7517 = vpack.c.bf16 %v7502, %v7501
    %v7518 = vpack.c.bf16 %v7504, %v7503
    %v7519 = vpack.c.bf16 %v7506, %v7505
    %v7520 = vpack.c.bf16 %v7508, %v7507
    %v7521 = vpack.c.bf16 %v7509, %v7509
    %s7522 = scalar_lea.vmem %s3, 96
    %v7523 = vld [vmem:[%s7522] sm:$0xf]
    %v7524 = vld [vmem:[%s7522 + $0x4] sm:$0xf]
    %v7525 = vld [vmem:[%s7522 + $0x8] sm:$0xf]
    %v7526 = vld [vmem:[%s7522 + $0xc] sm:$0xf]
    %v7531 = vunpack.c.l.b16 %v7523
    %v7532 = vunpack.c.l.b16 %v7524
    %v7533 = vunpack.c.l.b16 %v7525
    %v7534 = vunpack.c.l.b16 %v7526
    %v7535 = vpack.c.b16 %v7532, %v7531
    %v7536 = vpack.c.b16 %v7534, %v7533
    %v7540 = vsel %vm5877, %v7510, 0
    %v7543 = vsel %vm5877, %v7511, 0
    %v7546 = vsel %vm5877, %v7512, 0
    %v7549 = vsel %vm5877, %v7513, 0
    %v7552 = vsel %vm5877, %v7514, 0
    %v7555 = vsel %vm5877, %v7515, 0
    %v7558 = vsel %vm5877, %v7516, 0
    %v7561 = vsel %vm5877, %v7517, 0
    %v7564 = vsel %vm5877, %v7518, 0
    %v7567 = vsel %vm5877, %v7519, 0
    %v7570 = vsel %vm5877, %v7520, 0
    %v7573 = vsel %vm5877, %v7521, 0
    %7575 = vmatpush.bf16.msra.mxu0 0
    %7576 = vmatpush.bf16.msra.mxu0 0
    %7577 = vmatpush.bf16.msra.mxu0 0
    %7578 = vmatpush.bf16.msra.mxu0 0
    %7579 = vmatpush.bf16.msra.mxu0 0
    %7580 = vmatpush.bf16.msra.mxu0 0
    %7581 = vmatpush.bf16.msra.mxu0 %v7536
    %7582 = vmatpush.bf16.msra.mxu0 %v7535
    %7583 = vmatmul.bf16.gmra.mxu0 %v7540
    %v7584 = vpop.f32.mrf.mxu0
    %v7585 = vadd.f32 0.0, %v7584
    %v7586 = vpop.f32.mrf.mxu0
    %v7587 = vadd.f32 0.0, %v7586
    %7588 = vmatmul.bf16.gmra.mxu0 %v7543
    %v7589 = vpop.f32.mrf.mxu0
    %v7590 = vadd.f32 0.0, %v7589
    %v7591 = vpop.f32.mrf.mxu0
    %v7592 = vadd.f32 0.0, %v7591
    %7593 = vmatmul.bf16.gmra.mxu0 %v7546
    %v7594 = vpop.f32.mrf.mxu0
    %v7595 = vadd.f32 0.0, %v7594
    %v7596 = vpop.f32.mrf.mxu0
    %v7597 = vadd.f32 0.0, %v7596
    %7598 = vmatmul.bf16.gmra.mxu0 %v7549
    %v7599 = vpop.f32.mrf.mxu0
    %v7600 = vadd.f32 0.0, %v7599
    %v7601 = vpop.f32.mrf.mxu0
    %v7602 = vadd.f32 0.0, %v7601
    %7603 = vmatmul.bf16.gmra.mxu0 %v7552
    %v7604 = vpop.f32.mrf.mxu0
    %v7605 = vadd.f32 0.0, %v7604
    %v7606 = vpop.f32.mrf.mxu0
    %v7607 = vadd.f32 0.0, %v7606
    %7608 = vmatmul.bf16.gmra.mxu0 %v7555
    %v7609 = vpop.f32.mrf.mxu0
    %v7610 = vadd.f32 0.0, %v7609
    %v7611 = vpop.f32.mrf.mxu0
    %v7612 = vadd.f32 0.0, %v7611
    %7613 = vmatmul.bf16.gmra.mxu0 %v7558
    %v7614 = vpop.f32.mrf.mxu0
    %v7615 = vadd.f32 0.0, %v7614
    %v7616 = vpop.f32.mrf.mxu0
    %v7617 = vadd.f32 0.0, %v7616
    %7618 = vmatmul.bf16.gmra.mxu0 %v7561
    %v7619 = vpop.f32.mrf.mxu0
    %v7620 = vadd.f32 0.0, %v7619
    %v7621 = vpop.f32.mrf.mxu0
    %v7622 = vadd.f32 0.0, %v7621
    %7623 = vmatmul.bf16.gmra.mxu0 %v7564
    %v7624 = vpop.f32.mrf.mxu0
    %v7625 = vadd.f32 0.0, %v7624
    %v7626 = vpop.f32.mrf.mxu0
    %v7627 = vadd.f32 0.0, %v7626
    %7628 = vmatmul.bf16.gmra.mxu0 %v7567
    %v7629 = vpop.f32.mrf.mxu0
    %v7630 = vadd.f32 0.0, %v7629
    %v7631 = vpop.f32.mrf.mxu0
    %v7632 = vadd.f32 0.0, %v7631
    %7633 = vmatmul.bf16.gmra.mxu0 %v7570
    %v7634 = vpop.f32.mrf.mxu0
    %v7635 = vadd.f32 0.0, %v7634
    %v7636 = vpop.f32.mrf.mxu0
    %v7637 = vadd.f32 0.0, %v7636
    %7638 = vmatmul.bf16.gmra.mxu0 %v7573
    %v7639 = vpop.f32.mrf.mxu0
    %v7640 = vadd.f32 0.0, %v7639
    %v7641 = vpop.f32.mrf.mxu0
    %7642 = vdwg.mxu0
    %v7643 = vadd.f32 %v7464, %v7585
    %v7644 = vadd.f32 %v7465, %v7587
    %v7645 = vadd.f32 %v7466, %v7590
    %v7646 = vadd.f32 %v7467, %v7592
    %v7647 = vadd.f32 %v7468, %v7595
    %v7648 = vadd.f32 %v7469, %v7597
    %v7649 = vadd.f32 %v7470, %v7600
    %v7650 = vadd.f32 %v7471, %v7602
    %v7651 = vadd.f32 %v7472, %v7605
    %v7652 = vadd.f32 %v7473, %v7607
    %v7653 = vadd.f32 %v7474, %v7610
    %v7654 = vadd.f32 %v7475, %v7612
    %v7655 = vadd.f32 %v7476, %v7615
    %v7656 = vadd.f32 %v7477, %v7617
    %v7657 = vadd.f32 %v7478, %v7620
    %v7658 = vadd.f32 %v7479, %v7622
    %v7659 = vadd.f32 %v7480, %v7625
    %v7660 = vadd.f32 %v7481, %v7627
    %v7661 = vadd.f32 %v7482, %v7630
    %v7662 = vadd.f32 %v7483, %v7632
    %v7663 = vadd.f32 %v7484, %v7635
    %v7664 = vadd.f32 %v7485, %v7637
    %v7665 = vadd.f32 %v7486, %v7640
    %v7666 = vld [vmem:[#allocation5 + $0x15] sm:$0xff]
    %v7667 = vld [vmem:[#allocation5 + $0x1d] sm:$0xff]
    %v7668 = vld [vmem:[#allocation5 + $0x25] sm:$0xff]
    %v7669 = vld [vmem:[#allocation5 + $0x2d] sm:$0xff]
    %v7670 = vld [vmem:[#allocation5 + $0x35] sm:$0xff]
    %v7671 = vld [vmem:[#allocation5 + $0x3d] sm:$0xff]
    %v7672 = vld [vmem:[#allocation5 + $0x45] sm:$0xff]
    %v7673 = vld [vmem:[#allocation5 + $0x4d] sm:$0xff]
    %v7674 = vld [vmem:[#allocation5 + $0x55] sm:$0xff]
    %v7675 = vld [vmem:[#allocation5 + $0x5d] sm:$0xff]
    %v7676 = vld [vmem:[#allocation5 + $0x65] sm:$0xff]
    %v7677 = vld [vmem:[#allocation5 + $0x6d] sm:$0xff]
    %v7678 = vld [vmem:[#allocation5 + $0x75] sm:$0xff]
    %v7679 = vld [vmem:[#allocation5 + $0x7d] sm:$0xff]
    %v7680 = vld [vmem:[#allocation5 + $0x85] sm:$0xff]
    %v7681 = vld [vmem:[#allocation5 + $0x8d] sm:$0xff]
    %v7682 = vld [vmem:[#allocation5 + $0x95] sm:$0xff]
    %v7683 = vld [vmem:[#allocation5 + $0x9d] sm:$0xff]
    %v7684 = vld [vmem:[#allocation5 + $0xa5] sm:$0xff]
    %v7685 = vld [vmem:[#allocation5 + $0xad] sm:$0xff]
    %v7686 = vld [vmem:[#allocation5 + $0xb5] sm:$0xff]
    %v7687 = vld [vmem:[#allocation5 + $0xbd] sm:$0xff]
    %v7688 = vld [vmem:[#allocation5 + $0xc5] sm:$0x3]
    %v7689 = vpack.c.bf16 %v7667, %v7666
    %v7690 = vpack.c.bf16 %v7669, %v7668
    %v7691 = vpack.c.bf16 %v7671, %v7670
    %v7692 = vpack.c.bf16 %v7673, %v7672
    %v7693 = vpack.c.bf16 %v7675, %v7674
    %v7694 = vpack.c.bf16 %v7677, %v7676
    %v7695 = vpack.c.bf16 %v7679, %v7678
    %v7696 = vpack.c.bf16 %v7681, %v7680
    %v7697 = vpack.c.bf16 %v7683, %v7682
    %v7698 = vpack.c.bf16 %v7685, %v7684
    %v7699 = vpack.c.bf16 %v7687, %v7686
    %v7700 = vpack.c.bf16 %v7688, %v7688
    %s7701 = scalar_lea.vmem %s3, 112
    %v7702 = vld [vmem:[%s7701] sm:$0xf]
    %v7703 = vld [vmem:[%s7701 + $0x4] sm:$0xf]
    %v7704 = vld [vmem:[%s7701 + $0x8] sm:$0xf]
    %v7705 = vld [vmem:[%s7701 + $0xc] sm:$0xf]
    %v7710 = vunpack.c.l.b16 %v7702
    %v7711 = vunpack.c.l.b16 %v7703
    %v7712 = vunpack.c.l.b16 %v7704
    %v7713 = vunpack.c.l.b16 %v7705
    %v7714 = vpack.c.b16 %v7711, %v7710
    %v7715 = vpack.c.b16 %v7713, %v7712
    %v7719 = vsel %vm5877, %v7689, 0
    %v7722 = vsel %vm5877, %v7690, 0
    %v7725 = vsel %vm5877, %v7691, 0
    %v7728 = vsel %vm5877, %v7692, 0
    %v7731 = vsel %vm5877, %v7693, 0
    %v7734 = vsel %vm5877, %v7694, 0
    %v7737 = vsel %vm5877, %v7695, 0
    %v7740 = vsel %vm5877, %v7696, 0
    %v7743 = vsel %vm5877, %v7697, 0
    %v7746 = vsel %vm5877, %v7698, 0
    %v7749 = vsel %vm5877, %v7699, 0
    %v7752 = vsel %vm5877, %v7700, 0
    %7754 = vmatpush.bf16.msra.mxu0 0
    %7755 = vmatpush.bf16.msra.mxu0 0
    %7756 = vmatpush.bf16.msra.mxu0 0
    %7757 = vmatpush.bf16.msra.mxu0 0
    %7758 = vmatpush.bf16.msra.mxu0 0
    %7759 = vmatpush.bf16.msra.mxu0 0
    %7760 = vmatpush.bf16.msra.mxu0 %v7715
    %7761 = vmatpush.bf16.msra.mxu0 %v7714
    %7762 = vmatmul.bf16.gmra.mxu0 %v7719
    %v7763 = vpop.f32.mrf.mxu0
    %v7764 = vadd.f32 0.0, %v7763
    %v7765 = vpop.f32.mrf.mxu0
    %v7766 = vadd.f32 0.0, %v7765
    %7767 = vmatmul.bf16.gmra.mxu0 %v7722
    %v7768 = vpop.f32.mrf.mxu0
    %v7769 = vadd.f32 0.0, %v7768
    %v7770 = vpop.f32.mrf.mxu0
    %v7771 = vadd.f32 0.0, %v7770
    %7772 = vmatmul.bf16.gmra.mxu0 %v7725
    %v7773 = vpop.f32.mrf.mxu0
    %v7774 = vadd.f32 0.0, %v7773
    %v7775 = vpop.f32.mrf.mxu0
    %v7776 = vadd.f32 0.0, %v7775
    %7777 = vmatmul.bf16.gmra.mxu0 %v7728
    %v7778 = vpop.f32.mrf.mxu0
    %v7779 = vadd.f32 0.0, %v7778
    %v7780 = vpop.f32.mrf.mxu0
    %v7781 = vadd.f32 0.0, %v7780
    %7782 = vmatmul.bf16.gmra.mxu0 %v7731
    %v7783 = vpop.f32.mrf.mxu0
    %v7784 = vadd.f32 0.0, %v7783
    %v7785 = vpop.f32.mrf.mxu0
    %v7786 = vadd.f32 0.0, %v7785
    %7787 = vmatmul.bf16.gmra.mxu0 %v7734
    %v7788 = vpop.f32.mrf.mxu0
    %v7789 = vadd.f32 0.0, %v7788
    %v7790 = vpop.f32.mrf.mxu0
    %v7791 = vadd.f32 0.0, %v7790
    %7792 = vmatmul.bf16.gmra.mxu0 %v7737
    %v7793 = vpop.f32.mrf.mxu0
    %v7794 = vadd.f32 0.0, %v7793
    %v7795 = vpop.f32.mrf.mxu0
    %v7796 = vadd.f32 0.0, %v7795
    %7797 = vmatmul.bf16.gmra.mxu0 %v7740
    %v7798 = vpop.f32.mrf.mxu0
    %v7799 = vadd.f32 0.0, %v7798
    %v7800 = vpop.f32.mrf.mxu0
    %v7801 = vadd.f32 0.0, %v7800
    %7802 = vmatmul.bf16.gmra.mxu0 %v7743
    %v7803 = vpop.f32.mrf.mxu0
    %v7804 = vadd.f32 0.0, %v7803
    %v7805 = vpop.f32.mrf.mxu0
    %v7806 = vadd.f32 0.0, %v7805
    %7807 = vmatmul.bf16.gmra.mxu0 %v7746
    %v7808 = vpop.f32.mrf.mxu0
    %v7809 = vadd.f32 0.0, %v7808
    %v7810 = vpop.f32.mrf.mxu0
    %v7811 = vadd.f32 0.0, %v7810
    %7812 = vmatmul.bf16.gmra.mxu0 %v7749
    %v7813 = vpop.f32.mrf.mxu0
    %v7814 = vadd.f32 0.0, %v7813
    %v7815 = vpop.f32.mrf.mxu0
    %v7816 = vadd.f32 0.0, %v7815
    %7817 = vmatmul.bf16.gmra.mxu0 %v7752
    %v7818 = vpop.f32.mrf.mxu0
    %v7819 = vadd.f32 0.0, %v7818
    %v7820 = vpop.f32.mrf.mxu0
    %7821 = vdwg.mxu0
    %v7822 = vadd.f32 %v7643, %v7764
    %v7823 = vadd.f32 %v7644, %v7766
    %v7824 = vadd.f32 %v7645, %v7769
    %v7825 = vadd.f32 %v7646, %v7771
    %v7826 = vadd.f32 %v7647, %v7774
    %v7827 = vadd.f32 %v7648, %v7776
    %v7828 = vadd.f32 %v7649, %v7779
    %v7829 = vadd.f32 %v7650, %v7781
    %v7830 = vadd.f32 %v7651, %v7784
    %v7831 = vadd.f32 %v7652, %v7786
    %v7832 = vadd.f32 %v7653, %v7789
    %v7833 = vadd.f32 %v7654, %v7791
    %v7834 = vadd.f32 %v7655, %v7794
    %v7835 = vadd.f32 %v7656, %v7796
    %v7836 = vadd.f32 %v7657, %v7799
    %v7837 = vadd.f32 %v7658, %v7801
    %v7838 = vadd.f32 %v7659, %v7804
    %v7839 = vadd.f32 %v7660, %v7806
    %v7840 = vadd.f32 %v7661, %v7809
    %v7841 = vadd.f32 %v7662, %v7811
    %v7842 = vadd.f32 %v7663, %v7814
    %v7843 = vadd.f32 %v7664, %v7816
    %v7844 = vadd.f32 %v7665, %v7819
    %v7845 = vld [vmem:[#allocation5 + $0x16] sm:$0xff]
    %v7846 = vld [vmem:[#allocation5 + $0x1e] sm:$0xff]
    %v7847 = vld [vmem:[#allocation5 + $0x26] sm:$0xff]
    %v7848 = vld [vmem:[#allocation5 + $0x2e] sm:$0xff]
    %v7849 = vld [vmem:[#allocation5 + $0x36] sm:$0xff]
    %v7850 = vld [vmem:[#allocation5 + $0x3e] sm:$0xff]
    %v7851 = vld [vmem:[#allocation5 + $0x46] sm:$0xff]
    %v7852 = vld [vmem:[#allocation5 + $0x4e] sm:$0xff]
    %v7853 = vld [vmem:[#allocation5 + $0x56] sm:$0xff]
    %v7854 = vld [vmem:[#allocation5 + $0x5e] sm:$0xff]
    %v7855 = vld [vmem:[#allocation5 + $0x66] sm:$0xff]
    %v7856 = vld [vmem:[#allocation5 + $0x6e] sm:$0xff]
    %v7857 = vld [vmem:[#allocation5 + $0x76] sm:$0xff]
    %v7858 = vld [vmem:[#allocation5 + $0x7e] sm:$0xff]
    %v7859 = vld [vmem:[#allocation5 + $0x86] sm:$0xff]
    %v7860 = vld [vmem:[#allocation5 + $0x8e] sm:$0xff]
    %v7861 = vld [vmem:[#allocation5 + $0x96] sm:$0xff]
    %v7862 = vld [vmem:[#allocation5 + $0x9e] sm:$0xff]
    %v7863 = vld [vmem:[#allocation5 + $0xa6] sm:$0xff]
    %v7864 = vld [vmem:[#allocation5 + $0xae] sm:$0xff]
    %v7865 = vld [vmem:[#allocation5 + $0xb6] sm:$0xff]
    %v7866 = vld [vmem:[#allocation5 + $0xbe] sm:$0xff]
    %v7867 = vld [vmem:[#allocation5 + $0xc6] sm:$0x3]
    %v7868 = vpack.c.bf16 %v7846, %v7845
    %v7869 = vpack.c.bf16 %v7848, %v7847
    %v7870 = vpack.c.bf16 %v7850, %v7849
    %v7871 = vpack.c.bf16 %v7852, %v7851
    %v7872 = vpack.c.bf16 %v7854, %v7853
    %v7873 = vpack.c.bf16 %v7856, %v7855
    %v7874 = vpack.c.bf16 %v7858, %v7857
    %v7875 = vpack.c.bf16 %v7860, %v7859
    %v7876 = vpack.c.bf16 %v7862, %v7861
    %v7877 = vpack.c.bf16 %v7864, %v7863
    %v7878 = vpack.c.bf16 %v7866, %v7865
    %v7879 = vpack.c.bf16 %v7867, %v7867
    %s7880 = scalar_lea.vmem %s3, 128
    %v7881 = vld [vmem:[%s7880] sm:$0xf]
    %v7882 = vld [vmem:[%s7880 + $0x4] sm:$0xf]
    %v7883 = vld [vmem:[%s7880 + $0x8] sm:$0xf]
    %v7884 = vld [vmem:[%s7880 + $0xc] sm:$0xf]
    %v7889 = vunpack.c.l.b16 %v7881
    %v7890 = vunpack.c.l.b16 %v7882
    %v7891 = vunpack.c.l.b16 %v7883
    %v7892 = vunpack.c.l.b16 %v7884
    %v7893 = vpack.c.b16 %v7890, %v7889
    %v7894 = vpack.c.b16 %v7892, %v7891
    %v7898 = vsel %vm5877, %v7868, 0
    %v7901 = vsel %vm5877, %v7869, 0
    %v7904 = vsel %vm5877, %v7870, 0
    %v7907 = vsel %vm5877, %v7871, 0
    %v7910 = vsel %vm5877, %v7872, 0
    %v7913 = vsel %vm5877, %v7873, 0
    %v7916 = vsel %vm5877, %v7874, 0
    %v7919 = vsel %vm5877, %v7875, 0
    %v7922 = vsel %vm5877, %v7876, 0
    %v7925 = vsel %vm5877, %v7877, 0
    %v7928 = vsel %vm5877, %v7878, 0
    %v7931 = vsel %vm5877, %v7879, 0
    %7933 = vmatpush.bf16.msra.mxu0 0
    %7934 = vmatpush.bf16.msra.mxu0 0
    %7935 = vmatpush.bf16.msra.mxu0 0
    %7936 = vmatpush.bf16.msra.mxu0 0
    %7937 = vmatpush.bf16.msra.mxu0 0
    %7938 = vmatpush.bf16.msra.mxu0 0
    %7939 = vmatpush.bf16.msra.mxu0 %v7894
    %7940 = vmatpush.bf16.msra.mxu0 %v7893
    %7941 = vmatmul.bf16.gmra.mxu0 %v7898
    %v7942 = vpop.f32.mrf.mxu0
    %v7943 = vadd.f32 0.0, %v7942
    %v7944 = vpop.f32.mrf.mxu0
    %v7945 = vadd.f32 0.0, %v7944
    %7946 = vmatmul.bf16.gmra.mxu0 %v7901
    %v7947 = vpop.f32.mrf.mxu0
    %v7948 = vadd.f32 0.0, %v7947
    %v7949 = vpop.f32.mrf.mxu0
    %v7950 = vadd.f32 0.0, %v7949
    %7951 = vmatmul.bf16.gmra.mxu0 %v7904
    %v7952 = vpop.f32.mrf.mxu0
    %v7953 = vadd.f32 0.0, %v7952
    %v7954 = vpop.f32.mrf.mxu0
    %v7955 = vadd.f32 0.0, %v7954
    %7956 = vmatmul.bf16.gmra.mxu0 %v7907
    %v7957 = vpop.f32.mrf.mxu0
    %v7958 = vadd.f32 0.0, %v7957
    %v7959 = vpop.f32.mrf.mxu0
    %v7960 = vadd.f32 0.0, %v7959
    %7961 = vmatmul.bf16.gmra.mxu0 %v7910
    %v7962 = vpop.f32.mrf.mxu0
    %v7963 = vadd.f32 0.0, %v7962
    %v7964 = vpop.f32.mrf.mxu0
    %v7965 = vadd.f32 0.0, %v7964
    %7966 = vmatmul.bf16.gmra.mxu0 %v7913
    %v7967 = vpop.f32.mrf.mxu0
    %v7968 = vadd.f32 0.0, %v7967
    %v7969 = vpop.f32.mrf.mxu0
    %v7970 = vadd.f32 0.0, %v7969
    %7971 = vmatmul.bf16.gmra.mxu0 %v7916
    %v7972 = vpop.f32.mrf.mxu0
    %v7973 = vadd.f32 0.0, %v7972
    %v7974 = vpop.f32.mrf.mxu0
    %v7975 = vadd.f32 0.0, %v7974
    %7976 = vmatmul.bf16.gmra.mxu0 %v7919
    %v7977 = vpop.f32.mrf.mxu0
    %v7978 = vadd.f32 0.0, %v7977
    %v7979 = vpop.f32.mrf.mxu0
    %v7980 = vadd.f32 0.0, %v7979
    %7981 = vmatmul.bf16.gmra.mxu0 %v7922
    %v7982 = vpop.f32.mrf.mxu0
    %v7983 = vadd.f32 0.0, %v7982
    %v7984 = vpop.f32.mrf.mxu0
    %v7985 = vadd.f32 0.0, %v7984
    %7986 = vmatmul.bf16.gmra.mxu0 %v7925
    %v7987 = vpop.f32.mrf.mxu0
    %v7988 = vadd.f32 0.0, %v7987
    %v7989 = vpop.f32.mrf.mxu0
    %v7990 = vadd.f32 0.0, %v7989
    %7991 = vmatmul.bf16.gmra.mxu0 %v7928
    %v7992 = vpop.f32.mrf.mxu0
    %v7993 = vadd.f32 0.0, %v7992
    %v7994 = vpop.f32.mrf.mxu0
    %v7995 = vadd.f32 0.0, %v7994
    %7996 = vmatmul.bf16.gmra.mxu0 %v7931
    %v7997 = vpop.f32.mrf.mxu0
    %v7998 = vadd.f32 0.0, %v7997
    %v7999 = vpop.f32.mrf.mxu0
    %8000 = vdwg.mxu0
    %v8001 = vadd.f32 %v7822, %v7943
    %v8002 = vadd.f32 %v7823, %v7945
    %v8003 = vadd.f32 %v7824, %v7948
    %v8004 = vadd.f32 %v7825, %v7950
    %v8005 = vadd.f32 %v7826, %v7953
    %v8006 = vadd.f32 %v7827, %v7955
    %v8007 = vadd.f32 %v7828, %v7958
    %v8008 = vadd.f32 %v7829, %v7960
    %v8009 = vadd.f32 %v7830, %v7963
    %v8010 = vadd.f32 %v7831, %v7965
    %v8011 = vadd.f32 %v7832, %v7968
    %v8012 = vadd.f32 %v7833, %v7970
    %v8013 = vadd.f32 %v7834, %v7973
    %v8014 = vadd.f32 %v7835, %v7975
    %v8015 = vadd.f32 %v7836, %v7978
    %v8016 = vadd.f32 %v7837, %v7980
    %v8017 = vadd.f32 %v7838, %v7983
    %v8018 = vadd.f32 %v7839, %v7985
    %v8019 = vadd.f32 %v7840, %v7988
    %v8020 = vadd.f32 %v7841, %v7990
    %v8021 = vadd.f32 %v7842, %v7993
    %v8022 = vadd.f32 %v7843, %v7995
    %v8023 = vadd.f32 %v7844, %v7998
    %v8024 = vld [vmem:[%s4] sm:$0x1]
    %v8026 = vperm.slane %v8024, 0
    %v8028 = vadd.f32 %v8001, %v8026
    %v8029 = vadd.f32 %v8002, %v8026
    %v8030 = vadd.f32 %v8003, %v8026
    %v8031 = vadd.f32 %v8004, %v8026
    %v8032 = vadd.f32 %v8005, %v8026
    %v8033 = vadd.f32 %v8006, %v8026
    %v8034 = vadd.f32 %v8007, %v8026
    %v8035 = vadd.f32 %v8008, %v8026
    %v8036 = vadd.f32 %v8009, %v8026
    %v8037 = vadd.f32 %v8010, %v8026
    %v8038 = vadd.f32 %v8011, %v8026
    %v8039 = vadd.f32 %v8012, %v8026
    %v8040 = vadd.f32 %v8013, %v8026
    %v8041 = vadd.f32 %v8014, %v8026
    %v8042 = vadd.f32 %v8015, %v8026
    %v8043 = vadd.f32 %v8016, %v8026
    %v8044 = vadd.f32 %v8017, %v8026
    %v8045 = vadd.f32 %v8018, %v8026
    %v8046 = vadd.f32 %v8019, %v8026
    %v8047 = vadd.f32 %v8020, %v8026
    %v8048 = vadd.f32 %v8021, %v8026
    %v8049 = vadd.f32 %v8022, %v8026
    %v8050 = vadd.f32 %v8023, %v8026
    %v8051 = vmax.f32 %v8028, 0.0
    %v8052 = vmax.f32 %v8029, 0.0
    %v8053 = vmax.f32 %v8030, 0.0
    %v8054 = vmax.f32 %v8031, 0.0
    %v8055 = vmax.f32 %v8032, 0.0
    %v8056 = vmax.f32 %v8033, 0.0
    %v8057 = vmax.f32 %v8034, 0.0
    %v8058 = vmax.f32 %v8035, 0.0
    %v8059 = vmax.f32 %v8036, 0.0
    %v8060 = vmax.f32 %v8037, 0.0
    %v8061 = vmax.f32 %v8038, 0.0
    %v8062 = vmax.f32 %v8039, 0.0
    %v8063 = vmax.f32 %v8040, 0.0
    %v8064 = vmax.f32 %v8041, 0.0
    %v8065 = vmax.f32 %v8042, 0.0
    %v8066 = vmax.f32 %v8043, 0.0
    %v8067 = vmax.f32 %v8044, 0.0
    %v8068 = vmax.f32 %v8045, 0.0
    %v8069 = vmax.f32 %v8046, 0.0
    %v8070 = vmax.f32 %v8047, 0.0
    %v8071 = vmax.f32 %v8048, 0.0
    %v8072 = vmax.f32 %v8049, 0.0
    %v8073 = vmax.f32 %v8050, 0.0
    %vm8074 = vcmask 523264
    %8075 = vst.msk [vmem:[#allocation3] sm:$0xff] %vm8074, %v8051
    %8076 = vst.msk [vmem:[#allocation3 + $0x8] sm:$0xff] %vm8074, %v8052
    %8077 = vst.msk [vmem:[#allocation3 + $0x10] sm:$0xff] %vm8074, %v8053
    %8078 = vst.msk [vmem:[#allocation3 + $0x18] sm:$0xff] %vm8074, %v8054
    %8079 = vst.msk [vmem:[#allocation3 + $0x20] sm:$0xff] %vm8074, %v8055
    %8080 = vst.msk [vmem:[#allocation3 + $0x28] sm:$0xff] %vm8074, %v8056
    %8081 = vst.msk [vmem:[#allocation3 + $0x30] sm:$0xff] %vm8074, %v8057
    %8082 = vst.msk [vmem:[#allocation3 + $0x38] sm:$0xff] %vm8074, %v8058
    %8083 = vst.msk [vmem:[#allocation3 + $0x40] sm:$0xff] %vm8074, %v8059
    %8084 = vst.msk [vmem:[#allocation3 + $0x48] sm:$0xff] %vm8074, %v8060
    %8085 = vst.msk [vmem:[#allocation3 + $0x50] sm:$0xff] %vm8074, %v8061
    %8086 = vst.msk [vmem:[#allocation3 + $0x58] sm:$0xff] %vm8074, %v8062
    %8087 = vst.msk [vmem:[#allocation3 + $0x60] sm:$0xff] %vm8074, %v8063
    %8088 = vst.msk [vmem:[#allocation3 + $0x68] sm:$0xff] %vm8074, %v8064
    %8089 = vst.msk [vmem:[#allocation3 + $0x70] sm:$0xff] %vm8074, %v8065
    %8090 = vst.msk [vmem:[#allocation3 + $0x78] sm:$0xff] %vm8074, %v8066
    %8091 = vst.msk [vmem:[#allocation3 + $0x80] sm:$0xff] %vm8074, %v8067
    %8092 = vst.msk [vmem:[#allocation3 + $0x88] sm:$0xff] %vm8074, %v8068
    %8093 = vst.msk [vmem:[#allocation3 + $0x90] sm:$0xff] %vm8074, %v8069
    %8094 = vst.msk [vmem:[#allocation3 + $0x98] sm:$0xff] %vm8074, %v8070
    %8095 = vst.msk [vmem:[#allocation3 + $0xa0] sm:$0xff] %vm8074, %v8071
    %8096 = vst.msk [vmem:[#allocation3 + $0xa8] sm:$0xff] %vm8074, %v8072
    %vm8097 = vcmask 517120
    %8098 = vst.msk [vmem:[#allocation3 + $0xb0] sm:$0x3] %vm8097, %v8073
    %v8099 = vld [vmem:[#allocation3] ss:$2 sm:$0xff]
    %s8100 = scalar_lea.vmem [#allocation3], 16
    %v8101 = vld [vmem:[%s8100] ss:$2 sm:$0xff]
    %s8102 = scalar_lea.vmem [#allocation3], 32
    %v8103 = vld [vmem:[%s8102] ss:$2 sm:$0xff]
    %s8104 = scalar_lea.vmem [#allocation3], 48
    %v8105 = vld [vmem:[%s8104] ss:$2 sm:$0xff]
    %s8106 = scalar_lea.vmem [#allocation3], 64
    %v8107 = vld [vmem:[%s8106] ss:$2 sm:$0xff]
    %s8108 = scalar_lea.vmem [#allocation3], 80
    %v8109 = vld [vmem:[%s8108] ss:$2 sm:$0xff]
    %s8110 = scalar_lea.vmem [#allocation3], 96
    %v8111 = vld [vmem:[%s8110] ss:$2 sm:$0xff]
    %s8112 = scalar_lea.vmem [#allocation3], 112
    %v8113 = vld [vmem:[%s8112] ss:$2 sm:$0xff]
    %s8114 = scalar_lea.vmem [#allocation3], 128
    %v8115 = vld [vmem:[%s8114] ss:$2 sm:$0xff]
    %s8116 = scalar_lea.vmem [#allocation3], 144
    %v8117 = vld [vmem:[%s8116] ss:$2 sm:$0xff]
    %s8118 = scalar_lea.vmem [#allocation3], 160
    %v8119 = vld [vmem:[%s8118] ss:$2 sm:$0xff]
    %s8120 = scalar_lea.vmem [#allocation3], 176
    %v8121 = vld [vmem:[%s8120] ss:$2 sm:$0x1]
    %s8122 = scalar_lea.vmem [#allocation3], 1
    %v8123 = vld [vmem:[%s8122] ss:$2 sm:$0xff]
    %s8124 = scalar_lea.vmem [#allocation3], 17
    %v8125 = vld [vmem:[%s8124] ss:$2 sm:$0xff]
    %s8126 = scalar_lea.vmem [#allocation3], 33
    %v8127 = vld [vmem:[%s8126] ss:$2 sm:$0xff]
    %s8128 = scalar_lea.vmem [#allocation3], 49
    %v8129 = vld [vmem:[%s8128] ss:$2 sm:$0xff]
    %s8130 = scalar_lea.vmem [#allocation3], 65
    %v8131 = vld [vmem:[%s8130] ss:$2 sm:$0xff]
    %s8132 = scalar_lea.vmem [#allocation3], 81
    %v8133 = vld [vmem:[%s8132] ss:$2 sm:$0xff]
    %s8134 = scalar_lea.vmem [#allocation3], 97
    %v8135 = vld [vmem:[%s8134] ss:$2 sm:$0xff]
    %s8136 = scalar_lea.vmem [#allocation3], 113
    %v8137 = vld [vmem:[%s8136] ss:$2 sm:$0xff]
    %s8138 = scalar_lea.vmem [#allocation3], 129
    %v8139 = vld [vmem:[%s8138] ss:$2 sm:$0xff]
    %s8140 = scalar_lea.vmem [#allocation3], 145
    %v8141 = vld [vmem:[%s8140] ss:$2 sm:$0xff]
    %s8142 = scalar_lea.vmem [#allocation3], 161
    %v8143 = vld [vmem:[%s8142] ss:$2 sm:$0xff]
    %s8144 = scalar_lea.vmem [#allocation3], 177
    %v8145 = vld [vmem:[%s8144] ss:$2 sm:$0x1]
    %v8146 = vmax.f32 %v8099, %v8123
    %v8147 = vmax.f32 %v8101, %v8125
    %v8148 = vmax.f32 %v8103, %v8127
    %v8149 = vmax.f32 %v8105, %v8129
    %v8150 = vmax.f32 %v8107, %v8131
    %v8151 = vmax.f32 %v8109, %v8133
    %v8152 = vmax.f32 %v8111, %v8135
    %v8153 = vmax.f32 %v8113, %v8137
    %v8154 = vmax.f32 %v8115, %v8139
    %v8155 = vmax.f32 %v8117, %v8141
    %v8156 = vmax.f32 %v8119, %v8143
    %v8157 = vmax.f32 %v8121, %v8145
    %v8170 = vrot.slane %v8146, 5
    %v8171 = vrot.slane %v8147, 5
    %v8172 = vsel %vm6307, %v8170, %v8171
    %v8173 = vrot.slane %v8148, 5
    %v8174 = vsel %vm6307, %v8171, %v8173
    %v8175 = vrot.slane %v8149, 5
    %v8176 = vsel %vm6307, %v8173, %v8175
    %v8177 = vrot.slane %v8150, 5
    %v8178 = vsel %vm6307, %v8175, %v8177
    %v8179 = vrot.slane %v8151, 5
    %v8180 = vsel %vm6307, %v8177, %v8179
    %v8181 = vrot.slane %v8152, 5
    %v8182 = vrot.slane %v8153, 5
    %v8183 = vsel %vm6307, %v8181, %v8182
    %v8184 = vrot.slane %v8154, 5
    %v8185 = vsel %vm6307, %v8182, %v8184
    %v8186 = vrot.slane %v8155, 5
    %v8187 = vsel %vm6307, %v8184, %v8186
    %v8188 = vrot.slane %v8156, 5
    %v8189 = vsel %vm6307, %v8186, %v8188
    %v8190 = vrot.slane %v8157, 5
    %v8191 = vsel %vm6307, %v8188, %v8190
    %v8202 = vmax.f32 %v8146, %v8172
    %v8203 = vmax.f32 %v8147, %v8174
    %v8204 = vmax.f32 %v8148, %v8176
    %v8205 = vmax.f32 %v8149, %v8178
    %v8206 = vmax.f32 %v8150, %v8180
    %v8207 = vmax.f32 %v8152, %v8183
    %v8208 = vmax.f32 %v8153, %v8185
    %v8209 = vmax.f32 %v8154, %v8187
    %v8210 = vmax.f32 %v8155, %v8189
    %v8211 = vmax.f32 %v8156, %v8191
    %v8213 = vrot.slane %v8202, 1
    %v8216 = vrot.slane %v8203, 5
    %v8219 = vrot.slane %v8204, 1
    %v8223 = vrot.slane %v8205, 5
    %v8224 = vrot.slane %v8206, 5
    %v8225 = vsel %vm6307, %v8223, %v8224
    %v8227 = vsel %vm6181, 0.0, %v8213
    %v8228 = vsel %vm6307, %v8213, 0.0
    %v8229 = vsel %vm6353, %v8228, %v8216
    %v8230 = vsel %vm6358, %v8216, 0.0
    %v8231 = vsel %vm6307, %v8230, %v8219
    %v8232 = vsel %vm6181, %v8231, 0.0
    %v8233 = vsel %vm6358, 0.0, %v8225
    %v8234 = vsel %vm6353, %v8233, 0.0
    %8235 = vst.msk [vmem:[#allocation6] sm:$0xff] %vm8074, %v8227
    %8236 = vst.msk [vmem:[#allocation6 + $0x8] sm:$0xff] %vm8074, %v8229
    %8237 = vst.msk [vmem:[#allocation6 + $0x10] sm:$0xff] %vm8074, %v8232
    %8238 = vst.msk [vmem:[#allocation6 + $0x18] sm:$0xff] %vm8074, %v8234
    %vm8239 = vcmask 519168
    %8240 = vst.msk [vmem:[#allocation6 + $0x20] sm:$0xf] %vm8239, 0.0
    %v8242 = vrot.slane %v8207, 3
    %v8245 = vrot.slane %v8208, 7
    %v8249 = vrot.slane %v8209, 3
    %v8250 = vrot.slane %v8210, 3
    %v8251 = vsel %vm6353, %v8249, %v8250
    %v8254 = vrot.slane %v8211, 7
    %v8256 = vsel %vm6181, 0.0, %v8242
    %v8257 = vsel %vm6307, %v8242, 0.0
    %v8258 = vsel %vm6353, %v8257, %v8245
    %v8259 = vsel %vm6358, %v8245, 0.0
    %v8260 = vsel %vm6307, %v8259, %v8251
    %v8261 = vsel %vm6181, %v8260, 0.0
    %v8262 = vsel %vm6358, 0.0, %v8254
    %v8263 = vsel %vm6353, %v8262, 0.0
    %8264 = vst.msk [vmem:[#allocation6 + $0x24] sm:$0xff] %vm8074, %v8256
    %8265 = vst.msk [vmem:[#allocation6 + $0x2c] sm:$0xff] %vm8074, %v8258
    %8266 = vst.msk [vmem:[#allocation6 + $0x34] sm:$0xff] %vm8074, %v8261
    %8267 = vst.msk [vmem:[#allocation6 + $0x3c] sm:$0xff] %vm8074, %v8263
    %8268 = vst.msk [vmem:[#allocation6 + $0x44] sm:$0xf] %vm8239, 0.0
    %v8269 = vld [vmem:[#allocation6] sm:$0xff]
    %v8270 = vld [vmem:[#allocation6 + $0x8] sm:$0xff]
    %v8271 = vld [vmem:[#allocation6 + $0x10] sm:$0xff]
    %v8272 = vld [vmem:[#allocation6 + $0x18] sm:$0xff]
    %v8273 = vld [vmem:[#allocation6 + $0x20] sm:$0xff]
    %v8274 = vld [vmem:[#allocation6 + $0x28] sm:$0xff]
    %v8275 = vld [vmem:[#allocation6 + $0x30] sm:$0xff]
    %v8276 = vld [vmem:[#allocation6 + $0x38] sm:$0x3]
    %v8277 = vpack.c.bf16 %v8270, %v8269
    %v8278 = vpack.c.bf16 %v8272, %v8271
    %v8279 = vpack.c.bf16 %v8274, %v8273
    %v8280 = vpack.c.bf16 %v8276, %v8275
    %v8281 = vld [vmem:[%s5] sm:$0xf]
    %v8282 = vld [vmem:[%s5 + $0x4] sm:$0xf]
    %v8283 = vld [vmem:[%s5 + $0x8] sm:$0xf]
    %v8284 = vld [vmem:[%s5 + $0xc] sm:$0xf]
    %v8285 = vld [vmem:[%s5 + $0x10] sm:$0xf]
    %v8286 = vld [vmem:[%s5 + $0x14] sm:$0xf]
    %v8287 = vld [vmem:[%s5 + $0x18] sm:$0xf]
    %v8288 = vld [vmem:[%s5 + $0x1c] sm:$0xf]
    %v8289 = vld [vmem:[#allocation6 + $0x1] sm:$0xff]
    %v8290 = vld [vmem:[#allocation6 + $0x9] sm:$0xff]
    %v8291 = vld [vmem:[#allocation6 + $0x11] sm:$0xff]
    %v8292 = vld [vmem:[#allocation6 + $0x19] sm:$0xff]
    %v8293 = vld [vmem:[#allocation6 + $0x21] sm:$0xff]
    %v8294 = vld [vmem:[#allocation6 + $0x29] sm:$0xff]
    %v8295 = vld [vmem:[#allocation6 + $0x31] sm:$0xff]
    %v8296 = vld [vmem:[#allocation6 + $0x39] sm:$0x3]
    %v8297 = vpack.c.bf16 %v8290, %v8289
    %v8298 = vpack.c.bf16 %v8292, %v8291
    %v8299 = vpack.c.bf16 %v8294, %v8293
    %v8300 = vpack.c.bf16 %v8296, %v8295
    %s8301 = scalar_lea.vmem %s5, 32
    %v8302 = vld [vmem:[%s8301] sm:$0xf]
    %v8303 = vld [vmem:[%s8301 + $0x4] sm:$0xf]
    %v8304 = vld [vmem:[%s8301 + $0x8] sm:$0xf]
    %v8305 = vld [vmem:[%s8301 + $0xc] sm:$0xf]
    %v8306 = vld [vmem:[%s8301 + $0x10] sm:$0xf]
    %v8307 = vld [vmem:[%s8301 + $0x14] sm:$0xf]
    %v8308 = vld [vmem:[%s8301 + $0x18] sm:$0xf]
    %v8309 = vld [vmem:[%s8301 + $0x1c] sm:$0xf]
    %v8318 = vunpack.c.l.b16 %v8302
    %v8319 = vunpack.c.l.b16 %v8303
    %v8320 = vunpack.c.l.b16 %v8304
    %v8321 = vunpack.c.l.b16 %v8305
    %v8322 = vunpack.c.l.b16 %v8306
    %v8323 = vunpack.c.l.b16 %v8307
    %v8324 = vunpack.c.l.b16 %v8308
    %v8325 = vunpack.c.l.b16 %v8309
    %v8326 = vpack.c.b16 %v8319, %v8318
    %v8327 = vpack.c.b16 %v8321, %v8320
    %v8328 = vpack.c.b16 %v8323, %v8322
    %v8329 = vpack.c.b16 %v8325, %v8324
    %v8335 = vsel %vm8074, %v8297, 0
    %v8338 = vsel %vm8074, %v8298, 0
    %v8341 = vsel %vm8074, %v8299, 0
    %v8344 = vsel %vm8074, %v8300, 0
    %8346 = vmatpush.bf16.msra.mxu0 0
    %8347 = vmatpush.bf16.msra.mxu0 0
    %8348 = vmatpush.bf16.msra.mxu0 0
    %8349 = vmatpush.bf16.msra.mxu0 0
    %8350 = vmatpush.bf16.msra.mxu0 %v8329
    %8351 = vmatpush.bf16.msra.mxu0 %v8328
    %8352 = vmatpush.bf16.msra.mxu0 %v8327
    %8353 = vmatpush.bf16.msra.mxu0 %v8326
    %8354 = vmatmul.bf16.gmra.mxu0 %v8335
    %v8355 = vpop.f32.mrf.mxu0
    %v8356 = vadd.f32 0.0, %v8355
    %v8357 = vpop.f32.mrf.mxu0
    %v8358 = vadd.f32 0.0, %v8357
    %8359 = vmatmul.bf16.gmra.mxu0 %v8338
    %v8360 = vpop.f32.mrf.mxu0
    %v8361 = vadd.f32 0.0, %v8360
    %v8362 = vpop.f32.mrf.mxu0
    %v8363 = vadd.f32 0.0, %v8362
    %8364 = vmatmul.bf16.gmra.mxu0 %v8341
    %v8365 = vpop.f32.mrf.mxu0
    %v8366 = vadd.f32 0.0, %v8365
    %v8367 = vpop.f32.mrf.mxu0
    %v8368 = vadd.f32 0.0, %v8367
    %8369 = vmatmul.bf16.gmra.mxu0 %v8344
    %v8370 = vpop.f32.mrf.mxu0
    %v8371 = vadd.f32 0.0, %v8370
    %v8372 = vpop.f32.mrf.mxu0
    %v8373 = vadd.f32 0.0, %v8372
    %8374 = vdwg.mxu0
    %v8383 = vunpack.c.l.b16 %v8281
    %v8384 = vunpack.c.l.b16 %v8282
    %v8385 = vunpack.c.l.b16 %v8283
    %v8386 = vunpack.c.l.b16 %v8284
    %v8387 = vunpack.c.l.b16 %v8285
    %v8388 = vunpack.c.l.b16 %v8286
    %v8389 = vunpack.c.l.b16 %v8287
    %v8390 = vunpack.c.l.b16 %v8288
    %v8391 = vpack.c.b16 %v8384, %v8383
    %v8392 = vpack.c.b16 %v8386, %v8385
    %v8393 = vpack.c.b16 %v8388, %v8387
    %v8394 = vpack.c.b16 %v8390, %v8389
    %v8400 = vsel %vm8074, %v8277, 0
    %v8403 = vsel %vm8074, %v8278, 0
    %v8406 = vsel %vm8074, %v8279, 0
    %v8409 = vsel %vm8074, %v8280, 0
    %8411 = vmatpush.bf16.msra.mxu0 0
    %8412 = vmatpush.bf16.msra.mxu0 0
    %8413 = vmatpush.bf16.msra.mxu0 0
    %8414 = vmatpush.bf16.msra.mxu0 0
    %8415 = vmatpush.bf16.msra.mxu0 %v8394
    %8416 = vmatpush.bf16.msra.mxu0 %v8393
    %8417 = vmatpush.bf16.msra.mxu0 %v8392
    %8418 = vmatpush.bf16.msra.mxu0 %v8391
    %8419 = vmatmul.bf16.gmra.mxu0 %v8400
    %v8420 = vpop.f32.mrf.mxu0
    %v8421 = vadd.f32 %v8356, %v8420
    %v8422 = vpop.f32.mrf.mxu0
    %v8423 = vadd.f32 %v8358, %v8422
    %8424 = vmatmul.bf16.gmra.mxu0 %v8403
    %v8425 = vpop.f32.mrf.mxu0
    %v8426 = vadd.f32 %v8361, %v8425
    %v8427 = vpop.f32.mrf.mxu0
    %v8428 = vadd.f32 %v8363, %v8427
    %8429 = vmatmul.bf16.gmra.mxu0 %v8406
    %v8430 = vpop.f32.mrf.mxu0
    %v8431 = vadd.f32 %v8366, %v8430
    %v8432 = vpop.f32.mrf.mxu0
    %v8433 = vadd.f32 %v8368, %v8432
    %8434 = vmatmul.bf16.gmra.mxu0 %v8409
    %v8435 = vpop.f32.mrf.mxu0
    %v8436 = vadd.f32 %v8371, %v8435
    %v8437 = vpop.f32.mrf.mxu0
    %v8438 = vadd.f32 %v8373, %v8437
    %8439 = vdwg.mxu0
    %v8440 = vld [vmem:[#allocation6 + $0x2] sm:$0xff]
    %v8441 = vld [vmem:[#allocation6 + $0xa] sm:$0xff]
    %v8442 = vld [vmem:[#allocation6 + $0x12] sm:$0xff]
    %v8443 = vld [vmem:[#allocation6 + $0x1a] sm:$0xff]
    %v8444 = vld [vmem:[#allocation6 + $0x22] sm:$0xff]
    %v8445 = vld [vmem:[#allocation6 + $0x2a] sm:$0xff]
    %v8446 = vld [vmem:[#allocation6 + $0x32] sm:$0xff]
    %v8447 = vld [vmem:[#allocation6 + $0x3a] sm:$0x3]
    %v8448 = vpack.c.bf16 %v8441, %v8440
    %v8449 = vpack.c.bf16 %v8443, %v8442
    %v8450 = vpack.c.bf16 %v8445, %v8444
    %v8451 = vpack.c.bf16 %v8447, %v8446
    %s8452 = scalar_lea.vmem %s5, 64
    %v8453 = vld [vmem:[%s8452] sm:$0xf]
    %v8454 = vld [vmem:[%s8452 + $0x4] sm:$0xf]
    %v8455 = vld [vmem:[%s8452 + $0x8] sm:$0xf]
    %v8456 = vld [vmem:[%s8452 + $0xc] sm:$0xf]
    %v8457 = vld [vmem:[%s8452 + $0x10] sm:$0xf]
    %v8458 = vld [vmem:[%s8452 + $0x14] sm:$0xf]
    %v8459 = vld [vmem:[%s8452 + $0x18] sm:$0xf]
    %v8460 = vld [vmem:[%s8452 + $0x1c] sm:$0xf]
    %v8469 = vunpack.c.l.b16 %v8453
    %v8470 = vunpack.c.l.b16 %v8454
    %v8471 = vunpack.c.l.b16 %v8455
    %v8472 = vunpack.c.l.b16 %v8456
    %v8473 = vunpack.c.l.b16 %v8457
    %v8474 = vunpack.c.l.b16 %v8458
    %v8475 = vunpack.c.l.b16 %v8459
    %v8476 = vunpack.c.l.b16 %v8460
    %v8477 = vpack.c.b16 %v8470, %v8469
    %v8478 = vpack.c.b16 %v8472, %v8471
    %v8479 = vpack.c.b16 %v8474, %v8473
    %v8480 = vpack.c.b16 %v8476, %v8475
    %v8486 = vsel %vm8074, %v8448, 0
    %v8489 = vsel %vm8074, %v8449, 0
    %v8492 = vsel %vm8074, %v8450, 0
    %v8495 = vsel %vm8074, %v8451, 0
    %8497 = vmatpush.bf16.msra.mxu0 0
    %8498 = vmatpush.bf16.msra.mxu0 0
    %8499 = vmatpush.bf16.msra.mxu0 0
    %8500 = vmatpush.bf16.msra.mxu0 0
    %8501 = vmatpush.bf16.msra.mxu0 %v8480
    %8502 = vmatpush.bf16.msra.mxu0 %v8479
    %8503 = vmatpush.bf16.msra.mxu0 %v8478
    %8504 = vmatpush.bf16.msra.mxu0 %v8477
    %8505 = vmatmul.bf16.gmra.mxu0 %v8486
    %v8506 = vpop.f32.mrf.mxu0
    %v8507 = vadd.f32 0.0, %v8506
    %v8508 = vpop.f32.mrf.mxu0
    %v8509 = vadd.f32 0.0, %v8508
    %8510 = vmatmul.bf16.gmra.mxu0 %v8489
    %v8511 = vpop.f32.mrf.mxu0
    %v8512 = vadd.f32 0.0, %v8511
    %v8513 = vpop.f32.mrf.mxu0
    %v8514 = vadd.f32 0.0, %v8513
    %8515 = vmatmul.bf16.gmra.mxu0 %v8492
    %v8516 = vpop.f32.mrf.mxu0
    %v8517 = vadd.f32 0.0, %v8516
    %v8518 = vpop.f32.mrf.mxu0
    %v8519 = vadd.f32 0.0, %v8518
    %8520 = vmatmul.bf16.gmra.mxu0 %v8495
    %v8521 = vpop.f32.mrf.mxu0
    %v8522 = vadd.f32 0.0, %v8521
    %v8523 = vpop.f32.mrf.mxu0
    %v8524 = vadd.f32 0.0, %v8523
    %8525 = vdwg.mxu0
    %v8526 = vadd.f32 %v8421, %v8507
    %v8527 = vadd.f32 %v8423, %v8509
    %v8528 = vadd.f32 %v8426, %v8512
    %v8529 = vadd.f32 %v8428, %v8514
    %v8530 = vadd.f32 %v8431, %v8517
    %v8531 = vadd.f32 %v8433, %v8519
    %v8532 = vadd.f32 %v8436, %v8522
    %v8533 = vadd.f32 %v8438, %v8524
    %v8534 = vld [vmem:[#allocation6 + $0x6] sm:$0xff]
    %v8535 = vld [vmem:[#allocation6 + $0xe] sm:$0xff]
    %v8536 = vld [vmem:[#allocation6 + $0x16] sm:$0xff]
    %v8537 = vld [vmem:[#allocation6 + $0x1e] sm:$0xff]
    %v8538 = vld [vmem:[#allocation6 + $0x26] sm:$0xff]
    %v8539 = vld [vmem:[#allocation6 + $0x2e] sm:$0xff]
    %v8540 = vld [vmem:[#allocation6 + $0x36] sm:$0xff]
    %v8541 = vld [vmem:[#allocation6 + $0x3e] sm:$0x3]
    %v8542 = vpack.c.bf16 %v8535, %v8534
    %v8543 = vpack.c.bf16 %v8537, %v8536
    %v8544 = vpack.c.bf16 %v8539, %v8538
    %v8545 = vpack.c.bf16 %v8541, %v8540
    %s8546 = scalar_lea.vmem %s5, 96
    %v8547 = vld [vmem:[%s8546] sm:$0xf]
    %v8548 = vld [vmem:[%s8546 + $0x4] sm:$0xf]
    %v8549 = vld [vmem:[%s8546 + $0x8] sm:$0xf]
    %v8550 = vld [vmem:[%s8546 + $0xc] sm:$0xf]
    %v8551 = vld [vmem:[%s8546 + $0x10] sm:$0xf]
    %v8552 = vld [vmem:[%s8546 + $0x14] sm:$0xf]
    %v8553 = vld [vmem:[%s8546 + $0x18] sm:$0xf]
    %v8554 = vld [vmem:[%s8546 + $0x1c] sm:$0xf]
    %v8563 = vunpack.c.l.b16 %v8547
    %v8564 = vunpack.c.l.b16 %v8548
    %v8565 = vunpack.c.l.b16 %v8549
    %v8566 = vunpack.c.l.b16 %v8550
    %v8567 = vunpack.c.l.b16 %v8551
    %v8568 = vunpack.c.l.b16 %v8552
    %v8569 = vunpack.c.l.b16 %v8553
    %v8570 = vunpack.c.l.b16 %v8554
    %v8571 = vpack.c.b16 %v8564, %v8563
    %v8572 = vpack.c.b16 %v8566, %v8565
    %v8573 = vpack.c.b16 %v8568, %v8567
    %v8574 = vpack.c.b16 %v8570, %v8569
    %v8580 = vsel %vm8074, %v8542, 0
    %v8583 = vsel %vm8074, %v8543, 0
    %v8586 = vsel %vm8074, %v8544, 0
    %v8589 = vsel %vm8074, %v8545, 0
    %8591 = vmatpush.bf16.msra.mxu0 0
    %8592 = vmatpush.bf16.msra.mxu0 0
    %8593 = vmatpush.bf16.msra.mxu0 0
    %8594 = vmatpush.bf16.msra.mxu0 0
    %8595 = vmatpush.bf16.msra.mxu0 %v8574
    %8596 = vmatpush.bf16.msra.mxu0 %v8573
    %8597 = vmatpush.bf16.msra.mxu0 %v8572
    %8598 = vmatpush.bf16.msra.mxu0 %v8571
    %8599 = vmatmul.bf16.gmra.mxu0 %v8580
    %v8600 = vpop.f32.mrf.mxu0
    %v8601 = vadd.f32 0.0, %v8600
    %v8602 = vpop.f32.mrf.mxu0
    %v8603 = vadd.f32 0.0, %v8602
    %8604 = vmatmul.bf16.gmra.mxu0 %v8583
    %v8605 = vpop.f32.mrf.mxu0
    %v8606 = vadd.f32 0.0, %v8605
    %v8607 = vpop.f32.mrf.mxu0
    %v8608 = vadd.f32 0.0, %v8607
    %8609 = vmatmul.bf16.gmra.mxu0 %v8586
    %v8610 = vpop.f32.mrf.mxu0
    %v8611 = vadd.f32 0.0, %v8610
    %v8612 = vpop.f32.mrf.mxu0
    %v8613 = vadd.f32 0.0, %v8612
    %8614 = vmatmul.bf16.gmra.mxu0 %v8589
    %v8615 = vpop.f32.mrf.mxu0
    %v8616 = vadd.f32 0.0, %v8615
    %v8617 = vpop.f32.mrf.mxu0
    %v8618 = vadd.f32 0.0, %v8617
    %8619 = vdwg.mxu0
    %v8620 = vadd.f32 %v8526, %v8601
    %v8621 = vadd.f32 %v8527, %v8603
    %v8622 = vadd.f32 %v8528, %v8606
    %v8623 = vadd.f32 %v8529, %v8608
    %v8624 = vadd.f32 %v8530, %v8611
    %v8625 = vadd.f32 %v8531, %v8613
    %v8626 = vadd.f32 %v8532, %v8616
    %v8627 = vadd.f32 %v8533, %v8618
    %v8628 = vld [vmem:[#allocation6 + $0x7] sm:$0xff]
    %v8629 = vld [vmem:[#allocation6 + $0xf] sm:$0xff]
    %v8630 = vld [vmem:[#allocation6 + $0x17] sm:$0xff]
    %v8631 = vld [vmem:[#allocation6 + $0x1f] sm:$0xff]
    %v8632 = vld [vmem:[#allocation6 + $0x27] sm:$0xff]
    %v8633 = vld [vmem:[#allocation6 + $0x2f] sm:$0xff]
    %v8634 = vld [vmem:[#allocation6 + $0x37] sm:$0xff]
    %v8635 = vld [vmem:[#allocation6 + $0x3f] sm:$0x3]
    %v8636 = vpack.c.bf16 %v8629, %v8628
    %v8637 = vpack.c.bf16 %v8631, %v8630
    %v8638 = vpack.c.bf16 %v8633, %v8632
    %v8639 = vpack.c.bf16 %v8635, %v8634
    %s8640 = scalar_lea.vmem %s5, 128
    %v8641 = vld [vmem:[%s8640] sm:$0xf]
    %v8642 = vld [vmem:[%s8640 + $0x4] sm:$0xf]
    %v8643 = vld [vmem:[%s8640 + $0x8] sm:$0xf]
    %v8644 = vld [vmem:[%s8640 + $0xc] sm:$0xf]
    %v8645 = vld [vmem:[%s8640 + $0x10] sm:$0xf]
    %v8646 = vld [vmem:[%s8640 + $0x14] sm:$0xf]
    %v8647 = vld [vmem:[%s8640 + $0x18] sm:$0xf]
    %v8648 = vld [vmem:[%s8640 + $0x1c] sm:$0xf]
    %v8657 = vunpack.c.l.b16 %v8641
    %v8658 = vunpack.c.l.b16 %v8642
    %v8659 = vunpack.c.l.b16 %v8643
    %v8660 = vunpack.c.l.b16 %v8644
    %v8661 = vunpack.c.l.b16 %v8645
    %v8662 = vunpack.c.l.b16 %v8646
    %v8663 = vunpack.c.l.b16 %v8647
    %v8664 = vunpack.c.l.b16 %v8648
    %v8665 = vpack.c.b16 %v8658, %v8657
    %v8666 = vpack.c.b16 %v8660, %v8659
    %v8667 = vpack.c.b16 %v8662, %v8661
    %v8668 = vpack.c.b16 %v8664, %v8663
    %v8674 = vsel %vm8074, %v8636, 0
    %v8677 = vsel %vm8074, %v8637, 0
    %v8680 = vsel %vm8074, %v8638, 0
    %v8683 = vsel %vm8074, %v8639, 0
    %8685 = vmatpush.bf16.msra.mxu0 0
    %8686 = vmatpush.bf16.msra.mxu0 0
    %8687 = vmatpush.bf16.msra.mxu0 0
    %8688 = vmatpush.bf16.msra.mxu0 0
    %8689 = vmatpush.bf16.msra.mxu0 %v8668
    %8690 = vmatpush.bf16.msra.mxu0 %v8667
    %8691 = vmatpush.bf16.msra.mxu0 %v8666
    %8692 = vmatpush.bf16.msra.mxu0 %v8665
    %8693 = vmatmul.bf16.gmra.mxu0 %v8674
    %v8694 = vpop.f32.mrf.mxu0
    %v8695 = vadd.f32 0.0, %v8694
    %v8696 = vpop.f32.mrf.mxu0
    %v8697 = vadd.f32 0.0, %v8696
    %8698 = vmatmul.bf16.gmra.mxu0 %v8677
    %v8699 = vpop.f32.mrf.mxu0
    %v8700 = vadd.f32 0.0, %v8699
    %v8701 = vpop.f32.mrf.mxu0
    %v8702 = vadd.f32 0.0, %v8701
    %8703 = vmatmul.bf16.gmra.mxu0 %v8680
    %v8704 = vpop.f32.mrf.mxu0
    %v8705 = vadd.f32 0.0, %v8704
    %v8706 = vpop.f32.mrf.mxu0
    %v8707 = vadd.f32 0.0, %v8706
    %8708 = vmatmul.bf16.gmra.mxu0 %v8683
    %v8709 = vpop.f32.mrf.mxu0
    %v8710 = vadd.f32 0.0, %v8709
    %v8711 = vpop.f32.mrf.mxu0
    %v8712 = vadd.f32 0.0, %v8711
    %8713 = vdwg.mxu0
    %v8714 = vadd.f32 %v8620, %v8695
    %v8715 = vadd.f32 %v8621, %v8697
    %v8716 = vadd.f32 %v8622, %v8700
    %v8717 = vadd.f32 %v8623, %v8702
    %v8718 = vadd.f32 %v8624, %v8705
    %v8719 = vadd.f32 %v8625, %v8707
    %v8720 = vadd.f32 %v8626, %v8710
    %v8721 = vadd.f32 %v8627, %v8712
    %v8722 = vld [vmem:[#allocation6 + $0x8] sm:$0xff]
    %v8723 = vld [vmem:[#allocation6 + $0x10] sm:$0xff]
    %v8724 = vld [vmem:[#allocation6 + $0x18] sm:$0xff]
    %v8725 = vld [vmem:[#allocation6 + $0x20] sm:$0xff]
    %v8726 = vld [vmem:[#allocation6 + $0x28] sm:$0xff]
    %v8727 = vld [vmem:[#allocation6 + $0x30] sm:$0xff]
    %v8728 = vld [vmem:[#allocation6 + $0x38] sm:$0xff]
    %v8729 = vld [vmem:[#allocation6 + $0x40] sm:$0x3]
    %v8730 = vpack.c.bf16 %v8723, %v8722
    %v8731 = vpack.c.bf16 %v8725, %v8724
    %v8732 = vpack.c.bf16 %v8727, %v8726
    %v8733 = vpack.c.bf16 %v8729, %v8728
    %s8734 = scalar_lea.vmem %s5, 160
    %v8735 = vld [vmem:[%s8734] sm:$0xf]
    %v8736 = vld [vmem:[%s8734 + $0x4] sm:$0xf]
    %v8737 = vld [vmem:[%s8734 + $0x8] sm:$0xf]
    %v8738 = vld [vmem:[%s8734 + $0xc] sm:$0xf]
    %v8739 = vld [vmem:[%s8734 + $0x10] sm:$0xf]
    %v8740 = vld [vmem:[%s8734 + $0x14] sm:$0xf]
    %v8741 = vld [vmem:[%s8734 + $0x18] sm:$0xf]
    %v8742 = vld [vmem:[%s8734 + $0x1c] sm:$0xf]
    %v8751 = vunpack.c.l.b16 %v8735
    %v8752 = vunpack.c.l.b16 %v8736
    %v8753 = vunpack.c.l.b16 %v8737
    %v8754 = vunpack.c.l.b16 %v8738
    %v8755 = vunpack.c.l.b16 %v8739
    %v8756 = vunpack.c.l.b16 %v8740
    %v8757 = vunpack.c.l.b16 %v8741
    %v8758 = vunpack.c.l.b16 %v8742
    %v8759 = vpack.c.b16 %v8752, %v8751
    %v8760 = vpack.c.b16 %v8754, %v8753
    %v8761 = vpack.c.b16 %v8756, %v8755
    %v8762 = vpack.c.b16 %v8758, %v8757
    %v8768 = vsel %vm8074, %v8730, 0
    %v8771 = vsel %vm8074, %v8731, 0
    %v8774 = vsel %vm8074, %v8732, 0
    %v8777 = vsel %vm8074, %v8733, 0
    %8779 = vmatpush.bf16.msra.mxu0 0
    %8780 = vmatpush.bf16.msra.mxu0 0
    %8781 = vmatpush.bf16.msra.mxu0 0
    %8782 = vmatpush.bf16.msra.mxu0 0
    %8783 = vmatpush.bf16.msra.mxu0 %v8762
    %8784 = vmatpush.bf16.msra.mxu0 %v8761
    %8785 = vmatpush.bf16.msra.mxu0 %v8760
    %8786 = vmatpush.bf16.msra.mxu0 %v8759
    %8787 = vmatmul.bf16.gmra.mxu0 %v8768
    %v8788 = vpop.f32.mrf.mxu0
    %v8789 = vadd.f32 0.0, %v8788
    %v8790 = vpop.f32.mrf.mxu0
    %v8791 = vadd.f32 0.0, %v8790
    %8792 = vmatmul.bf16.gmra.mxu0 %v8771
    %v8793 = vpop.f32.mrf.mxu0
    %v8794 = vadd.f32 0.0, %v8793
    %v8795 = vpop.f32.mrf.mxu0
    %v8796 = vadd.f32 0.0, %v8795
    %8797 = vmatmul.bf16.gmra.mxu0 %v8774
    %v8798 = vpop.f32.mrf.mxu0
    %v8799 = vadd.f32 0.0, %v8798
    %v8800 = vpop.f32.mrf.mxu0
    %v8801 = vadd.f32 0.0, %v8800
    %8802 = vmatmul.bf16.gmra.mxu0 %v8777
    %v8803 = vpop.f32.mrf.mxu0
    %v8804 = vadd.f32 0.0, %v8803
    %v8805 = vpop.f32.mrf.mxu0
    %v8806 = vadd.f32 0.0, %v8805
    %8807 = vdwg.mxu0
    %v8808 = vadd.f32 %v8714, %v8789
    %v8809 = vadd.f32 %v8715, %v8791
    %v8810 = vadd.f32 %v8716, %v8794
    %v8811 = vadd.f32 %v8717, %v8796
    %v8812 = vadd.f32 %v8718, %v8799
    %v8813 = vadd.f32 %v8719, %v8801
    %v8814 = vadd.f32 %v8720, %v8804
    %v8815 = vadd.f32 %v8721, %v8806
    %v8816 = vld [vmem:[#allocation6 + $0xc] sm:$0xff]
    %v8817 = vld [vmem:[#allocation6 + $0x14] sm:$0xff]
    %v8818 = vld [vmem:[#allocation6 + $0x1c] sm:$0xff]
    %v8819 = vld [vmem:[#allocation6 + $0x24] sm:$0xff]
    %v8820 = vld [vmem:[#allocation6 + $0x2c] sm:$0xff]
    %v8821 = vld [vmem:[#allocation6 + $0x34] sm:$0xff]
    %v8822 = vld [vmem:[#allocation6 + $0x3c] sm:$0xff]
    %v8823 = vld [vmem:[#allocation6 + $0x44] sm:$0x3]
    %v8824 = vpack.c.bf16 %v8817, %v8816
    %v8825 = vpack.c.bf16 %v8819, %v8818
    %v8826 = vpack.c.bf16 %v8821, %v8820
    %v8827 = vpack.c.bf16 %v8823, %v8822
    %s8828 = scalar_lea.vmem %s5, 192
    %v8829 = vld [vmem:[%s8828] sm:$0xf]
    %v8830 = vld [vmem:[%s8828 + $0x4] sm:$0xf]
    %v8831 = vld [vmem:[%s8828 + $0x8] sm:$0xf]
    %v8832 = vld [vmem:[%s8828 + $0xc] sm:$0xf]
    %v8833 = vld [vmem:[%s8828 + $0x10] sm:$0xf]
    %v8834 = vld [vmem:[%s8828 + $0x14] sm:$0xf]
    %v8835 = vld [vmem:[%s8828 + $0x18] sm:$0xf]
    %v8836 = vld [vmem:[%s8828 + $0x1c] sm:$0xf]
    %v8845 = vunpack.c.l.b16 %v8829
    %v8846 = vunpack.c.l.b16 %v8830
    %v8847 = vunpack.c.l.b16 %v8831
    %v8848 = vunpack.c.l.b16 %v8832
    %v8849 = vunpack.c.l.b16 %v8833
    %v8850 = vunpack.c.l.b16 %v8834
    %v8851 = vunpack.c.l.b16 %v8835
    %v8852 = vunpack.c.l.b16 %v8836
    %v8853 = vpack.c.b16 %v8846, %v8845
    %v8854 = vpack.c.b16 %v8848, %v8847
    %v8855 = vpack.c.b16 %v8850, %v8849
    %v8856 = vpack.c.b16 %v8852, %v8851
    %v8862 = vsel %vm8074, %v8824, 0
    %v8865 = vsel %vm8074, %v8825, 0
    %v8868 = vsel %vm8074, %v8826, 0
    %v8871 = vsel %vm8074, %v8827, 0
    %8873 = vmatpush.bf16.msra.mxu0 0
    %8874 = vmatpush.bf16.msra.mxu0 0
    %8875 = vmatpush.bf16.msra.mxu0 0
    %8876 = vmatpush.bf16.msra.mxu0 0
    %8877 = vmatpush.bf16.msra.mxu0 %v8856
    %8878 = vmatpush.bf16.msra.mxu0 %v8855
    %8879 = vmatpush.bf16.msra.mxu0 %v8854
    %8880 = vmatpush.bf16.msra.mxu0 %v8853
    %8881 = vmatmul.bf16.gmra.mxu0 %v8862
    %v8882 = vpop.f32.mrf.mxu0
    %v8883 = vadd.f32 0.0, %v8882
    %v8884 = vpop.f32.mrf.mxu0
    %v8885 = vadd.f32 0.0, %v8884
    %8886 = vmatmul.bf16.gmra.mxu0 %v8865
    %v8887 = vpop.f32.mrf.mxu0
    %v8888 = vadd.f32 0.0, %v8887
    %v8889 = vpop.f32.mrf.mxu0
    %v8890 = vadd.f32 0.0, %v8889
    %8891 = vmatmul.bf16.gmra.mxu0 %v8868
    %v8892 = vpop.f32.mrf.mxu0
    %v8893 = vadd.f32 0.0, %v8892
    %v8894 = vpop.f32.mrf.mxu0
    %v8895 = vadd.f32 0.0, %v8894
    %8896 = vmatmul.bf16.gmra.mxu0 %v8871
    %v8897 = vpop.f32.mrf.mxu0
    %v8898 = vadd.f32 0.0, %v8897
    %v8899 = vpop.f32.mrf.mxu0
    %v8900 = vadd.f32 0.0, %v8899
    %8901 = vdwg.mxu0
    %v8902 = vadd.f32 %v8808, %v8883
    %v8903 = vadd.f32 %v8809, %v8885
    %v8904 = vadd.f32 %v8810, %v8888
    %v8905 = vadd.f32 %v8811, %v8890
    %v8906 = vadd.f32 %v8812, %v8893
    %v8907 = vadd.f32 %v8813, %v8895
    %v8908 = vadd.f32 %v8814, %v8898
    %v8909 = vadd.f32 %v8815, %v8900
    %v8910 = vld [vmem:[#allocation6 + $0xd] sm:$0xff]
    %v8911 = vld [vmem:[#allocation6 + $0x15] sm:$0xff]
    %v8912 = vld [vmem:[#allocation6 + $0x1d] sm:$0xff]
    %v8913 = vld [vmem:[#allocation6 + $0x25] sm:$0xff]
    %v8914 = vld [vmem:[#allocation6 + $0x2d] sm:$0xff]
    %v8915 = vld [vmem:[#allocation6 + $0x35] sm:$0xff]
    %v8916 = vld [vmem:[#allocation6 + $0x3d] sm:$0xff]
    %v8917 = vld [vmem:[#allocation6 + $0x45] sm:$0x3]
    %v8918 = vpack.c.bf16 %v8911, %v8910
    %v8919 = vpack.c.bf16 %v8913, %v8912
    %v8920 = vpack.c.bf16 %v8915, %v8914
    %v8921 = vpack.c.bf16 %v8917, %v8916
    %s8922 = scalar_lea.vmem %s5, 224
    %v8923 = vld [vmem:[%s8922] sm:$0xf]
    %v8924 = vld [vmem:[%s8922 + $0x4] sm:$0xf]
    %v8925 = vld [vmem:[%s8922 + $0x8] sm:$0xf]
    %v8926 = vld [vmem:[%s8922 + $0xc] sm:$0xf]
    %v8927 = vld [vmem:[%s8922 + $0x10] sm:$0xf]
    %v8928 = vld [vmem:[%s8922 + $0x14] sm:$0xf]
    %v8929 = vld [vmem:[%s8922 + $0x18] sm:$0xf]
    %v8930 = vld [vmem:[%s8922 + $0x1c] sm:$0xf]
    %v8939 = vunpack.c.l.b16 %v8923
    %v8940 = vunpack.c.l.b16 %v8924
    %v8941 = vunpack.c.l.b16 %v8925
    %v8942 = vunpack.c.l.b16 %v8926
    %v8943 = vunpack.c.l.b16 %v8927
    %v8944 = vunpack.c.l.b16 %v8928
    %v8945 = vunpack.c.l.b16 %v8929
    %v8946 = vunpack.c.l.b16 %v8930
    %v8947 = vpack.c.b16 %v8940, %v8939
    %v8948 = vpack.c.b16 %v8942, %v8941
    %v8949 = vpack.c.b16 %v8944, %v8943
    %v8950 = vpack.c.b16 %v8946, %v8945
    %v8956 = vsel %vm8074, %v8918, 0
    %v8959 = vsel %vm8074, %v8919, 0
    %v8962 = vsel %vm8074, %v8920, 0
    %v8965 = vsel %vm8074, %v8921, 0
    %8967 = vmatpush.bf16.msra.mxu0 0
    %8968 = vmatpush.bf16.msra.mxu0 0
    %8969 = vmatpush.bf16.msra.mxu0 0
    %8970 = vmatpush.bf16.msra.mxu0 0
    %8971 = vmatpush.bf16.msra.mxu0 %v8950
    %8972 = vmatpush.bf16.msra.mxu0 %v8949
    %8973 = vmatpush.bf16.msra.mxu0 %v8948
    %8974 = vmatpush.bf16.msra.mxu0 %v8947
    %8975 = vmatmul.bf16.gmra.mxu0 %v8956
    %v8976 = vpop.f32.mrf.mxu0
    %v8977 = vadd.f32 0.0, %v8976
    %v8978 = vpop.f32.mrf.mxu0
    %v8979 = vadd.f32 0.0, %v8978
    %8980 = vmatmul.bf16.gmra.mxu0 %v8959
    %v8981 = vpop.f32.mrf.mxu0
    %v8982 = vadd.f32 0.0, %v8981
    %v8983 = vpop.f32.mrf.mxu0
    %v8984 = vadd.f32 0.0, %v8983
    %8985 = vmatmul.bf16.gmra.mxu0 %v8962
    %v8986 = vpop.f32.mrf.mxu0
    %v8987 = vadd.f32 0.0, %v8986
    %v8988 = vpop.f32.mrf.mxu0
    %v8989 = vadd.f32 0.0, %v8988
    %8990 = vmatmul.bf16.gmra.mxu0 %v8965
    %v8991 = vpop.f32.mrf.mxu0
    %v8992 = vadd.f32 0.0, %v8991
    %v8993 = vpop.f32.mrf.mxu0
    %v8994 = vadd.f32 0.0, %v8993
    %8995 = vdwg.mxu0
    %v8996 = vadd.f32 %v8902, %v8977
    %v8997 = vadd.f32 %v8903, %v8979
    %v8998 = vadd.f32 %v8904, %v8982
    %v8999 = vadd.f32 %v8905, %v8984
    %v9000 = vadd.f32 %v8906, %v8987
    %v9001 = vadd.f32 %v8907, %v8989
    %v9002 = vadd.f32 %v8908, %v8992
    %v9003 = vadd.f32 %v8909, %v8994
    %v9004 = vld [vmem:[#allocation6 + $0xe] sm:$0xff]
    %v9005 = vld [vmem:[#allocation6 + $0x16] sm:$0xff]
    %v9006 = vld [vmem:[#allocation6 + $0x1e] sm:$0xff]
    %v9007 = vld [vmem:[#allocation6 + $0x26] sm:$0xff]
    %v9008 = vld [vmem:[#allocation6 + $0x2e] sm:$0xff]
    %v9009 = vld [vmem:[#allocation6 + $0x36] sm:$0xff]
    %v9010 = vld [vmem:[#allocation6 + $0x3e] sm:$0xff]
    %v9011 = vld [vmem:[#allocation6 + $0x46] sm:$0x3]
    %v9012 = vpack.c.bf16 %v9005, %v9004
    %v9013 = vpack.c.bf16 %v9007, %v9006
    %v9014 = vpack.c.bf16 %v9009, %v9008
    %v9015 = vpack.c.bf16 %v9011, %v9010
    %s9016 = scalar_lea.vmem %s5, 256
    %v9017 = vld [vmem:[%s9016] sm:$0xf]
    %v9018 = vld [vmem:[%s9016 + $0x4] sm:$0xf]
    %v9019 = vld [vmem:[%s9016 + $0x8] sm:$0xf]
    %v9020 = vld [vmem:[%s9016 + $0xc] sm:$0xf]
    %v9021 = vld [vmem:[%s9016 + $0x10] sm:$0xf]
    %v9022 = vld [vmem:[%s9016 + $0x14] sm:$0xf]
    %v9023 = vld [vmem:[%s9016 + $0x18] sm:$0xf]
    %v9024 = vld [vmem:[%s9016 + $0x1c] sm:$0xf]
    %v9033 = vunpack.c.l.b16 %v9017
    %v9034 = vunpack.c.l.b16 %v9018
    %v9035 = vunpack.c.l.b16 %v9019
    %v9036 = vunpack.c.l.b16 %v9020
    %v9037 = vunpack.c.l.b16 %v9021
    %v9038 = vunpack.c.l.b16 %v9022
    %v9039 = vunpack.c.l.b16 %v9023
    %v9040 = vunpack.c.l.b16 %v9024
    %v9041 = vpack.c.b16 %v9034, %v9033
    %v9042 = vpack.c.b16 %v9036, %v9035
    %v9043 = vpack.c.b16 %v9038, %v9037
    %v9044 = vpack.c.b16 %v9040, %v9039
    %v9050 = vsel %vm8074, %v9012, 0
    %v9053 = vsel %vm8074, %v9013, 0
    %v9056 = vsel %vm8074, %v9014, 0
    %v9059 = vsel %vm8074, %v9015, 0
    %9061 = vmatpush.bf16.msra.mxu0 0
    %9062 = vmatpush.bf16.msra.mxu0 0
    %9063 = vmatpush.bf16.msra.mxu0 0
    %9064 = vmatpush.bf16.msra.mxu0 0
    %9065 = vmatpush.bf16.msra.mxu0 %v9044
    %9066 = vmatpush.bf16.msra.mxu0 %v9043
    %9067 = vmatpush.bf16.msra.mxu0 %v9042
    %9068 = vmatpush.bf16.msra.mxu0 %v9041
    %9069 = vmatmul.bf16.gmra.mxu0 %v9050
    %v9070 = vpop.f32.mrf.mxu0
    %v9071 = vadd.f32 0.0, %v9070
    %v9072 = vpop.f32.mrf.mxu0
    %v9073 = vadd.f32 0.0, %v9072
    %9074 = vmatmul.bf16.gmra.mxu0 %v9053
    %v9075 = vpop.f32.mrf.mxu0
    %v9076 = vadd.f32 0.0, %v9075
    %v9077 = vpop.f32.mrf.mxu0
    %v9078 = vadd.f32 0.0, %v9077
    %9079 = vmatmul.bf16.gmra.mxu0 %v9056
    %v9080 = vpop.f32.mrf.mxu0
    %v9081 = vadd.f32 0.0, %v9080
    %v9082 = vpop.f32.mrf.mxu0
    %v9083 = vadd.f32 0.0, %v9082
    %9084 = vmatmul.bf16.gmra.mxu0 %v9059
    %v9085 = vpop.f32.mrf.mxu0
    %v9086 = vadd.f32 0.0, %v9085
    %v9087 = vpop.f32.mrf.mxu0
    %v9088 = vadd.f32 0.0, %v9087
    %9089 = vdwg.mxu0
    %v9090 = vadd.f32 %v8996, %v9071
    %v9091 = vadd.f32 %v8997, %v9073
    %v9092 = vadd.f32 %v8998, %v9076
    %v9093 = vadd.f32 %v8999, %v9078
    %v9094 = vadd.f32 %v9000, %v9081
    %v9095 = vadd.f32 %v9001, %v9083
    %v9096 = vadd.f32 %v9002, %v9086
    %v9097 = vadd.f32 %v9003, %v9088
    %v9098 = vld [vmem:[%s6] sm:$0x1]
    %v9100 = vperm.slane %v9098, 0
    %v9102 = vadd.f32 %v9090, %v9100
    %v9103 = vadd.f32 %v9091, %v9100
    %v9104 = vadd.f32 %v9092, %v9100
    %v9105 = vadd.f32 %v9093, %v9100
    %v9106 = vadd.f32 %v9094, %v9100
    %v9107 = vadd.f32 %v9095, %v9100
    %v9108 = vadd.f32 %v9096, %v9100
    %v9109 = vadd.f32 %v9097, %v9100
    %v9110 = vmax.f32 %v9102, 0.0
    %v9111 = vmax.f32 %v9103, 0.0
    %v9112 = vmax.f32 %v9104, 0.0
    %v9113 = vmax.f32 %v9105, 0.0
    %v9114 = vmax.f32 %v9106, 0.0
    %v9115 = vmax.f32 %v9107, 0.0
    %v9116 = vmax.f32 %v9108, 0.0
    %v9117 = vmax.f32 %v9109, 0.0
    %9118 = vst [vmem:[#allocation4] sm:$0xff] %v9110
    %9119 = vst [vmem:[#allocation4 + $0x8] sm:$0xff] %v9111
    %9120 = vst [vmem:[#allocation4 + $0x10] sm:$0xff] %v9112
    %9121 = vst [vmem:[#allocation4 + $0x18] sm:$0xff] %v9113
    %9122 = vst [vmem:[#allocation4 + $0x20] sm:$0xff] %v9114
    %9123 = vst [vmem:[#allocation4 + $0x28] sm:$0xff] %v9115
    %9124 = vst [vmem:[#allocation4 + $0x30] sm:$0xff] %v9116
    %9125 = vst [vmem:[#allocation4 + $0x38] sm:$0x3] %v9117
    %v9126 = vld [vmem:[#allocation4] ss:$2 sm:$0xff]
    %s9127 = scalar_lea.vmem [#allocation4], 16
    %v9128 = vld [vmem:[%s9127] ss:$2 sm:$0xff]
    %s9129 = scalar_lea.vmem [#allocation4], 32
    %v9130 = vld [vmem:[%s9129] ss:$2 sm:$0xff]
    %s9131 = scalar_lea.vmem [#allocation4], 48
    %v9132 = vld [vmem:[%s9131] ss:$2 sm:$0x1f]
    %s9133 = scalar_lea.vmem [#allocation4], 1
    %v9134 = vld [vmem:[%s9133] ss:$2 sm:$0xff]
    %s9135 = scalar_lea.vmem [#allocation4], 17
    %v9136 = vld [vmem:[%s9135] ss:$2 sm:$0xff]
    %s9137 = scalar_lea.vmem [#allocation4], 33
    %v9138 = vld [vmem:[%s9137] ss:$2 sm:$0xff]
    %s9139 = scalar_lea.vmem [#allocation4], 49
    %v9140 = vld [vmem:[%s9139] ss:$2 sm:$0x1f]
    %v9141 = vmax.f32 %v9126, %v9134
    %v9142 = vmax.f32 %v9128, %v9136
    %v9143 = vmax.f32 %v9130, %v9138
    %v9144 = vmax.f32 %v9132, %v9140
    %v9149 = vrot.slane %v9141, 3
    %v9150 = vrot.slane %v9142, 3
    %v9151 = vsel %vm6353, %v9149, %v9150
    %v9152 = vrot.slane %v9143, 3
    %v9153 = vrot.slane %v9144, 3
    %v9154 = vsel %vm6353, %v9152, %v9153
    %v9158 = vmax.f32 %v9141, %v9151
    %v9159 = vmax.f32 %v9143, %v9154
    %v9160 = vmax.f32 %v9144, %v9153
    %v9162 = vrot.slane %v9158, 1
    %v9164 = vrot.slane %v9158, 6
    %v9166 = vrot.slane %v9158, 7
    %v9169 = vrot.slane %v9159, 1
    %v9171 = vrot.slane %v9160, 6
    %v9172 = vrot.slane %v9160, 7
    %v9173 = vrot.slane %v9169, 1
    %v9174 = vrot.slane %v9171, 1
    %v9175 = vrot.slane %v9172, 1
    %v9180 = vsel %vm6358, %v9158, %v9169
    %v9181 = vsel %vm6358, %v9162, %v9173
    %v9182 = vsel %vm6358, %v9164, %v9174
    %v9183 = vsel %vm6358, %v9166, %v9175
    %v9184 = vpack.c.bf16 %v9180, %v9180
    %v9185 = vpack.c.bf16 %v9181, %v9181
    %v9186 = vpack.c.bf16 %v9182, %v9182
    %v9187 = vpack.c.bf16 %v9183, %v9183
    %v9188 = vld [vmem:[#allocation7] sm:$0xff]
    %v9189 = vld [vmem:[#allocation7 + $0x8] sm:$0xff]
    %v9190 = vld [vmem:[#allocation7 + $0x10] sm:$0xff]
    %v9191 = vld [vmem:[#allocation7 + $0x18] sm:$0xff]
    %v9192 = vld [vmem:[#allocation7 + $0x20] sm:$0xff]
    %v9193 = vld [vmem:[#allocation7 + $0x28] sm:$0xff]
    %v9194 = vld [vmem:[#allocation7 + $0x30] sm:$0xff]
    %v9195 = vld [vmem:[#allocation7 + $0x38] sm:$0xff]
    %v9196 = vld [vmem:[#allocation7 + $0x40] sm:$0xff]
    %v9197 = vld [vmem:[#allocation7 + $0x48] sm:$0xff]
    %v9198 = vld [vmem:[#allocation7 + $0x50] sm:$0xff]
    %v9199 = vld [vmem:[#allocation7 + $0x58] sm:$0xff]
    %v9200 = vld [vmem:[#allocation7 + $0x60] sm:$0xff]
    %v9201 = vld [vmem:[#allocation7 + $0x68] sm:$0xff]
    %v9202 = vld [vmem:[#allocation7 + $0x70] sm:$0xff]
    %v9203 = vld [vmem:[#allocation7 + $0x78] sm:$0xff]
    %v9204 = vld [vmem:[#allocation7 + $0x80] sm:$0xff]
    %v9205 = vld [vmem:[#allocation7 + $0x88] sm:$0xff]
    %v9206 = vld [vmem:[#allocation7 + $0x90] sm:$0xff]
    %v9207 = vld [vmem:[#allocation7 + $0x98] sm:$0xff]
    %v9208 = vld [vmem:[#allocation7 + $0xa0] sm:$0xff]
    %v9209 = vld [vmem:[#allocation7 + $0xa8] sm:$0xff]
    %v9210 = vld [vmem:[#allocation7 + $0xb0] sm:$0xff]
    %v9211 = vld [vmem:[#allocation7 + $0xb8] sm:$0xff]
    %v9212 = vld [vmem:[#allocation7 + $0xc0] sm:$0xff]
    %v9213 = vld [vmem:[#allocation7 + $0xc8] sm:$0xff]
    %v9214 = vld [vmem:[#allocation7 + $0xd0] sm:$0xff]
    %v9215 = vld [vmem:[#allocation7 + $0xd8] sm:$0xff]
    %v9216 = vld [vmem:[#allocation7 + $0xe0] sm:$0xff]
    %v9217 = vld [vmem:[#allocation7 + $0xe8] sm:$0xff]
    %v9218 = vld [vmem:[#allocation7 + $0xf0] sm:$0xff]
    %v9219 = vld [vmem:[#allocation7 + $0xf8] sm:$0xff]
    %v9220 = vld [vmem:[#allocation7 + $0x100] sm:$0xff]
    %v9221 = vld [vmem:[#allocation7 + $0x108] sm:$0xff]
    %v9222 = vld [vmem:[#allocation7 + $0x110] sm:$0xff]
    %v9223 = vld [vmem:[#allocation7 + $0x118] sm:$0xff]
    %v9224 = vld [vmem:[#allocation7 + $0x120] sm:$0xff]
    %v9225 = vld [vmem:[#allocation7 + $0x128] sm:$0xff]
    %v9226 = vld [vmem:[#allocation7 + $0x130] sm:$0xff]
    %v9227 = vld [vmem:[#allocation7 + $0x138] sm:$0xff]
    %v9228 = vld [vmem:[#allocation7 + $0x140] sm:$0xff]
    %v9229 = vld [vmem:[#allocation7 + $0x148] sm:$0xff]
    %v9230 = vld [vmem:[#allocation7 + $0x150] sm:$0xff]
    %v9231 = vld [vmem:[#allocation7 + $0x158] sm:$0xff]
    %v9232 = vld [vmem:[#allocation7 + $0x160] sm:$0xff]
    %v9233 = vld [vmem:[#allocation7 + $0x168] sm:$0xff]
    %v9234 = vld [vmem:[#allocation7 + $0x170] sm:$0xff]
    %v9235 = vld [vmem:[#allocation7 + $0x178] sm:$0xff]
    %v9236 = vld [vmem:[#allocation7 + $0x180] sm:$0xff]
    %v9237 = vld [vmem:[#allocation7 + $0x188] sm:$0xff]
    %v9238 = vld [vmem:[#allocation7 + $0x190] sm:$0xff]
    %v9239 = vld [vmem:[#allocation7 + $0x198] sm:$0xff]
    %v9240 = vld [vmem:[#allocation7 + $0x1a0] sm:$0xff]
    %v9241 = vld [vmem:[#allocation7 + $0x1a8] sm:$0xff]
    %v9242 = vld [vmem:[#allocation7 + $0x1b0] sm:$0xff]
    %v9243 = vld [vmem:[#allocation7 + $0x1b8] sm:$0xff]
    %v9244 = vld [vmem:[#allocation7 + $0x1c0] sm:$0xff]
    %v9245 = vld [vmem:[#allocation7 + $0x1c8] sm:$0xff]
    %v9246 = vld [vmem:[#allocation7 + $0x1d0] sm:$0xff]
    %v9247 = vld [vmem:[#allocation7 + $0x1d8] sm:$0xff]
    %v9248 = vld [vmem:[#allocation7 + $0x1e0] sm:$0xff]
    %v9249 = vld [vmem:[#allocation7 + $0x1e8] sm:$0xff]
    %v9250 = vld [vmem:[#allocation7 + $0x1f0] sm:$0xff]
    %v9251 = vld [vmem:[#allocation7 + $0x1f8] sm:$0xff]
    %v9252 = vld [vmem:[#allocation7 + $0x200] sm:$0xff]
    %v9253 = vld [vmem:[#allocation7 + $0x208] sm:$0xff]
    %v9254 = vld [vmem:[#allocation7 + $0x210] sm:$0xff]
    %v9255 = vld [vmem:[#allocation7 + $0x218] sm:$0xff]
    %v9256 = vld [vmem:[#allocation7 + $0x220] sm:$0xff]
    %v9257 = vld [vmem:[#allocation7 + $0x228] sm:$0xff]
    %v9258 = vld [vmem:[#allocation7 + $0x230] sm:$0xff]
    %v9259 = vld [vmem:[#allocation7 + $0x238] sm:$0xff]
    %v9260 = vld [vmem:[#allocation7 + $0x240] sm:$0xff]
    %v9261 = vld [vmem:[#allocation7 + $0x248] sm:$0xff]
    %v9262 = vld [vmem:[#allocation7 + $0x250] sm:$0xff]
    %v9263 = vld [vmem:[#allocation7 + $0x258] sm:$0xff]
    %v9264 = vld [vmem:[#allocation7 + $0x260] sm:$0xff]
    %v9265 = vld [vmem:[#allocation7 + $0x268] sm:$0xff]
    %v9266 = vld [vmem:[#allocation7 + $0x270] sm:$0xff]
    %v9267 = vld [vmem:[#allocation7 + $0x278] sm:$0xff]
    %v9268 = vld [vmem:[#allocation7 + $0x280] sm:$0xff]
    %v9269 = vld [vmem:[#allocation7 + $0x288] sm:$0xff]
    %v9270 = vld [vmem:[#allocation7 + $0x290] sm:$0xff]
    %v9271 = vld [vmem:[#allocation7 + $0x298] sm:$0xff]
    %v9272 = vld [vmem:[#allocation7 + $0x2a0] sm:$0xff]
    %v9273 = vld [vmem:[#allocation7 + $0x2a8] sm:$0xff]
    %v9274 = vld [vmem:[#allocation7 + $0x2b0] sm:$0xff]
    %v9275 = vld [vmem:[#allocation7 + $0x2b8] sm:$0xff]
    %v9276 = vld [vmem:[#allocation7 + $0x2c0] sm:$0xff]
    %v9277 = vld [vmem:[#allocation7 + $0x2c8] sm:$0xff]
    %v9278 = vld [vmem:[#allocation7 + $0x2d0] sm:$0xff]
    %v9279 = vld [vmem:[#allocation7 + $0x2d8] sm:$0xff]
    %v9280 = vld [vmem:[#allocation7 + $0x2e0] sm:$0xff]
    %v9281 = vld [vmem:[#allocation7 + $0x2e8] sm:$0xff]
    %v9282 = vld [vmem:[#allocation7 + $0x2f0] sm:$0xff]
    %v9283 = vld [vmem:[#allocation7 + $0x2f8] sm:$0xff]
    %v9284 = vld [vmem:[#allocation7 + $0x300] sm:$0xff]
    %v9285 = vld [vmem:[#allocation7 + $0x308] sm:$0xff]
    %v9286 = vld [vmem:[#allocation7 + $0x310] sm:$0xff]
    %v9287 = vld [vmem:[#allocation7 + $0x318] sm:$0xff]
    %v9288 = vld [vmem:[#allocation7 + $0x320] sm:$0xff]
    %v9289 = vld [vmem:[#allocation7 + $0x328] sm:$0xff]
    %v9290 = vld [vmem:[#allocation7 + $0x330] sm:$0xff]
    %v9291 = vld [vmem:[#allocation7 + $0x338] sm:$0xff]
    %v9292 = vld [vmem:[#allocation7 + $0x340] sm:$0xff]
    %v9293 = vld [vmem:[#allocation7 + $0x348] sm:$0xff]
    %v9294 = vld [vmem:[#allocation7 + $0x350] sm:$0xff]
    %v9295 = vld [vmem:[#allocation7 + $0x358] sm:$0xff]
    %v9296 = vld [vmem:[#allocation7 + $0x360] sm:$0xff]
    %v9297 = vld [vmem:[#allocation7 + $0x368] sm:$0xff]
    %v9298 = vld [vmem:[#allocation7 + $0x370] sm:$0xff]
    %v9299 = vld [vmem:[#allocation7 + $0x378] sm:$0xff]
    %v9300 = vld [vmem:[#allocation7 + $0x380] sm:$0xff]
    %v9301 = vld [vmem:[#allocation7 + $0x388] sm:$0xff]
    %v9302 = vld [vmem:[#allocation7 + $0x390] sm:$0xff]
    %v9303 = vld [vmem:[#allocation7 + $0x398] sm:$0xff]
    %v9304 = vld [vmem:[#allocation7 + $0x3a0] sm:$0xff]
    %v9305 = vld [vmem:[#allocation7 + $0x3a8] sm:$0xff]
    %v9306 = vld [vmem:[#allocation7 + $0x3b0] sm:$0xff]
    %v9307 = vld [vmem:[#allocation7 + $0x3b8] sm:$0xff]
    %v9308 = vld [vmem:[#allocation7 + $0x3c0] sm:$0xff]
    %v9309 = vld [vmem:[#allocation7 + $0x3c8] sm:$0xff]
    %v9310 = vld [vmem:[#allocation7 + $0x3d0] sm:$0xff]
    %v9311 = vld [vmem:[#allocation7 + $0x3d8] sm:$0xff]
    %v9312 = vld [vmem:[#allocation7 + $0x3e0] sm:$0xff]
    %v9313 = vld [vmem:[#allocation7 + $0x3e8] sm:$0xff]
    %v9314 = vld [vmem:[#allocation7 + $0x3f0] sm:$0xff]
    %v9315 = vld [vmem:[#allocation7 + $0x3f8] sm:$0xff]
    %v9316 = vld [vmem:[%s8] sm:$0xf]
    %v9318 = vperm.slane %v9316, 0
    %v9319 = vperm.slane %v9316, 1
    %v9320 = vperm.slane %v9316, 2
    %v9321 = vperm.slane %v9316, 3
    %v9454 = vunpack.c.l.b16 %v9188
    %v9455 = vunpack.c.h.b16 %v9188
    %v9456 = vunpack.c.l.b16 %v9189
    %v9457 = vunpack.c.h.b16 %v9189
    %v9458 = vunpack.c.l.b16 %v9190
    %v9459 = vunpack.c.h.b16 %v9190
    %v9460 = vunpack.c.l.b16 %v9191
    %v9461 = vunpack.c.h.b16 %v9191
    %v9462 = vunpack.c.l.b16 %v9192
    %v9463 = vunpack.c.h.b16 %v9192
    %v9464 = vunpack.c.l.b16 %v9193
    %v9465 = vunpack.c.h.b16 %v9193
    %v9466 = vunpack.c.l.b16 %v9194
    %v9467 = vunpack.c.h.b16 %v9194
    %v9468 = vunpack.c.l.b16 %v9195
    %v9469 = vunpack.c.h.b16 %v9195
    %v9470 = vunpack.c.l.b16 %v9196
    %v9471 = vunpack.c.h.b16 %v9196
    %v9472 = vunpack.c.l.b16 %v9197
    %v9473 = vunpack.c.h.b16 %v9197
    %v9474 = vunpack.c.l.b16 %v9198
    %v9475 = vunpack.c.h.b16 %v9198
    %v9476 = vunpack.c.l.b16 %v9199
    %v9477 = vunpack.c.h.b16 %v9199
    %v9478 = vunpack.c.l.b16 %v9200
    %v9479 = vunpack.c.h.b16 %v9200
    %v9480 = vunpack.c.l.b16 %v9201
    %v9481 = vunpack.c.h.b16 %v9201
    %v9482 = vunpack.c.l.b16 %v9202
    %v9483 = vunpack.c.h.b16 %v9202
    %v9484 = vunpack.c.l.b16 %v9203
    %v9485 = vunpack.c.h.b16 %v9203
    %v9486 = vunpack.c.l.b16 %v9204
    %v9487 = vunpack.c.h.b16 %v9204
    %v9488 = vunpack.c.l.b16 %v9205
    %v9489 = vunpack.c.h.b16 %v9205
    %v9490 = vunpack.c.l.b16 %v9206
    %v9491 = vunpack.c.h.b16 %v9206
    %v9492 = vunpack.c.l.b16 %v9207
    %v9493 = vunpack.c.h.b16 %v9207
    %v9494 = vunpack.c.l.b16 %v9208
    %v9495 = vunpack.c.h.b16 %v9208
    %v9496 = vunpack.c.l.b16 %v9209
    %v9497 = vunpack.c.h.b16 %v9209
    %v9498 = vunpack.c.l.b16 %v9210
    %v9499 = vunpack.c.h.b16 %v9210
    %v9500 = vunpack.c.l.b16 %v9211
    %v9501 = vunpack.c.h.b16 %v9211
    %v9502 = vunpack.c.l.b16 %v9212
    %v9503 = vunpack.c.h.b16 %v9212
    %v9504 = vunpack.c.l.b16 %v9213
    %v9505 = vunpack.c.h.b16 %v9213
    %v9506 = vunpack.c.l.b16 %v9214
    %v9507 = vunpack.c.h.b16 %v9214
    %v9508 = vunpack.c.l.b16 %v9215
    %v9509 = vunpack.c.h.b16 %v9215
    %v9510 = vunpack.c.l.b16 %v9216
    %v9511 = vunpack.c.h.b16 %v9216
    %v9512 = vunpack.c.l.b16 %v9217
    %v9513 = vunpack.c.h.b16 %v9217
    %v9514 = vunpack.c.l.b16 %v9218
    %v9515 = vunpack.c.h.b16 %v9218
    %v9516 = vunpack.c.l.b16 %v9219
    %v9517 = vunpack.c.h.b16 %v9219
    %v9518 = vunpack.c.l.b16 %v9220
    %v9519 = vunpack.c.h.b16 %v9220
    %v9520 = vunpack.c.l.b16 %v9221
    %v9521 = vunpack.c.h.b16 %v9221
    %v9522 = vunpack.c.l.b16 %v9222
    %v9523 = vunpack.c.h.b16 %v9222
    %v9524 = vunpack.c.l.b16 %v9223
    %v9525 = vunpack.c.h.b16 %v9223
    %v9526 = vunpack.c.l.b16 %v9224
    %v9527 = vunpack.c.h.b16 %v9224
    %v9528 = vunpack.c.l.b16 %v9225
    %v9529 = vunpack.c.h.b16 %v9225
    %v9530 = vunpack.c.l.b16 %v9226
    %v9531 = vunpack.c.h.b16 %v9226
    %v9532 = vunpack.c.l.b16 %v9227
    %v9533 = vunpack.c.h.b16 %v9227
    %v9534 = vunpack.c.l.b16 %v9228
    %v9535 = vunpack.c.h.b16 %v9228
    %v9536 = vunpack.c.l.b16 %v9229
    %v9537 = vunpack.c.h.b16 %v9229
    %v9538 = vunpack.c.l.b16 %v9230
    %v9539 = vunpack.c.h.b16 %v9230
    %v9540 = vunpack.c.l.b16 %v9231
    %v9541 = vunpack.c.h.b16 %v9231
    %v9542 = vunpack.c.l.b16 %v9232
    %v9543 = vunpack.c.h.b16 %v9232
    %v9544 = vunpack.c.l.b16 %v9233
    %v9545 = vunpack.c.h.b16 %v9233
    %v9546 = vunpack.c.l.b16 %v9234
    %v9547 = vunpack.c.h.b16 %v9234
    %v9548 = vunpack.c.l.b16 %v9235
    %v9549 = vunpack.c.h.b16 %v9235
    %v9550 = vunpack.c.l.b16 %v9236
    %v9551 = vunpack.c.h.b16 %v9236
    %v9552 = vunpack.c.l.b16 %v9237
    %v9553 = vunpack.c.h.b16 %v9237
    %v9554 = vunpack.c.l.b16 %v9238
    %v9555 = vunpack.c.h.b16 %v9238
    %v9556 = vunpack.c.l.b16 %v9239
    %v9557 = vunpack.c.h.b16 %v9239
    %v9558 = vunpack.c.l.b16 %v9240
    %v9559 = vunpack.c.h.b16 %v9240
    %v9560 = vunpack.c.l.b16 %v9241
    %v9561 = vunpack.c.h.b16 %v9241
    %v9562 = vunpack.c.l.b16 %v9242
    %v9563 = vunpack.c.h.b16 %v9242
    %v9564 = vunpack.c.l.b16 %v9243
    %v9565 = vunpack.c.h.b16 %v9243
    %v9566 = vunpack.c.l.b16 %v9244
    %v9567 = vunpack.c.h.b16 %v9244
    %v9568 = vunpack.c.l.b16 %v9245
    %v9569 = vunpack.c.h.b16 %v9245
    %v9570 = vunpack.c.l.b16 %v9246
    %v9571 = vunpack.c.h.b16 %v9246
    %v9572 = vunpack.c.l.b16 %v9247
    %v9573 = vunpack.c.h.b16 %v9247
    %v9574 = vunpack.c.l.b16 %v9248
    %v9575 = vunpack.c.h.b16 %v9248
    %v9576 = vunpack.c.l.b16 %v9249
    %v9577 = vunpack.c.h.b16 %v9249
    %v9578 = vunpack.c.l.b16 %v9250
    %v9579 = vunpack.c.h.b16 %v9250
    %v9580 = vunpack.c.l.b16 %v9251
    %v9581 = vunpack.c.h.b16 %v9251
    %v9582 = vunpack.c.l.b16 %v9252
    %v9583 = vunpack.c.h.b16 %v9252
    %v9584 = vunpack.c.l.b16 %v9253
    %v9585 = vunpack.c.h.b16 %v9253
    %v9586 = vunpack.c.l.b16 %v9254
    %v9587 = vunpack.c.h.b16 %v9254
    %v9588 = vunpack.c.l.b16 %v9255
    %v9589 = vunpack.c.h.b16 %v9255
    %v9590 = vunpack.c.l.b16 %v9256
    %v9591 = vunpack.c.h.b16 %v9256
    %v9592 = vunpack.c.l.b16 %v9257
    %v9593 = vunpack.c.h.b16 %v9257
    %v9594 = vunpack.c.l.b16 %v9258
    %v9595 = vunpack.c.h.b16 %v9258
    %v9596 = vunpack.c.l.b16 %v9259
    %v9597 = vunpack.c.h.b16 %v9259
    %v9598 = vunpack.c.l.b16 %v9260
    %v9599 = vunpack.c.h.b16 %v9260
    %v9600 = vunpack.c.l.b16 %v9261
    %v9601 = vunpack.c.h.b16 %v9261
    %v9602 = vunpack.c.l.b16 %v9262
    %v9603 = vunpack.c.h.b16 %v9262
    %v9604 = vunpack.c.l.b16 %v9263
    %v9605 = vunpack.c.h.b16 %v9263
    %v9606 = vunpack.c.l.b16 %v9264
    %v9607 = vunpack.c.h.b16 %v9264
    %v9608 = vunpack.c.l.b16 %v9265
    %v9609 = vunpack.c.h.b16 %v9265
    %v9610 = vunpack.c.l.b16 %v9266
    %v9611 = vunpack.c.h.b16 %v9266
    %v9612 = vunpack.c.l.b16 %v9267
    %v9613 = vunpack.c.h.b16 %v9267
    %v9614 = vunpack.c.l.b16 %v9268
    %v9615 = vunpack.c.h.b16 %v9268
    %v9616 = vunpack.c.l.b16 %v9269
    %v9617 = vunpack.c.h.b16 %v9269
    %v9618 = vunpack.c.l.b16 %v9270
    %v9619 = vunpack.c.h.b16 %v9270
    %v9620 = vunpack.c.l.b16 %v9271
    %v9621 = vunpack.c.h.b16 %v9271
    %v9622 = vunpack.c.l.b16 %v9272
    %v9623 = vunpack.c.h.b16 %v9272
    %v9624 = vunpack.c.l.b16 %v9273
    %v9625 = vunpack.c.h.b16 %v9273
    %v9626 = vunpack.c.l.b16 %v9274
    %v9627 = vunpack.c.h.b16 %v9274
    %v9628 = vunpack.c.l.b16 %v9275
    %v9629 = vunpack.c.h.b16 %v9275
    %v9630 = vunpack.c.l.b16 %v9276
    %v9631 = vunpack.c.h.b16 %v9276
    %v9632 = vunpack.c.l.b16 %v9277
    %v9633 = vunpack.c.h.b16 %v9277
    %v9634 = vunpack.c.l.b16 %v9278
    %v9635 = vunpack.c.h.b16 %v9278
    %v9636 = vunpack.c.l.b16 %v9279
    %v9637 = vunpack.c.h.b16 %v9279
    %v9638 = vunpack.c.l.b16 %v9280
    %v9639 = vunpack.c.h.b16 %v9280
    %v9640 = vunpack.c.l.b16 %v9281
    %v9641 = vunpack.c.h.b16 %v9281
    %v9642 = vunpack.c.l.b16 %v9282
    %v9643 = vunpack.c.h.b16 %v9282
    %v9644 = vunpack.c.l.b16 %v9283
    %v9645 = vunpack.c.h.b16 %v9283
    %v9646 = vunpack.c.l.b16 %v9284
    %v9647 = vunpack.c.h.b16 %v9284
    %v9648 = vunpack.c.l.b16 %v9285
    %v9649 = vunpack.c.h.b16 %v9285
    %v9650 = vunpack.c.l.b16 %v9286
    %v9651 = vunpack.c.h.b16 %v9286
    %v9652 = vunpack.c.l.b16 %v9287
    %v9653 = vunpack.c.h.b16 %v9287
    %v9654 = vunpack.c.l.b16 %v9288
    %v9655 = vunpack.c.h.b16 %v9288
    %v9656 = vunpack.c.l.b16 %v9289
    %v9657 = vunpack.c.h.b16 %v9289
    %v9658 = vunpack.c.l.b16 %v9290
    %v9659 = vunpack.c.h.b16 %v9290
    %v9660 = vunpack.c.l.b16 %v9291
    %v9661 = vunpack.c.h.b16 %v9291
    %v9662 = vunpack.c.l.b16 %v9292
    %v9663 = vunpack.c.h.b16 %v9292
    %v9664 = vunpack.c.l.b16 %v9293
    %v9665 = vunpack.c.h.b16 %v9293
    %v9666 = vunpack.c.l.b16 %v9294
    %v9667 = vunpack.c.h.b16 %v9294
    %v9668 = vunpack.c.l.b16 %v9295
    %v9669 = vunpack.c.h.b16 %v9295
    %v9670 = vunpack.c.l.b16 %v9296
    %v9671 = vunpack.c.h.b16 %v9296
    %v9672 = vunpack.c.l.b16 %v9297
    %v9673 = vunpack.c.h.b16 %v9297
    %v9674 = vunpack.c.l.b16 %v9298
    %v9675 = vunpack.c.h.b16 %v9298
    %v9676 = vunpack.c.l.b16 %v9299
    %v9677 = vunpack.c.h.b16 %v9299
    %v9678 = vunpack.c.l.b16 %v9300
    %v9679 = vunpack.c.h.b16 %v9300
    %v9680 = vunpack.c.l.b16 %v9301
    %v9681 = vunpack.c.h.b16 %v9301
    %v9682 = vunpack.c.l.b16 %v9302
    %v9683 = vunpack.c.h.b16 %v9302
    %v9684 = vunpack.c.l.b16 %v9303
    %v9685 = vunpack.c.h.b16 %v9303
    %v9686 = vunpack.c.l.b16 %v9304
    %v9687 = vunpack.c.h.b16 %v9304
    %v9688 = vunpack.c.l.b16 %v9305
    %v9689 = vunpack.c.h.b16 %v9305
    %v9690 = vunpack.c.l.b16 %v9306
    %v9691 = vunpack.c.h.b16 %v9306
    %v9692 = vunpack.c.l.b16 %v9307
    %v9693 = vunpack.c.h.b16 %v9307
    %v9694 = vunpack.c.l.b16 %v9308
    %v9695 = vunpack.c.h.b16 %v9308
    %v9696 = vunpack.c.l.b16 %v9309
    %v9697 = vunpack.c.h.b16 %v9309
    %v9698 = vunpack.c.l.b16 %v9310
    %v9699 = vunpack.c.h.b16 %v9310
    %v9700 = vunpack.c.l.b16 %v9311
    %v9701 = vunpack.c.h.b16 %v9311
    %v9702 = vunpack.c.l.b16 %v9312
    %v9703 = vunpack.c.h.b16 %v9312
    %v9704 = vunpack.c.l.b16 %v9313
    %v9705 = vunpack.c.h.b16 %v9313
    %v9706 = vunpack.c.l.b16 %v9314
    %v9707 = vunpack.c.h.b16 %v9314
    %v9708 = vunpack.c.l.b16 %v9315
    %v9709 = vunpack.c.h.b16 %v9315
    %v9710 = vpack.c.b16 %v9458, %v9454
    %v9711 = vpack.c.b16 %v9459, %v9455
    %v9712 = vpack.c.b16 %v9460, %v9456
    %v9713 = vpack.c.b16 %v9461, %v9457
    %v9714 = vpack.c.b16 %v9466, %v9462
    %v9715 = vpack.c.b16 %v9467, %v9463
    %v9716 = vpack.c.b16 %v9468, %v9464
    %v9717 = vpack.c.b16 %v9469, %v9465
    %v9718 = vpack.c.b16 %v9474, %v9470
    %v9719 = vpack.c.b16 %v9475, %v9471
    %v9720 = vpack.c.b16 %v9476, %v9472
    %v9721 = vpack.c.b16 %v9477, %v9473
    %v9722 = vpack.c.b16 %v9482, %v9478
    %v9723 = vpack.c.b16 %v9483, %v9479
    %v9724 = vpack.c.b16 %v9484, %v9480
    %v9725 = vpack.c.b16 %v9485, %v9481
    %v9726 = vpack.c.b16 %v9490, %v9486
    %v9727 = vpack.c.b16 %v9491, %v9487
    %v9728 = vpack.c.b16 %v9492, %v9488
    %v9729 = vpack.c.b16 %v9493, %v9489
    %v9730 = vpack.c.b16 %v9498, %v9494
    %v9731 = vpack.c.b16 %v9499, %v9495
    %v9732 = vpack.c.b16 %v9500, %v9496
    %v9733 = vpack.c.b16 %v9501, %v9497
    %v9734 = vpack.c.b16 %v9506, %v9502
    %v9735 = vpack.c.b16 %v9507, %v9503
    %v9736 = vpack.c.b16 %v9508, %v9504
    %v9737 = vpack.c.b16 %v9509, %v9505
    %v9738 = vpack.c.b16 %v9514, %v9510
    %v9739 = vpack.c.b16 %v9515, %v9511
    %v9740 = vpack.c.b16 %v9516, %v9512
    %v9741 = vpack.c.b16 %v9517, %v9513
    %v9742 = vpack.c.b16 %v9522, %v9518
    %v9743 = vpack.c.b16 %v9523, %v9519
    %v9744 = vpack.c.b16 %v9524, %v9520
    %v9745 = vpack.c.b16 %v9525, %v9521
    %v9746 = vpack.c.b16 %v9530, %v9526
    %v9747 = vpack.c.b16 %v9531, %v9527
    %v9748 = vpack.c.b16 %v9532, %v9528
    %v9749 = vpack.c.b16 %v9533, %v9529
    %v9750 = vpack.c.b16 %v9538, %v9534
    %v9751 = vpack.c.b16 %v9539, %v9535
    %v9752 = vpack.c.b16 %v9540, %v9536
    %v9753 = vpack.c.b16 %v9541, %v9537
    %v9754 = vpack.c.b16 %v9546, %v9542
    %v9755 = vpack.c.b16 %v9547, %v9543
    %v9756 = vpack.c.b16 %v9548, %v9544
    %v9757 = vpack.c.b16 %v9549, %v9545
    %v9758 = vpack.c.b16 %v9554, %v9550
    %v9759 = vpack.c.b16 %v9555, %v9551
    %v9760 = vpack.c.b16 %v9556, %v9552
    %v9761 = vpack.c.b16 %v9557, %v9553
    %v9762 = vpack.c.b16 %v9562, %v9558
    %v9763 = vpack.c.b16 %v9563, %v9559
    %v9764 = vpack.c.b16 %v9564, %v9560
    %v9765 = vpack.c.b16 %v9565, %v9561
    %v9766 = vpack.c.b16 %v9570, %v9566
    %v9767 = vpack.c.b16 %v9571, %v9567
    %v9768 = vpack.c.b16 %v9572, %v9568
    %v9769 = vpack.c.b16 %v9573, %v9569
    %v9770 = vpack.c.b16 %v9578, %v9574
    %v9771 = vpack.c.b16 %v9579, %v9575
    %v9772 = vpack.c.b16 %v9580, %v9576
    %v9773 = vpack.c.b16 %v9581, %v9577
    %v9774 = vpack.c.b16 %v9586, %v9582
    %v9775 = vpack.c.b16 %v9587, %v9583
    %v9776 = vpack.c.b16 %v9588, %v9584
    %v9777 = vpack.c.b16 %v9589, %v9585
    %v9778 = vpack.c.b16 %v9594, %v9590
    %v9779 = vpack.c.b16 %v9595, %v9591
    %v9780 = vpack.c.b16 %v9596, %v9592
    %v9781 = vpack.c.b16 %v9597, %v9593
    %v9782 = vpack.c.b16 %v9602, %v9598
    %v9783 = vpack.c.b16 %v9603, %v9599
    %v9784 = vpack.c.b16 %v9604, %v9600
    %v9785 = vpack.c.b16 %v9605, %v9601
    %v9786 = vpack.c.b16 %v9610, %v9606
    %v9787 = vpack.c.b16 %v9611, %v9607
    %v9788 = vpack.c.b16 %v9612, %v9608
    %v9789 = vpack.c.b16 %v9613, %v9609
    %v9790 = vpack.c.b16 %v9618, %v9614
    %v9791 = vpack.c.b16 %v9619, %v9615
    %v9792 = vpack.c.b16 %v9620, %v9616
    %v9793 = vpack.c.b16 %v9621, %v9617
    %v9794 = vpack.c.b16 %v9626, %v9622
    %v9795 = vpack.c.b16 %v9627, %v9623
    %v9796 = vpack.c.b16 %v9628, %v9624
    %v9797 = vpack.c.b16 %v9629, %v9625
    %v9798 = vpack.c.b16 %v9634, %v9630
    %v9799 = vpack.c.b16 %v9635, %v9631
    %v9800 = vpack.c.b16 %v9636, %v9632
    %v9801 = vpack.c.b16 %v9637, %v9633
    %v9802 = vpack.c.b16 %v9642, %v9638
    %v9803 = vpack.c.b16 %v9643, %v9639
    %v9804 = vpack.c.b16 %v9644, %v9640
    %v9805 = vpack.c.b16 %v9645, %v9641
    %v9806 = vpack.c.b16 %v9650, %v9646
    %v9807 = vpack.c.b16 %v9651, %v9647
    %v9808 = vpack.c.b16 %v9652, %v9648
    %v9809 = vpack.c.b16 %v9653, %v9649
    %v9810 = vpack.c.b16 %v9658, %v9654
    %v9811 = vpack.c.b16 %v9659, %v9655
    %v9812 = vpack.c.b16 %v9660, %v9656
    %v9813 = vpack.c.b16 %v9661, %v9657
    %v9814 = vpack.c.b16 %v9666, %v9662
    %v9815 = vpack.c.b16 %v9667, %v9663
    %v9816 = vpack.c.b16 %v9668, %v9664
    %v9817 = vpack.c.b16 %v9669, %v9665
    %v9818 = vpack.c.b16 %v9674, %v9670
    %v9819 = vpack.c.b16 %v9675, %v9671
    %v9820 = vpack.c.b16 %v9676, %v9672
    %v9821 = vpack.c.b16 %v9677, %v9673
    %v9822 = vpack.c.b16 %v9682, %v9678
    %v9823 = vpack.c.b16 %v9683, %v9679
    %v9824 = vpack.c.b16 %v9684, %v9680
    %v9825 = vpack.c.b16 %v9685, %v9681
    %v9826 = vpack.c.b16 %v9690, %v9686
    %v9827 = vpack.c.b16 %v9691, %v9687
    %v9828 = vpack.c.b16 %v9692, %v9688
    %v9829 = vpack.c.b16 %v9693, %v9689
    %v9830 = vpack.c.b16 %v9698, %v9694
    %v9831 = vpack.c.b16 %v9699, %v9695
    %v9832 = vpack.c.b16 %v9700, %v9696
    %v9833 = vpack.c.b16 %v9701, %v9697
    %v9834 = vpack.c.b16 %v9706, %v9702
    %v9835 = vpack.c.b16 %v9707, %v9703
    %v9836 = vpack.c.b16 %v9708, %v9704
    %v9837 = vpack.c.b16 %v9709, %v9705
    %9966 = vmatpush.bf16.msra.mxu0 %v9738
    %9967 = vmatpush.bf16.msra.mxu0 %v9734
    %9968 = vmatpush.bf16.msra.mxu0 %v9730
    %9969 = vmatpush.bf16.msra.mxu0 %v9726
    %9970 = vmatpush.bf16.msra.mxu0 %v9722
    %9971 = vmatpush.bf16.msra.mxu0 %v9718
    %9972 = vmatpush.bf16.msra.mxu0 %v9714
    %9973 = vmatpush.bf16.msra.mxu0 %v9710
    %9974 = vmatmul.bf16.gmra.mxu0 %v9184
    %v9975 = vpop.f32.mrf.mxu0
    %v9976 = vadd.f32 %v9318, %v9975
    %v9977 = vpop.f32.mrf.mxu0
    %9978 = vdwg.mxu0
    %9979 = vmatpush.bf16.msra.mxu0 %v9770
    %9980 = vmatpush.bf16.msra.mxu0 %v9766
    %9981 = vmatpush.bf16.msra.mxu0 %v9762
    %9982 = vmatpush.bf16.msra.mxu0 %v9758
    %9983 = vmatpush.bf16.msra.mxu0 %v9754
    %9984 = vmatpush.bf16.msra.mxu0 %v9750
    %9985 = vmatpush.bf16.msra.mxu0 %v9746
    %9986 = vmatpush.bf16.msra.mxu0 %v9742
    %9987 = vmatmul.bf16.gmra.mxu0 %v9185
    %v9988 = vpop.f32.mrf.mxu0
    %v9989 = vadd.f32 %v9976, %v9988
    %v9990 = vpop.f32.mrf.mxu0
    %9991 = vdwg.mxu0
    %9992 = vmatpush.bf16.msra.mxu0 %v9802
    %9993 = vmatpush.bf16.msra.mxu0 %v9798
    %9994 = vmatpush.bf16.msra.mxu0 %v9794
    %9995 = vmatpush.bf16.msra.mxu0 %v9790
    %9996 = vmatpush.bf16.msra.mxu0 %v9786
    %9997 = vmatpush.bf16.msra.mxu0 %v9782
    %9998 = vmatpush.bf16.msra.mxu0 %v9778
    %9999 = vmatpush.bf16.msra.mxu0 %v9774
    %10000 = vmatmul.bf16.gmra.mxu0 %v9186
    %v10001 = vpop.f32.mrf.mxu0
    %v10002 = vadd.f32 %v9989, %v10001
    %v10003 = vpop.f32.mrf.mxu0
    %10004 = vdwg.mxu0
    %10005 = vmatpush.bf16.msra.mxu0 %v9834
    %10006 = vmatpush.bf16.msra.mxu0 %v9830
    %10007 = vmatpush.bf16.msra.mxu0 %v9826
    %10008 = vmatpush.bf16.msra.mxu0 %v9822
    %10009 = vmatpush.bf16.msra.mxu0 %v9818
    %10010 = vmatpush.bf16.msra.mxu0 %v9814
    %10011 = vmatpush.bf16.msra.mxu0 %v9810
    %10012 = vmatpush.bf16.msra.mxu0 %v9806
    %10013 = vmatmul.bf16.gmra.mxu0 %v9187
    %v10014 = vpop.f32.mrf.mxu0
    %v10015 = vadd.f32 %v10002, %v10014
    %v10016 = vpop.f32.mrf.mxu0
    %10017 = vdwg.mxu0
    %10018 = vmatpush.bf16.msra.mxu0 %v9739
    %10019 = vmatpush.bf16.msra.mxu0 %v9735
    %10020 = vmatpush.bf16.msra.mxu0 %v9731
    %10021 = vmatpush.bf16.msra.mxu0 %v9727
    %10022 = vmatpush.bf16.msra.mxu0 %v9723
    %10023 = vmatpush.bf16.msra.mxu0 %v9719
    %10024 = vmatpush.bf16.msra.mxu0 %v9715
    %10025 = vmatpush.bf16.msra.mxu0 %v9711
    %10026 = vmatmul.bf16.gmra.mxu0 %v9184
    %v10027 = vpop.f32.mrf.mxu0
    %v10028 = vadd.f32 %v9319, %v10027
    %v10029 = vpop.f32.mrf.mxu0
    %10030 = vdwg.mxu0
    %10031 = vmatpush.bf16.msra.mxu0 %v9771
    %10032 = vmatpush.bf16.msra.mxu0 %v9767
    %10033 = vmatpush.bf16.msra.mxu0 %v9763
    %10034 = vmatpush.bf16.msra.mxu0 %v9759
    %10035 = vmatpush.bf16.msra.mxu0 %v9755
    %10036 = vmatpush.bf16.msra.mxu0 %v9751
    %10037 = vmatpush.bf16.msra.mxu0 %v9747
    %10038 = vmatpush.bf16.msra.mxu0 %v9743
    %10039 = vmatmul.bf16.gmra.mxu0 %v9185
    %v10040 = vpop.f32.mrf.mxu0
    %v10041 = vadd.f32 %v10028, %v10040
    %v10042 = vpop.f32.mrf.mxu0
    %10043 = vdwg.mxu0
    %10044 = vmatpush.bf16.msra.mxu0 %v9803
    %10045 = vmatpush.bf16.msra.mxu0 %v9799
    %10046 = vmatpush.bf16.msra.mxu0 %v9795
    %10047 = vmatpush.bf16.msra.mxu0 %v9791
    %10048 = vmatpush.bf16.msra.mxu0 %v9787
    %10049 = vmatpush.bf16.msra.mxu0 %v9783
    %10050 = vmatpush.bf16.msra.mxu0 %v9779
    %10051 = vmatpush.bf16.msra.mxu0 %v9775
    %10052 = vmatmul.bf16.gmra.mxu0 %v9186
    %v10053 = vpop.f32.mrf.mxu0
    %v10054 = vadd.f32 %v10041, %v10053
    %v10055 = vpop.f32.mrf.mxu0
    %10056 = vdwg.mxu0
    %10057 = vmatpush.bf16.msra.mxu0 %v9835
    %10058 = vmatpush.bf16.msra.mxu0 %v9831
    %10059 = vmatpush.bf16.msra.mxu0 %v9827
    %10060 = vmatpush.bf16.msra.mxu0 %v9823
    %10061 = vmatpush.bf16.msra.mxu0 %v9819
    %10062 = vmatpush.bf16.msra.mxu0 %v9815
    %10063 = vmatpush.bf16.msra.mxu0 %v9811
    %10064 = vmatpush.bf16.msra.mxu0 %v9807
    %10065 = vmatmul.bf16.gmra.mxu0 %v9187
    %v10066 = vpop.f32.mrf.mxu0
    %v10067 = vadd.f32 %v10054, %v10066
    %v10068 = vpop.f32.mrf.mxu0
    %10069 = vdwg.mxu0
    %10070 = vmatpush.bf16.msra.mxu0 %v9740
    %10071 = vmatpush.bf16.msra.mxu0 %v9736
    %10072 = vmatpush.bf16.msra.mxu0 %v9732
    %10073 = vmatpush.bf16.msra.mxu0 %v9728
    %10074 = vmatpush.bf16.msra.mxu0 %v9724
    %10075 = vmatpush.bf16.msra.mxu0 %v9720
    %10076 = vmatpush.bf16.msra.mxu0 %v9716
    %10077 = vmatpush.bf16.msra.mxu0 %v9712
    %10078 = vmatmul.bf16.gmra.mxu0 %v9184
    %v10079 = vpop.f32.mrf.mxu0
    %v10080 = vadd.f32 %v9320, %v10079
    %v10081 = vpop.f32.mrf.mxu0
    %10082 = vdwg.mxu0
    %10083 = vmatpush.bf16.msra.mxu0 %v9772
    %10084 = vmatpush.bf16.msra.mxu0 %v9768
    %10085 = vmatpush.bf16.msra.mxu0 %v9764
    %10086 = vmatpush.bf16.msra.mxu0 %v9760
    %10087 = vmatpush.bf16.msra.mxu0 %v9756
    %10088 = vmatpush.bf16.msra.mxu0 %v9752
    %10089 = vmatpush.bf16.msra.mxu0 %v9748
    %10090 = vmatpush.bf16.msra.mxu0 %v9744
    %10091 = vmatmul.bf16.gmra.mxu0 %v9185
    %v10092 = vpop.f32.mrf.mxu0
    %v10093 = vadd.f32 %v10080, %v10092
    %v10094 = vpop.f32.mrf.mxu0
    %10095 = vdwg.mxu0
    %10096 = vmatpush.bf16.msra.mxu0 %v9804
    %10097 = vmatpush.bf16.msra.mxu0 %v9800
    %10098 = vmatpush.bf16.msra.mxu0 %v9796
    %10099 = vmatpush.bf16.msra.mxu0 %v9792
    %10100 = vmatpush.bf16.msra.mxu0 %v9788
    %10101 = vmatpush.bf16.msra.mxu0 %v9784
    %10102 = vmatpush.bf16.msra.mxu0 %v9780
    %10103 = vmatpush.bf16.msra.mxu0 %v9776
    %10104 = vmatmul.bf16.gmra.mxu0 %v9186
    %v10105 = vpop.f32.mrf.mxu0
    %v10106 = vadd.f32 %v10093, %v10105
    %v10107 = vpop.f32.mrf.mxu0
    %10108 = vdwg.mxu0
    %10109 = vmatpush.bf16.msra.mxu0 %v9836
    %10110 = vmatpush.bf16.msra.mxu0 %v9832
    %10111 = vmatpush.bf16.msra.mxu0 %v9828
    %10112 = vmatpush.bf16.msra.mxu0 %v9824
    %10113 = vmatpush.bf16.msra.mxu0 %v9820
    %10114 = vmatpush.bf16.msra.mxu0 %v9816
    %10115 = vmatpush.bf16.msra.mxu0 %v9812
    %10116 = vmatpush.bf16.msra.mxu0 %v9808
    %10117 = vmatmul.bf16.gmra.mxu0 %v9187
    %v10118 = vpop.f32.mrf.mxu0
    %v10119 = vadd.f32 %v10106, %v10118
    %v10120 = vpop.f32.mrf.mxu0
    %10121 = vdwg.mxu0
    %10122 = vmatpush.bf16.msra.mxu0 %v9741
    %10123 = vmatpush.bf16.msra.mxu0 %v9737
    %10124 = vmatpush.bf16.msra.mxu0 %v9733
    %10125 = vmatpush.bf16.msra.mxu0 %v9729
    %10126 = vmatpush.bf16.msra.mxu0 %v9725
    %10127 = vmatpush.bf16.msra.mxu0 %v9721
    %10128 = vmatpush.bf16.msra.mxu0 %v9717
    %10129 = vmatpush.bf16.msra.mxu0 %v9713
    %10130 = vmatmul.bf16.gmra.mxu0 %v9184
    %v10131 = vpop.f32.mrf.mxu0
    %v10132 = vadd.f32 %v9321, %v10131
    %v10133 = vpop.f32.mrf.mxu0
    %10134 = vdwg.mxu0
    %10135 = vmatpush.bf16.msra.mxu0 %v9773
    %10136 = vmatpush.bf16.msra.mxu0 %v9769
    %10137 = vmatpush.bf16.msra.mxu0 %v9765
    %10138 = vmatpush.bf16.msra.mxu0 %v9761
    %10139 = vmatpush.bf16.msra.mxu0 %v9757
    %10140 = vmatpush.bf16.msra.mxu0 %v9753
    %10141 = vmatpush.bf16.msra.mxu0 %v9749
    %10142 = vmatpush.bf16.msra.mxu0 %v9745
    %10143 = vmatmul.bf16.gmra.mxu0 %v9185
    %v10144 = vpop.f32.mrf.mxu0
    %v10145 = vadd.f32 %v10132, %v10144
    %v10146 = vpop.f32.mrf.mxu0
    %10147 = vdwg.mxu0
    %10148 = vmatpush.bf16.msra.mxu0 %v9805
    %10149 = vmatpush.bf16.msra.mxu0 %v9801
    %10150 = vmatpush.bf16.msra.mxu0 %v9797
    %10151 = vmatpush.bf16.msra.mxu0 %v9793
    %10152 = vmatpush.bf16.msra.mxu0 %v9789
    %10153 = vmatpush.bf16.msra.mxu0 %v9785
    %10154 = vmatpush.bf16.msra.mxu0 %v9781
    %10155 = vmatpush.bf16.msra.mxu0 %v9777
    %10156 = vmatmul.bf16.gmra.mxu0 %v9186
    %v10157 = vpop.f32.mrf.mxu0
    %v10158 = vadd.f32 %v10145, %v10157
    %v10159 = vpop.f32.mrf.mxu0
    %10160 = vdwg.mxu0
    %10161 = vmatpush.bf16.msra.mxu0 %v9837
    %10162 = vmatpush.bf16.msra.mxu0 %v9833
    %10163 = vmatpush.bf16.msra.mxu0 %v9829
    %10164 = vmatpush.bf16.msra.mxu0 %v9825
    %10165 = vmatpush.bf16.msra.mxu0 %v9821
    %10166 = vmatpush.bf16.msra.mxu0 %v9817
    %10167 = vmatpush.bf16.msra.mxu0 %v9813
    %10168 = vmatpush.bf16.msra.mxu0 %v9809
    %10169 = vmatmul.bf16.gmra.mxu0 %v9187
    %v10170 = vpop.f32.mrf.mxu0
    %v10171 = vadd.f32 %v10158, %v10170
    %v10172 = vpop.f32.mrf.mxu0
    %10173 = vdwg.mxu0
    %v10174 = vmax.f32 %v10015, 0.0
    %v10175 = vmax.f32 %v10067, 0.0
    %v10176 = vmax.f32 %v10119, 0.0
    %v10177 = vmax.f32 %v10171, 0.0
    %v10178 = vld [vmem:[%s9] sm:$0xff]
    %v10179 = vld [vmem:[%s9 + $0x8] sm:$0xff]
    %v10180 = vld [vmem:[%s9 + $0x10] sm:$0xff]
    %v10181 = vld [vmem:[%s9 + $0x18] sm:$0xff]
    %v10182 = vld [vmem:[%s9 + $0x20] sm:$0xff]
    %v10183 = vld [vmem:[%s9 + $0x28] sm:$0xff]
    %v10184 = vld [vmem:[%s9 + $0x30] sm:$0xff]
    %v10185 = vld [vmem:[%s9 + $0x38] sm:$0xff]
    %v10186 = vld [vmem:[%s9 + $0x40] sm:$0xff]
    %v10187 = vld [vmem:[%s9 + $0x48] sm:$0xff]
    %v10188 = vld [vmem:[%s9 + $0x50] sm:$0xff]
    %v10189 = vld [vmem:[%s9 + $0x58] sm:$0xff]
    %v10190 = vld [vmem:[%s9 + $0x60] sm:$0xff]
    %v10191 = vld [vmem:[%s9 + $0x68] sm:$0xff]
    %v10192 = vld [vmem:[%s9 + $0x70] sm:$0xff]
    %v10193 = vld [vmem:[%s9 + $0x78] sm:$0xff]
    %v10194 = vld [vmem:[%s9 + $0x80] sm:$0xff]
    %v10195 = vld [vmem:[%s9 + $0x88] sm:$0xff]
    %v10196 = vld [vmem:[%s9 + $0x90] sm:$0xff]
    %v10197 = vld [vmem:[%s9 + $0x98] sm:$0xff]
    %v10198 = vld [vmem:[%s9 + $0xa0] sm:$0xff]
    %v10199 = vld [vmem:[%s9 + $0xa8] sm:$0xff]
    %v10200 = vld [vmem:[%s9 + $0xb0] sm:$0xff]
    %v10201 = vld [vmem:[%s9 + $0xb8] sm:$0xff]
    %v10202 = vld [vmem:[%s9 + $0xc0] sm:$0xff]
    %v10203 = vld [vmem:[%s9 + $0xc8] sm:$0xff]
    %v10204 = vld [vmem:[%s9 + $0xd0] sm:$0xff]
    %v10205 = vld [vmem:[%s9 + $0xd8] sm:$0xff]
    %v10206 = vld [vmem:[%s9 + $0xe0] sm:$0xff]
    %v10207 = vld [vmem:[%s9 + $0xe8] sm:$0xff]
    %v10208 = vld [vmem:[%s9 + $0xf0] sm:$0xff]
    %v10209 = vld [vmem:[%s9 + $0xf8] sm:$0xff]
    %v10210 = vld [vmem:[%s9 + $0x100] sm:$0xff]
    %v10211 = vld [vmem:[%s9 + $0x108] sm:$0xff]
    %v10212 = vld [vmem:[%s9 + $0x110] sm:$0xff]
    %v10213 = vld [vmem:[%s9 + $0x118] sm:$0xff]
    %v10214 = vld [vmem:[%s9 + $0x120] sm:$0xff]
    %v10215 = vld [vmem:[%s9 + $0x128] sm:$0xff]
    %v10216 = vld [vmem:[%s9 + $0x130] sm:$0xff]
    %v10217 = vld [vmem:[%s9 + $0x138] sm:$0xff]
    %v10218 = vld [vmem:[%s9 + $0x140] sm:$0xff]
    %v10219 = vld [vmem:[%s9 + $0x148] sm:$0xff]
    %v10220 = vld [vmem:[%s9 + $0x150] sm:$0xff]
    %v10221 = vld [vmem:[%s9 + $0x158] sm:$0xff]
    %v10222 = vld [vmem:[%s9 + $0x160] sm:$0xff]
    %v10223 = vld [vmem:[%s9 + $0x168] sm:$0xff]
    %v10224 = vld [vmem:[%s9 + $0x170] sm:$0xff]
    %v10225 = vld [vmem:[%s9 + $0x178] sm:$0xff]
    %v10226 = vld [vmem:[%s9 + $0x180] sm:$0xff]
    %v10227 = vld [vmem:[%s9 + $0x188] sm:$0xff]
    %v10228 = vld [vmem:[%s9 + $0x190] sm:$0xff]
    %v10229 = vld [vmem:[%s9 + $0x198] sm:$0xff]
    %v10230 = vld [vmem:[%s9 + $0x1a0] sm:$0xff]
    %v10231 = vld [vmem:[%s9 + $0x1a8] sm:$0xff]
    %v10232 = vld [vmem:[%s9 + $0x1b0] sm:$0xff]
    %v10233 = vld [vmem:[%s9 + $0x1b8] sm:$0xff]
    %v10234 = vld [vmem:[%s9 + $0x1c0] sm:$0xff]
    %v10235 = vld [vmem:[%s9 + $0x1c8] sm:$0xff]
    %v10236 = vld [vmem:[%s9 + $0x1d0] sm:$0xff]
    %v10237 = vld [vmem:[%s9 + $0x1d8] sm:$0xff]
    %v10238 = vld [vmem:[%s9 + $0x1e0] sm:$0xff]
    %v10239 = vld [vmem:[%s9 + $0x1e8] sm:$0xff]
    %v10240 = vld [vmem:[%s9 + $0x1f0] sm:$0xff]
    %v10241 = vld [vmem:[%s9 + $0x1f8] sm:$0xff]
    %v10242 = vld [vmem:[%s10] sm:$0x1]
    %v10244 = vperm.slane %v10242, 0
    %10246 = vmatpush.msra.mxu0 %v10193
    %10247 = vmatpush.msra.mxu0 %v10192
    %10248 = vmatpush.msra.mxu0 %v10191
    %10249 = vmatpush.msra.mxu0 %v10190
    %10250 = vmatpush.msra.mxu0 %v10189
    %10251 = vmatpush.msra.mxu0 %v10188
    %10252 = vmatpush.msra.mxu0 %v10187
    %10253 = vmatpush.msra.mxu0 %v10186
    %10254 = vmatpush.msra.mxu0 %v10185
    %10255 = vmatpush.msra.mxu0 %v10184
    %10256 = vmatpush.msra.mxu0 %v10183
    %10257 = vmatpush.msra.mxu0 %v10182
    %10258 = vmatpush.msra.mxu0 %v10181
    %10259 = vmatpush.msra.mxu0 %v10180
    %10260 = vmatpush.msra.mxu0 %v10179
    %10261 = vmatpush.msra.mxu0 %v10178
    %10262 = vmatmul.f32.gmra.mxu0 %v10174
    %v10263 = vpop.f32.mrf.mxu0
    %v10264 = vadd.f32 %v10244, %v10263
    %10265 = vdwg.mxu0
    %10266 = vmatpush.msra.mxu0 %v10209
    %10267 = vmatpush.msra.mxu0 %v10208
    %10268 = vmatpush.msra.mxu0 %v10207
    %10269 = vmatpush.msra.mxu0 %v10206
    %10270 = vmatpush.msra.mxu0 %v10205
    %10271 = vmatpush.msra.mxu0 %v10204
    %10272 = vmatpush.msra.mxu0 %v10203
    %10273 = vmatpush.msra.mxu0 %v10202
    %10274 = vmatpush.msra.mxu0 %v10201
    %10275 = vmatpush.msra.mxu0 %v10200
    %10276 = vmatpush.msra.mxu0 %v10199
    %10277 = vmatpush.msra.mxu0 %v10198
    %10278 = vmatpush.msra.mxu0 %v10197
    %10279 = vmatpush.msra.mxu0 %v10196
    %10280 = vmatpush.msra.mxu0 %v10195
    %10281 = vmatpush.msra.mxu0 %v10194
    %10282 = vmatmul.f32.gmra.mxu0 %v10175
    %v10283 = vpop.f32.mrf.mxu0
    %v10284 = vadd.f32 %v10264, %v10283
    %10285 = vdwg.mxu0
    %10286 = vmatpush.msra.mxu0 %v10225
    %10287 = vmatpush.msra.mxu0 %v10224
    %10288 = vmatpush.msra.mxu0 %v10223
    %10289 = vmatpush.msra.mxu0 %v10222
    %10290 = vmatpush.msra.mxu0 %v10221
    %10291 = vmatpush.msra.mxu0 %v10220
    %10292 = vmatpush.msra.mxu0 %v10219
    %10293 = vmatpush.msra.mxu0 %v10218
    %10294 = vmatpush.msra.mxu0 %v10217
    %10295 = vmatpush.msra.mxu0 %v10216
    %10296 = vmatpush.msra.mxu0 %v10215
    %10297 = vmatpush.msra.mxu0 %v10214
    %10298 = vmatpush.msra.mxu0 %v10213
    %10299 = vmatpush.msra.mxu0 %v10212
    %10300 = vmatpush.msra.mxu0 %v10211
    %10301 = vmatpush.msra.mxu0 %v10210
    %10302 = vmatmul.f32.gmra.mxu0 %v10176
    %v10303 = vpop.f32.mrf.mxu0
    %v10304 = vadd.f32 %v10284, %v10303
    %10305 = vdwg.mxu0
    %10306 = vmatpush.msra.mxu0 %v10241
    %10307 = vmatpush.msra.mxu0 %v10240
    %10308 = vmatpush.msra.mxu0 %v10239
    %10309 = vmatpush.msra.mxu0 %v10238
    %10310 = vmatpush.msra.mxu0 %v10237
    %10311 = vmatpush.msra.mxu0 %v10236
    %10312 = vmatpush.msra.mxu0 %v10235
    %10313 = vmatpush.msra.mxu0 %v10234
    %10314 = vmatpush.msra.mxu0 %v10233
    %10315 = vmatpush.msra.mxu0 %v10232
    %10316 = vmatpush.msra.mxu0 %v10231
    %10317 = vmatpush.msra.mxu0 %v10230
    %10318 = vmatpush.msra.mxu0 %v10229
    %10319 = vmatpush.msra.mxu0 %v10228
    %10320 = vmatpush.msra.mxu0 %v10227
    %10321 = vmatpush.msra.mxu0 %v10226
    %10322 = vmatmul.f32.gmra.mxu0 %v10177
    %v10323 = vpop.f32.mrf.mxu0
    %v10324 = vadd.f32 %v10304, %v10323
    %10325 = vdwg.mxu0
    %vm10326 = vcmask 74752
    %v10327 = vsel %vm10326, %v10324, -inf
    %10328 = vmax.xlane.f32.xlu0 %v10327
    %v10329 = vpop.xlane.xlu0 %10328
    %v10330 = vsub.f32 %v10324, %v10329
    %v10331 = vmul.f32 %v10330, 1.442695
    %v10332 = vpow.pop %v10331
    %v10333 = vsel %vm10326, %v10332, 0.0
    %10334 = vadd.xlane.f32.xlu0 %v10333
    %v10335 = vpop.xlane.xlu0 %10334
    %v10336 = vrcp.pop %v10335
    %v10337 = vmul.f32 %v10335, %v10336
    %v10338 = vsub.f32 1.0, %v10337
    %v10339 = vmul.f32 %v10336, %v10338
    %v10340 = vadd.f32 %v10336, %v10339
    %vm10341 = vweird.f32 %v10335
    %vm10342 = vweird.f32 %v10336
    %vm10343 = vmor %vm10341, %vm10342
    %v10344 = vsel %vm10343, %v10336, %v10340
    %v10345 = vand.u32 2147483647, %v10335
    %vm10346 = vcmp.eq.f32.partialorder %v10345, 8.507059e+37
    %v10347 = vand.u32 %v10335, 2147483648
    %v10348 = vor.u32 1.1754944e-38, %v10347
    %v10349 = vsel %vm10346, %v10348, %v10344
    %v10350 = vmul.f32 %v10332, %v10349
    %10351 = vst.msk [vmem:[#allocation10] sm:$0x3] %vm10326, %v10350
    // Predicated region
    $region50: #{cnn_forward.1} parent=1 // pred_check
      _
    $region51: #{cnn_forward.1} parent=1 // pred_check_branch
      %10353 = sbr.rel (0) target = $region53
    $region52: #{cnn_forward.1} parent=1 // pred_region
      %10355 = vsyncadd [#allocation9], 0
      %s10357 = sshll.u32 [#allocation10], 4
      %s10358 = int_to_ptr.vmem [resolvable:$true] %s10357
      %s10359 = sshll.u32 %s11, 4
      %s10360 = int_to_ptr.hbm [resolvable:$true] %s10359
      %10362 = dma.vmem_to_hbm [thread:$0]  %s10358, 32, %s10360, [#allocation9]
    $region53: #{cnn_forward.1} parent=1 // pred_fallthru
      _
    // Predicated region
    $region54: #{cnn_forward.1} parent=1 // pred_check
      _
    $region55: #{cnn_forward.1} parent=1 // pred_check_branch
      %10364 = sbr.rel (0) target = $region57
    $region56: #{cnn_forward.1} parent=1 // pred_region
      %10366 = dma.done [#allocation9], 32
    $region57: #{cnn_forward.1} parent=1 // pred_fallthru
      _
    %10367 = vsyncpa [#allocation8], 1
    %10368 = vsyncpa [#allocation9], 1

</llo_original>
